<compile_context>
chip_gen: v7x
topology: tpu7x:2x2x1
jax: 0.10.0
libtpu: 0.0.40
codegen_flags: <defaults>
</compile_context>

<pallas_src>
import functools

import jax
import jax.numpy as jnp
import numpy as np
from jax import lax
from jax.experimental import pallas as pl
from jax.experimental.pallas import tpu as pltpu

_VMEM_LIMIT = 32 * 1024 * 1024        # scoped-VMEM cap (safe on v5e/v6e/v7x)
_BLOCK_BUDGET = 8 * 1024 * 1024       # target bytes for one step's blocks (incl. x2 buffers)


def _choose_tile(dim, align, cap):
    """Pick a block size for a tiled axis.

    Returns (tile, padded_dim).  The full extent is always legal; otherwise the
    tile must be a multiple of `align` (TPU (8,128) BlockSpec rule).  If no
    aligned divisor of `dim` fits under `cap`, the axis is zero-padded up to a
    multiple of `align` (zero padding is exact for the reductions used here).
    """
    cap = max(cap, align)
    if dim <= cap:
        return dim, dim
    t = (cap // align) * align
    while t >= align:
        if dim % t == 0:
            return t, dim
        t -= align
    padded = -(-dim // align) * align
    t = (cap // align) * align
    while t >= align:
        if padded % t == 0:
            return t, padded
        t -= align
    return align, padded


# --------------------------------------------------------------------------
# Kernel A: fused Q/K/V 1x1x1 projections + MaxPool3d((2,1,1)) over the
# attention axis.  x block is (C, 2*pairs*P): channels on sublanes, positions
# on lanes.  Outputs are channel-major so PyTorch's .view()s become free
# reshapes on the host.
# --------------------------------------------------------------------------
def _proj_pool_kernel(x_ref, wq_ref, bq_ref, wk_ref, bk_ref, wv_ref, bv_ref,
                      q_ref, k_ref, v_ref, *, pairs, P):
    xb = x_ref[0]                                        # (C, 2*pairs*P)
    # TODO(synk): on v6e/v7x cast xb / weights to bf16 (fp32 accumulate) and
    # store bf16 q/k/v once the 2e-3 end-to-end tolerance is re-validated.
    yq = jnp.dot(wq_ref[...], xb, preferred_element_type=jnp.float32) + bq_ref[...]
    q_ref[0] = yq                                        # single lane-dense store
    yk = jnp.dot(wk_ref[...], xb, preferred_element_type=jnp.float32) + bk_ref[...]
    yv = jnp.dot(wv_ref[...], xb, preferred_element_type=jnp.float32) + bv_ref[...]
    # MaxPool over the attention axis == max of adjacent P-lane chunks.
    for i in range(pairs):
        lo = 2 * i * P
        k_ref[0, :, i * P:(i + 1) * P] = jnp.maximum(yk[:, lo:lo + P],
                                                     yk[:, lo + P:lo + 2 * P])
        v_ref[0, :, i * P:(i + 1) * P] = jnp.maximum(yv[:, lo:lo + P],
                                                     yv[:, lo + P:lo + 2 * P])


def _proj_pool(x_cm, wq, bq, wk, bk, wv, bv, *, A, P):
    B, C, L = x_cm.shape
    assert L == A * P
    C2 = wq.shape[0]
    A2 = A // 2

    # pooling pairs per grid step: largest aligned divisor of A2 within budget.
    per_pair = 2 * 4 * P * (2 * C + 2 * C2 + C2 + C)     # x,q,k,v blocks, x2 buffers
    cands = [d for d in range(1, A2 + 1)
             if A2 % d == 0 and ((d * P) % 128 == 0 or d == A2)]
    fitting = [d for d in cands if d * per_pair <= _BLOCK_BUDGET]
    pt = max(fitting) if fitting else min(cands)
    grid = (B, A2 // pt)

    bq2 = bq.reshape(C2, 1)
    bk2 = bk.reshape(C2, 1)
    bv2 = bv.reshape(C, 1)

    flops = 2 * B * A * P * C * (2 * C2 + C)
    bytes_accessed = 4 * (B * C * L + B * C2 * L + B * C2 * A2 * P
                          + B * C * A2 * P + 2 * C2 * C + C * C)

    return pl.pallas_call(
        functools.partial(_proj_pool_kernel, pairs=pt, P=P),
        out_shape=(jax.ShapeDtypeStruct((B, C2, A * P), jnp.float32),
                   jax.ShapeDtypeStruct((B, C2, A2 * P), jnp.float32),
                   jax.ShapeDtypeStruct((B, C, A2 * P), jnp.float32)),
        grid=grid,
        in_specs=[
            pl.BlockSpec((1, C, 2 * pt * P), lambda b, j: (b, 0, j)),
            pl.BlockSpec((C2, C), lambda b, j: (0, 0)),
            pl.BlockSpec((C2, 1), lambda b, j: (0, 0)),
            pl.BlockSpec((C2, C), lambda b, j: (0, 0)),
            pl.BlockSpec((C2, 1), lambda b, j: (0, 0)),
            pl.BlockSpec((C, C), lambda b, j: (0, 0)),
            pl.BlockSpec((C, 1), lambda b, j: (0, 0)),
        ],
        out_specs=(
            pl.BlockSpec((1, C2, 2 * pt * P), lambda b, j: (b, 0, j)),
            pl.BlockSpec((1, C2, pt * P), lambda b, j: (b, 0, j)),
            pl.BlockSpec((1, C, pt * P), lambda b, j: (b, 0, j)),
        ),
        compiler_params=pltpu.CompilerParams(
            dimension_semantics=("parallel", "parallel"),
            vmem_limit_bytes=_VMEM_LIMIT),
        cost_estimate=pl.CostEstimate(flops=flops, transcendentals=0,
                                      bytes_accessed=bytes_accessed),
    )(x_cm, wq, bq2, wk, bk2, wv, bv2)


# --------------------------------------------------------------------------
# Kernel B1: dist = Q @ K accumulated into the resident output block across
# M tiles, softmax finalized in place at the last reduction step.
# --------------------------------------------------------------------------
def _dist_softmax_kernel(q_ref, k_ref, attn_ref):
    kk = pl.program_id(2)

    @pl.when(kk == 0)
    def _():
        attn_ref[...] = jnp.zeros_like(attn_ref)

    attn_ref[0] += jnp.dot(q_ref[0], k_ref[0], preferred_element_type=jnp.float32)

    @pl.when(kk == pl.num_programs(2) - 1)
    def _():
        s = attn_ref[0]
        s = s - jnp.max(s, axis=-1, keepdims=True)
        p = jnp.exp(s)
        attn_ref[0] = p / jnp.sum(p, axis=-1, keepdims=True)


def _dist_softmax(q_mat, k_mat):
    B, A, M = q_mat.shape
    A2 = k_mat.shape[2]

    # Split the A rows so there are >=2 parallel grid blocks per batch (v7x 2TC).
    at = A // 2 if (A % 16 == 0) else A

    # Reduction (M) tile: multiple of 128 (or full), VMEM-budgeted; the (mt, A2)
    # K tile pads its lanes to 128 in VMEM, so account for that.
    bytes_per_m = 2 * 4 * (at + max(A2, 128))
    cap = max(128, _BLOCK_BUDGET // bytes_per_m)
    mt, Mp = _choose_tile(M, 128, cap)
    if Mp != M:
        q_mat = jnp.pad(q_mat, ((0, 0), (0, 0), (0, Mp - M)))
        k_mat = jnp.pad(k_mat, ((0, 0), (0, Mp - M), (0, 0)))

    grid = (B, A // at, Mp // mt)

    flops = 2 * B * A * Mp * A2
    bytes_accessed = 4 * (B * A * Mp + B * Mp * A2 + B * A * A2)

    return pl.pallas_call(
        _dist_softmax_kernel,
        out_shape=jax.ShapeDtypeStruct((B, A, A2), jnp.float32),
        grid=grid,
        in_specs=[
            pl.BlockSpec((1, at, mt), lambda b, i, k: (b, i, k)),
            pl.BlockSpec((1, mt, A2), lambda b, i, k: (b, k, 0)),
        ],
        out_specs=pl.BlockSpec((1, at, A2), lambda b, i, k: (b, i, 0)),
        compiler_params=pltpu.CompilerParams(
            dimension_semantics=("parallel", "parallel", "arbitrary"),
            vmem_limit_bytes=_VMEM_LIMIT),
        cost_estimate=pl.CostEstimate(flops=flops, transcendentals=B * A * A2,
                                      bytes_accessed=bytes_accessed),
    )(q_mat, k_mat)


# --------------------------------------------------------------------------
# Kernel B2: OUT[b, c, a, p] = gamma * sum_a2 attn[b,a,a2] * V_view[b, c*P+p, a2]
# Tiled over channels; output already channel-major so the host epilogue is a
# free reshape ('T') or a single axis swap ('W'/'H') fused with the residual.
# --------------------------------------------------------------------------
def _apply_attn_kernel(gamma_ref, attn_ref, v_ref, o_ref, *, cpb, P):
    att = attn_ref[0]                                    # (A, A2)
    vb = v_ref[0]                                        # (cpb*P, A2)
    o = lax.dot_general(att, vb, (((1,), (1,)), ((), ())),
                        preferred_element_type=jnp.float32)   # (A, cpb*P)
    g = gamma_ref[0, 0]
    for c in range(cpb):
        o_ref[0, c] = g * o[:, c * P:(c + 1) * P]


def _apply_attn(gamma, attn, v_mat, *, C, A, P):
    B, _, A2 = attn.shape
    N = v_mat.shape[1]
    assert N == C * P

    # channels per grid step: v tile pads lanes to 128; keep blocks in budget.
    per_ch = 2 * 4 * P * (max(A2, 128) + 2 * A)
    cands = [d for d in range(1, C + 1)
             if C % d == 0 and ((d * P) % 8 == 0 or d == C)]
    fitting = [d for d in cands if d * per_ch <= _BLOCK_BUDGET]
    cpb = max(fitting) if fitting else min(cands)
    grid = (B, C // cpb)

    flops = 2 * B * A * A2 * N
    bytes_accessed = 4 * (B * N * A2 + B * A * A2 + B * C * A * P)

    return pl.pallas_call(
        functools.partial(_apply_attn_kernel, cpb=cpb, P=P),
        out_shape=jax.ShapeDtypeStruct((B, C, A, P), jnp.float32),
        grid=grid,
        in_specs=[
            pl.BlockSpec(memory_space=pltpu.MemorySpace.SMEM),   # gamma (1,1)
            pl.BlockSpec((1, A, A2), lambda b, j: (b, 0, 0)),
            pl.BlockSpec((1, cpb * P, A2), lambda b, j: (b, j, 0)),
        ],
        out_specs=pl.BlockSpec((1, cpb, A, P), lambda b, j: (b, j, 0, 0)),
        compiler_params=pltpu.CompilerParams(
            dimension_semantics=("parallel", "parallel"),
            vmem_limit_bytes=_VMEM_LIMIT),
        cost_estimate=pl.CostEstimate(flops=flops, transcendentals=0,
                                      bytes_accessed=bytes_accessed),
    )(gamma, attn, v_mat)


# --------------------------------------------------------------------------
# SeparableAttnCell / SeparableAttn forward (thin host glue — only the
# unavoidable input/output axis swaps for the 'W'/'H' cells remain).
# --------------------------------------------------------------------------
def separable_attn_cell(x, params, attn_id, pooling_factor=2):
    wq, bq, wk, bk, wv, bv, gamma = params
    B, C, T, W, H = x.shape
    assert T % 2 == 0 and W % 2 == 0 and H % 2 == 0, "T, W, H is not even"
    assert pooling_factor == 2  # MaxPool3d(kernel=(2,1,1), stride=(2,1,1))
    C2 = C // 2

    if attn_id == 'T':
        out5 = x
        A, D1, D2 = T, W, H
    elif attn_id == 'W':
        out5 = jnp.swapaxes(x, 2, 3)
        A, D1, D2 = W, T, H
    else:  # 'H'
        out5 = jnp.swapaxes(x, 2, 4)
        A, D1, D2 = H, W, T

    P = D1 * D2
    A2 = A // pooling_factor
    M = C2 * P
    N = C * P

    # channel-major, position-on-lanes slab; free reshape for 'T', one transpose
    # (the same one PyTorch pays) for 'W'/'H'.
    x_cm = out5.reshape(B, C, A * P)

    q_cm, k_cm, v_cm = _proj_pool(x_cm, wq, bq, wk, bk, wv, bv, A=A, P=P)
    # q_cm (B, C2, A*P), k_cm (B, C2, A2*P), v_cm (B, C, A2*P) are laid out
    # exactly like PyTorch's contiguous conv/pool outputs, so the .view()
    # reinterpretations below are free C-order reshapes (bug-compatible).
    q_mat = q_cm.reshape(B, A, M)
    k_mat = k_cm.reshape(B, M, A2)
    v_mat = v_cm.reshape(B, N, A2)

    attn = _dist_softmax(q_mat, k_mat)                       # (B, A, A2)
    o_cm = _apply_attn(gamma.reshape(1, 1).astype(jnp.float32),
                       attn, v_mat, C=C, A=A, P=P)           # (B, C, A, P), * gamma

    # reassemble to (B, C, T, W, H); residual add fuses into this op.
    if attn_id == 'T':
        o5 = o_cm.reshape(B, C, T, W, H)                     # free
    elif attn_id == 'W':
        o5 = jnp.swapaxes(o_cm.reshape(B, C, W, T, H), 2, 3)
    else:  # 'H': reproduces PyTorch's .view(B, C, T, W, H) of the (N, A) buffer
        o5 = jnp.transpose(o_cm.reshape(B, C, H, T, W), (0, 1, 3, 4, 2))
    return x + o5


def separable_attn(x, all_params):
    for attn_id, params in zip(('T', 'W', 'H'), all_params):
        x = separable_attn_cell(x, params, attn_id)
    return x


# --------------------------------------------------------------------------
# Deterministic parameter init (shapes from SeparableAttnCell.__init__)
# --------------------------------------------------------------------------
def init_params(key, C):
    C2 = C // 2
    cells = []
    scale = 1.0 / np.sqrt(C)
    for _ in range(3):  # cells 'T', 'W', 'H'
        key, k0, k1, k2, k3, k4, k5 = jax.random.split(key, 7)
        wq = jax.random.uniform(k0, (C2, C), jnp.float32, -scale, scale)
        bq = jax.random.uniform(k1, (C2,), jnp.float32, -scale, scale)
        wk = jax.random.uniform(k2, (C2, C), jnp.float32, -scale, scale)
        bk = jax.random.uniform(k3, (C2,), jnp.float32, -scale, scale)
        wv = jax.random.uniform(k4, (C, C), jnp.float32, -scale, scale)
        bv = jax.random.uniform(k5, (C,), jnp.float32, -scale, scale)
        # PyTorch init is gamma = 0 (identity); use a nonzero value so the
        # attention path is actually exercised by the check.
        gamma = jnp.full((1,), 0.1, jnp.float32)
        cells.append((wq, bq, wk, bk, wv, bv, gamma))
    return cells


# --------------------------------------------------------------------------
# Pure-JAX reference (mirrors the PyTorch forward), used for validation.
# --------------------------------------------------------------------------
def _cell_ref(x, params, attn_id, pf=2):
    wq, bq, wk, bk, wv, bv, gamma = params
    B, C, T, W, H = x.shape
    if attn_id == 'T':
        out = x; A = T
    elif attn_id == 'W':
        out = jnp.swapaxes(x, 2, 3); A = W
    else:
        out = jnp.swapaxes(x, 2, 4); A = H

    hp = jax.lax.Precision.HIGHEST

    def conv(o, w, b):
        return (jnp.einsum('bcadh,oc->boadh', o, w, precision=hp)
                + b[None, :, None, None, None])

    q = conv(out, wq, bq).reshape(B, A, -1)
    k = conv(out, wk, bk)
    k = jnp.maximum(k[:, :, 0::2], k[:, :, 1::2]).reshape(B, -1, A // pf)
    dist = jnp.einsum('bam,bmn->ban', q, k, precision=hp)
    attn = jax.nn.softmax(dist, axis=-1)
    v = conv(out, wv, bv)
    v = jnp.maximum(v[:, :, 0::2], v[:, :, 1::2]).reshape(B, -1, A // pf)
    o = jnp.einsum('bnp,bap->bna', v, attn, precision=hp)
    if attn_id == 'T':
        o = jnp.transpose(o.reshape(B, C, W, H, T), (0, 1, 4, 2, 3))
    elif attn_id == 'W':
        o = jnp.transpose(o.reshape(B, C, T, H, W), (0, 1, 2, 4, 3))
    else:
        o = o.reshape(B, C, T, W, H)
    return gamma[0] * o + x


def separable_attn_ref(x, all_params):
    for attn_id, params in zip(('T', 'W', 'H'), all_params):
        x = _cell_ref(x, params, attn_id)
    return x


if __name__ == "__main__":
    B, C, T, W, H = 2, 8, 8, 16, 16
    key = jax.random.PRNGKey(0)
    kx, kp = jax.random.split(key)
    x = jax.random.normal(kx, (B, C, T, W, H), jnp.float32)
    params = init_params(kp, C)

    fwd = jax.jit(separable_attn)
    y = jax.block_until_ready(fwd(x, params))

    y_ref = separable_attn_ref(x, params)
    np.testing.assert_allclose(np.asarray(y), np.asarray(y_ref),
                               rtol=2e-3, atol=2e-3)
    print("KERNEL_OK")
</pallas_src>

<mosaic_0001>
module attributes {stable_mosaic.version = 11 : i64} {
  func.func @_proj_pool_kernel(%arg0: i32, %arg1: i32, %arg2: memref<1x8x2048xf32, #tpu.memory_space<vmem>>, %arg3: memref<4x8xf32, #tpu.memory_space<vmem>>, %arg4: memref<4x1xf32, #tpu.memory_space<vmem>>, %arg5: memref<4x8xf32, #tpu.memory_space<vmem>>, %arg6: memref<4x1xf32, #tpu.memory_space<vmem>>, %arg7: memref<8x8xf32, #tpu.memory_space<vmem>>, %arg8: memref<8x1xf32, #tpu.memory_space<vmem>>, %arg9: memref<1x4x2048xf32, #tpu.memory_space<vmem>>, %arg10: memref<1x4x1024xf32, #tpu.memory_space<vmem>>, %arg11: memref<1x8x1024xf32, #tpu.memory_space<vmem>>) attributes {dimension_semantics = [#tpu.dimension_semantics<parallel>, #tpu.dimension_semantics<parallel>], iteration_bounds = array<i64: 2, 1>, scalar_prefetch = 0 : i64, scratch_operands = 0 : i64, tpu.core_type = #tpu.core_type<tc>, window_params = [{transform_indices = @transform_0, window_bounds = array<i64: 1, 8, 2048>}, {pipeline_mode = #tpu.pipeline_mode<synchronous>, transform_indices = @transform_1, window_bounds = array<i64: 4, 8>}, {pipeline_mode = #tpu.pipeline_mode<synchronous>, transform_indices = @transform_2, window_bounds = array<i64: 4, 1>}, {pipeline_mode = #tpu.pipeline_mode<synchronous>, transform_indices = @transform_3, window_bounds = array<i64: 4, 8>}, {pipeline_mode = #tpu.pipeline_mode<synchronous>, transform_indices = @transform_4, window_bounds = array<i64: 4, 1>}, {pipeline_mode = #tpu.pipeline_mode<synchronous>, transform_indices = @transform_5, window_bounds = array<i64: 8, 8>}, {pipeline_mode = #tpu.pipeline_mode<synchronous>, transform_indices = @transform_6, window_bounds = array<i64: 8, 1>}, {transform_indices = @transform_7, window_bounds = array<i64: 1, 4, 2048>}, {transform_indices = @transform_8, window_bounds = array<i64: 1, 4, 1024>}, {transform_indices = @transform_9, window_bounds = array<i64: 1, 8, 1024>}]} {
    %c0 = arith.constant 0 : index
    %c0_0 = arith.constant 0 : index
    %c0_1 = arith.constant 0 : index
    %0 = vector.load %arg2[%c0, %c0_0, %c0_1] : memref<1x8x2048xf32, #tpu.memory_space<vmem>>, vector<1x8x2048xf32>
    %1 = vector.shape_cast %0 : vector<1x8x2048xf32> to vector<8x2048xf32>
    %c0_2 = arith.constant 0 : index
    %c0_3 = arith.constant 0 : index
    %2 = vector.load %arg3[%c0_2, %c0_3] : memref<4x8xf32, #tpu.memory_space<vmem>>, vector<4x8xf32>
    %cst = arith.constant dense<0.000000e+00> : vector<4x2048xf32>
    %3 = tpu.matmul %2, %1, %cst {dimension_numbers = #tpu.dot_dimension_numbers<[1], [0], [0], [1], [0, 0, 1, 1], [], []>} : vector<4x8xf32>, vector<8x2048xf32>, vector<4x2048xf32> -> vector<4x2048xf32>
    %c0_4 = arith.constant 0 : index
    %c0_5 = arith.constant 0 : index
    %4 = vector.load %arg4[%c0_4, %c0_5] : memref<4x1xf32, #tpu.memory_space<vmem>>, vector<4x1xf32>
    %5 = vector.broadcast %4 : vector<4x1xf32> to vector<4x2048xf32>
    %6 = arith.addf %3, %5 : vector<4x2048xf32>
    %c0_6 = arith.constant 0 : index
    %c0_7 = arith.constant 0 : index
    %c0_8 = arith.constant 0 : index
    %7 = vector.load %arg9[%c0_6, %c0_7, %c0_8] : memref<1x4x2048xf32, #tpu.memory_space<vmem>>, vector<1x4x2048xf32>
    %8 = vector.shape_cast %7 : vector<1x4x2048xf32> to vector<4x2048xf32>
    %9 = vector.shape_cast %6 : vector<4x2048xf32> to vector<1x4x2048xf32>
    tpu.vector_store %arg9[%c0_6, %c0_7, %c0_8], %9 {strides = array<i32>} : memref<1x4x2048xf32, #tpu.memory_space<vmem>>, vector<1x4x2048xf32>,
    %c0_9 = arith.constant 0 : index
    %c0_10 = arith.constant 0 : index
    %10 = vector.load %arg5[%c0_9, %c0_10] : memref<4x8xf32, #tpu.memory_space<vmem>>, vector<4x8xf32>
    %cst_11 = arith.constant dense<0.000000e+00> : vector<4x2048xf32>
    %11 = tpu.matmul %10, %1, %cst_11 {dimension_numbers = #tpu.dot_dimension_numbers<[1], [0], [0], [1], [0, 0, 1, 1], [], []>} : vector<4x8xf32>, vector<8x2048xf32>, vector<4x2048xf32> -> vector<4x2048xf32>
    %c0_12 = arith.constant 0 : index
    %c0_13 = arith.constant 0 : index
    %12 = vector.load %arg6[%c0_12, %c0_13] : memref<4x1xf32, #tpu.memory_space<vmem>>, vector<4x1xf32>
    %13 = vector.broadcast %12 : vector<4x1xf32> to vector<4x2048xf32>
    %14 = arith.addf %11, %13 : vector<4x2048xf32>
    %c0_14 = arith.constant 0 : index
    %c0_15 = arith.constant 0 : index
    %15 = vector.load %arg7[%c0_14, %c0_15] : memref<8x8xf32, #tpu.memory_space<vmem>>, vector<8x8xf32>
    %cst_16 = arith.constant dense<0.000000e+00> : vector<8x2048xf32>
    %16 = tpu.matmul %15, %1, %cst_16 {dimension_numbers = #tpu.dot_dimension_numbers<[1], [0], [0], [1], [0, 0, 1, 1], [], []>} : vector<8x8xf32>, vector<8x2048xf32>, vector<8x2048xf32> -> vector<8x2048xf32>
    %c0_17 = arith.constant 0 : index
    %c0_18 = arith.constant 0 : index
    %17 = vector.load %arg8[%c0_17, %c0_18] : memref<8x1xf32, #tpu.memory_space<vmem>>, vector<8x1xf32>
    %18 = vector.broadcast %17 : vector<8x1xf32> to vector<8x2048xf32>
    %19 = arith.addf %16, %18 : vector<8x2048xf32>
    %20 = vector.extract_strided_slice %14 {offsets = [0, 0], sizes = [4, 256], strides = [1, 1]} : vector<4x2048xf32> to vector<4x256xf32>
    %21 = vector.extract_strided_slice %14 {offsets = [0, 256], sizes = [4, 256], strides = [1, 1]} : vector<4x2048xf32> to vector<4x256xf32>
    %22 = arith.maximumf %20, %21 : vector<4x256xf32>
    %c0_19 = arith.constant 0 : index
    %c0_20 = arith.constant 0 : index
    %c0_21 = arith.constant 0 : index
    %23 = vector.load %arg10[%c0_19, %c0_20, %c0_21] : memref<1x4x1024xf32, #tpu.memory_space<vmem>>, vector<1x4x256xf32>
    %24 = vector.shape_cast %23 : vector<1x4x256xf32> to vector<4x256xf32>
    %25 = vector.shape_cast %22 : vector<4x256xf32> to vector<1x4x256xf32>
    tpu.vector_store %arg10[%c0_19, %c0_20, %c0_21], %25 {strides = array<i32>} : memref<1x4x1024xf32, #tpu.memory_space<vmem>>, vector<1x4x256xf32>,
    %26 = vector.extract_strided_slice %19 {offsets = [0, 0], sizes = [8, 256], strides = [1, 1]} : vector<8x2048xf32> to vector<8x256xf32>
    %27 = vector.extract_strided_slice %19 {offsets = [0, 256], sizes = [8, 256], strides = [1, 1]} : vector<8x2048xf32> to vector<8x256xf32>
    %28 = arith.maximumf %26, %27 : vector<8x256xf32>
    %c0_22 = arith.constant 0 : index
    %c0_23 = arith.constant 0 : index
    %c0_24 = arith.constant 0 : index
    %29 = vector.load %arg11[%c0_22, %c0_23, %c0_24] : memref<1x8x1024xf32, #tpu.memory_space<vmem>>, vector<1x8x256xf32>
    %30 = vector.shape_cast %29 : vector<1x8x256xf32> to vector<8x256xf32>
    %31 = vector.shape_cast %28 : vector<8x256xf32> to vector<1x8x256xf32>
    tpu.vector_store %arg11[%c0_22, %c0_23, %c0_24], %31 {strides = array<i32>} : memref<1x8x1024xf32, #tpu.memory_space<vmem>>, vector<1x8x256xf32>,
    %32 = vector.extract_strided_slice %14 {offsets = [0, 512], sizes = [4, 256], strides = [1, 1]} : vector<4x2048xf32> to vector<4x256xf32>
    %33 = vector.extract_strided_slice %14 {offsets = [0, 768], sizes = [4, 256], strides = [1, 1]} : vector<4x2048xf32> to vector<4x256xf32>
    %34 = arith.maximumf %32, %33 : vector<4x256xf32>
    %c0_25 = arith.constant 0 : index
    %c0_26 = arith.constant 0 : index
    %c256 = arith.constant 256 : index
    %35 = vector.load %arg10[%c0_25, %c0_26, %c256] : memref<1x4x1024xf32, #tpu.memory_space<vmem>>, vector<1x4x256xf32>
    %36 = vector.shape_cast %35 : vector<1x4x256xf32> to vector<4x256xf32>
    %37 = vector.shape_cast %34 : vector<4x256xf32> to vector<1x4x256xf32>
    tpu.vector_store %arg10[%c0_25, %c0_26, %c256], %37 {strides = array<i32>} : memref<1x4x1024xf32, #tpu.memory_space<vmem>>, vector<1x4x256xf32>,
    %38 = vector.extract_strided_slice %19 {offsets = [0, 512], sizes = [8, 256], strides = [1, 1]} : vector<8x2048xf32> to vector<8x256xf32>
    %39 = vector.extract_strided_slice %19 {offsets = [0, 768], sizes = [8, 256], strides = [1, 1]} : vector<8x2048xf32> to vector<8x256xf32>
    %40 = arith.maximumf %38, %39 : vector<8x256xf32>
    %c0_27 = arith.constant 0 : index
    %c0_28 = arith.constant 0 : index
    %c256_29 = arith.constant 256 : index
    %41 = vector.load %arg11[%c0_27, %c0_28, %c256_29] : memref<1x8x1024xf32, #tpu.memory_space<vmem>>, vector<1x8x256xf32>
    %42 = vector.shape_cast %41 : vector<1x8x256xf32> to vector<8x256xf32>
    %43 = vector.shape_cast %40 : vector<8x256xf32> to vector<1x8x256xf32>
    tpu.vector_store %arg11[%c0_27, %c0_28, %c256_29], %43 {strides = array<i32>} : memref<1x8x1024xf32, #tpu.memory_space<vmem>>, vector<1x8x256xf32>,
    %44 = vector.extract_strided_slice %14 {offsets = [0, 1024], sizes = [4, 256], strides = [1, 1]} : vector<4x2048xf32> to vector<4x256xf32>
    %45 = vector.extract_strided_slice %14 {offsets = [0, 1280], sizes = [4, 256], strides = [1, 1]} : vector<4x2048xf32> to vector<4x256xf32>
    %46 = arith.maximumf %44, %45 : vector<4x256xf32>
    %c0_30 = arith.constant 0 : index
    %c0_31 = arith.constant 0 : index
    %c512 = arith.constant 512 : index
    %47 = vector.load %arg10[%c0_30, %c0_31, %c512] : memref<1x4x1024xf32, #tpu.memory_space<vmem>>, vector<1x4x256xf32>
    %48 = vector.shape_cast %47 : vector<1x4x256xf32> to vector<4x256xf32>
    %49 = vector.shape_cast %46 : vector<4x256xf32> to vector<1x4x256xf32>
    tpu.vector_store %arg10[%c0_30, %c0_31, %c512], %49 {strides = array<i32>} : memref<1x4x1024xf32, #tpu.memory_space<vmem>>, vector<1x4x256xf32>,
    %50 = vector.extract_strided_slice %19 {offsets = [0, 1024], sizes = [8, 256], strides = [1, 1]} : vector<8x2048xf32> to vector<8x256xf32>
    %51 = vector.extract_strided_slice %19 {offsets = [0, 1280], sizes = [8, 256], strides = [1, 1]} : vector<8x2048xf32> to vector<8x256xf32>
    %52 = arith.maximumf %50, %51 : vector<8x256xf32>
    %c0_32 = arith.constant 0 : index
    %c0_33 = arith.constant 0 : index
    %c512_34 = arith.constant 512 : index
    %53 = vector.load %arg11[%c0_32, %c0_33, %c512_34] : memref<1x8x1024xf32, #tpu.memory_space<vmem>>, vector<1x8x256xf32>
    %54 = vector.shape_cast %53 : vector<1x8x256xf32> to vector<8x256xf32>
    %55 = vector.shape_cast %52 : vector<8x256xf32> to vector<1x8x256xf32>
    tpu.vector_store %arg11[%c0_32, %c0_33, %c512_34], %55 {strides = array<i32>} : memref<1x8x1024xf32, #tpu.memory_space<vmem>>, vector<1x8x256xf32>,
    %56 = vector.extract_strided_slice %14 {offsets = [0, 1536], sizes = [4, 256], strides = [1, 1]} : vector<4x2048xf32> to vector<4x256xf32>
    %57 = vector.extract_strided_slice %14 {offsets = [0, 1792], sizes = [4, 256], strides = [1, 1]} : vector<4x2048xf32> to vector<4x256xf32>
    %58 = arith.maximumf %56, %57 : vector<4x256xf32>
    %c0_35 = arith.constant 0 : index
    %c0_36 = arith.constant 0 : index
    %c768 = arith.constant 768 : index
    %59 = vector.load %arg10[%c0_35, %c0_36, %c768] : memref<1x4x1024xf32, #tpu.memory_space<vmem>>, vector<1x4x256xf32>
    %60 = vector.shape_cast %59 : vector<1x4x256xf32> to vector<4x256xf32>
    %61 = vector.shape_cast %58 : vector<4x256xf32> to vector<1x4x256xf32>
    tpu.vector_store %arg10[%c0_35, %c0_36, %c768], %61 {strides = array<i32>} : memref<1x4x1024xf32, #tpu.memory_space<vmem>>, vector<1x4x256xf32>,
    %62 = vector.extract_strided_slice %19 {offsets = [0, 1536], sizes = [8, 256], strides = [1, 1]} : vector<8x2048xf32> to vector<8x256xf32>
    %63 = vector.extract_strided_slice %19 {offsets = [0, 1792], sizes = [8, 256], strides = [1, 1]} : vector<8x2048xf32> to vector<8x256xf32>
    %64 = arith.maximumf %62, %63 : vector<8x256xf32>
    %c0_37 = arith.constant 0 : index
    %c0_38 = arith.constant 0 : index
    %c768_39 = arith.constant 768 : index
    %65 = vector.load %arg11[%c0_37, %c0_38, %c768_39] : memref<1x8x1024xf32, #tpu.memory_space<vmem>>, vector<1x8x256xf32>
    %66 = vector.shape_cast %65 : vector<1x8x256xf32> to vector<8x256xf32>
    %67 = vector.shape_cast %64 : vector<8x256xf32> to vector<1x8x256xf32>
    tpu.vector_store %arg11[%c0_37, %c0_38, %c768_39], %67 {strides = array<i32>} : memref<1x8x1024xf32, #tpu.memory_space<vmem>>, vector<1x8x256xf32>,
    return
  }
  func.func @transform_0(%arg0: i32, %arg1: i32) -> (i32, i32, i32) {
    %c0_i32 = arith.constant 0 : i32
    %c0_i32_0 = arith.constant 0 : i32
    return %arg0, %c0_i32, %arg1 : i32, i32, i32
  }
  func.func @transform_1(%arg0: i32, %arg1: i32) -> (i32, i32) {
    %c0_i32 = arith.constant 0 : i32
    %c0_i32_0 = arith.constant 0 : i32
    %c0_i32_1 = arith.constant 0 : i32
    return %c0_i32, %c0_i32_0 : i32, i32
  }
  func.func @transform_2(%arg0: i32, %arg1: i32) -> (i32, i32) {
    %c0_i32 = arith.constant 0 : i32
    %c0_i32_0 = arith.constant 0 : i32
    %c0_i32_1 = arith.constant 0 : i32
    return %c0_i32, %c0_i32_0 : i32, i32
  }
  func.func @transform_3(%arg0: i32, %arg1: i32) -> (i32, i32) {
    %c0_i32 = arith.constant 0 : i32
    %c0_i32_0 = arith.constant 0 : i32
    %c0_i32_1 = arith.constant 0 : i32
    return %c0_i32, %c0_i32_0 : i32, i32
  }
  func.func @transform_4(%arg0: i32, %arg1: i32) -> (i32, i32) {
    %c0_i32 = arith.constant 0 : i32
    %c0_i32_0 = arith.constant 0 : i32
    %c0_i32_1 = arith.constant 0 : i32
    return %c0_i32, %c0_i32_0 : i32, i32
  }
  func.func @transform_5(%arg0: i32, %arg1: i32) -> (i32, i32) {
    %c0_i32 = arith.constant 0 : i32
    %c0_i32_0 = arith.constant 0 : i32
    %c0_i32_1 = arith.constant 0 : i32
    return %c0_i32, %c0_i32_0 : i32, i32
  }
  func.func @transform_6(%arg0: i32, %arg1: i32) -> (i32, i32) {
    %c0_i32 = arith.constant 0 : i32
    %c0_i32_0 = arith.constant 0 : i32
    %c0_i32_1 = arith.constant 0 : i32
    return %c0_i32, %c0_i32_0 : i32, i32
  }
  func.func @transform_7(%arg0: i32, %arg1: i32) -> (i32, i32, i32) {
    %c0_i32 = arith.constant 0 : i32
    %c0_i32_0 = arith.constant 0 : i32
    return %arg0, %c0_i32, %arg1 : i32, i32, i32
  }
  func.func @transform_8(%arg0: i32, %arg1: i32) -> (i32, i32, i32) {
    %c0_i32 = arith.constant 0 : i32
    %c0_i32_0 = arith.constant 0 : i32
    return %arg0, %c0_i32, %arg1 : i32, i32, i32
  }
  func.func @transform_9(%arg0: i32, %arg1: i32) -> (i32, i32, i32) {
    %c0_i32 = arith.constant 0 : i32
    %c0_i32_0 = arith.constant 0 : i32
    return %arg0, %c0_i32, %arg1 : i32, i32, i32
  }
}

module attributes {stable_mosaic.version = 11 : i64} {
  func.func @_dist_softmax_kernel(%arg0: i32, %arg1: i32, %arg2: i32, %arg3: memref<1x8x1024xf32, #tpu.memory_space<vmem>>, %arg4: memref<1x1024x4xf32, #tpu.memory_space<vmem>>, %arg5: memref<1x8x4xf32, #tpu.memory_space<vmem>>) attributes {dimension_semantics = [#tpu.dimension_semantics<parallel>, #tpu.dimension_semantics<parallel>, #tpu.dimension_semantics<arbitrary>], iteration_bounds = array<i64: 2, 1, 1>, scalar_prefetch = 0 : i64, scratch_operands = 0 : i64, tpu.core_type = #tpu.core_type<tc>, window_params = [{transform_indices = @transform_0, window_bounds = array<i64: 1, 8, 1024>}, {transform_indices = @transform_1, window_bounds = array<i64: 1, 1024, 4>}, {transform_indices = @transform_2, window_bounds = array<i64: 1, 8, 4>}]} {
    %c0_i32 = arith.constant 0 : i32
    %0 = arith.cmpi eq, %arg2, %c0_i32 : i32
    %1 = arith.extui %0 : i1 to i32
    %c0_i32_0 = arith.constant 0 : i32
    %2 = arith.cmpi ne, %1, %c0_i32_0 : i32
    scf.if %2 {
      %cst_14 = arith.constant 0.000000e+00 : f32
      %17 = vector.broadcast %cst_14 : f32 to vector<1x8x4xf32>
      %c0_15 = arith.constant 0 : index
      %c0_16 = arith.constant 0 : index
      %c0_17 = arith.constant 0 : index
      %18 = vector.load %arg5[%c0_15, %c0_16, %c0_17] : memref<1x8x4xf32, #tpu.memory_space<vmem>>, vector<1x8x4xf32>
      tpu.vector_store %arg5[%c0_15, %c0_16, %c0_17], %17 {strides = array<i32>} : memref<1x8x4xf32, #tpu.memory_space<vmem>>, vector<1x8x4xf32>,
    } else {
    }
    %c0 = arith.constant 0 : index
    %c0_1 = arith.constant 0 : index
    %c0_2 = arith.constant 0 : index
    %3 = vector.load %arg5[%c0, %c0_1, %c0_2] : memref<1x8x4xf32, #tpu.memory_space<vmem>>, vector<1x8x4xf32>
    %4 = vector.shape_cast %3 : vector<1x8x4xf32> to vector<8x4xf32>
    %c0_3 = arith.constant 0 : index
    %c0_4 = arith.constant 0 : index
    %c0_5 = arith.constant 0 : index
    %5 = vector.load %arg3[%c0_3, %c0_4, %c0_5] : memref<1x8x1024xf32, #tpu.memory_space<vmem>>, vector<1x8x1024xf32>
    %6 = vector.shape_cast %5 : vector<1x8x1024xf32> to vector<8x1024xf32>
    %c0_6 = arith.constant 0 : index
    %c0_7 = arith.constant 0 : index
    %c0_8 = arith.constant 0 : index
    %7 = vector.load %arg4[%c0_6, %c0_7, %c0_8] : memref<1x1024x4xf32, #tpu.memory_space<vmem>>, vector<1x1024x4xf32>
    %8 = vector.shape_cast %7 : vector<1x1024x4xf32> to vector<1024x4xf32>
    %cst = arith.constant dense<0.000000e+00> : vector<8x4xf32>
    %9 = tpu.matmul %6, %8, %cst {dimension_numbers = #tpu.dot_dimension_numbers<[1], [0], [0], [1], [0, 0, 1, 1], [], []>} : vector<8x1024xf32>, vector<1024x4xf32>, vector<8x4xf32> -> vector<8x4xf32>
    %10 = arith.addf %4, %9 : vector<8x4xf32>
    %c0_9 = arith.constant 0 : index
    %c0_10 = arith.constant 0 : index
    %c0_11 = arith.constant 0 : index
    %11 = vector.load %arg5[%c0_9, %c0_10, %c0_11] : memref<1x8x4xf32, #tpu.memory_space<vmem>>, vector<1x8x4xf32>
    %12 = vector.shape_cast %11 : vector<1x8x4xf32> to vector<8x4xf32>
    %13 = vector.shape_cast %10 : vector<8x4xf32> to vector<1x8x4xf32>
    tpu.vector_store %arg5[%c0_9, %c0_10, %c0_11], %13 {strides = array<i32>} : memref<1x8x4xf32, #tpu.memory_space<vmem>>, vector<1x8x4xf32>,
    %c0_i32_12 = arith.constant 0 : i32
    %14 = arith.cmpi eq, %arg2, %c0_i32_12 : i32
    %15 = arith.extui %14 : i1 to i32
    %c0_i32_13 = arith.constant 0 : i32
    %16 = arith.cmpi ne, %15, %c0_i32_13 : i32
    scf.if %16 {
      %c0_14 = arith.constant 0 : index
      %c0_15 = arith.constant 0 : index
      %c0_16 = arith.constant 0 : index
      %17 = vector.load %arg5[%c0_14, %c0_15, %c0_16] : memref<1x8x4xf32, #tpu.memory_space<vmem>>, vector<1x8x4xf32>
      %18 = vector.shape_cast %17 : vector<1x8x4xf32> to vector<8x4xf32>
      %cst_17 = arith.constant dense<0xFF800000> : vector<8xf32>
      %19 = vector.multi_reduction <maximumf>, %18, %cst_17 [1] : vector<8x4xf32> to vector<8xf32>
      %20 = vector.shape_cast %19 : vector<8xf32> to vector<8x1xf32>
      %21 = vector.broadcast %20 : vector<8x1xf32> to vector<8x4xf32>
      %22 = arith.subf %18, %21 : vector<8x4xf32>
      %23 = math.exp %22 : vector<8x4xf32>
      %cst_18 = arith.constant dense<0.000000e+00> : vector<8xf32>
      %24 = vector.multi_reduction <add>, %23, %cst_18 [1] : vector<8x4xf32> to vector<8xf32>
      %25 = vector.shape_cast %24 : vector<8xf32> to vector<8x1xf32>
      %26 = vector.broadcast %25 : vector<8x1xf32> to vector<8x4xf32>
      %27 = arith.divf %23, %26 : vector<8x4xf32>
      %c0_19 = arith.constant 0 : index
      %c0_20 = arith.constant 0 : index
      %c0_21 = arith.constant 0 : index
      %28 = vector.load %arg5[%c0_19, %c0_20, %c0_21] : memref<1x8x4xf32, #tpu.memory_space<vmem>>, vector<1x8x4xf32>
      %29 = vector.shape_cast %28 : vector<1x8x4xf32> to vector<8x4xf32>
      %30 = vector.shape_cast %27 : vector<8x4xf32> to vector<1x8x4xf32>
      tpu.vector_store %arg5[%c0_19, %c0_20, %c0_21], %30 {strides = array<i32>} : memref<1x8x4xf32, #tpu.memory_space<vmem>>, vector<1x8x4xf32>,
    } else {
    }
    return
  }
  func.func @transform_0(%arg0: i32, %arg1: i32, %arg2: i32) -> (i32, i32, i32) {
    %c0_i32 = arith.constant 0 : i32
    return %arg0, %arg1, %arg2 : i32, i32, i32
  }
  func.func @transform_1(%arg0: i32, %arg1: i32, %arg2: i32) -> (i32, i32, i32) {
    %c0_i32 = arith.constant 0 : i32
    %c0_i32_0 = arith.constant 0 : i32
    return %arg0, %arg2, %c0_i32 : i32, i32, i32
  }
  func.func @transform_2(%arg0: i32, %arg1: i32, %arg2: i32) -> (i32, i32, i32) {
    %c0_i32 = arith.constant 0 : i32
    %c0_i32_0 = arith.constant 0 : i32
    return %arg0, %arg1, %c0_i32 : i32, i32, i32
  }
}

module attributes {stable_mosaic.version = 11 : i64} {
  func.func @_apply_attn_kernel(%arg0: i32, %arg1: i32, %arg2: memref<1x1xf32, #tpu.memory_space<smem>>, %arg3: memref<1x8x4xf32, #tpu.memory_space<vmem>>, %arg4: memref<1x2048x4xf32, #tpu.memory_space<vmem>>, %arg5: memref<1x8x8x256xf32, #tpu.memory_space<vmem>>) attributes {dimension_semantics = [#tpu.dimension_semantics<parallel>, #tpu.dimension_semantics<parallel>], iteration_bounds = array<i64: 2, 1>, scalar_prefetch = 0 : i64, scratch_operands = 0 : i64, tpu.core_type = #tpu.core_type<tc>, window_params = [{transform_indices = @transform_0, window_bounds = array<i64: 1, 1>}, {transform_indices = @transform_1, window_bounds = array<i64: 1, 8, 4>}, {transform_indices = @transform_2, window_bounds = array<i64: 1, 2048, 4>}, {transform_indices = @transform_3, window_bounds = array<i64: 1, 8, 8, 256>}]} {
    %c0 = arith.constant 0 : index
    %c0_0 = arith.constant 0 : index
    %c0_1 = arith.constant 0 : index
    %0 = vector.load %arg3[%c0, %c0_0, %c0_1] : memref<1x8x4xf32, #tpu.memory_space<vmem>>, vector<1x8x4xf32>
    %1 = vector.shape_cast %0 : vector<1x8x4xf32> to vector<8x4xf32>
    %c0_2 = arith.constant 0 : index
    %c0_3 = arith.constant 0 : index
    %c0_4 = arith.constant 0 : index
    %2 = vector.load %arg4[%c0_2, %c0_3, %c0_4] : memref<1x2048x4xf32, #tpu.memory_space<vmem>>, vector<1x2048x4xf32>
    %3 = vector.shape_cast %2 : vector<1x2048x4xf32> to vector<2048x4xf32>
    %cst = arith.constant dense<0.000000e+00> : vector<8x2048xf32>
    %4 = tpu.matmul %1, %3, %cst {dimension_numbers = #tpu.dot_dimension_numbers<[1], [1], [0], [0], [0, 0, 1, 0], [], []>} : vector<8x4xf32>, vector<2048x4xf32>, vector<8x2048xf32> -> vector<8x2048xf32>
    %c0_5 = arith.constant 0 : index
    %c0_6 = arith.constant 0 : index
    %5 = memref.load %arg2[%c0_5, %c0_6] : memref<1x1xf32, #tpu.memory_space<smem>>
    %6 = vector.extract_strided_slice %4 {offsets = [0, 0], sizes = [8, 256], strides = [1, 1]} : vector<8x2048xf32> to vector<8x256xf32>
    %7 = vector.broadcast %5 : f32 to vector<8x256xf32>
    %8 = arith.mulf %7, %6 : vector<8x256xf32>
    %c0_7 = arith.constant 0 : index
    %c0_8 = arith.constant 0 : index
    %c0_9 = arith.constant 0 : index
    %c0_10 = arith.constant 0 : index
    %9 = vector.load %arg5[%c0_7, %c0_8, %c0_9, %c0_10] : memref<1x8x8x256xf32, #tpu.memory_space<vmem>>, vector<1x1x8x256xf32>
    %10 = vector.shape_cast %9 : vector<1x1x8x256xf32> to vector<8x256xf32>
    %11 = vector.shape_cast %8 : vector<8x256xf32> to vector<1x1x8x256xf32>
    tpu.vector_store %arg5[%c0_7, %c0_8, %c0_9, %c0_10], %11 {strides = array<i32>} : memref<1x8x8x256xf32, #tpu.memory_space<vmem>>, vector<1x1x8x256xf32>,
    %12 = vector.extract_strided_slice %4 {offsets = [0, 256], sizes = [8, 256], strides = [1, 1]} : vector<8x2048xf32> to vector<8x256xf32>
    %13 = vector.broadcast %5 : f32 to vector<8x256xf32>
    %14 = arith.mulf %13, %12 : vector<8x256xf32>
    %c0_11 = arith.constant 0 : index
    %c1 = arith.constant 1 : index
    %c0_12 = arith.constant 0 : index
    %c0_13 = arith.constant 0 : index
    %15 = vector.load %arg5[%c0_11, %c1, %c0_12, %c0_13] : memref<1x8x8x256xf32, #tpu.memory_space<vmem>>, vector<1x1x8x256xf32>
    %16 = vector.shape_cast %15 : vector<1x1x8x256xf32> to vector<8x256xf32>
    %17 = vector.shape_cast %14 : vector<8x256xf32> to vector<1x1x8x256xf32>
    tpu.vector_store %arg5[%c0_11, %c1, %c0_12, %c0_13], %17 {strides = array<i32>} : memref<1x8x8x256xf32, #tpu.memory_space<vmem>>, vector<1x1x8x256xf32>,
    %18 = vector.extract_strided_slice %4 {offsets = [0, 512], sizes = [8, 256], strides = [1, 1]} : vector<8x2048xf32> to vector<8x256xf32>
    %19 = vector.broadcast %5 : f32 to vector<8x256xf32>
    %20 = arith.mulf %19, %18 : vector<8x256xf32>
    %c0_14 = arith.constant 0 : index
    %c2 = arith.constant 2 : index
    %c0_15 = arith.constant 0 : index
    %c0_16 = arith.constant 0 : index
    %21 = vector.load %arg5[%c0_14, %c2, %c0_15, %c0_16] : memref<1x8x8x256xf32, #tpu.memory_space<vmem>>, vector<1x1x8x256xf32>
    %22 = vector.shape_cast %21 : vector<1x1x8x256xf32> to vector<8x256xf32>
    %23 = vector.shape_cast %20 : vector<8x256xf32> to vector<1x1x8x256xf32>
    tpu.vector_store %arg5[%c0_14, %c2, %c0_15, %c0_16], %23 {strides = array<i32>} : memref<1x8x8x256xf32, #tpu.memory_space<vmem>>, vector<1x1x8x256xf32>,
    %24 = vector.extract_strided_slice %4 {offsets = [0, 768], sizes = [8, 256], strides = [1, 1]} : vector<8x2048xf32> to vector<8x256xf32>
    %25 = vector.broadcast %5 : f32 to vector<8x256xf32>
    %26 = arith.mulf %25, %24 : vector<8x256xf32>
    %c0_17 = arith.constant 0 : index
    %c3 = arith.constant 3 : index
    %c0_18 = arith.constant 0 : index
    %c0_19 = arith.constant 0 : index
    %27 = vector.load %arg5[%c0_17, %c3, %c0_18, %c0_19] : memref<1x8x8x256xf32, #tpu.memory_space<vmem>>, vector<1x1x8x256xf32>
    %28 = vector.shape_cast %27 : vector<1x1x8x256xf32> to vector<8x256xf32>
    %29 = vector.shape_cast %26 : vector<8x256xf32> to vector<1x1x8x256xf32>
    tpu.vector_store %arg5[%c0_17, %c3, %c0_18, %c0_19], %29 {strides = array<i32>} : memref<1x8x8x256xf32, #tpu.memory_space<vmem>>, vector<1x1x8x256xf32>,
    %30 = vector.extract_strided_slice %4 {offsets = [0, 1024], sizes = [8, 256], strides = [1, 1]} : vector<8x2048xf32> to vector<8x256xf32>
    %31 = vector.broadcast %5 : f32 to vector<8x256xf32>
    %32 = arith.mulf %31, %30 : vector<8x256xf32>
    %c0_20 = arith.constant 0 : index
    %c4 = arith.constant 4 : index
    %c0_21 = arith.constant 0 : index
    %c0_22 = arith.constant 0 : index
    %33 = vector.load %arg5[%c0_20, %c4, %c0_21, %c0_22] : memref<1x8x8x256xf32, #tpu.memory_space<vmem>>, vector<1x1x8x256xf32>
    %34 = vector.shape_cast %33 : vector<1x1x8x256xf32> to vector<8x256xf32>
    %35 = vector.shape_cast %32 : vector<8x256xf32> to vector<1x1x8x256xf32>
    tpu.vector_store %arg5[%c0_20, %c4, %c0_21, %c0_22], %35 {strides = array<i32>} : memref<1x8x8x256xf32, #tpu.memory_space<vmem>>, vector<1x1x8x256xf32>,
    %36 = vector.extract_strided_slice %4 {offsets = [0, 1280], sizes = [8, 256], strides = [1, 1]} : vector<8x2048xf32> to vector<8x256xf32>
    %37 = vector.broadcast %5 : f32 to vector<8x256xf32>
    %38 = arith.mulf %37, %36 : vector<8x256xf32>
    %c0_23 = arith.constant 0 : index
    %c5 = arith.constant 5 : index
    %c0_24 = arith.constant 0 : index
    %c0_25 = arith.constant 0 : index
    %39 = vector.load %arg5[%c0_23, %c5, %c0_24, %c0_25] : memref<1x8x8x256xf32, #tpu.memory_space<vmem>>, vector<1x1x8x256xf32>
    %40 = vector.shape_cast %39 : vector<1x1x8x256xf32> to vector<8x256xf32>
    %41 = vector.shape_cast %38 : vector<8x256xf32> to vector<1x1x8x256xf32>
    tpu.vector_store %arg5[%c0_23, %c5, %c0_24, %c0_25], %41 {strides = array<i32>} : memref<1x8x8x256xf32, #tpu.memory_space<vmem>>, vector<1x1x8x256xf32>,
    %42 = vector.extract_strided_slice %4 {offsets = [0, 1536], sizes = [8, 256], strides = [1, 1]} : vector<8x2048xf32> to vector<8x256xf32>
    %43 = vector.broadcast %5 : f32 to vector<8x256xf32>
    %44 = arith.mulf %43, %42 : vector<8x256xf32>
    %c0_26 = arith.constant 0 : index
    %c6 = arith.constant 6 : index
    %c0_27 = arith.constant 0 : index
    %c0_28 = arith.constant 0 : index
    %45 = vector.load %arg5[%c0_26, %c6, %c0_27, %c0_28] : memref<1x8x8x256xf32, #tpu.memory_space<vmem>>, vector<1x1x8x256xf32>
    %46 = vector.shape_cast %45 : vector<1x1x8x256xf32> to vector<8x256xf32>
    %47 = vector.shape_cast %44 : vector<8x256xf32> to vector<1x1x8x256xf32>
    tpu.vector_store %arg5[%c0_26, %c6, %c0_27, %c0_28], %47 {strides = array<i32>} : memref<1x8x8x256xf32, #tpu.memory_space<vmem>>, vector<1x1x8x256xf32>,
    %48 = vector.extract_strided_slice %4 {offsets = [0, 1792], sizes = [8, 256], strides = [1, 1]} : vector<8x2048xf32> to vector<8x256xf32>
    %49 = vector.broadcast %5 : f32 to vector<8x256xf32>
    %50 = arith.mulf %49, %48 : vector<8x256xf32>
    %c0_29 = arith.constant 0 : index
    %c7 = arith.constant 7 : index
    %c0_30 = arith.constant 0 : index
    %c0_31 = arith.constant 0 : index
    %51 = vector.load %arg5[%c0_29, %c7, %c0_30, %c0_31] : memref<1x8x8x256xf32, #tpu.memory_space<vmem>>, vector<1x1x8x256xf32>
    %52 = vector.shape_cast %51 : vector<1x1x8x256xf32> to vector<8x256xf32>
    %53 = vector.shape_cast %50 : vector<8x256xf32> to vector<1x1x8x256xf32>
    tpu.vector_store %arg5[%c0_29, %c7, %c0_30, %c0_31], %53 {strides = array<i32>} : memref<1x8x8x256xf32, #tpu.memory_space<vmem>>, vector<1x1x8x256xf32>,
    return
  }
  func.func @transform_0(%arg0: i32, %arg1: i32) -> (i32, i32) {
    %c0_i32 = arith.constant 0 : i32
    %c0_i32_0 = arith.constant 0 : i32
    %c0_i32_1 = arith.constant 0 : i32
    return %c0_i32, %c0_i32_0 : i32, i32
  }
  func.func @transform_1(%arg0: i32, %arg1: i32) -> (i32, i32, i32) {
    %c0_i32 = arith.constant 0 : i32
    %c0_i32_0 = arith.constant 0 : i32
    %c0_i32_1 = arith.constant 0 : i32
    return %arg0, %c0_i32, %c0_i32_0 : i32, i32, i32
  }
  func.func @transform_2(%arg0: i32, %arg1: i32) -> (i32, i32, i32) {
    %c0_i32 = arith.constant 0 : i32
    %c0_i32_0 = arith.constant 0 : i32
    return %arg0, %arg1, %c0_i32 : i32, i32, i32
  }
  func.func @transform_3(%arg0: i32, %arg1: i32) -> (i32, i32, i32, i32) {
    %c0_i32 = arith.constant 0 : i32
    %c0_i32_0 = arith.constant 0 : i32
    %c0_i32_1 = arith.constant 0 : i32
    return %arg0, %arg1, %c0_i32, %c0_i32_0 : i32, i32, i32, i32
  }
}

module attributes {stable_mosaic.version = 11 : i64} {
  func.func @_proj_pool_kernel(%arg0: i32, %arg1: i32, %arg2: memref<1x8x2048xf32, #tpu.memory_space<vmem>>, %arg3: memref<4x8xf32, #tpu.memory_space<vmem>>, %arg4: memref<4x1xf32, #tpu.memory_space<vmem>>, %arg5: memref<4x8xf32, #tpu.memory_space<vmem>>, %arg6: memref<4x1xf32, #tpu.memory_space<vmem>>, %arg7: memref<8x8xf32, #tpu.memory_space<vmem>>, %arg8: memref<8x1xf32, #tpu.memory_space<vmem>>, %arg9: memref<1x4x2048xf32, #tpu.memory_space<vmem>>, %arg10: memref<1x4x1024xf32, #tpu.memory_space<vmem>>, %arg11: memref<1x8x1024xf32, #tpu.memory_space<vmem>>) attributes {dimension_semantics = [#tpu.dimension_semantics<parallel>, #tpu.dimension_semantics<parallel>], iteration_bounds = array<i64: 2, 1>, scalar_prefetch = 0 : i64, scratch_operands = 0 : i64, tpu.core_type = #tpu.core_type<tc>, window_params = [{transform_indices = @transform_0, window_bounds = array<i64: 1, 8, 2048>}, {pipeline_mode = #tpu.pipeline_mode<synchronous>, transform_indices = @transform_1, window_bounds = array<i64: 4, 8>}, {pipeline_mode = #tpu.pipeline_mode<synchronous>, transform_indices = @transform_2, window_bounds = array<i64: 4, 1>}, {pipeline_mode = #tpu.pipeline_mode<synchronous>, transform_indices = @transform_3, window_bounds = array<i64: 4, 8>}, {pipeline_mode = #tpu.pipeline_mode<synchronous>, transform_indices = @transform_4, window_bounds = array<i64: 4, 1>}, {pipeline_mode = #tpu.pipeline_mode<synchronous>, transform_indices = @transform_5, window_bounds = array<i64: 8, 8>}, {pipeline_mode = #tpu.pipeline_mode<synchronous>, transform_indices = @transform_6, window_bounds = array<i64: 8, 1>}, {transform_indices = @transform_7, window_bounds = array<i64: 1, 4, 2048>}, {transform_indices = @transform_8, window_bounds = array<i64: 1, 4, 1024>}, {transform_indices = @transform_9, window_bounds = array<i64: 1, 8, 1024>}]} {
    %c0 = arith.constant 0 : index
    %c0_0 = arith.constant 0 : index
    %c0_1 = arith.constant 0 : index
    %0 = vector.load %arg2[%c0, %c0_0, %c0_1] : memref<1x8x2048xf32, #tpu.memory_space<vmem>>, vector<1x8x2048xf32>
    %1 = vector.shape_cast %0 : vector<1x8x2048xf32> to vector<8x2048xf32>
    %c0_2 = arith.constant 0 : index
    %c0_3 = arith.constant 0 : index
    %2 = vector.load %arg3[%c0_2, %c0_3] : memref<4x8xf32, #tpu.memory_space<vmem>>, vector<4x8xf32>
    %cst = arith.constant dense<0.000000e+00> : vector<4x2048xf32>
    %3 = tpu.matmul %2, %1, %cst {dimension_numbers = #tpu.dot_dimension_numbers<[1], [0], [0], [1], [0, 0, 1, 1], [], []>} : vector<4x8xf32>, vector<8x2048xf32>, vector<4x2048xf32> -> vector<4x2048xf32>
    %c0_4 = arith.constant 0 : index
    %c0_5 = arith.constant 0 : index
    %4 = vector.load %arg4[%c0_4, %c0_5] : memref<4x1xf32, #tpu.memory_space<vmem>>, vector<4x1xf32>
    %5 = vector.broadcast %4 : vector<4x1xf32> to vector<4x2048xf32>
    %6 = arith.addf %3, %5 : vector<4x2048xf32>
    %c0_6 = arith.constant 0 : index
    %c0_7 = arith.constant 0 : index
    %c0_8 = arith.constant 0 : index
    %7 = vector.load %arg9[%c0_6, %c0_7, %c0_8] : memref<1x4x2048xf32, #tpu.memory_space<vmem>>, vector<1x4x2048xf32>
    %8 = vector.shape_cast %7 : vector<1x4x2048xf32> to vector<4x2048xf32>
    %9 = vector.shape_cast %6 : vector<4x2048xf32> to vector<1x4x2048xf32>
    tpu.vector_store %arg9[%c0_6, %c0_7, %c0_8], %9 {strides = array<i32>} : memref<1x4x2048xf32, #tpu.memory_space<vmem>>, vector<1x4x2048xf32>,
    %c0_9 = arith.constant 0 : index
    %c0_10 = arith.constant 0 : index
    %10 = vector.load %arg5[%c0_9, %c0_10] : memref<4x8xf32, #tpu.memory_space<vmem>>, vector<4x8xf32>
    %cst_11 = arith.constant dense<0.000000e+00> : vector<4x2048xf32>
    %11 = tpu.matmul %10, %1, %cst_11 {dimension_numbers = #tpu.dot_dimension_numbers<[1], [0], [0], [1], [0, 0, 1, 1], [], []>} : vector<4x8xf32>, vector<8x2048xf32>, vector<4x2048xf32> -> vector<4x2048xf32>
    %c0_12 = arith.constant 0 : index
    %c0_13 = arith.constant 0 : index
    %12 = vector.load %arg6[%c0_12, %c0_13] : memref<4x1xf32, #tpu.memory_space<vmem>>, vector<4x1xf32>
    %13 = vector.broadcast %12 : vector<4x1xf32> to vector<4x2048xf32>
    %14 = arith.addf %11, %13 : vector<4x2048xf32>
    %c0_14 = arith.constant 0 : index
    %c0_15 = arith.constant 0 : index
    %15 = vector.load %arg7[%c0_14, %c0_15] : memref<8x8xf32, #tpu.memory_space<vmem>>, vector<8x8xf32>
    %cst_16 = arith.constant dense<0.000000e+00> : vector<8x2048xf32>
    %16 = tpu.matmul %15, %1, %cst_16 {dimension_numbers = #tpu.dot_dimension_numbers<[1], [0], [0], [1], [0, 0, 1, 1], [], []>} : vector<8x8xf32>, vector<8x2048xf32>, vector<8x2048xf32> -> vector<8x2048xf32>
    %c0_17 = arith.constant 0 : index
    %c0_18 = arith.constant 0 : index
    %17 = vector.load %arg8[%c0_17, %c0_18] : memref<8x1xf32, #tpu.memory_space<vmem>>, vector<8x1xf32>
    %18 = vector.broadcast %17 : vector<8x1xf32> to vector<8x2048xf32>
    %19 = arith.addf %16, %18 : vector<8x2048xf32>
    %20 = vector.extract_strided_slice %14 {offsets = [0, 0], sizes = [4, 128], strides = [1, 1]} : vector<4x2048xf32> to vector<4x128xf32>
    %21 = vector.extract_strided_slice %14 {offsets = [0, 128], sizes = [4, 128], strides = [1, 1]} : vector<4x2048xf32> to vector<4x128xf32>
    %22 = arith.maximumf %20, %21 : vector<4x128xf32>
    %c0_19 = arith.constant 0 : index
    %c0_20 = arith.constant 0 : index
    %c0_21 = arith.constant 0 : index
    %23 = vector.load %arg10[%c0_19, %c0_20, %c0_21] : memref<1x4x1024xf32, #tpu.memory_space<vmem>>, vector<1x4x128xf32>
    %24 = vector.shape_cast %23 : vector<1x4x128xf32> to vector<4x128xf32>
    %25 = vector.shape_cast %22 : vector<4x128xf32> to vector<1x4x128xf32>
    tpu.vector_store %arg10[%c0_19, %c0_20, %c0_21], %25 {strides = array<i32>} : memref<1x4x1024xf32, #tpu.memory_space<vmem>>, vector<1x4x128xf32>,
    %26 = vector.extract_strided_slice %19 {offsets = [0, 0], sizes = [8, 128], strides = [1, 1]} : vector<8x2048xf32> to vector<8x128xf32>
    %27 = vector.extract_strided_slice %19 {offsets = [0, 128], sizes = [8, 128], strides = [1, 1]} : vector<8x2048xf32> to vector<8x128xf32>
    %28 = arith.maximumf %26, %27 : vector<8x128xf32>
    %c0_22 = arith.constant 0 : index
    %c0_23 = arith.constant 0 : index
    %c0_24 = arith.constant 0 : index
    %29 = vector.load %arg11[%c0_22, %c0_23, %c0_24] : memref<1x8x1024xf32, #tpu.memory_space<vmem>>, vector<1x8x128xf32>
    %30 = vector.shape_cast %29 : vector<1x8x128xf32> to vector<8x128xf32>
    %31 = vector.shape_cast %28 : vector<8x128xf32> to vector<1x8x128xf32>
    tpu.vector_store %arg11[%c0_22, %c0_23, %c0_24], %31 {strides = array<i32>} : memref<1x8x1024xf32, #tpu.memory_space<vmem>>, vector<1x8x128xf32>,
    %32 = vector.extract_strided_slice %14 {offsets = [0, 256], sizes = [4, 128], strides = [1, 1]} : vector<4x2048xf32> to vector<4x128xf32>
    %33 = vector.extract_strided_slice %14 {offsets = [0, 384], sizes = [4, 128], strides = [1, 1]} : vector<4x2048xf32> to vector<4x128xf32>
    %34 = arith.maximumf %32, %33 : vector<4x128xf32>
    %c0_25 = arith.constant 0 : index
    %c0_26 = arith.constant 0 : index
    %c128 = arith.constant 128 : index
    %35 = vector.load %arg10[%c0_25, %c0_26, %c128] : memref<1x4x1024xf32, #tpu.memory_space<vmem>>, vector<1x4x128xf32>
    %36 = vector.shape_cast %35 : vector<1x4x128xf32> to vector<4x128xf32>
    %37 = vector.shape_cast %34 : vector<4x128xf32> to vector<1x4x128xf32>
    tpu.vector_store %arg10[%c0_25, %c0_26, %c128], %37 {strides = array<i32>} : memref<1x4x1024xf32, #tpu.memory_space<vmem>>, vector<1x4x128xf32>,
    %38 = vector.extract_strided_slice %19 {offsets = [0, 256], sizes = [8, 128], strides = [1, 1]} : vector<8x2048xf32> to vector<8x128xf32>
    %39 = vector.extract_strided_slice %19 {offsets = [0, 384], sizes = [8, 128], strides = [1, 1]} : vector<8x2048xf32> to vector<8x128xf32>
    %40 = arith.maximumf %38, %39 : vector<8x128xf32>
    %c0_27 = arith.constant 0 : index
    %c0_28 = arith.constant 0 : index
    %c128_29 = arith.constant 128 : index
    %41 = vector.load %arg11[%c0_27, %c0_28, %c128_29] : memref<1x8x1024xf32, #tpu.memory_space<vmem>>, vector<1x8x128xf32>
    %42 = vector.shape_cast %41 : vector<1x8x128xf32> to vector<8x128xf32>
    %43 = vector.shape_cast %40 : vector<8x128xf32> to vector<1x8x128xf32>
    tpu.vector_store %arg11[%c0_27, %c0_28, %c128_29], %43 {strides = array<i32>} : memref<1x8x1024xf32, #tpu.memory_space<vmem>>, vector<1x8x128xf32>,
    %44 = vector.extract_strided_slice %14 {offsets = [0, 512], sizes = [4, 128], strides = [1, 1]} : vector<4x2048xf32> to vector<4x128xf32>
    %45 = vector.extract_strided_slice %14 {offsets = [0, 640], sizes = [4, 128], strides = [1, 1]} : vector<4x2048xf32> to vector<4x128xf32>
    %46 = arith.maximumf %44, %45 : vector<4x128xf32>
    %c0_30 = arith.constant 0 : index
    %c0_31 = arith.constant 0 : index
    %c256 = arith.constant 256 : index
    %47 = vector.load %arg10[%c0_30, %c0_31, %c256] : memref<1x4x1024xf32, #tpu.memory_space<vmem>>, vector<1x4x128xf32>
    %48 = vector.shape_cast %47 : vector<1x4x128xf32> to vector<4x128xf32>
    %49 = vector.shape_cast %46 : vector<4x128xf32> to vector<1x4x128xf32>
    tpu.vector_store %arg10[%c0_30, %c0_31, %c256], %49 {strides = array<i32>} : memref<1x4x1024xf32, #tpu.memory_space<vmem>>, vector<1x4x128xf32>,
    %50 = vector.extract_strided_slice %19 {offsets = [0, 512], sizes = [8, 128], strides = [1, 1]} : vector<8x2048xf32> to vector<8x128xf32>
    %51 = vector.extract_strided_slice %19 {offsets = [0, 640], sizes = [8, 128], strides = [1, 1]} : vector<8x2048xf32> to vector<8x128xf32>
    %52 = arith.maximumf %50, %51 : vector<8x128xf32>
    %c0_32 = arith.constant 0 : index
    %c0_33 = arith.constant 0 : index
    %c256_34 = arith.constant 256 : index
    %53 = vector.load %arg11[%c0_32, %c0_33, %c256_34] : memref<1x8x1024xf32, #tpu.memory_space<vmem>>, vector<1x8x128xf32>
    %54 = vector.shape_cast %53 : vector<1x8x128xf32> to vector<8x128xf32>
    %55 = vector.shape_cast %52 : vector<8x128xf32> to vector<1x8x128xf32>
    tpu.vector_store %arg11[%c0_32, %c0_33, %c256_34], %55 {strides = array<i32>} : memref<1x8x1024xf32, #tpu.memory_space<vmem>>, vector<1x8x128xf32>,
    %56 = vector.extract_strided_slice %14 {offsets = [0, 768], sizes = [4, 128], strides = [1, 1]} : vector<4x2048xf32> to vector<4x128xf32>
    %57 = vector.extract_strided_slice %14 {offsets = [0, 896], sizes = [4, 128], strides = [1, 1]} : vector<4x2048xf32> to vector<4x128xf32>
    %58 = arith.maximumf %56, %57 : vector<4x128xf32>
    %c0_35 = arith.constant 0 : index
    %c0_36 = arith.constant 0 : index
    %c384 = arith.constant 384 : index
    %59 = vector.load %arg10[%c0_35, %c0_36, %c384] : memref<1x4x1024xf32, #tpu.memory_space<vmem>>, vector<1x4x128xf32>
    %60 = vector.shape_cast %59 : vector<1x4x128xf32> to vector<4x128xf32>
    %61 = vector.shape_cast %58 : vector<4x128xf32> to vector<1x4x128xf32>
    tpu.vector_store %arg10[%c0_35, %c0_36, %c384], %61 {strides = array<i32>} : memref<1x4x1024xf32, #tpu.memory_space<vmem>>, vector<1x4x128xf32>,
    %62 = vector.extract_strided_slice %19 {offsets = [0, 768], sizes = [8, 128], strides = [1, 1]} : vector<8x2048xf32> to vector<8x128xf32>
    %63 = vector.extract_strided_slice %19 {offsets = [0, 896], sizes = [8, 128], strides = [1, 1]} : vector<8x2048xf32> to vector<8x128xf32>
    %64 = arith.maximumf %62, %63 : vector<8x128xf32>
    %c0_37 = arith.constant 0 : index
    %c0_38 = arith.constant 0 : index
    %c384_39 = arith.constant 384 : index
    %65 = vector.load %arg11[%c0_37, %c0_38, %c384_39] : memref<1x8x1024xf32, #tpu.memory_space<vmem>>, vector<1x8x128xf32>
    %66 = vector.shape_cast %65 : vector<1x8x128xf32> to vector<8x128xf32>
    %67 = vector.shape_cast %64 : vector<8x128xf32> to vector<1x8x128xf32>
    tpu.vector_store %arg11[%c0_37, %c0_38, %c384_39], %67 {strides = array<i32>} : memref<1x8x1024xf32, #tpu.memory_space<vmem>>, vector<1x8x128xf32>,
    %68 = vector.extract_strided_slice %14 {offsets = [0, 1024], sizes = [4, 128], strides = [1, 1]} : vector<4x2048xf32> to vector<4x128xf32>
    %69 = vector.extract_strided_slice %14 {offsets = [0, 1152], sizes = [4, 128], strides = [1, 1]} : vector<4x2048xf32> to vector<4x128xf32>
    %70 = arith.maximumf %68, %69 : vector<4x128xf32>
    %c0_40 = arith.constant 0 : index
    %c0_41 = arith.constant 0 : index
    %c512 = arith.constant 512 : index
    %71 = vector.load %arg10[%c0_40, %c0_41, %c512] : memref<1x4x1024xf32, #tpu.memory_space<vmem>>, vector<1x4x128xf32>
    %72 = vector.shape_cast %71 : vector<1x4x128xf32> to vector<4x128xf32>
    %73 = vector.shape_cast %70 : vector<4x128xf32> to vector<1x4x128xf32>
    tpu.vector_store %arg10[%c0_40, %c0_41, %c512], %73 {strides = array<i32>} : memref<1x4x1024xf32, #tpu.memory_space<vmem>>, vector<1x4x128xf32>,
    %74 = vector.extract_strided_slice %19 {offsets = [0, 1024], sizes = [8, 128], strides = [1, 1]} : vector<8x2048xf32> to vector<8x128xf32>
    %75 = vector.extract_strided_slice %19 {offsets = [0, 1152], sizes = [8, 128], strides = [1, 1]} : vector<8x2048xf32> to vector<8x128xf32>
    %76 = arith.maximumf %74, %75 : vector<8x128xf32>
    %c0_42 = arith.constant 0 : index
    %c0_43 = arith.constant 0 : index
    %c512_44 = arith.constant 512 : index
    %77 = vector.load %arg11[%c0_42, %c0_43, %c512_44] : memref<1x8x1024xf32, #tpu.memory_space<vmem>>, vector<1x8x128xf32>
    %78 = vector.shape_cast %77 : vector<1x8x128xf32> to vector<8x128xf32>
    %79 = vector.shape_cast %76 : vector<8x128xf32> to vector<1x8x128xf32>
    tpu.vector_store %arg11[%c0_42, %c0_43, %c512_44], %79 {strides = array<i32>} : memref<1x8x1024xf32, #tpu.memory_space<vmem>>, vector<1x8x128xf32>,
    %80 = vector.extract_strided_slice %14 {offsets = [0, 1280], sizes = [4, 128], strides = [1, 1]} : vector<4x2048xf32> to vector<4x128xf32>
    %81 = vector.extract_strided_slice %14 {offsets = [0, 1408], sizes = [4, 128], strides = [1, 1]} : vector<4x2048xf32> to vector<4x128xf32>
    %82 = arith.maximumf %80, %81 : vector<4x128xf32>
    %c0_45 = arith.constant 0 : index
    %c0_46 = arith.constant 0 : index
    %c640 = arith.constant 640 : index
    %83 = vector.load %arg10[%c0_45, %c0_46, %c640] : memref<1x4x1024xf32, #tpu.memory_space<vmem>>, vector<1x4x128xf32>
    %84 = vector.shape_cast %83 : vector<1x4x128xf32> to vector<4x128xf32>
    %85 = vector.shape_cast %82 : vector<4x128xf32> to vector<1x4x128xf32>
    tpu.vector_store %arg10[%c0_45, %c0_46, %c640], %85 {strides = array<i32>} : memref<1x4x1024xf32, #tpu.memory_space<vmem>>, vector<1x4x128xf32>,
    %86 = vector.extract_strided_slice %19 {offsets = [0, 1280], sizes = [8, 128], strides = [1, 1]} : vector<8x2048xf32> to vector<8x128xf32>
    %87 = vector.extract_strided_slice %19 {offsets = [0, 1408], sizes = [8, 128], strides = [1, 1]} : vector<8x2048xf32> to vector<8x128xf32>
    %88 = arith.maximumf %86, %87 : vector<8x128xf32>
    %c0_47 = arith.constant 0 : index
    %c0_48 = arith.constant 0 : index
    %c640_49 = arith.constant 640 : index
    %89 = vector.load %arg11[%c0_47, %c0_48, %c640_49] : memref<1x8x1024xf32, #tpu.memory_space<vmem>>, vector<1x8x128xf32>
    %90 = vector.shape_cast %89 : vector<1x8x128xf32> to vector<8x128xf32>
    %91 = vector.shape_cast %88 : vector<8x128xf32> to vector<1x8x128xf32>
    tpu.vector_store %arg11[%c0_47, %c0_48, %c640_49], %91 {strides = array<i32>} : memref<1x8x1024xf32, #tpu.memory_space<vmem>>, vector<1x8x128xf32>,
    %92 = vector.extract_strided_slice %14 {offsets = [0, 1536], sizes = [4, 128], strides = [1, 1]} : vector<4x2048xf32> to vector<4x128xf32>
    %93 = vector.extract_strided_slice %14 {offsets = [0, 1664], sizes = [4, 128], strides = [1, 1]} : vector<4x2048xf32> to vector<4x128xf32>
    %94 = arith.maximumf %92, %93 : vector<4x128xf32>
    %c0_50 = arith.constant 0 : index
    %c0_51 = arith.constant 0 : index
    %c768 = arith.constant 768 : index
    %95 = vector.load %arg10[%c0_50, %c0_51, %c768] : memref<1x4x1024xf32, #tpu.memory_space<vmem>>, vector<1x4x128xf32>
    %96 = vector.shape_cast %95 : vector<1x4x128xf32> to vector<4x128xf32>
    %97 = vector.shape_cast %94 : vector<4x128xf32> to vector<1x4x128xf32>
    tpu.vector_store %arg10[%c0_50, %c0_51, %c768], %97 {strides = array<i32>} : memref<1x4x1024xf32, #tpu.memory_space<vmem>>, vector<1x4x128xf32>,
    %98 = vector.extract_strided_slice %19 {offsets = [0, 1536], sizes = [8, 128], strides = [1, 1]} : vector<8x2048xf32> to vector<8x128xf32>
    %99 = vector.extract_strided_slice %19 {offsets = [0, 1664], sizes = [8, 128], strides = [1, 1]} : vector<8x2048xf32> to vector<8x128xf32>
    %100 = arith.maximumf %98, %99 : vector<8x128xf32>
    %c0_52 = arith.constant 0 : index
    %c0_53 = arith.constant 0 : index
    %c768_54 = arith.constant 768 : index
    %101 = vector.load %arg11[%c0_52, %c0_53, %c768_54] : memref<1x8x1024xf32, #tpu.memory_space<vmem>>, vector<1x8x128xf32>
    %102 = vector.shape_cast %101 : vector<1x8x128xf32> to vector<8x128xf32>
    %103 = vector.shape_cast %100 : vector<8x128xf32> to vector<1x8x128xf32>
    tpu.vector_store %arg11[%c0_52, %c0_53, %c768_54], %103 {strides = array<i32>} : memref<1x8x1024xf32, #tpu.memory_space<vmem>>, vector<1x8x128xf32>,
    %104 = vector.extract_strided_slice %14 {offsets = [0, 1792], sizes = [4, 128], strides = [1, 1]} : vector<4x2048xf32> to vector<4x128xf32>
    %105 = vector.extract_strided_slice %14 {offsets = [0, 1920], sizes = [4, 128], strides = [1, 1]} : vector<4x2048xf32> to vector<4x128xf32>
    %106 = arith.maximumf %104, %105 : vector<4x128xf32>
    %c0_55 = arith.constant 0 : index
    %c0_56 = arith.constant 0 : index
    %c896 = arith.constant 896 : index
    %107 = vector.load %arg10[%c0_55, %c0_56, %c896] : memref<1x4x1024xf32, #tpu.memory_space<vmem>>, vector<1x4x128xf32>
    %108 = vector.shape_cast %107 : vector<1x4x128xf32> to vector<4x128xf32>
    %109 = vector.shape_cast %106 : vector<4x128xf32> to vector<1x4x128xf32>
    tpu.vector_store %arg10[%c0_55, %c0_56, %c896], %109 {strides = array<i32>} : memref<1x4x1024xf32, #tpu.memory_space<vmem>>, vector<1x4x128xf32>,
    %110 = vector.extract_strided_slice %19 {offsets = [0, 1792], sizes = [8, 128], strides = [1, 1]} : vector<8x2048xf32> to vector<8x128xf32>
    %111 = vector.extract_strided_slice %19 {offsets = [0, 1920], sizes = [8, 128], strides = [1, 1]} : vector<8x2048xf32> to vector<8x128xf32>
    %112 = arith.maximumf %110, %111 : vector<8x128xf32>
    %c0_57 = arith.constant 0 : index
    %c0_58 = arith.constant 0 : index
    %c896_59 = arith.constant 896 : index
    %113 = vector.load %arg11[%c0_57, %c0_58, %c896_59] : memref<1x8x1024xf32, #tpu.memory_space<vmem>>, vector<1x8x128xf32>
    %114 = vector.shape_cast %113 : vector<1x8x128xf32> to vector<8x128xf32>
    %115 = vector.shape_cast %112 : vector<8x128xf32> to vector<1x8x128xf32>
    tpu.vector_store %arg11[%c0_57, %c0_58, %c896_59], %115 {strides = array<i32>} : memref<1x8x1024xf32, #tpu.memory_space<vmem>>, vector<1x8x128xf32>,
    return
  }
  func.func @transform_0(%arg0: i32, %arg1: i32) -> (i32, i32, i32) {
    %c0_i32 = arith.constant 0 : i32
    %c0_i32_0 = arith.constant 0 : i32
    return %arg0, %c0_i32, %arg1 : i32, i32, i32
  }
  func.func @transform_1(%arg0: i32, %arg1: i32) -> (i32, i32) {
    %c0_i32 = arith.constant 0 : i32
    %c0_i32_0 = arith.constant 0 : i32
    %c0_i32_1 = arith.constant 0 : i32
    return %c0_i32, %c0_i32_0 : i32, i32
  }
  func.func @transform_2(%arg0: i32, %arg1: i32) -> (i32, i32) {
    %c0_i32 = arith.constant 0 : i32
    %c0_i32_0 = arith.constant 0 : i32
    %c0_i32_1 = arith.constant 0 : i32
    return %c0_i32, %c0_i32_0 : i32, i32
  }
  func.func @transform_3(%arg0: i32, %arg1: i32) -> (i32, i32) {
    %c0_i32 = arith.constant 0 : i32
    %c0_i32_0 = arith.constant 0 : i32
    %c0_i32_1 = arith.constant 0 : i32
    return %c0_i32, %c0_i32_0 : i32, i32
  }
  func.func @transform_4(%arg0: i32, %arg1: i32) -> (i32, i32) {
    %c0_i32 = arith.constant 0 : i32
    %c0_i32_0 = arith.constant 0 : i32
    %c0_i32_1 = arith.constant 0 : i32
    return %c0_i32, %c0_i32_0 : i32, i32
  }
  func.func @transform_5(%arg0: i32, %arg1: i32) -> (i32, i32) {
    %c0_i32 = arith.constant 0 : i32
    %c0_i32_0 = arith.constant 0 : i32
    %c0_i32_1 = arith.constant 0 : i32
    return %c0_i32, %c0_i32_0 : i32, i32
  }
  func.func @transform_6(%arg0: i32, %arg1: i32) -> (i32, i32) {
    %c0_i32 = arith.constant 0 : i32
    %c0_i32_0 = arith.constant 0 : i32
    %c0_i32_1 = arith.constant 0 : i32
    return %c0_i32, %c0_i32_0 : i32, i32
  }
  func.func @transform_7(%arg0: i32, %arg1: i32) -> (i32, i32, i32) {
    %c0_i32 = arith.constant 0 : i32
    %c0_i32_0 = arith.constant 0 : i32
    return %arg0, %c0_i32, %arg1 : i32, i32, i32
  }
  func.func @transform_8(%arg0: i32, %arg1: i32) -> (i32, i32, i32) {
    %c0_i32 = arith.constant 0 : i32
    %c0_i32_0 = arith.constant 0 : i32
    return %arg0, %c0_i32, %arg1 : i32, i32, i32
  }
  func.func @transform_9(%arg0: i32, %arg1: i32) -> (i32, i32, i32) {
    %c0_i32 = arith.constant 0 : i32
    %c0_i32_0 = arith.constant 0 : i32
    return %arg0, %c0_i32, %arg1 : i32, i32, i32
  }
}

module attributes {stable_mosaic.version = 11 : i64} {
  func.func @_dist_softmax_kernel(%arg0: i32, %arg1: i32, %arg2: i32, %arg3: memref<1x8x512xf32, #tpu.memory_space<vmem>>, %arg4: memref<1x512x8xf32, #tpu.memory_space<vmem>>, %arg5: memref<1x8x8xf32, #tpu.memory_space<vmem>>) attributes {dimension_semantics = [#tpu.dimension_semantics<parallel>, #tpu.dimension_semantics<parallel>, #tpu.dimension_semantics<arbitrary>], iteration_bounds = array<i64: 2, 2, 1>, scalar_prefetch = 0 : i64, scratch_operands = 0 : i64, tpu.core_type = #tpu.core_type<tc>, window_params = [{transform_indices = @transform_0, window_bounds = array<i64: 1, 8, 512>}, {transform_indices = @transform_1, window_bounds = array<i64: 1, 512, 8>}, {transform_indices = @transform_2, window_bounds = array<i64: 1, 8, 8>}]} {
    %c0_i32 = arith.constant 0 : i32
    %0 = arith.cmpi eq, %arg2, %c0_i32 : i32
    %1 = arith.extui %0 : i1 to i32
    %c0_i32_0 = arith.constant 0 : i32
    %2 = arith.cmpi ne, %1, %c0_i32_0 : i32
    scf.if %2 {
      %cst_14 = arith.constant 0.000000e+00 : f32
      %17 = vector.broadcast %cst_14 : f32 to vector<1x8x8xf32>
      %c0_15 = arith.constant 0 : index
      %c0_16 = arith.constant 0 : index
      %c0_17 = arith.constant 0 : index
      %18 = vector.load %arg5[%c0_15, %c0_16, %c0_17] : memref<1x8x8xf32, #tpu.memory_space<vmem>>, vector<1x8x8xf32>
      tpu.vector_store %arg5[%c0_15, %c0_16, %c0_17], %17 {strides = array<i32>} : memref<1x8x8xf32, #tpu.memory_space<vmem>>, vector<1x8x8xf32>,
    } else {
    }
    %c0 = arith.constant 0 : index
    %c0_1 = arith.constant 0 : index
    %c0_2 = arith.constant 0 : index
    %3 = vector.load %arg5[%c0, %c0_1, %c0_2] : memref<1x8x8xf32, #tpu.memory_space<vmem>>, vector<1x8x8xf32>
    %4 = vector.shape_cast %3 : vector<1x8x8xf32> to vector<8x8xf32>
    %c0_3 = arith.constant 0 : index
    %c0_4 = arith.constant 0 : index
    %c0_5 = arith.constant 0 : index
    %5 = vector.load %arg3[%c0_3, %c0_4, %c0_5] : memref<1x8x512xf32, #tpu.memory_space<vmem>>, vector<1x8x512xf32>
    %6 = vector.shape_cast %5 : vector<1x8x512xf32> to vector<8x512xf32>
    %c0_6 = arith.constant 0 : index
    %c0_7 = arith.constant 0 : index
    %c0_8 = arith.constant 0 : index
    %7 = vector.load %arg4[%c0_6, %c0_7, %c0_8] : memref<1x512x8xf32, #tpu.memory_space<vmem>>, vector<1x512x8xf32>
    %8 = vector.shape_cast %7 : vector<1x512x8xf32> to vector<512x8xf32>
    %cst = arith.constant dense<0.000000e+00> : vector<8x8xf32>
    %9 = tpu.matmul %6, %8, %cst {dimension_numbers = #tpu.dot_dimension_numbers<[1], [0], [0], [1], [0, 0, 1, 1], [], []>} : vector<8x512xf32>, vector<512x8xf32>, vector<8x8xf32> -> vector<8x8xf32>
    %10 = arith.addf %4, %9 : vector<8x8xf32>
    %c0_9 = arith.constant 0 : index
    %c0_10 = arith.constant 0 : index
    %c0_11 = arith.constant 0 : index
    %11 = vector.load %arg5[%c0_9, %c0_10, %c0_11] : memref<1x8x8xf32, #tpu.memory_space<vmem>>, vector<1x8x8xf32>
    %12 = vector.shape_cast %11 : vector<1x8x8xf32> to vector<8x8xf32>
    %13 = vector.shape_cast %10 : vector<8x8xf32> to vector<1x8x8xf32>
    tpu.vector_store %arg5[%c0_9, %c0_10, %c0_11], %13 {strides = array<i32>} : memref<1x8x8xf32, #tpu.memory_space<vmem>>, vector<1x8x8xf32>,
    %c0_i32_12 = arith.constant 0 : i32
    %14 = arith.cmpi eq, %arg2, %c0_i32_12 : i32
    %15 = arith.extui %14 : i1 to i32
    %c0_i32_13 = arith.constant 0 : i32
    %16 = arith.cmpi ne, %15, %c0_i32_13 : i32
    scf.if %16 {
      %c0_14 = arith.constant 0 : index
      %c0_15 = arith.constant 0 : index
      %c0_16 = arith.constant 0 : index
      %17 = vector.load %arg5[%c0_14, %c0_15, %c0_16] : memref<1x8x8xf32, #tpu.memory_space<vmem>>, vector<1x8x8xf32>
      %18 = vector.shape_cast %17 : vector<1x8x8xf32> to vector<8x8xf32>
      %cst_17 = arith.constant dense<0xFF800000> : vector<8xf32>
      %19 = vector.multi_reduction <maximumf>, %18, %cst_17 [1] : vector<8x8xf32> to vector<8xf32>
      %20 = vector.shape_cast %19 : vector<8xf32> to vector<8x1xf32>
      %21 = vector.broadcast %20 : vector<8x1xf32> to vector<8x8xf32>
      %22 = arith.subf %18, %21 : vector<8x8xf32>
      %23 = math.exp %22 : vector<8x8xf32>
      %cst_18 = arith.constant dense<0.000000e+00> : vector<8xf32>
      %24 = vector.multi_reduction <add>, %23, %cst_18 [1] : vector<8x8xf32> to vector<8xf32>
      %25 = vector.shape_cast %24 : vector<8xf32> to vector<8x1xf32>
      %26 = vector.broadcast %25 : vector<8x1xf32> to vector<8x8xf32>
      %27 = arith.divf %23, %26 : vector<8x8xf32>
      %c0_19 = arith.constant 0 : index
      %c0_20 = arith.constant 0 : index
      %c0_21 = arith.constant 0 : index
      %28 = vector.load %arg5[%c0_19, %c0_20, %c0_21] : memref<1x8x8xf32, #tpu.memory_space<vmem>>, vector<1x8x8xf32>
      %29 = vector.shape_cast %28 : vector<1x8x8xf32> to vector<8x8xf32>
      %30 = vector.shape_cast %27 : vector<8x8xf32> to vector<1x8x8xf32>
      tpu.vector_store %arg5[%c0_19, %c0_20, %c0_21], %30 {strides = array<i32>} : memref<1x8x8xf32, #tpu.memory_space<vmem>>, vector<1x8x8xf32>,
    } else {
    }
    return
  }
  func.func @transform_0(%arg0: i32, %arg1: i32, %arg2: i32) -> (i32, i32, i32) {
    %c0_i32 = arith.constant 0 : i32
    return %arg0, %arg1, %arg2 : i32, i32, i32
  }
  func.func @transform_1(%arg0: i32, %arg1: i32, %arg2: i32) -> (i32, i32, i32) {
    %c0_i32 = arith.constant 0 : i32
    %c0_i32_0 = arith.constant 0 : i32
    return %arg0, %arg2, %c0_i32 : i32, i32, i32
  }
  func.func @transform_2(%arg0: i32, %arg1: i32, %arg2: i32) -> (i32, i32, i32) {
    %c0_i32 = arith.constant 0 : i32
    %c0_i32_0 = arith.constant 0 : i32
    return %arg0, %arg1, %c0_i32 : i32, i32, i32
  }
}

module attributes {stable_mosaic.version = 11 : i64} {
  func.func @_apply_attn_kernel(%arg0: i32, %arg1: i32, %arg2: memref<1x1xf32, #tpu.memory_space<smem>>, %arg3: memref<1x16x8xf32, #tpu.memory_space<vmem>>, %arg4: memref<1x1024x8xf32, #tpu.memory_space<vmem>>, %arg5: memref<1x8x16x128xf32, #tpu.memory_space<vmem>>) attributes {dimension_semantics = [#tpu.dimension_semantics<parallel>, #tpu.dimension_semantics<parallel>], iteration_bounds = array<i64: 2, 1>, scalar_prefetch = 0 : i64, scratch_operands = 0 : i64, tpu.core_type = #tpu.core_type<tc>, window_params = [{transform_indices = @transform_0, window_bounds = array<i64: 1, 1>}, {transform_indices = @transform_1, window_bounds = array<i64: 1, 16, 8>}, {transform_indices = @transform_2, window_bounds = array<i64: 1, 1024, 8>}, {transform_indices = @transform_3, window_bounds = array<i64: 1, 8, 16, 128>}]} {
    %c0 = arith.constant 0 : index
    %c0_0 = arith.constant 0 : index
    %c0_1 = arith.constant 0 : index
    %0 = vector.load %arg3[%c0, %c0_0, %c0_1] : memref<1x16x8xf32, #tpu.memory_space<vmem>>, vector<1x16x8xf32>
    %1 = vector.shape_cast %0 : vector<1x16x8xf32> to vector<16x8xf32>
    %c0_2 = arith.constant 0 : index
    %c0_3 = arith.constant 0 : index
    %c0_4 = arith.constant 0 : index
    %2 = vector.load %arg4[%c0_2, %c0_3, %c0_4] : memref<1x1024x8xf32, #tpu.memory_space<vmem>>, vector<1x1024x8xf32>
    %3 = vector.shape_cast %2 : vector<1x1024x8xf32> to vector<1024x8xf32>
    %cst = arith.constant dense<0.000000e+00> : vector<16x1024xf32>
    %4 = tpu.matmul %1, %3, %cst {dimension_numbers = #tpu.dot_dimension_numbers<[1], [1], [0], [0], [0, 0, 1, 0], [], []>} : vector<16x8xf32>, vector<1024x8xf32>, vector<16x1024xf32> -> vector<16x1024xf32>
    %c0_5 = arith.constant 0 : index
    %c0_6 = arith.constant 0 : index
    %5 = memref.load %arg2[%c0_5, %c0_6] : memref<1x1xf32, #tpu.memory_space<smem>>
    %6 = vector.extract_strided_slice %4 {offsets = [0, 0], sizes = [16, 128], strides = [1, 1]} : vector<16x1024xf32> to vector<16x128xf32>
    %7 = vector.broadcast %5 : f32 to vector<16x128xf32>
    %8 = arith.mulf %7, %6 : vector<16x128xf32>
    %c0_7 = arith.constant 0 : index
    %c0_8 = arith.constant 0 : index
    %c0_9 = arith.constant 0 : index
    %c0_10 = arith.constant 0 : index
    %9 = vector.load %arg5[%c0_7, %c0_8, %c0_9, %c0_10] : memref<1x8x16x128xf32, #tpu.memory_space<vmem>>, vector<1x1x16x128xf32>
    %10 = vector.shape_cast %9 : vector<1x1x16x128xf32> to vector<16x128xf32>
    %11 = vector.shape_cast %8 : vector<16x128xf32> to vector<1x1x16x128xf32>
    tpu.vector_store %arg5[%c0_7, %c0_8, %c0_9, %c0_10], %11 {strides = array<i32>} : memref<1x8x16x128xf32, #tpu.memory_space<vmem>>, vector<1x1x16x128xf32>,
    %12 = vector.extract_strided_slice %4 {offsets = [0, 128], sizes = [16, 128], strides = [1, 1]} : vector<16x1024xf32> to vector<16x128xf32>
    %13 = vector.broadcast %5 : f32 to vector<16x128xf32>
    %14 = arith.mulf %13, %12 : vector<16x128xf32>
    %c0_11 = arith.constant 0 : index
    %c1 = arith.constant 1 : index
    %c0_12 = arith.constant 0 : index
    %c0_13 = arith.constant 0 : index
    %15 = vector.load %arg5[%c0_11, %c1, %c0_12, %c0_13] : memref<1x8x16x128xf32, #tpu.memory_space<vmem>>, vector<1x1x16x128xf32>
    %16 = vector.shape_cast %15 : vector<1x1x16x128xf32> to vector<16x128xf32>
    %17 = vector.shape_cast %14 : vector<16x128xf32> to vector<1x1x16x128xf32>
    tpu.vector_store %arg5[%c0_11, %c1, %c0_12, %c0_13], %17 {strides = array<i32>} : memref<1x8x16x128xf32, #tpu.memory_space<vmem>>, vector<1x1x16x128xf32>,
    %18 = vector.extract_strided_slice %4 {offsets = [0, 256], sizes = [16, 128], strides = [1, 1]} : vector<16x1024xf32> to vector<16x128xf32>
    %19 = vector.broadcast %5 : f32 to vector<16x128xf32>
    %20 = arith.mulf %19, %18 : vector<16x128xf32>
    %c0_14 = arith.constant 0 : index
    %c2 = arith.constant 2 : index
    %c0_15 = arith.constant 0 : index
    %c0_16 = arith.constant 0 : index
    %21 = vector.load %arg5[%c0_14, %c2, %c0_15, %c0_16] : memref<1x8x16x128xf32, #tpu.memory_space<vmem>>, vector<1x1x16x128xf32>
    %22 = vector.shape_cast %21 : vector<1x1x16x128xf32> to vector<16x128xf32>
    %23 = vector.shape_cast %20 : vector<16x128xf32> to vector<1x1x16x128xf32>
    tpu.vector_store %arg5[%c0_14, %c2, %c0_15, %c0_16], %23 {strides = array<i32>} : memref<1x8x16x128xf32, #tpu.memory_space<vmem>>, vector<1x1x16x128xf32>,
    %24 = vector.extract_strided_slice %4 {offsets = [0, 384], sizes = [16, 128], strides = [1, 1]} : vector<16x1024xf32> to vector<16x128xf32>
    %25 = vector.broadcast %5 : f32 to vector<16x128xf32>
    %26 = arith.mulf %25, %24 : vector<16x128xf32>
    %c0_17 = arith.constant 0 : index
    %c3 = arith.constant 3 : index
    %c0_18 = arith.constant 0 : index
    %c0_19 = arith.constant 0 : index
    %27 = vector.load %arg5[%c0_17, %c3, %c0_18, %c0_19] : memref<1x8x16x128xf32, #tpu.memory_space<vmem>>, vector<1x1x16x128xf32>
    %28 = vector.shape_cast %27 : vector<1x1x16x128xf32> to vector<16x128xf32>
    %29 = vector.shape_cast %26 : vector<16x128xf32> to vector<1x1x16x128xf32>
    tpu.vector_store %arg5[%c0_17, %c3, %c0_18, %c0_19], %29 {strides = array<i32>} : memref<1x8x16x128xf32, #tpu.memory_space<vmem>>, vector<1x1x16x128xf32>,
    %30 = vector.extract_strided_slice %4 {offsets = [0, 512], sizes = [16, 128], strides = [1, 1]} : vector<16x1024xf32> to vector<16x128xf32>
    %31 = vector.broadcast %5 : f32 to vector<16x128xf32>
    %32 = arith.mulf %31, %30 : vector<16x128xf32>
    %c0_20 = arith.constant 0 : index
    %c4 = arith.constant 4 : index
    %c0_21 = arith.constant 0 : index
    %c0_22 = arith.constant 0 : index
    %33 = vector.load %arg5[%c0_20, %c4, %c0_21, %c0_22] : memref<1x8x16x128xf32, #tpu.memory_space<vmem>>, vector<1x1x16x128xf32>
    %34 = vector.shape_cast %33 : vector<1x1x16x128xf32> to vector<16x128xf32>
    %35 = vector.shape_cast %32 : vector<16x128xf32> to vector<1x1x16x128xf32>
    tpu.vector_store %arg5[%c0_20, %c4, %c0_21, %c0_22], %35 {strides = array<i32>} : memref<1x8x16x128xf32, #tpu.memory_space<vmem>>, vector<1x1x16x128xf32>,
    %36 = vector.extract_strided_slice %4 {offsets = [0, 640], sizes = [16, 128], strides = [1, 1]} : vector<16x1024xf32> to vector<16x128xf32>
    %37 = vector.broadcast %5 : f32 to vector<16x128xf32>
    %38 = arith.mulf %37, %36 : vector<16x128xf32>
    %c0_23 = arith.constant 0 : index
    %c5 = arith.constant 5 : index
    %c0_24 = arith.constant 0 : index
    %c0_25 = arith.constant 0 : index
    %39 = vector.load %arg5[%c0_23, %c5, %c0_24, %c0_25] : memref<1x8x16x128xf32, #tpu.memory_space<vmem>>, vector<1x1x16x128xf32>
    %40 = vector.shape_cast %39 : vector<1x1x16x128xf32> to vector<16x128xf32>
    %41 = vector.shape_cast %38 : vector<16x128xf32> to vector<1x1x16x128xf32>
    tpu.vector_store %arg5[%c0_23, %c5, %c0_24, %c0_25], %41 {strides = array<i32>} : memref<1x8x16x128xf32, #tpu.memory_space<vmem>>, vector<1x1x16x128xf32>,
    %42 = vector.extract_strided_slice %4 {offsets = [0, 768], sizes = [16, 128], strides = [1, 1]} : vector<16x1024xf32> to vector<16x128xf32>
    %43 = vector.broadcast %5 : f32 to vector<16x128xf32>
    %44 = arith.mulf %43, %42 : vector<16x128xf32>
    %c0_26 = arith.constant 0 : index
    %c6 = arith.constant 6 : index
    %c0_27 = arith.constant 0 : index
    %c0_28 = arith.constant 0 : index
    %45 = vector.load %arg5[%c0_26, %c6, %c0_27, %c0_28] : memref<1x8x16x128xf32, #tpu.memory_space<vmem>>, vector<1x1x16x128xf32>
    %46 = vector.shape_cast %45 : vector<1x1x16x128xf32> to vector<16x128xf32>
    %47 = vector.shape_cast %44 : vector<16x128xf32> to vector<1x1x16x128xf32>
    tpu.vector_store %arg5[%c0_26, %c6, %c0_27, %c0_28], %47 {strides = array<i32>} : memref<1x8x16x128xf32, #tpu.memory_space<vmem>>, vector<1x1x16x128xf32>,
    %48 = vector.extract_strided_slice %4 {offsets = [0, 896], sizes = [16, 128], strides = [1, 1]} : vector<16x1024xf32> to vector<16x128xf32>
    %49 = vector.broadcast %5 : f32 to vector<16x128xf32>
    %50 = arith.mulf %49, %48 : vector<16x128xf32>
    %c0_29 = arith.constant 0 : index
    %c7 = arith.constant 7 : index
    %c0_30 = arith.constant 0 : index
    %c0_31 = arith.constant 0 : index
    %51 = vector.load %arg5[%c0_29, %c7, %c0_30, %c0_31] : memref<1x8x16x128xf32, #tpu.memory_space<vmem>>, vector<1x1x16x128xf32>
    %52 = vector.shape_cast %51 : vector<1x1x16x128xf32> to vector<16x128xf32>
    %53 = vector.shape_cast %50 : vector<16x128xf32> to vector<1x1x16x128xf32>
    tpu.vector_store %arg5[%c0_29, %c7, %c0_30, %c0_31], %53 {strides = array<i32>} : memref<1x8x16x128xf32, #tpu.memory_space<vmem>>, vector<1x1x16x128xf32>,
    return
  }
  func.func @transform_0(%arg0: i32, %arg1: i32) -> (i32, i32) {
    %c0_i32 = arith.constant 0 : i32
    %c0_i32_0 = arith.constant 0 : i32
    %c0_i32_1 = arith.constant 0 : i32
    return %c0_i32, %c0_i32_0 : i32, i32
  }
  func.func @transform_1(%arg0: i32, %arg1: i32) -> (i32, i32, i32) {
    %c0_i32 = arith.constant 0 : i32
    %c0_i32_0 = arith.constant 0 : i32
    %c0_i32_1 = arith.constant 0 : i32
    return %arg0, %c0_i32, %c0_i32_0 : i32, i32, i32
  }
  func.func @transform_2(%arg0: i32, %arg1: i32) -> (i32, i32, i32) {
    %c0_i32 = arith.constant 0 : i32
    %c0_i32_0 = arith.constant 0 : i32
    return %arg0, %arg1, %c0_i32 : i32, i32, i32
  }
  func.func @transform_3(%arg0: i32, %arg1: i32) -> (i32, i32, i32, i32) {
    %c0_i32 = arith.constant 0 : i32
    %c0_i32_0 = arith.constant 0 : i32
    %c0_i32_1 = arith.constant 0 : i32
    return %arg0, %arg1, %c0_i32, %c0_i32_0 : i32, i32, i32, i32
  }
}

</mosaic_0001>

<llo_original>
// kernel: separable_attn.10
$region0: #{separable_attn.10}
  #allocation0 [shape = 'u32[]', space=smem, size = 0x4, offset = 0x4, fixed_abs, tag = 'smem constant byte address 0x4 - core index']
  #allocation1 [shape = 'u32[144,128]{1,0:T(1,128)}', space=vmem, size = 0x12000, scoped, tag = 'internal scratch']
  %s0 = inlined_call_operand.vmem [shape: f32[2,8,1024], index: 0, kind: input, shape index: {}]
  %s1 = inlined_call_operand.vmem [shape: f32[2,1024,4], index: 1, kind: input, shape index: {}]
  %s2 = inlined_call_operand.vmem [shape: f32[2,8,4], index: 2, kind: output, shape index: {}]
  %s3 = sld [smem:[#allocation0]]
  $region49: #{separable_attn.10} parent=0
    _
  %s5 = ssub.s32 1, %s3
  %s6 = scalar_select 0, %s5, %s3
  loop: start=0, step=1, limit=4
  $region2: #{separable_attn.10} parent=0 // loop_pre_header
    _
  $region3: #{separable_attn.10} parent=0 // loop_header
    %s8 = sphi 0, %s12
    %p9 = scmp.ge.s32.totalorder %s8, 4
    %s15 = sphi 0, %s34
    %s16 = sphi 0, %s30
    %s17 = sphi 0, %s26
    %s18 = sphi 0, %s15
    %s19 = sphi 0, %s16
    %s20 = sphi 0, %s17
    %s21 = sphi 0, %s18
    %s22 = sphi 0, %s19
    %s23 = sphi 0, %s20
    %s41 = sphi 0, %s43
    %s44 = sphi 0, %s41
    %s45 = sphi 0, %s44
    %s61 = sphi 0, %s45
    %s69 = sphi 0, %s71
    %s72 = sphi 0, %s69
    %s73 = sphi 0, %s72
    %s89 = sphi 0, %s73
    %s97 = sphi 0, %s99
    %s100 = sphi 0, %s97
    %s101 = sphi 0, %s100
    %s117 = sphi 0, %s101
  $region4: #{separable_attn.10} parent=0 // loop_header_branch
    %11 = sbr.rel (%p9) target = $region8
  $region5: #{separable_attn.10} parent=0 // loop_body
    %s13 = ssub.s32 %s8, 1
    %s14 = ssub.s32 %s8, 2
    %s24 = sadd.s32 1, %s17
    %p25 = scmp.ge.s32.totalorder %s24, 1
    %s26 = scalar_select %p25, 0, %s24
    %s27 = sadd.s32 1, %s16
    %s28 = scalar_select %p25, %s27, %s16
    %p29 = scmp.ge.s32.totalorder %s28, 1
    %s30 = scalar_select %p29, 0, %s28
    %s31 = sadd.s32 1, %s15
    %s32 = scalar_select %p29, %s31, %s15
    %p33 = scmp.ge.s32.totalorder %s32, 2
    %s34 = scalar_select %p33, 0, %s32
    %s35 = ssub.s32 %s15, %s34
    %s36 = ssub.s32 %s16, %s30
    %s37 = sor.u32 %s35, %s36
    %s38 = ssub.s32 %s17, %s26
    %s39 = sor.u32 %s37, %s38
    %p40 = scmp.eq.s32.totalorder %s39, 0
    %s42 = sadd.s32 %s41, 1
    %s43 = scalar_select %p40, %s41, %s42
    %p46 = pneg %p40
    %p47 = scmp.eq.s32.totalorder %s8, 1
    %p48 = por %p46, %p47
    %p49 = scmp.ne.s32.totalorder %s41, %s44
    %p50 = scmp.eq.s32.totalorder %s8, 0
    %p51 = por %p49, %p50
    %p52 = scmp.ne.s32.totalorder %s41, %s44
    %p53 = scmp.eq.s32.totalorder %s13, 1
    %p54 = por %p52, %p53
    %p55 = scmp.ne.s32.totalorder %s44, %s45
    %p56 = scmp.eq.s32.totalorder %s13, 0
    %p57 = por %p55, %p56
    %p58 = scmp.ne.s32.totalorder %s44, %s45
    %p59 = scmp.eq.s32.totalorder %s14, 1
    %p60 = por %p58, %p59
    %p62 = scmp.ne.s32.totalorder %s45, %s61
    %p63 = scmp.eq.s32.totalorder %s14, 0
    %p64 = por %p62, %p63
    %s65 = ssub.s32 %s15, %s34
    %s66 = ssub.s32 %s17, %s26
    %s67 = sor.u32 %s65, %s66
    %p68 = scmp.eq.s32.totalorder %s67, 0
    %s70 = sadd.s32 %s69, 1
    %s71 = scalar_select %p68, %s69, %s70
    %p74 = pneg %p68
    %p75 = scmp.eq.s32.totalorder %s8, 1
    %p76 = por %p74, %p75
    %p77 = scmp.ne.s32.totalorder %s69, %s72
    %p78 = scmp.eq.s32.totalorder %s8, 0
    %p79 = por %p77, %p78
    %p80 = scmp.ne.s32.totalorder %s69, %s72
    %p81 = scmp.eq.s32.totalorder %s13, 1
    %p82 = por %p80, %p81
    %p83 = scmp.ne.s32.totalorder %s72, %s73
    %p84 = scmp.eq.s32.totalorder %s13, 0
    %p85 = por %p83, %p84
    %p86 = scmp.ne.s32.totalorder %s72, %s73
    %p87 = scmp.eq.s32.totalorder %s14, 1
    %p88 = por %p86, %p87
    %p90 = scmp.ne.s32.totalorder %s73, %s89
    %p91 = scmp.eq.s32.totalorder %s14, 0
    %p92 = por %p90, %p91
    %s93 = ssub.s32 %s15, %s34
    %s94 = ssub.s32 %s16, %s30
    %s95 = sor.u32 %s93, %s94
    %p96 = scmp.eq.s32.totalorder %s95, 0
    %s98 = sadd.s32 %s97, 1
    %s99 = scalar_select %p96, %s97, %s98
    %p102 = pneg %p96
    %p103 = scmp.eq.s32.totalorder %s8, 1
    %p104 = por %p102, %p103
    %p105 = scmp.ne.s32.totalorder %s97, %s100
    %p106 = scmp.eq.s32.totalorder %s8, 0
    %p107 = por %p105, %p106
    %p108 = scmp.ne.s32.totalorder %s97, %s100
    %p109 = scmp.eq.s32.totalorder %s13, 1
    %p110 = por %p108, %p109
    %p111 = scmp.ne.s32.totalorder %s100, %s101
    %p112 = scmp.eq.s32.totalorder %s13, 0
    %p113 = por %p111, %p112
    %p114 = scmp.ne.s32.totalorder %s100, %s101
    %p115 = scmp.eq.s32.totalorder %s14, 1
    %p116 = por %p114, %p115
    %p118 = scmp.ne.s32.totalorder %s101, %s117
    %p119 = scmp.eq.s32.totalorder %s14, 0
    %p120 = por %p118, %p119
    %p121 = scmp.le.s32.totalorder 1, %s8
    %p122 = scmp.lt.s32.totalorder %s8, 3
    %p123 = pnand %p121, %p122
    %p124 = pneg %p123
    // Predicated region
    $region9: #{separable_attn.10} parent=5 // pred_check
      _
    $region10: #{separable_attn.10} parent=5 // pred_check_branch
      %126 = sbr.rel (%p123) target = $region12
    $region11: #{separable_attn.10} parent=5 // pred_region
      %s127 = ssub.s32 %s8, 1
    $region12: #{separable_attn.10} parent=5 // pred_fallthru
      _
    %p128 = scmp.lt.s32.totalorder %s8, 2
    // Predicated region
    $region13: #{separable_attn.10} parent=5 // pred_check
      %p129 = pneg %p128
    $region14: #{separable_attn.10} parent=5 // pred_check_branch
      %131 = sbr.rel (%p129) target = $region16
    $region15: #{separable_attn.10} parent=5 // pred_region
      // Predicated region
      $region17: #{separable_attn.10} parent=15 // pred_check
        %p132 = pneg %p51
      $region18: #{separable_attn.10} parent=15 // pred_check_branch
        %134 = sbr.rel (%p132) target = $region20
      $region19: #{separable_attn.10} parent=15 // pred_region
        %s135 = smul.u32 8, %s17
        %p136 = scmp.lt.s32.totalorder %s15, 1
        %s137 = scalar_select %p136, %s15, 1
        %p138 = scmp.lt.s32.totalorder %s16, 0
        %s139 = scalar_select %p138, %s16, 0
        %p140 = scmp.lt.s32.totalorder %s135, 7
        %s141 = scalar_select %p140, %s135, 7
        %s142 = smul.addr %s139, 8
        %s143 = sadd.s32 %s141, %s142
        %s144 = smul.addr %s137, 8
        %s145 = sadd.s32 %s143, %s144
        %s146 = smul.addr %s145, 8
        %s147 = scalar_lea.vmem %s0, %s146
        %s148 = smul.u32 8, %s17
      $region20: #{separable_attn.10} parent=15 // pred_fallthru
        _
      // Predicated region
      $region21: #{separable_attn.10} parent=15 // pred_check
        %p149 = pneg %p79
      $region22: #{separable_attn.10} parent=15 // pred_check_branch
        %151 = sbr.rel (%p149) target = $region24
      $region23: #{separable_attn.10} parent=15 // pred_region
        %s152 = smul.u32 128, %s17
        %p153 = scmp.lt.s32.totalorder %s15, 1
        %s154 = scalar_select %p153, %s15, 1
        %p155 = scmp.lt.s32.totalorder %s152, 127
        %s156 = scalar_select %p155, %s152, 127
        %s157 = smul.addr %s154, 128
        %s158 = sadd.s32 %s156, %s157
        %s159 = smul.addr %s158, 8
        %s160 = scalar_lea.vmem %s1, %s159
        %s161 = smul.u32 128, %s17
      $region24: #{separable_attn.10} parent=15 // pred_fallthru
        _
    $region16: #{separable_attn.10} parent=5 // pred_fallthru
      _
    %p162 = scmp.le.s32.totalorder 1, %s8
    %p163 = scmp.lt.s32.totalorder %s8, 3
    %p164 = pnand %p162, %p163
    %p165 = pneg %p164
    // Predicated region
    $region25: #{separable_attn.10} parent=5 // pred_check
      _
    $region26: #{separable_attn.10} parent=5 // pred_check_branch
      %167 = sbr.rel (%p164) target = $region28
    $region27: #{separable_attn.10} parent=5 // pred_region
      %s168 = ssub.s32 %s8, 1
      %s169 = smul.u32 8, %s20
      %p170 = scmp.lt.s32.totalorder %s18, 1
      %s171 = scalar_select %p170, %s18, 1
      %p172 = scmp.lt.s32.totalorder %s19, 0
      %s173 = scalar_select %p172, %s19, 0
      %p174 = scmp.lt.s32.totalorder %s169, 7
      %s175 = scalar_select %p174, %s169, 7
      %s176 = smul.addr %s173, 8
      %s177 = sadd.s32 %s175, %s176
      %s178 = smul.addr %s171, 8
      %s179 = sadd.s32 %s177, %s178
      %s180 = smul.addr %s179, 8
      %s181 = scalar_lea.vmem %s0, %s180
      %p182 = pneg %p57
      %p183 = pneg %p54
      %s184 = smul.u32 128, %s20
      %p185 = scmp.lt.s32.totalorder %s18, 1
      %s186 = scalar_select %p185, %s18, 1
      %p187 = scmp.lt.s32.totalorder %s184, 127
      %s188 = scalar_select %p187, %s184, 127
      %s189 = smul.addr %s186, 128
      %s190 = sadd.s32 %s188, %s189
      %s191 = smul.addr %s190, 8
      %s192 = scalar_lea.vmem %s1, %s191
      %p193 = pneg %p85
      %p194 = pneg %p82
      %p195 = pneg %p113
      %p196 = pneg %p110
      %p197 = scmp.lt.s32.totalorder %s18, 1
      %s198 = scalar_select %p197, %s18, 1
      %p199 = scmp.lt.s32.totalorder %s19, 0
      %s200 = scalar_select %p199, %s19, 0
      %s201 = sadd.s32 %s200, %s198
      %s202 = smul.addr %s201, 8
      %s203 = scalar_lea.vmem %s2, %s202
      %s204 = smul.u32 8, %s20
      %p205 = scmp.lt.s32.totalorder %s18, 1
      %s206 = scalar_select %p205, %s18, 1
      %p207 = scmp.lt.s32.totalorder %s19, 0
      %s208 = scalar_select %p207, %s19, 0
      %p209 = scmp.lt.s32.totalorder %s204, 7
      %s210 = scalar_select %p209, %s204, 7
      %s211 = smul.addr %s208, 8
      %s212 = sadd.s32 %s210, %s211
      %s213 = smul.addr %s206, 8
      %s214 = sadd.s32 %s212, %s213
      %s215 = smul.addr %s214, 8
      %s216 = scalar_lea.vmem %s0, %s215
      %s217 = smul.u32 8, %s20
      %s218 = smul.u32 128, %s20
      %p219 = scmp.lt.s32.totalorder %s18, 1
      %s220 = scalar_select %p219, %s18, 1
      %p221 = scmp.lt.s32.totalorder %s218, 127
      %s222 = scalar_select %p221, %s218, 127
      %s223 = smul.addr %s220, 128
      %s224 = sadd.s32 %s222, %s223
      %s225 = smul.addr %s224, 8
      %s226 = scalar_lea.vmem %s1, %s225
      %s227 = smul.u32 128, %s20
      %p228 = scmp.lt.s32.totalorder %s18, 1
      %s229 = scalar_select %p228, %s18, 1
      %p230 = scmp.lt.s32.totalorder %s19, 0
      %s231 = scalar_select %p230, %s19, 0
      %s232 = sadd.s32 %s231, %s229
      %s233 = smul.addr %s232, 8
      %s234 = scalar_lea.vmem %s2, %s233
      %p235 = scmp.eq.s32.totalorder %s20, 0
      // Predicated region
      $region29: #{separable_attn.10} parent=27 // pred_check
        %p236 = pneg %p235
      $region30: #{separable_attn.10} parent=27 // pred_check_branch
        %238 = sbr.rel (%p236) target = $region32
      $region31: #{separable_attn.10} parent=27 // pred_region
        %vm239 = vcmask 31744
        %240 = vst.msk [vmem:[%s234] sm:$0xff] %vm239, 0.0
      $region32: #{separable_attn.10} parent=27 // pred_fallthru
        _
      %v241 = vld [vmem:[%s234] sm:$0xff]
      %v242 = vld [vmem:[%s216] sm:$0xff]
      %v243 = vld [vmem:[%s216 + $0x8] sm:$0xff]
      %v244 = vld [vmem:[%s216 + $0x10] sm:$0xff]
      %v245 = vld [vmem:[%s216 + $0x18] sm:$0xff]
      %v246 = vld [vmem:[%s216 + $0x20] sm:$0xff]
      %v247 = vld [vmem:[%s216 + $0x28] sm:$0xff]
      %v248 = vld [vmem:[%s216 + $0x30] sm:$0xff]
      %v249 = vld [vmem:[%s216 + $0x38] sm:$0xff]
      %v250 = vld [vmem:[%s226] sm:$0xff]
      %v251 = vld [vmem:[%s226 + $0x8] sm:$0xff]
      %v252 = vld [vmem:[%s226 + $0x10] sm:$0xff]
      %v253 = vld [vmem:[%s226 + $0x18] sm:$0xff]
      %v254 = vld [vmem:[%s226 + $0x20] sm:$0xff]
      %v255 = vld [vmem:[%s226 + $0x28] sm:$0xff]
      %v256 = vld [vmem:[%s226 + $0x30] sm:$0xff]
      %v257 = vld [vmem:[%s226 + $0x38] sm:$0xff]
      %v258 = vld [vmem:[%s226 + $0x40] sm:$0xff]
      %v259 = vld [vmem:[%s226 + $0x48] sm:$0xff]
      %v260 = vld [vmem:[%s226 + $0x50] sm:$0xff]
      %v261 = vld [vmem:[%s226 + $0x58] sm:$0xff]
      %v262 = vld [vmem:[%s226 + $0x60] sm:$0xff]
      %v263 = vld [vmem:[%s226 + $0x68] sm:$0xff]
      %v264 = vld [vmem:[%s226 + $0x70] sm:$0xff]
      %v265 = vld [vmem:[%s226 + $0x78] sm:$0xff]
      %v266 = vld [vmem:[%s226 + $0x80] sm:$0xff]
      %v267 = vld [vmem:[%s226 + $0x88] sm:$0xff]
      %v268 = vld [vmem:[%s226 + $0x90] sm:$0xff]
      %v269 = vld [vmem:[%s226 + $0x98] sm:$0xff]
      %v270 = vld [vmem:[%s226 + $0xa0] sm:$0xff]
      %v271 = vld [vmem:[%s226 + $0xa8] sm:$0xff]
      %v272 = vld [vmem:[%s226 + $0xb0] sm:$0xff]
      %v273 = vld [vmem:[%s226 + $0xb8] sm:$0xff]
      %v274 = vld [vmem:[%s226 + $0xc0] sm:$0xff]
      %v275 = vld [vmem:[%s226 + $0xc8] sm:$0xff]
      %v276 = vld [vmem:[%s226 + $0xd0] sm:$0xff]
      %v277 = vld [vmem:[%s226 + $0xd8] sm:$0xff]
      %v278 = vld [vmem:[%s226 + $0xe0] sm:$0xff]
      %v279 = vld [vmem:[%s226 + $0xe8] sm:$0xff]
      %v280 = vld [vmem:[%s226 + $0xf0] sm:$0xff]
      %v281 = vld [vmem:[%s226 + $0xf8] sm:$0xff]
      %v282 = vld [vmem:[%s226 + $0x100] sm:$0xff]
      %v283 = vld [vmem:[%s226 + $0x108] sm:$0xff]
      %v284 = vld [vmem:[%s226 + $0x110] sm:$0xff]
      %v285 = vld [vmem:[%s226 + $0x118] sm:$0xff]
      %v286 = vld [vmem:[%s226 + $0x120] sm:$0xff]
      %v287 = vld [vmem:[%s226 + $0x128] sm:$0xff]
      %v288 = vld [vmem:[%s226 + $0x130] sm:$0xff]
      %v289 = vld [vmem:[%s226 + $0x138] sm:$0xff]
      %v290 = vld [vmem:[%s226 + $0x140] sm:$0xff]
      %v291 = vld [vmem:[%s226 + $0x148] sm:$0xff]
      %v292 = vld [vmem:[%s226 + $0x150] sm:$0xff]
      %v293 = vld [vmem:[%s226 + $0x158] sm:$0xff]
      %v294 = vld [vmem:[%s226 + $0x160] sm:$0xff]
      %v295 = vld [vmem:[%s226 + $0x168] sm:$0xff]
      %v296 = vld [vmem:[%s226 + $0x170] sm:$0xff]
      %v297 = vld [vmem:[%s226 + $0x178] sm:$0xff]
      %v298 = vld [vmem:[%s226 + $0x180] sm:$0xff]
      %v299 = vld [vmem:[%s226 + $0x188] sm:$0xff]
      %v300 = vld [vmem:[%s226 + $0x190] sm:$0xff]
      %v301 = vld [vmem:[%s226 + $0x198] sm:$0xff]
      %v302 = vld [vmem:[%s226 + $0x1a0] sm:$0xff]
      %v303 = vld [vmem:[%s226 + $0x1a8] sm:$0xff]
      %v304 = vld [vmem:[%s226 + $0x1b0] sm:$0xff]
      %v305 = vld [vmem:[%s226 + $0x1b8] sm:$0xff]
      %v306 = vld [vmem:[%s226 + $0x1c0] sm:$0xff]
      %v307 = vld [vmem:[%s226 + $0x1c8] sm:$0xff]
      %v308 = vld [vmem:[%s226 + $0x1d0] sm:$0xff]
      %v309 = vld [vmem:[%s226 + $0x1d8] sm:$0xff]
      %v310 = vld [vmem:[%s226 + $0x1e0] sm:$0xff]
      %v311 = vld [vmem:[%s226 + $0x1e8] sm:$0xff]
      %v312 = vld [vmem:[%s226 + $0x1f0] sm:$0xff]
      %v313 = vld [vmem:[%s226 + $0x1f8] sm:$0xff]
      %v314 = vld [vmem:[%s226 + $0x200] sm:$0xff]
      %v315 = vld [vmem:[%s226 + $0x208] sm:$0xff]
      %v316 = vld [vmem:[%s226 + $0x210] sm:$0xff]
      %v317 = vld [vmem:[%s226 + $0x218] sm:$0xff]
      %v318 = vld [vmem:[%s226 + $0x220] sm:$0xff]
      %v319 = vld [vmem:[%s226 + $0x228] sm:$0xff]
      %v320 = vld [vmem:[%s226 + $0x230] sm:$0xff]
      %v321 = vld [vmem:[%s226 + $0x238] sm:$0xff]
      %v322 = vld [vmem:[%s226 + $0x240] sm:$0xff]
      %v323 = vld [vmem:[%s226 + $0x248] sm:$0xff]
      %v324 = vld [vmem:[%s226 + $0x250] sm:$0xff]
      %v325 = vld [vmem:[%s226 + $0x258] sm:$0xff]
      %v326 = vld [vmem:[%s226 + $0x260] sm:$0xff]
      %v327 = vld [vmem:[%s226 + $0x268] sm:$0xff]
      %v328 = vld [vmem:[%s226 + $0x270] sm:$0xff]
      %v329 = vld [vmem:[%s226 + $0x278] sm:$0xff]
      %v330 = vld [vmem:[%s226 + $0x280] sm:$0xff]
      %v331 = vld [vmem:[%s226 + $0x288] sm:$0xff]
      %v332 = vld [vmem:[%s226 + $0x290] sm:$0xff]
      %v333 = vld [vmem:[%s226 + $0x298] sm:$0xff]
      %v334 = vld [vmem:[%s226 + $0x2a0] sm:$0xff]
      %v335 = vld [vmem:[%s226 + $0x2a8] sm:$0xff]
      %v336 = vld [vmem:[%s226 + $0x2b0] sm:$0xff]
      %v337 = vld [vmem:[%s226 + $0x2b8] sm:$0xff]
      %v338 = vld [vmem:[%s226 + $0x2c0] sm:$0xff]
      %v339 = vld [vmem:[%s226 + $0x2c8] sm:$0xff]
      %v340 = vld [vmem:[%s226 + $0x2d0] sm:$0xff]
      %v341 = vld [vmem:[%s226 + $0x2d8] sm:$0xff]
      %v342 = vld [vmem:[%s226 + $0x2e0] sm:$0xff]
      %v343 = vld [vmem:[%s226 + $0x2e8] sm:$0xff]
      %v344 = vld [vmem:[%s226 + $0x2f0] sm:$0xff]
      %v345 = vld [vmem:[%s226 + $0x2f8] sm:$0xff]
      %v346 = vld [vmem:[%s226 + $0x300] sm:$0xff]
      %v347 = vld [vmem:[%s226 + $0x308] sm:$0xff]
      %v348 = vld [vmem:[%s226 + $0x310] sm:$0xff]
      %v349 = vld [vmem:[%s226 + $0x318] sm:$0xff]
      %v350 = vld [vmem:[%s226 + $0x320] sm:$0xff]
      %v351 = vld [vmem:[%s226 + $0x328] sm:$0xff]
      %v352 = vld [vmem:[%s226 + $0x330] sm:$0xff]
      %v353 = vld [vmem:[%s226 + $0x338] sm:$0xff]
      %v354 = vld [vmem:[%s226 + $0x340] sm:$0xff]
      %v355 = vld [vmem:[%s226 + $0x348] sm:$0xff]
      %v356 = vld [vmem:[%s226 + $0x350] sm:$0xff]
      %v357 = vld [vmem:[%s226 + $0x358] sm:$0xff]
      %v358 = vld [vmem:[%s226 + $0x360] sm:$0xff]
      %v359 = vld [vmem:[%s226 + $0x368] sm:$0xff]
      %v360 = vld [vmem:[%s226 + $0x370] sm:$0xff]
      %v361 = vld [vmem:[%s226 + $0x378] sm:$0xff]
      %v362 = vld [vmem:[%s226 + $0x380] sm:$0xff]
      %v363 = vld [vmem:[%s226 + $0x388] sm:$0xff]
      %v364 = vld [vmem:[%s226 + $0x390] sm:$0xff]
      %v365 = vld [vmem:[%s226 + $0x398] sm:$0xff]
      %v366 = vld [vmem:[%s226 + $0x3a0] sm:$0xff]
      %v367 = vld [vmem:[%s226 + $0x3a8] sm:$0xff]
      %v368 = vld [vmem:[%s226 + $0x3b0] sm:$0xff]
      %v369 = vld [vmem:[%s226 + $0x3b8] sm:$0xff]
      %v370 = vld [vmem:[%s226 + $0x3c0] sm:$0xff]
      %v371 = vld [vmem:[%s226 + $0x3c8] sm:$0xff]
      %v372 = vld [vmem:[%s226 + $0x3d0] sm:$0xff]
      %v373 = vld [vmem:[%s226 + $0x3d8] sm:$0xff]
      %v374 = vld [vmem:[%s226 + $0x3e0] sm:$0xff]
      %v375 = vld [vmem:[%s226 + $0x3e8] sm:$0xff]
      %v376 = vld [vmem:[%s226 + $0x3f0] sm:$0xff]
      %v377 = vld [vmem:[%s226 + $0x3f8] sm:$0xff]
      %378 = vmatprep.subr.mxu0 0.0
      %379 = vmatpush1.msra.mxu0 %v250
      %380 = vmatprep.subr.mxu0 0.0
      %381 = vmatpush1.msra.mxu0 %v251
      %382 = vmatprep.subr.mxu0 0.0
      %383 = vmatpush1.msra.mxu0 %v252
      %384 = vmatprep.subr.mxu0 0.0
      %385 = vmatpush1.msra.mxu0 %v253
      %386 = vmatprep.subr.mxu0 0.0
      %387 = vmatpush1.msra.mxu0 %v254
      %388 = vmatprep.subr.mxu0 0.0
      %389 = vmatpush1.msra.mxu0 %v255
      %390 = vmatprep.subr.mxu0 0.0
      %391 = vmatpush1.msra.mxu0 %v256
      %392 = vmatprep.subr.mxu0 0.0
      %393 = vmatpush1.msra.mxu0 %v257
      %394 = vmatprep.subr.mxu0 0.0
      %395 = vmatpush1.msra.mxu0 %v258
      %396 = vmatprep.subr.mxu0 0.0
      %397 = vmatpush1.msra.mxu0 %v259
      %398 = vmatprep.subr.mxu0 0.0
      %399 = vmatpush1.msra.mxu0 %v260
      %400 = vmatprep.subr.mxu0 0.0
      %401 = vmatpush1.msra.mxu0 %v261
      %402 = vmatprep.subr.mxu0 0.0
      %403 = vmatpush1.msra.mxu0 %v262
      %404 = vmatprep.subr.mxu0 0.0
      %405 = vmatpush1.msra.mxu0 %v263
      %406 = vmatprep.subr.mxu0 0.0
      %407 = vmatpush1.msra.mxu0 %v264
      %408 = vmatprep.subr.mxu0 0.0
      %409 = vmatpush1.msra.mxu0 %v265
      %410 = vmatprep.subr.mxu0 0.0
      %411 = vmatpush1.msra.mxu0 %v266
      %412 = vmatprep.subr.mxu0 0.0
      %413 = vmatpush1.msra.mxu0 %v267
      %414 = vmatprep.subr.mxu0 0.0
      %415 = vmatpush1.msra.mxu0 %v268
      %416 = vmatprep.subr.mxu0 0.0
      %417 = vmatpush1.msra.mxu0 %v269
      %418 = vmatprep.subr.mxu0 0.0
      %419 = vmatpush1.msra.mxu0 %v270
      %420 = vmatprep.subr.mxu0 0.0
      %421 = vmatpush1.msra.mxu0 %v271
      %422 = vmatprep.subr.mxu0 0.0
      %423 = vmatpush1.msra.mxu0 %v272
      %424 = vmatprep.subr.mxu0 0.0
      %425 = vmatpush1.msra.mxu0 %v273
      %426 = vmatprep.subr.mxu0 0.0
      %427 = vmatpush1.msra.mxu0 %v274
      %428 = vmatprep.subr.mxu0 0.0
      %429 = vmatpush1.msra.mxu0 %v275
      %430 = vmatprep.subr.mxu0 0.0
      %431 = vmatpush1.msra.mxu0 %v276
      %432 = vmatprep.subr.mxu0 0.0
      %433 = vmatpush1.msra.mxu0 %v277
      %434 = vmatprep.subr.mxu0 0.0
      %435 = vmatpush1.msra.mxu0 %v278
      %436 = vmatprep.subr.mxu0 0.0
      %437 = vmatpush1.msra.mxu0 %v279
      %438 = vmatprep.subr.mxu0 0.0
      %439 = vmatpush1.msra.mxu0 %v280
      %440 = vmatprep.subr.mxu0 0.0
      %441 = vmatpush1.msra.mxu0 %v281
      %442 = vmatprep.mubr.f32.mxu0 %v243
      %443 = vmatmul.mubr.f32.gmra.mrb[0].mxu0 %v242
      %v444 = vpop.f32.mrb[0].mxu0
      %v445 = vadd.f32 0.0, %v444
      %v446 = vpop.f32.mrb[0].mxu0
      %447 = vdwg.mxu0
      %448 = vmatprep.subr.mxu0 0.0
      %449 = vmatpush1.msra.mxu0 %v282
      %450 = vmatprep.subr.mxu0 0.0
      %451 = vmatpush1.msra.mxu0 %v283
      %452 = vmatprep.subr.mxu0 0.0
      %453 = vmatpush1.msra.mxu0 %v284
      %454 = vmatprep.subr.mxu0 0.0
      %455 = vmatpush1.msra.mxu0 %v285
      %456 = vmatprep.subr.mxu0 0.0
      %457 = vmatpush1.msra.mxu0 %v286
      %458 = vmatprep.subr.mxu0 0.0
      %459 = vmatpush1.msra.mxu0 %v287
      %460 = vmatprep.subr.mxu0 0.0
      %461 = vmatpush1.msra.mxu0 %v288
      %462 = vmatprep.subr.mxu0 0.0
      %463 = vmatpush1.msra.mxu0 %v289
      %464 = vmatprep.subr.mxu0 0.0
      %465 = vmatpush1.msra.mxu0 %v290
      %466 = vmatprep.subr.mxu0 0.0
      %467 = vmatpush1.msra.mxu0 %v291
      %468 = vmatprep.subr.mxu0 0.0
      %469 = vmatpush1.msra.mxu0 %v292
      %470 = vmatprep.subr.mxu0 0.0
      %471 = vmatpush1.msra.mxu0 %v293
      %472 = vmatprep.subr.mxu0 0.0
      %473 = vmatpush1.msra.mxu0 %v294
      %474 = vmatprep.subr.mxu0 0.0
      %475 = vmatpush1.msra.mxu0 %v295
      %476 = vmatprep.subr.mxu0 0.0
      %477 = vmatpush1.msra.mxu0 %v296
      %478 = vmatprep.subr.mxu0 0.0
      %479 = vmatpush1.msra.mxu0 %v297
      %480 = vmatprep.subr.mxu0 0.0
      %481 = vmatpush1.msra.mxu0 %v298
      %482 = vmatprep.subr.mxu0 0.0
      %483 = vmatpush1.msra.mxu0 %v299
      %484 = vmatprep.subr.mxu0 0.0
      %485 = vmatpush1.msra.mxu0 %v300
      %486 = vmatprep.subr.mxu0 0.0
      %487 = vmatpush1.msra.mxu0 %v301
      %488 = vmatprep.subr.mxu0 0.0
      %489 = vmatpush1.msra.mxu0 %v302
      %490 = vmatprep.subr.mxu0 0.0
      %491 = vmatpush1.msra.mxu0 %v303
      %492 = vmatprep.subr.mxu0 0.0
      %493 = vmatpush1.msra.mxu0 %v304
      %494 = vmatprep.subr.mxu0 0.0
      %495 = vmatpush1.msra.mxu0 %v305
      %496 = vmatprep.subr.mxu0 0.0
      %497 = vmatpush1.msra.mxu0 %v306
      %498 = vmatprep.subr.mxu0 0.0
      %499 = vmatpush1.msra.mxu0 %v307
      %500 = vmatprep.subr.mxu0 0.0
      %501 = vmatpush1.msra.mxu0 %v308
      %502 = vmatprep.subr.mxu0 0.0
      %503 = vmatpush1.msra.mxu0 %v309
      %504 = vmatprep.subr.mxu0 0.0
      %505 = vmatpush1.msra.mxu0 %v310
      %506 = vmatprep.subr.mxu0 0.0
      %507 = vmatpush1.msra.mxu0 %v311
      %508 = vmatprep.subr.mxu0 0.0
      %509 = vmatpush1.msra.mxu0 %v312
      %510 = vmatprep.subr.mxu0 0.0
      %511 = vmatpush1.msra.mxu0 %v313
      %512 = vmatprep.mubr.f32.mxu0 %v245
      %513 = vmatmul.mubr.f32.gmra.mrb[0].mxu0 %v244
      %v514 = vpop.f32.mrb[0].mxu0
      %v515 = vadd.f32 %v445, %v514
      %v516 = vpop.f32.mrb[0].mxu0
      %517 = vdwg.mxu0
      %518 = vmatprep.subr.mxu0 0.0
      %519 = vmatpush1.msra.mxu0 %v314
      %520 = vmatprep.subr.mxu0 0.0
      %521 = vmatpush1.msra.mxu0 %v315
      %522 = vmatprep.subr.mxu0 0.0
      %523 = vmatpush1.msra.mxu0 %v316
      %524 = vmatprep.subr.mxu0 0.0
      %525 = vmatpush1.msra.mxu0 %v317
      %526 = vmatprep.subr.mxu0 0.0
      %527 = vmatpush1.msra.mxu0 %v318
      %528 = vmatprep.subr.mxu0 0.0
      %529 = vmatpush1.msra.mxu0 %v319
      %530 = vmatprep.subr.mxu0 0.0
      %531 = vmatpush1.msra.mxu0 %v320
      %532 = vmatprep.subr.mxu0 0.0
      %533 = vmatpush1.msra.mxu0 %v321
      %534 = vmatprep.subr.mxu0 0.0
      %535 = vmatpush1.msra.mxu0 %v322
      %536 = vmatprep.subr.mxu0 0.0
      %537 = vmatpush1.msra.mxu0 %v323
      %538 = vmatprep.subr.mxu0 0.0
      %539 = vmatpush1.msra.mxu0 %v324
      %540 = vmatprep.subr.mxu0 0.0
      %541 = vmatpush1.msra.mxu0 %v325
      %542 = vmatprep.subr.mxu0 0.0
      %543 = vmatpush1.msra.mxu0 %v326
      %544 = vmatprep.subr.mxu0 0.0
      %545 = vmatpush1.msra.mxu0 %v327
      %546 = vmatprep.subr.mxu0 0.0
      %547 = vmatpush1.msra.mxu0 %v328
      %548 = vmatprep.subr.mxu0 0.0
      %549 = vmatpush1.msra.mxu0 %v329
      %550 = vmatprep.subr.mxu0 0.0
      %551 = vmatpush1.msra.mxu0 %v330
      %552 = vmatprep.subr.mxu0 0.0
      %553 = vmatpush1.msra.mxu0 %v331
      %554 = vmatprep.subr.mxu0 0.0
      %555 = vmatpush1.msra.mxu0 %v332
      %556 = vmatprep.subr.mxu0 0.0
      %557 = vmatpush1.msra.mxu0 %v333
      %558 = vmatprep.subr.mxu0 0.0
      %559 = vmatpush1.msra.mxu0 %v334
      %560 = vmatprep.subr.mxu0 0.0
      %561 = vmatpush1.msra.mxu0 %v335
      %562 = vmatprep.subr.mxu0 0.0
      %563 = vmatpush1.msra.mxu0 %v336
      %564 = vmatprep.subr.mxu0 0.0
      %565 = vmatpush1.msra.mxu0 %v337
      %566 = vmatprep.subr.mxu0 0.0
      %567 = vmatpush1.msra.mxu0 %v338
      %568 = vmatprep.subr.mxu0 0.0
      %569 = vmatpush1.msra.mxu0 %v339
      %570 = vmatprep.subr.mxu0 0.0
      %571 = vmatpush1.msra.mxu0 %v340
      %572 = vmatprep.subr.mxu0 0.0
      %573 = vmatpush1.msra.mxu0 %v341
      %574 = vmatprep.subr.mxu0 0.0
      %575 = vmatpush1.msra.mxu0 %v342
      %576 = vmatprep.subr.mxu0 0.0
      %577 = vmatpush1.msra.mxu0 %v343
      %578 = vmatprep.subr.mxu0 0.0
      %579 = vmatpush1.msra.mxu0 %v344
      %580 = vmatprep.subr.mxu0 0.0
      %581 = vmatpush1.msra.mxu0 %v345
      %582 = vmatprep.mubr.f32.mxu0 %v247
      %583 = vmatmul.mubr.f32.gmra.mrb[0].mxu0 %v246
      %v584 = vpop.f32.mrb[0].mxu0
      %v585 = vadd.f32 %v515, %v584
      %v586 = vpop.f32.mrb[0].mxu0
      %587 = vdwg.mxu0
      %588 = vmatprep.subr.mxu0 0.0
      %589 = vmatpush1.msra.mxu0 %v346
      %590 = vmatprep.subr.mxu0 0.0
      %591 = vmatpush1.msra.mxu0 %v347
      %592 = vmatprep.subr.mxu0 0.0
      %593 = vmatpush1.msra.mxu0 %v348
      %594 = vmatprep.subr.mxu0 0.0
      %595 = vmatpush1.msra.mxu0 %v349
      %596 = vmatprep.subr.mxu0 0.0
      %597 = vmatpush1.msra.mxu0 %v350
      %598 = vmatprep.subr.mxu0 0.0
      %599 = vmatpush1.msra.mxu0 %v351
      %600 = vmatprep.subr.mxu0 0.0
      %601 = vmatpush1.msra.mxu0 %v352
      %602 = vmatprep.subr.mxu0 0.0
      %603 = vmatpush1.msra.mxu0 %v353
      %604 = vmatprep.subr.mxu0 0.0
      %605 = vmatpush1.msra.mxu0 %v354
      %606 = vmatprep.subr.mxu0 0.0
      %607 = vmatpush1.msra.mxu0 %v355
      %608 = vmatprep.subr.mxu0 0.0
      %609 = vmatpush1.msra.mxu0 %v356
      %610 = vmatprep.subr.mxu0 0.0
      %611 = vmatpush1.msra.mxu0 %v357
      %612 = vmatprep.subr.mxu0 0.0
      %613 = vmatpush1.msra.mxu0 %v358
      %614 = vmatprep.subr.mxu0 0.0
      %615 = vmatpush1.msra.mxu0 %v359
      %616 = vmatprep.subr.mxu0 0.0
      %617 = vmatpush1.msra.mxu0 %v360
      %618 = vmatprep.subr.mxu0 0.0
      %619 = vmatpush1.msra.mxu0 %v361
      %620 = vmatprep.subr.mxu0 0.0
      %621 = vmatpush1.msra.mxu0 %v362
      %622 = vmatprep.subr.mxu0 0.0
      %623 = vmatpush1.msra.mxu0 %v363
      %624 = vmatprep.subr.mxu0 0.0
      %625 = vmatpush1.msra.mxu0 %v364
      %626 = vmatprep.subr.mxu0 0.0
      %627 = vmatpush1.msra.mxu0 %v365
      %628 = vmatprep.subr.mxu0 0.0
      %629 = vmatpush1.msra.mxu0 %v366
      %630 = vmatprep.subr.mxu0 0.0
      %631 = vmatpush1.msra.mxu0 %v367
      %632 = vmatprep.subr.mxu0 0.0
      %633 = vmatpush1.msra.mxu0 %v368
      %634 = vmatprep.subr.mxu0 0.0
      %635 = vmatpush1.msra.mxu0 %v369
      %636 = vmatprep.subr.mxu0 0.0
      %637 = vmatpush1.msra.mxu0 %v370
      %638 = vmatprep.subr.mxu0 0.0
      %639 = vmatpush1.msra.mxu0 %v371
      %640 = vmatprep.subr.mxu0 0.0
      %641 = vmatpush1.msra.mxu0 %v372
      %642 = vmatprep.subr.mxu0 0.0
      %643 = vmatpush1.msra.mxu0 %v373
      %644 = vmatprep.subr.mxu0 0.0
      %645 = vmatpush1.msra.mxu0 %v374
      %646 = vmatprep.subr.mxu0 0.0
      %647 = vmatpush1.msra.mxu0 %v375
      %648 = vmatprep.subr.mxu0 0.0
      %649 = vmatpush1.msra.mxu0 %v376
      %650 = vmatprep.subr.mxu0 0.0
      %651 = vmatpush1.msra.mxu0 %v377
      %652 = vmatprep.mubr.f32.mxu0 %v249
      %653 = vmatmul.mubr.f32.gmra.mrb[0].mxu0 %v248
      %v654 = vpop.f32.mrb[0].mxu0
      %v655 = vadd.f32 %v585, %v654
      %v656 = vpop.f32.mrb[0].mxu0
      %657 = vdwg.mxu0
      %v658 = vadd.f32 %v241, %v655
      %vm659 = vcmask 31744
      %660 = vst.msk [vmem:[%s234] sm:$0xff] %vm659, %v658
      // Predicated region
      $region33: #{separable_attn.10} parent=27 // pred_check
        %p661 = pneg %p235
      $region34: #{separable_attn.10} parent=27 // pred_check_branch
        %663 = sbr.rel (%p661) target = $region36
      $region35: #{separable_attn.10} parent=27 // pred_region
        %v664 = vld [vmem:[%s234] sm:$0xff]
        %v665 = vsel %vm659, %v664, -inf
        %666 = vmax.xlane.f32.xlu0 %v665
        %v667 = vpop.xlane.xlu0 %666
        %v668 = vsub.f32 %v664, %v667
        %v669 = vmul.f32 %v668, 1.442695
        %v670 = vpow.pop %v669
        %v671 = vsel %vm659, %v670, 0.0
        %672 = vadd.xlane.f32.xlu0 %v671
        %v673 = vpop.xlane.xlu0 %672
        %v674 = vrcp.pop %v673
        %v675 = vmul.f32 %v670, %v674
        %676 = vst.msk [vmem:[%s234] sm:$0xff] %vm659, %v675
      $region36: #{separable_attn.10} parent=27 // pred_fallthru
        _
      %p677 = scmp.lt.s32.totalorder %s18, 1
      %s678 = scalar_select %p677, %s18, 1
      %p679 = scmp.lt.s32.totalorder %s19, 0
      %s680 = scalar_select %p679, %s19, 0
      %s681 = sadd.s32 %s680, %s678
      %s682 = smul.addr %s681, 8
      %s683 = scalar_lea.vmem %s2, %s682
      // Predicated region
      $region37: #{separable_attn.10} parent=27 // pred_check
        %p684 = pneg %p110
      $region38: #{separable_attn.10} parent=27 // pred_check_branch
        %686 = sbr.rel (%p684) target = $region40
      $region39: #{separable_attn.10} parent=27 // pred_region
        _
      $region40: #{separable_attn.10} parent=27 // pred_fallthru
        _
    $region28: #{separable_attn.10} parent=5 // pred_fallthru
      _
    %p687 = scmp.le.s32.totalorder 2, %s8
    // Predicated region
    $region41: #{separable_attn.10} parent=5 // pred_check
      %p688 = pneg %p687
    $region42: #{separable_attn.10} parent=5 // pred_check_branch
      %690 = sbr.rel (%p688) target = $region44
    $region43: #{separable_attn.10} parent=5 // pred_region
      %s691 = ssub.s32 %s8, 2
      // Predicated region
      $region45: #{separable_attn.10} parent=43 // pred_check
        %p692 = pneg %p116
      $region46: #{separable_attn.10} parent=43 // pred_check_branch
        %694 = sbr.rel (%p692) target = $region48
      $region47: #{separable_attn.10} parent=43 // pred_region
        %p695 = scmp.lt.s32.totalorder %s21, 1
        %s696 = scalar_select %p695, %s21, 1
        %p697 = scmp.lt.s32.totalorder %s22, 0
        %s698 = scalar_select %p697, %s22, 0
        %s699 = sadd.s32 %s698, %s696
        %s700 = smul.addr %s699, 8
        %s701 = scalar_lea.vmem %s2, %s700
      $region48: #{separable_attn.10} parent=43 // pred_fallthru
        _
    $region44: #{separable_attn.10} parent=5 // pred_fallthru
      _
  $region6: #{separable_attn.10} parent=0 // loop_footer
    %s12 = sadd.s32 1, %s8
  $region7: #{separable_attn.10} parent=0 // loop_footer_branch
    %7 = sbr.rel target = $region3
  $region8: #{separable_attn.10} parent=0 // loop_exit
    _

// kernel: separable_attn.9
$region0: #{separable_attn.9}
  #allocation0 [shape = 'u32[]', space=smem, size = 0x4, offset = 0x4, fixed_abs, tag = 'smem constant byte address 0x4 - core index']
  #allocation1 [shape = 'u32[144,128]{1,0:T(1,128)}', space=vmem, size = 0x12000, scoped, tag = 'internal scratch']
  %s0 = inlined_call_operand.vmem [shape: f32[2,8,2048], index: 0, kind: input, shape index: {}]
  %s1 = inlined_call_operand.hbm [shape: f32[4,8], index: 1, kind: input, shape index: {}]
  %s2 = inlined_call_operand.vmem [shape: f32[4,1], index: 2, kind: input, shape index: {}]
  %s3 = inlined_call_operand.hbm [shape: f32[4,8], index: 3, kind: input, shape index: {}]
  %s4 = inlined_call_operand.vmem [shape: f32[4,1], index: 4, kind: input, shape index: {}]
  %s5 = inlined_call_operand.hbm [shape: f32[8,8], index: 5, kind: input, shape index: {}]
  %s6 = inlined_call_operand.vmem [shape: f32[8,1], index: 6, kind: input, shape index: {}]
  %s7 = inlined_call_operand.vmem [shape: f32[2,4,2048], index: 7, kind: output, shape index: {0}]
  %s8 = inlined_call_operand.vmem [shape: f32[2,4,1024], index: 8, kind: output, shape index: {1}]
  %s9 = inlined_call_operand.vmem [shape: f32[2,8,1024], index: 9, kind: output, shape index: {2}]
  %10 = xla_tuple %s7, %s8, %s9
  %s11 = sld [smem:[#allocation0]]
  $region89: #{separable_attn.9} parent=0
    _
  %s13 = ssub.s32 1, %s11
  %s14 = scalar_select 0, %s13, %s11
  $region1: #{separable_attn.9} parent=0
    #allocation2 [shape = 'u8[2048]{0}', space=vmem, size = 0x800, scoped, tag = 'input window, operand 1, single buffered']
    #allocation3 [shape = 's32[2]{0}', space=sflag, size = 0x8, scoped, tag = 'scoped memory for separable_attn.9']
    #allocation4 [shape = 'u8[2048]{0}', space=vmem, size = 0x800, scoped, tag = 'input window, operand 3, single buffered']
    #allocation5 [shape = 's32[1]{0}', space=sflag, size = 0x4, scoped, tag = 'scoped memory for separable_attn.9']
    #allocation6 [shape = 'u8[4096]{0}', space=vmem, size = 0x1000, scoped, tag = 'input window, operand 5, single buffered']
    %15 = vsyncpa [#allocation3], 0
    %16 = vsyncpa [#allocation5], 0
    loop: start=0, step=1, limit=4
    $region2: #{separable_attn.9} parent=1 // loop_pre_header
      _
    $region3: #{separable_attn.9} parent=1 // loop_header
      %s18 = sphi 0, %s22
      %p19 = scmp.ge.s32.totalorder %s18, 4
      %s25 = sphi 0, %s37
      %s26 = sphi 0, %s33
      %s27 = sphi 0, %s25
      %s28 = sphi 0, %s26
      %s29 = sphi 0, %s27
      %s30 = sphi 0, %s28
      %s42 = sphi 0, %s44
      %s45 = sphi 0, %s42
      %s46 = sphi 0, %s45
      %s62 = sphi 0, %s46
      %s66 = sphi 0, %s66
      %s68 = sphi 0, %s66
      %s69 = sphi 0, %s68
      %s83 = sphi 0, %s69
      %s87 = sphi 0, %s87
      %s89 = sphi 0, %s87
      %s90 = sphi 0, %s89
      %s104 = sphi 0, %s90
      %s108 = sphi 0, %s108
      %s110 = sphi 0, %s108
      %s111 = sphi 0, %s110
      %s125 = sphi 0, %s111
      %s129 = sphi 0, %s129
      %s131 = sphi 0, %s129
      %s132 = sphi 0, %s131
      %s146 = sphi 0, %s132
      %s150 = sphi 0, %s150
      %s152 = sphi 0, %s150
      %s153 = sphi 0, %s152
      %s167 = sphi 0, %s153
      %s171 = sphi 0, %s171
      %s173 = sphi 0, %s171
      %s174 = sphi 0, %s173
      %s188 = sphi 0, %s174
      %s196 = sphi 0, %s198
      %s199 = sphi 0, %s196
      %s200 = sphi 0, %s199
      %s216 = sphi 0, %s200
      %s224 = sphi 0, %s226
      %s227 = sphi 0, %s224
      %s228 = sphi 0, %s227
      %s244 = sphi 0, %s228
      %s252 = sphi 0, %s254
      %s255 = sphi 0, %s252
      %s256 = sphi 0, %s255
      %s272 = sphi 0, %s256
    $region4: #{separable_attn.9} parent=1 // loop_header_branch
      %21 = sbr.rel (%p19) target = $region8
    $region5: #{separable_attn.9} parent=1 // loop_body
      %s23 = ssub.s32 %s18, 1
      %s24 = ssub.s32 %s18, 2
      %s31 = sadd.s32 1, %s26
      %p32 = scmp.ge.s32.totalorder %s31, 1
      %s33 = scalar_select %p32, 0, %s31
      %s34 = sadd.s32 1, %s25
      %s35 = scalar_select %p32, %s34, %s25
      %p36 = scmp.ge.s32.totalorder %s35, 2
      %s37 = scalar_select %p36, 0, %s35
      %s38 = ssub.s32 %s25, %s37
      %s39 = ssub.s32 %s26, %s33
      %s40 = sor.u32 %s38, %s39
      %p41 = scmp.eq.s32.totalorder %s40, 0
      %s43 = sadd.s32 %s42, 1
      %s44 = scalar_select %p41, %s42, %s43
      %p47 = pneg %p41
      %p48 = scmp.eq.s32.totalorder %s18, 1
      %p49 = por %p47, %p48
      %p50 = scmp.ne.s32.totalorder %s42, %s45
      %p51 = scmp.eq.s32.totalorder %s18, 0
      %p52 = por %p50, %p51
      %p53 = scmp.ne.s32.totalorder %s42, %s45
      %p54 = scmp.eq.s32.totalorder %s23, 1
      %p55 = por %p53, %p54
      %p56 = scmp.ne.s32.totalorder %s45, %s46
      %p57 = scmp.eq.s32.totalorder %s23, 0
      %p58 = por %p56, %p57
      %p59 = scmp.ne.s32.totalorder %s45, %s46
      %p60 = scmp.eq.s32.totalorder %s24, 1
      %p61 = por %p59, %p60
      %p63 = scmp.ne.s32.totalorder %s46, %s62
      %p64 = scmp.eq.s32.totalorder %s24, 0
      %p65 = por %p63, %p64
      %s67 = sadd.s32 %s66, 1
      %p70 = scmp.eq.s32.totalorder %s18, 1
      %p71 = scmp.ne.s32.totalorder %s66, %s68
      %p72 = scmp.eq.s32.totalorder %s18, 0
      %p73 = por %p71, %p72
      %p74 = scmp.ne.s32.totalorder %s66, %s68
      %p75 = scmp.eq.s32.totalorder %s23, 1
      %p76 = por %p74, %p75
      %p77 = scmp.ne.s32.totalorder %s68, %s69
      %p78 = scmp.eq.s32.totalorder %s23, 0
      %p79 = por %p77, %p78
      %p80 = scmp.ne.s32.totalorder %s68, %s69
      %p81 = scmp.eq.s32.totalorder %s24, 1
      %p82 = por %p80, %p81
      %p84 = scmp.ne.s32.totalorder %s69, %s83
      %p85 = scmp.eq.s32.totalorder %s24, 0
      %p86 = por %p84, %p85
      %s88 = sadd.s32 %s87, 1
      %p91 = scmp.eq.s32.totalorder %s18, 1
      %p92 = scmp.ne.s32.totalorder %s87, %s89
      %p93 = scmp.eq.s32.totalorder %s18, 0
      %p94 = por %p92, %p93
      %p95 = scmp.ne.s32.totalorder %s87, %s89
      %p96 = scmp.eq.s32.totalorder %s23, 1
      %p97 = por %p95, %p96
      %p98 = scmp.ne.s32.totalorder %s89, %s90
      %p99 = scmp.eq.s32.totalorder %s23, 0
      %p100 = por %p98, %p99
      %p101 = scmp.ne.s32.totalorder %s89, %s90
      %p102 = scmp.eq.s32.totalorder %s24, 1
      %p103 = por %p101, %p102
      %p105 = scmp.ne.s32.totalorder %s90, %s104
      %p106 = scmp.eq.s32.totalorder %s24, 0
      %p107 = por %p105, %p106
      %s109 = sadd.s32 %s108, 1
      %p112 = scmp.eq.s32.totalorder %s18, 1
      %p113 = scmp.ne.s32.totalorder %s108, %s110
      %p114 = scmp.eq.s32.totalorder %s18, 0
      %p115 = por %p113, %p114
      %p116 = scmp.ne.s32.totalorder %s108, %s110
      %p117 = scmp.eq.s32.totalorder %s23, 1
      %p118 = por %p116, %p117
      %p119 = scmp.ne.s32.totalorder %s110, %s111
      %p120 = scmp.eq.s32.totalorder %s23, 0
      %p121 = por %p119, %p120
      %p122 = scmp.ne.s32.totalorder %s110, %s111
      %p123 = scmp.eq.s32.totalorder %s24, 1
      %p124 = por %p122, %p123
      %p126 = scmp.ne.s32.totalorder %s111, %s125
      %p127 = scmp.eq.s32.totalorder %s24, 0
      %p128 = por %p126, %p127
      %s130 = sadd.s32 %s129, 1
      %p133 = scmp.eq.s32.totalorder %s18, 1
      %p134 = scmp.ne.s32.totalorder %s129, %s131
      %p135 = scmp.eq.s32.totalorder %s18, 0
      %p136 = por %p134, %p135
      %p137 = scmp.ne.s32.totalorder %s129, %s131
      %p138 = scmp.eq.s32.totalorder %s23, 1
      %p139 = por %p137, %p138
      %p140 = scmp.ne.s32.totalorder %s131, %s132
      %p141 = scmp.eq.s32.totalorder %s23, 0
      %p142 = por %p140, %p141
      %p143 = scmp.ne.s32.totalorder %s131, %s132
      %p144 = scmp.eq.s32.totalorder %s24, 1
      %p145 = por %p143, %p144
      %p147 = scmp.ne.s32.totalorder %s132, %s146
      %p148 = scmp.eq.s32.totalorder %s24, 0
      %p149 = por %p147, %p148
      %s151 = sadd.s32 %s150, 1
      %p154 = scmp.eq.s32.totalorder %s18, 1
      %p155 = scmp.ne.s32.totalorder %s150, %s152
      %p156 = scmp.eq.s32.totalorder %s18, 0
      %p157 = por %p155, %p156
      %p158 = scmp.ne.s32.totalorder %s150, %s152
      %p159 = scmp.eq.s32.totalorder %s23, 1
      %p160 = por %p158, %p159
      %p161 = scmp.ne.s32.totalorder %s152, %s153
      %p162 = scmp.eq.s32.totalorder %s23, 0
      %p163 = por %p161, %p162
      %p164 = scmp.ne.s32.totalorder %s152, %s153
      %p165 = scmp.eq.s32.totalorder %s24, 1
      %p166 = por %p164, %p165
      %p168 = scmp.ne.s32.totalorder %s153, %s167
      %p169 = scmp.eq.s32.totalorder %s24, 0
      %p170 = por %p168, %p169
      %s172 = sadd.s32 %s171, 1
      %p175 = scmp.eq.s32.totalorder %s18, 1
      %p176 = scmp.ne.s32.totalorder %s171, %s173
      %p177 = scmp.eq.s32.totalorder %s18, 0
      %p178 = por %p176, %p177
      %p179 = scmp.ne.s32.totalorder %s171, %s173
      %p180 = scmp.eq.s32.totalorder %s23, 1
      %p181 = por %p179, %p180
      %p182 = scmp.ne.s32.totalorder %s173, %s174
      %p183 = scmp.eq.s32.totalorder %s23, 0
      %p184 = por %p182, %p183
      %p185 = scmp.ne.s32.totalorder %s173, %s174
      %p186 = scmp.eq.s32.totalorder %s24, 1
      %p187 = por %p185, %p186
      %p189 = scmp.ne.s32.totalorder %s174, %s188
      %p190 = scmp.eq.s32.totalorder %s24, 0
      %p191 = por %p189, %p190
      %s192 = ssub.s32 %s25, %s37
      %s193 = ssub.s32 %s26, %s33
      %s194 = sor.u32 %s192, %s193
      %p195 = scmp.eq.s32.totalorder %s194, 0
      %s197 = sadd.s32 %s196, 1
      %s198 = scalar_select %p195, %s196, %s197
      %p201 = pneg %p195
      %p202 = scmp.eq.s32.totalorder %s18, 1
      %p203 = por %p201, %p202
      %p204 = scmp.ne.s32.totalorder %s196, %s199
      %p205 = scmp.eq.s32.totalorder %s18, 0
      %p206 = por %p204, %p205
      %p207 = scmp.ne.s32.totalorder %s196, %s199
      %p208 = scmp.eq.s32.totalorder %s23, 1
      %p209 = por %p207, %p208
      %p210 = scmp.ne.s32.totalorder %s199, %s200
      %p211 = scmp.eq.s32.totalorder %s23, 0
      %p212 = por %p210, %p211
      %p213 = scmp.ne.s32.totalorder %s199, %s200
      %p214 = scmp.eq.s32.totalorder %s24, 1
      %p215 = por %p213, %p214
      %p217 = scmp.ne.s32.totalorder %s200, %s216
      %p218 = scmp.eq.s32.totalorder %s24, 0
      %p219 = por %p217, %p218
      %s220 = ssub.s32 %s25, %s37
      %s221 = ssub.s32 %s26, %s33
      %s222 = sor.u32 %s220, %s221
      %p223 = scmp.eq.s32.totalorder %s222, 0
      %s225 = sadd.s32 %s224, 1
      %s226 = scalar_select %p223, %s224, %s225
      %p229 = pneg %p223
      %p230 = scmp.eq.s32.totalorder %s18, 1
      %p231 = por %p229, %p230
      %p232 = scmp.ne.s32.totalorder %s224, %s227
      %p233 = scmp.eq.s32.totalorder %s18, 0
      %p234 = por %p232, %p233
      %p235 = scmp.ne.s32.totalorder %s224, %s227
      %p236 = scmp.eq.s32.totalorder %s23, 1
      %p237 = por %p235, %p236
      %p238 = scmp.ne.s32.totalorder %s227, %s228
      %p239 = scmp.eq.s32.totalorder %s23, 0
      %p240 = por %p238, %p239
      %p241 = scmp.ne.s32.totalorder %s227, %s228
      %p242 = scmp.eq.s32.totalorder %s24, 1
      %p243 = por %p241, %p242
      %p245 = scmp.ne.s32.totalorder %s228, %s244
      %p246 = scmp.eq.s32.totalorder %s24, 0
      %p247 = por %p245, %p246
      %s248 = ssub.s32 %s25, %s37
      %s249 = ssub.s32 %s26, %s33
      %s250 = sor.u32 %s248, %s249
      %p251 = scmp.eq.s32.totalorder %s250, 0
      %s253 = sadd.s32 %s252, 1
      %s254 = scalar_select %p251, %s252, %s253
      %p257 = pneg %p251
      %p258 = scmp.eq.s32.totalorder %s18, 1
      %p259 = por %p257, %p258
      %p260 = scmp.ne.s32.totalorder %s252, %s255
      %p261 = scmp.eq.s32.totalorder %s18, 0
      %p262 = por %p260, %p261
      %p263 = scmp.ne.s32.totalorder %s252, %s255
      %p264 = scmp.eq.s32.totalorder %s23, 1
      %p265 = por %p263, %p264
      %p266 = scmp.ne.s32.totalorder %s255, %s256
      %p267 = scmp.eq.s32.totalorder %s23, 0
      %p268 = por %p266, %p267
      %p269 = scmp.ne.s32.totalorder %s255, %s256
      %p270 = scmp.eq.s32.totalorder %s24, 1
      %p271 = por %p269, %p270
      %p273 = scmp.ne.s32.totalorder %s256, %s272
      %p274 = scmp.eq.s32.totalorder %s24, 0
      %p275 = por %p273, %p274
      %p276 = scmp.le.s32.totalorder 1, %s18
      %p277 = scmp.lt.s32.totalorder %s18, 3
      %p278 = pnand %p276, %p277
      %p279 = pneg %p278
      // Predicated region
      $region9: #{separable_attn.9} parent=5 // pred_check
        _
      $region10: #{separable_attn.9} parent=5 // pred_check_branch
        %281 = sbr.rel (%p278) target = $region12
      $region11: #{separable_attn.9} parent=5 // pred_region
        %s282 = ssub.s32 %s18, 1
        // Predicated region
        $region13: #{separable_attn.9} parent=11 // pred_check
          %p283 = pneg %p79
        $region14: #{separable_attn.9} parent=11 // pred_check_branch
          %285 = sbr.rel (%p283) target = $region16
        $region15: #{separable_attn.9} parent=11 // pred_region
          %s287 = ssub.s32 64, 64
          %288 = vsyncadd [#allocation3], %s287
          %s290 = sshll.u32 [#allocation2], 4
          %s291 = int_to_ptr.vmem [resolvable:$true] %s290
          %293 = dma.hbm_to_vmem [thread:$0]  %s1, 64, %s291, [#allocation3]
        $region16: #{separable_attn.9} parent=11 // pred_fallthru
          _
        // Predicated region
        $region17: #{separable_attn.9} parent=11 // pred_check
          %p294 = pneg %p100
        $region18: #{separable_attn.9} parent=11 // pred_check_branch
          %296 = sbr.rel (%p294) target = $region20
        $region19: #{separable_attn.9} parent=11 // pred_region
          _
        $region20: #{separable_attn.9} parent=11 // pred_fallthru
          _
        // Predicated region
        $region21: #{separable_attn.9} parent=11 // pred_check
          %p297 = pneg %p121
        $region22: #{separable_attn.9} parent=11 // pred_check_branch
          %299 = sbr.rel (%p297) target = $region24
        $region23: #{separable_attn.9} parent=11 // pred_region
          %s301 = ssub.s32 64, 64
          %302 = vsyncadd [#allocation5], %s301
          %s304 = sshll.u32 [#allocation4], 4
          %s305 = int_to_ptr.vmem [resolvable:$true] %s304
          %307 = dma.hbm_to_vmem [thread:$0]  %s3, 64, %s305, [#allocation5]
        $region24: #{separable_attn.9} parent=11 // pred_fallthru
          _
        // Predicated region
        $region25: #{separable_attn.9} parent=11 // pred_check
          %p308 = pneg %p142
        $region26: #{separable_attn.9} parent=11 // pred_check_branch
          %310 = sbr.rel (%p308) target = $region28
        $region27: #{separable_attn.9} parent=11 // pred_region
          _
        $region28: #{separable_attn.9} parent=11 // pred_fallthru
          _
        // Predicated region
        $region29: #{separable_attn.9} parent=11 // pred_check
          %p311 = pneg %p163
        $region30: #{separable_attn.9} parent=11 // pred_check_branch
          %313 = sbr.rel (%p311) target = $region32
        $region31: #{separable_attn.9} parent=11 // pred_region
          %s315 = ssub.s32 128, 128
          %316 = vsyncadd [#allocation5], %s315
          %s318 = sshll.u32 [#allocation6], 4
          %s319 = int_to_ptr.vmem [resolvable:$true] %s318
          %321 = dma.hbm_to_vmem [thread:$0]  %s5, 128, %s319, [#allocation5]
        $region32: #{separable_attn.9} parent=11 // pred_fallthru
          _
        // Predicated region
        $region33: #{separable_attn.9} parent=11 // pred_check
          %p322 = pneg %p184
        $region34: #{separable_attn.9} parent=11 // pred_check_branch
          %324 = sbr.rel (%p322) target = $region36
        $region35: #{separable_attn.9} parent=11 // pred_region
          _
        $region36: #{separable_attn.9} parent=11 // pred_fallthru
          _
      $region12: #{separable_attn.9} parent=5 // pred_fallthru
        _
      %p325 = scmp.lt.s32.totalorder %s18, 2
      // Predicated region
      $region37: #{separable_attn.9} parent=5 // pred_check
        %p326 = pneg %p325
      $region38: #{separable_attn.9} parent=5 // pred_check_branch
        %328 = sbr.rel (%p326) target = $region40
      $region39: #{separable_attn.9} parent=5 // pred_region
        // Predicated region
        $region41: #{separable_attn.9} parent=39 // pred_check
          %p329 = pneg %p52
        $region42: #{separable_attn.9} parent=39 // pred_check_branch
          %331 = sbr.rel (%p329) target = $region44
        $region43: #{separable_attn.9} parent=39 // pred_region
          %s332 = smul.u32 16, %s26
          %p333 = scmp.lt.s32.totalorder %s25, 1
          %s334 = scalar_select %p333, %s25, 1
          %p335 = scmp.lt.s32.totalorder %s332, 15
          %s336 = scalar_select %p335, %s332, 15
          %s337 = smul.addr %s334, 16
          %s338 = sadd.s32 %s336, %s337
          %s339 = smul.addr %s338, 8
          %s340 = scalar_lea.vmem %s0, %s339
          %s341 = smul.u32 16, %s26
        $region44: #{separable_attn.9} parent=39 // pred_fallthru
          _
      $region40: #{separable_attn.9} parent=5 // pred_fallthru
        _
      %p342 = scmp.le.s32.totalorder 1, %s18
      %p343 = scmp.lt.s32.totalorder %s18, 3
      %p344 = pnand %p342, %p343
      %p345 = pneg %p344
      // Predicated region
      $region45: #{separable_attn.9} parent=5 // pred_check
        _
      $region46: #{separable_attn.9} parent=5 // pred_check_branch
        %347 = sbr.rel (%p344) target = $region48
      $region47: #{separable_attn.9} parent=5 // pred_region
        %s348 = ssub.s32 %s18, 1
        // Predicated region
        $region49: #{separable_attn.9} parent=47 // pred_check
          %p349 = pneg %p79
        $region50: #{separable_attn.9} parent=47 // pred_check_branch
          %351 = sbr.rel (%p349) target = $region52
        $region51: #{separable_attn.9} parent=47 // pred_region
          %352 = dma.done [#allocation3], 64
        $region52: #{separable_attn.9} parent=47 // pred_fallthru
          _
        // Predicated region
        $region53: #{separable_attn.9} parent=47 // pred_check
          %p353 = pneg %p121
        $region54: #{separable_attn.9} parent=47 // pred_check_branch
          %355 = sbr.rel (%p353) target = $region56
        $region55: #{separable_attn.9} parent=47 // pred_region
          %356 = dma.done [#allocation5], 64
        $region56: #{separable_attn.9} parent=47 // pred_fallthru
          _
        // Predicated region
        $region57: #{separable_attn.9} parent=47 // pred_check
          %p357 = pneg %p163
        $region58: #{separable_attn.9} parent=47 // pred_check_branch
          %359 = sbr.rel (%p357) target = $region60
        $region59: #{separable_attn.9} parent=47 // pred_region
          %360 = dma.done [#allocation5], 128
        $region60: #{separable_attn.9} parent=47 // pred_fallthru
          _
        %s361 = smul.u32 16, %s28
        %p362 = scmp.lt.s32.totalorder %s27, 1
        %s363 = scalar_select %p362, %s27, 1
        %p364 = scmp.lt.s32.totalorder %s361, 15
        %s365 = scalar_select %p364, %s361, 15
        %s366 = smul.addr %s363, 16
        %s367 = sadd.s32 %s365, %s366
        %s368 = smul.addr %s367, 8
        %s369 = scalar_lea.vmem %s0, %s368
        %p370 = pneg %p58
        %p371 = pneg %p55
        %p372 = pneg %p79
        %p373 = pneg %p76
        %p374 = pneg %p100
        %p375 = pneg %p97
        %p376 = pneg %p121
        %p377 = pneg %p118
        %p378 = pneg %p142
        %p379 = pneg %p139
        %p380 = pneg %p163
        %p381 = pneg %p160
        %p382 = pneg %p184
        %p383 = pneg %p181
        %p384 = pneg %p212
        %p385 = pneg %p209
        %s386 = smul.u32 16, %s28
        %p387 = scmp.lt.s32.totalorder %s27, 1
        %s388 = scalar_select %p387, %s27, 1
        %p389 = scmp.lt.s32.totalorder %s386, 15
        %s390 = scalar_select %p389, %s386, 15
        %s391 = smul.addr %s388, 16
        %s392 = sadd.s32 %s390, %s391
        %s393 = smul.addr %s392, 4
        %s394 = scalar_lea.vmem %s7, %s393
        %p395 = pneg %p240
        %p396 = pneg %p237
        %s397 = smul.u32 8, %s28
        %p398 = scmp.lt.s32.totalorder %s27, 1
        %s399 = scalar_select %p398, %s27, 1
        %p400 = scmp.lt.s32.totalorder %s397, 7
        %s401 = scalar_select %p400, %s397, 7
        %s402 = smul.addr %s399, 8
        %s403 = sadd.s32 %s401, %s402
        %s404 = smul.addr %s403, 4
        %s405 = scalar_lea.vmem %s8, %s404
        %p406 = pneg %p268
        %p407 = pneg %p265
        %s408 = smul.u32 8, %s28
        %p409 = scmp.lt.s32.totalorder %s27, 1
        %s410 = scalar_select %p409, %s27, 1
        %p411 = scmp.lt.s32.totalorder %s408, 7
        %s412 = scalar_select %p411, %s408, 7
        %s413 = smul.addr %s410, 8
        %s414 = sadd.s32 %s412, %s413
        %s415 = smul.addr %s414, 8
        %s416 = scalar_lea.vmem %s9, %s415
        %s417 = smul.u32 16, %s28
        %p418 = scmp.lt.s32.totalorder %s27, 1
        %s419 = scalar_select %p418, %s27, 1
        %p420 = scmp.lt.s32.totalorder %s417, 15
        %s421 = scalar_select %p420, %s417, 15
        %s422 = smul.addr %s419, 16
        %s423 = sadd.s32 %s421, %s422
        %s424 = smul.addr %s423, 8
        %s425 = scalar_lea.vmem %s0, %s424
        %s426 = smul.u32 16, %s28
        %s427 = smul.u32 16, %s28
        %p428 = scmp.lt.s32.totalorder %s27, 1
        %s429 = scalar_select %p428, %s27, 1
        %p430 = scmp.lt.s32.totalorder %s427, 15
        %s431 = scalar_select %p430, %s427, 15
        %s432 = smul.addr %s429, 16
        %s433 = sadd.s32 %s431, %s432
        %s434 = smul.addr %s433, 4
        %s435 = scalar_lea.vmem %s7, %s434
        %s436 = smul.u32 16, %s28
        %s437 = smul.u32 8, %s28
        %p438 = scmp.lt.s32.totalorder %s27, 1
        %s439 = scalar_select %p438, %s27, 1
        %p440 = scmp.lt.s32.totalorder %s437, 7
        %s441 = scalar_select %p440, %s437, 7
        %s442 = smul.addr %s439, 8
        %s443 = sadd.s32 %s441, %s442
        %s444 = smul.addr %s443, 4
        %s445 = scalar_lea.vmem %s8, %s444
        %s446 = smul.u32 8, %s28
        %s447 = smul.u32 8, %s28
        %p448 = scmp.lt.s32.totalorder %s27, 1
        %s449 = scalar_select %p448, %s27, 1
        %p450 = scmp.lt.s32.totalorder %s447, 7
        %s451 = scalar_select %p450, %s447, 7
        %s452 = smul.addr %s449, 8
        %s453 = sadd.s32 %s451, %s452
        %s454 = smul.addr %s453, 8
        %s455 = scalar_lea.vmem %s9, %s454
        %s456 = smul.u32 8, %s28
        %v457 = vld [vmem:[%s425] sm:$0xff]
        %v458 = vld [vmem:[%s425 + $0x8] sm:$0xff]
        %v459 = vld [vmem:[%s425 + $0x10] sm:$0xff]
        %v460 = vld [vmem:[%s425 + $0x18] sm:$0xff]
        %v461 = vld [vmem:[%s425 + $0x20] sm:$0xff]
        %v462 = vld [vmem:[%s425 + $0x28] sm:$0xff]
        %v463 = vld [vmem:[%s425 + $0x30] sm:$0xff]
        %v464 = vld [vmem:[%s425 + $0x38] sm:$0xff]
        %v465 = vld [vmem:[%s425 + $0x40] sm:$0xff]
        %v466 = vld [vmem:[%s425 + $0x48] sm:$0xff]
        %v467 = vld [vmem:[%s425 + $0x50] sm:$0xff]
        %v468 = vld [vmem:[%s425 + $0x58] sm:$0xff]
        %v469 = vld [vmem:[%s425 + $0x60] sm:$0xff]
        %v470 = vld [vmem:[%s425 + $0x68] sm:$0xff]
        %v471 = vld [vmem:[%s425 + $0x70] sm:$0xff]
        %v472 = vld [vmem:[%s425 + $0x78] sm:$0xff]
        %v473 = vld [vmem:[#allocation2] sm:$0xf]
        %v474 = vld [vmem:[%s2] sm:$0xf]
        %476 = vset.pattern.permute.xlu0 0
        %477 = vperm.xlu0 %476, %v474
        %v478 = vpop.permute.xlu0 %477
        %vm480 = vcmask 64512
        %v482 = vsel %vm480, %v473, 0
        %484 = vmatprep.subr.mxu0 %v458
        %485 = vmatpush1.msra.mxu0 %v457
        %486 = vmatprep.subr.mxu0 0.0
        %487 = vmatpush1.msra.mxu0 0.0
        %488 = vmatprep.subr.mxu0 0.0
        %489 = vmatpush1.msra.mxu0 0.0
        %490 = vmatprep.subr.mxu0 0.0
        %491 = vmatpush1.msra.mxu0 0.0
        %492 = vmatprep.subr.mxu0 0.0
        %493 = vmatpush1.msra.mxu0 0.0
        %494 = vmatprep.subr.mxu0 0.0
        %495 = vmatpush1.msra.mxu0 0.0
        %496 = vmatprep.subr.mxu0 0.0
        %497 = vmatpush1.msra.mxu0 0.0
        %498 = vmatprep.subr.mxu0 0.0
        %499 = vmatpush1.msra.mxu0 0.0
        %500 = vmatprep.subr.mxu0 0.0
        %501 = vmatpush1.msra.mxu0 0.0
        %502 = vmatprep.subr.mxu0 0.0
        %503 = vmatpush1.msra.mxu0 0.0
        %504 = vmatprep.subr.mxu0 0.0
        %505 = vmatpush1.msra.mxu0 0.0
        %506 = vmatprep.subr.mxu0 0.0
        %507 = vmatpush1.msra.mxu0 0.0
        %508 = vmatprep.subr.mxu0 0.0
        %509 = vmatpush1.msra.mxu0 0.0
        %510 = vmatprep.subr.mxu0 0.0
        %511 = vmatpush1.msra.mxu0 0.0
        %512 = vmatprep.subr.mxu0 0.0
        %513 = vmatpush1.msra.mxu0 0.0
        %514 = vmatprep.subr.mxu0 0.0
        %515 = vmatpush1.msra.mxu0 0.0
        %516 = vmatprep.subr.mxu0 0.0
        %517 = vmatpush1.msra.mxu0 0.0
        %518 = vmatprep.subr.mxu0 0.0
        %519 = vmatpush1.msra.mxu0 0.0
        %520 = vmatprep.subr.mxu0 0.0
        %521 = vmatpush1.msra.mxu0 0.0
        %522 = vmatprep.subr.mxu0 0.0
        %523 = vmatpush1.msra.mxu0 0.0
        %524 = vmatprep.subr.mxu0 0.0
        %525 = vmatpush1.msra.mxu0 0.0
        %526 = vmatprep.subr.mxu0 0.0
        %527 = vmatpush1.msra.mxu0 0.0
        %528 = vmatprep.subr.mxu0 0.0
        %529 = vmatpush1.msra.mxu0 0.0
        %530 = vmatprep.subr.mxu0 0.0
        %531 = vmatpush1.msra.mxu0 0.0
        %532 = vmatprep.subr.mxu0 0.0
        %533 = vmatpush1.msra.mxu0 0.0
        %534 = vmatprep.subr.mxu0 0.0
        %535 = vmatpush1.msra.mxu0 0.0
        %536 = vmatprep.subr.mxu0 0.0
        %537 = vmatpush1.msra.mxu0 0.0
        %538 = vmatprep.subr.mxu0 0.0
        %539 = vmatpush1.msra.mxu0 0.0
        %540 = vmatprep.subr.mxu0 0.0
        %541 = vmatpush1.msra.mxu0 0.0
        %542 = vmatprep.subr.mxu0 0.0
        %543 = vmatpush1.msra.mxu0 0.0
        %544 = vmatprep.subr.mxu0 0.0
        %545 = vmatpush1.msra.mxu0 0.0
        %546 = vmatprep.subr.mxu0 0.0
        %547 = vmatpush1.msra.mxu0 0.0
        %548 = vmatprep.mubr.f32.mxu0 0.0
        %549 = vmatmul.mubr.f32.gmra.mrb[0].mxu0 %v482
        %v550 = vpop.f32.mrb[0].mxu0
        %v551 = vadd.f32 %v478, %v550
        %v552 = vpop.f32.mrb[0].mxu0
        %v553 = vadd.f32 %v478, %v552
        %554 = vdwg.mxu0
        %555 = vmatprep.subr.mxu0 %v460
        %556 = vmatpush1.msra.mxu0 %v459
        %557 = vmatprep.subr.mxu0 0.0
        %558 = vmatpush1.msra.mxu0 0.0
        %559 = vmatprep.subr.mxu0 0.0
        %560 = vmatpush1.msra.mxu0 0.0
        %561 = vmatprep.subr.mxu0 0.0
        %562 = vmatpush1.msra.mxu0 0.0
        %563 = vmatprep.subr.mxu0 0.0
        %564 = vmatpush1.msra.mxu0 0.0
        %565 = vmatprep.subr.mxu0 0.0
        %566 = vmatpush1.msra.mxu0 0.0
        %567 = vmatprep.subr.mxu0 0.0
        %568 = vmatpush1.msra.mxu0 0.0
        %569 = vmatprep.subr.mxu0 0.0
        %570 = vmatpush1.msra.mxu0 0.0
        %571 = vmatprep.subr.mxu0 0.0
        %572 = vmatpush1.msra.mxu0 0.0
        %573 = vmatprep.subr.mxu0 0.0
        %574 = vmatpush1.msra.mxu0 0.0
        %575 = vmatprep.subr.mxu0 0.0
        %576 = vmatpush1.msra.mxu0 0.0
        %577 = vmatprep.subr.mxu0 0.0
        %578 = vmatpush1.msra.mxu0 0.0
        %579 = vmatprep.subr.mxu0 0.0
        %580 = vmatpush1.msra.mxu0 0.0
        %581 = vmatprep.subr.mxu0 0.0
        %582 = vmatpush1.msra.mxu0 0.0
        %583 = vmatprep.subr.mxu0 0.0
        %584 = vmatpush1.msra.mxu0 0.0
        %585 = vmatprep.subr.mxu0 0.0
        %586 = vmatpush1.msra.mxu0 0.0
        %587 = vmatprep.subr.mxu0 0.0
        %588 = vmatpush1.msra.mxu0 0.0
        %589 = vmatprep.subr.mxu0 0.0
        %590 = vmatpush1.msra.mxu0 0.0
        %591 = vmatprep.subr.mxu0 0.0
        %592 = vmatpush1.msra.mxu0 0.0
        %593 = vmatprep.subr.mxu0 0.0
        %594 = vmatpush1.msra.mxu0 0.0
        %595 = vmatprep.subr.mxu0 0.0
        %596 = vmatpush1.msra.mxu0 0.0
        %597 = vmatprep.subr.mxu0 0.0
        %598 = vmatpush1.msra.mxu0 0.0
        %599 = vmatprep.subr.mxu0 0.0
        %600 = vmatpush1.msra.mxu0 0.0
        %601 = vmatprep.subr.mxu0 0.0
        %602 = vmatpush1.msra.mxu0 0.0
        %603 = vmatprep.subr.mxu0 0.0
        %604 = vmatpush1.msra.mxu0 0.0
        %605 = vmatprep.subr.mxu0 0.0
        %606 = vmatpush1.msra.mxu0 0.0
        %607 = vmatprep.subr.mxu0 0.0
        %608 = vmatpush1.msra.mxu0 0.0
        %609 = vmatprep.subr.mxu0 0.0
        %610 = vmatpush1.msra.mxu0 0.0
        %611 = vmatprep.subr.mxu0 0.0
        %612 = vmatpush1.msra.mxu0 0.0
        %613 = vmatprep.subr.mxu0 0.0
        %614 = vmatpush1.msra.mxu0 0.0
        %615 = vmatprep.subr.mxu0 0.0
        %616 = vmatpush1.msra.mxu0 0.0
        %617 = vmatprep.subr.mxu0 0.0
        %618 = vmatpush1.msra.mxu0 0.0
        %619 = vmatprep.mubr.f32.mxu0 0.0
        %620 = vmatmul.mubr.f32.gmra.mrb[0].mxu0 %v482
        %v621 = vpop.f32.mrb[0].mxu0
        %v622 = vadd.f32 %v478, %v621
        %v623 = vpop.f32.mrb[0].mxu0
        %v624 = vadd.f32 %v478, %v623
        %625 = vdwg.mxu0
        %626 = vmatprep.subr.mxu0 %v462
        %627 = vmatpush1.msra.mxu0 %v461
        %628 = vmatprep.subr.mxu0 0.0
        %629 = vmatpush1.msra.mxu0 0.0
        %630 = vmatprep.subr.mxu0 0.0
        %631 = vmatpush1.msra.mxu0 0.0
        %632 = vmatprep.subr.mxu0 0.0
        %633 = vmatpush1.msra.mxu0 0.0
        %634 = vmatprep.subr.mxu0 0.0
        %635 = vmatpush1.msra.mxu0 0.0
        %636 = vmatprep.subr.mxu0 0.0
        %637 = vmatpush1.msra.mxu0 0.0
        %638 = vmatprep.subr.mxu0 0.0
        %639 = vmatpush1.msra.mxu0 0.0
        %640 = vmatprep.subr.mxu0 0.0
        %641 = vmatpush1.msra.mxu0 0.0
        %642 = vmatprep.subr.mxu0 0.0
        %643 = vmatpush1.msra.mxu0 0.0
        %644 = vmatprep.subr.mxu0 0.0
        %645 = vmatpush1.msra.mxu0 0.0
        %646 = vmatprep.subr.mxu0 0.0
        %647 = vmatpush1.msra.mxu0 0.0
        %648 = vmatprep.subr.mxu0 0.0
        %649 = vmatpush1.msra.mxu0 0.0
        %650 = vmatprep.subr.mxu0 0.0
        %651 = vmatpush1.msra.mxu0 0.0
        %652 = vmatprep.subr.mxu0 0.0
        %653 = vmatpush1.msra.mxu0 0.0
        %654 = vmatprep.subr.mxu0 0.0
        %655 = vmatpush1.msra.mxu0 0.0
        %656 = vmatprep.subr.mxu0 0.0
        %657 = vmatpush1.msra.mxu0 0.0
        %658 = vmatprep.subr.mxu0 0.0
        %659 = vmatpush1.msra.mxu0 0.0
        %660 = vmatprep.subr.mxu0 0.0
        %661 = vmatpush1.msra.mxu0 0.0
        %662 = vmatprep.subr.mxu0 0.0
        %663 = vmatpush1.msra.mxu0 0.0
        %664 = vmatprep.subr.mxu0 0.0
        %665 = vmatpush1.msra.mxu0 0.0
        %666 = vmatprep.subr.mxu0 0.0
        %667 = vmatpush1.msra.mxu0 0.0
        %668 = vmatprep.subr.mxu0 0.0
        %669 = vmatpush1.msra.mxu0 0.0
        %670 = vmatprep.subr.mxu0 0.0
        %671 = vmatpush1.msra.mxu0 0.0
        %672 = vmatprep.subr.mxu0 0.0
        %673 = vmatpush1.msra.mxu0 0.0
        %674 = vmatprep.subr.mxu0 0.0
        %675 = vmatpush1.msra.mxu0 0.0
        %676 = vmatprep.subr.mxu0 0.0
        %677 = vmatpush1.msra.mxu0 0.0
        %678 = vmatprep.subr.mxu0 0.0
        %679 = vmatpush1.msra.mxu0 0.0
        %680 = vmatprep.subr.mxu0 0.0
        %681 = vmatpush1.msra.mxu0 0.0
        %682 = vmatprep.subr.mxu0 0.0
        %683 = vmatpush1.msra.mxu0 0.0
        %684 = vmatprep.subr.mxu0 0.0
        %685 = vmatpush1.msra.mxu0 0.0
        %686 = vmatprep.subr.mxu0 0.0
        %687 = vmatpush1.msra.mxu0 0.0
        %688 = vmatprep.subr.mxu0 0.0
        %689 = vmatpush1.msra.mxu0 0.0
        %690 = vmatprep.mubr.f32.mxu0 0.0
        %691 = vmatmul.mubr.f32.gmra.mrb[0].mxu0 %v482
        %v692 = vpop.f32.mrb[0].mxu0
        %v693 = vadd.f32 %v478, %v692
        %v694 = vpop.f32.mrb[0].mxu0
        %v695 = vadd.f32 %v478, %v694
        %696 = vdwg.mxu0
        %697 = vmatprep.subr.mxu0 %v464
        %698 = vmatpush1.msra.mxu0 %v463
        %699 = vmatprep.subr.mxu0 0.0
        %700 = vmatpush1.msra.mxu0 0.0
        %701 = vmatprep.subr.mxu0 0.0
        %702 = vmatpush1.msra.mxu0 0.0
        %703 = vmatprep.subr.mxu0 0.0
        %704 = vmatpush1.msra.mxu0 0.0
        %705 = vmatprep.subr.mxu0 0.0
        %706 = vmatpush1.msra.mxu0 0.0
        %707 = vmatprep.subr.mxu0 0.0
        %708 = vmatpush1.msra.mxu0 0.0
        %709 = vmatprep.subr.mxu0 0.0
        %710 = vmatpush1.msra.mxu0 0.0
        %711 = vmatprep.subr.mxu0 0.0
        %712 = vmatpush1.msra.mxu0 0.0
        %713 = vmatprep.subr.mxu0 0.0
        %714 = vmatpush1.msra.mxu0 0.0
        %715 = vmatprep.subr.mxu0 0.0
        %716 = vmatpush1.msra.mxu0 0.0
        %717 = vmatprep.subr.mxu0 0.0
        %718 = vmatpush1.msra.mxu0 0.0
        %719 = vmatprep.subr.mxu0 0.0
        %720 = vmatpush1.msra.mxu0 0.0
        %721 = vmatprep.subr.mxu0 0.0
        %722 = vmatpush1.msra.mxu0 0.0
        %723 = vmatprep.subr.mxu0 0.0
        %724 = vmatpush1.msra.mxu0 0.0
        %725 = vmatprep.subr.mxu0 0.0
        %726 = vmatpush1.msra.mxu0 0.0
        %727 = vmatprep.subr.mxu0 0.0
        %728 = vmatpush1.msra.mxu0 0.0
        %729 = vmatprep.subr.mxu0 0.0
        %730 = vmatpush1.msra.mxu0 0.0
        %731 = vmatprep.subr.mxu0 0.0
        %732 = vmatpush1.msra.mxu0 0.0
        %733 = vmatprep.subr.mxu0 0.0
        %734 = vmatpush1.msra.mxu0 0.0
        %735 = vmatprep.subr.mxu0 0.0
        %736 = vmatpush1.msra.mxu0 0.0
        %737 = vmatprep.subr.mxu0 0.0
        %738 = vmatpush1.msra.mxu0 0.0
        %739 = vmatprep.subr.mxu0 0.0
        %740 = vmatpush1.msra.mxu0 0.0
        %741 = vmatprep.subr.mxu0 0.0
        %742 = vmatpush1.msra.mxu0 0.0
        %743 = vmatprep.subr.mxu0 0.0
        %744 = vmatpush1.msra.mxu0 0.0
        %745 = vmatprep.subr.mxu0 0.0
        %746 = vmatpush1.msra.mxu0 0.0
        %747 = vmatprep.subr.mxu0 0.0
        %748 = vmatpush1.msra.mxu0 0.0
        %749 = vmatprep.subr.mxu0 0.0
        %750 = vmatpush1.msra.mxu0 0.0
        %751 = vmatprep.subr.mxu0 0.0
        %752 = vmatpush1.msra.mxu0 0.0
        %753 = vmatprep.subr.mxu0 0.0
        %754 = vmatpush1.msra.mxu0 0.0
        %755 = vmatprep.subr.mxu0 0.0
        %756 = vmatpush1.msra.mxu0 0.0
        %757 = vmatprep.subr.mxu0 0.0
        %758 = vmatpush1.msra.mxu0 0.0
        %759 = vmatprep.subr.mxu0 0.0
        %760 = vmatpush1.msra.mxu0 0.0
        %761 = vmatprep.mubr.f32.mxu0 0.0
        %762 = vmatmul.mubr.f32.gmra.mrb[0].mxu0 %v482
        %v763 = vpop.f32.mrb[0].mxu0
        %v764 = vadd.f32 %v478, %v763
        %v765 = vpop.f32.mrb[0].mxu0
        %v766 = vadd.f32 %v478, %v765
        %767 = vdwg.mxu0
        %768 = vmatprep.subr.mxu0 %v466
        %769 = vmatpush1.msra.mxu0 %v465
        %770 = vmatprep.subr.mxu0 0.0
        %771 = vmatpush1.msra.mxu0 0.0
        %772 = vmatprep.subr.mxu0 0.0
        %773 = vmatpush1.msra.mxu0 0.0
        %774 = vmatprep.subr.mxu0 0.0
        %775 = vmatpush1.msra.mxu0 0.0
        %776 = vmatprep.subr.mxu0 0.0
        %777 = vmatpush1.msra.mxu0 0.0
        %778 = vmatprep.subr.mxu0 0.0
        %779 = vmatpush1.msra.mxu0 0.0
        %780 = vmatprep.subr.mxu0 0.0
        %781 = vmatpush1.msra.mxu0 0.0
        %782 = vmatprep.subr.mxu0 0.0
        %783 = vmatpush1.msra.mxu0 0.0
        %784 = vmatprep.subr.mxu0 0.0
        %785 = vmatpush1.msra.mxu0 0.0
        %786 = vmatprep.subr.mxu0 0.0
        %787 = vmatpush1.msra.mxu0 0.0
        %788 = vmatprep.subr.mxu0 0.0
        %789 = vmatpush1.msra.mxu0 0.0
        %790 = vmatprep.subr.mxu0 0.0
        %791 = vmatpush1.msra.mxu0 0.0
        %792 = vmatprep.subr.mxu0 0.0
        %793 = vmatpush1.msra.mxu0 0.0
        %794 = vmatprep.subr.mxu0 0.0
        %795 = vmatpush1.msra.mxu0 0.0
        %796 = vmatprep.subr.mxu0 0.0
        %797 = vmatpush1.msra.mxu0 0.0
        %798 = vmatprep.subr.mxu0 0.0
        %799 = vmatpush1.msra.mxu0 0.0
        %800 = vmatprep.subr.mxu0 0.0
        %801 = vmatpush1.msra.mxu0 0.0
        %802 = vmatprep.subr.mxu0 0.0
        %803 = vmatpush1.msra.mxu0 0.0
        %804 = vmatprep.subr.mxu0 0.0
        %805 = vmatpush1.msra.mxu0 0.0
        %806 = vmatprep.subr.mxu0 0.0
        %807 = vmatpush1.msra.mxu0 0.0
        %808 = vmatprep.subr.mxu0 0.0
        %809 = vmatpush1.msra.mxu0 0.0
        %810 = vmatprep.subr.mxu0 0.0
        %811 = vmatpush1.msra.mxu0 0.0
        %812 = vmatprep.subr.mxu0 0.0
        %813 = vmatpush1.msra.mxu0 0.0
        %814 = vmatprep.subr.mxu0 0.0
        %815 = vmatpush1.msra.mxu0 0.0
        %816 = vmatprep.subr.mxu0 0.0
        %817 = vmatpush1.msra.mxu0 0.0
        %818 = vmatprep.subr.mxu0 0.0
        %819 = vmatpush1.msra.mxu0 0.0
        %820 = vmatprep.subr.mxu0 0.0
        %821 = vmatpush1.msra.mxu0 0.0
        %822 = vmatprep.subr.mxu0 0.0
        %823 = vmatpush1.msra.mxu0 0.0
        %824 = vmatprep.subr.mxu0 0.0
        %825 = vmatpush1.msra.mxu0 0.0
        %826 = vmatprep.subr.mxu0 0.0
        %827 = vmatpush1.msra.mxu0 0.0
        %828 = vmatprep.subr.mxu0 0.0
        %829 = vmatpush1.msra.mxu0 0.0
        %830 = vmatprep.subr.mxu0 0.0
        %831 = vmatpush1.msra.mxu0 0.0
        %832 = vmatprep.mubr.f32.mxu0 0.0
        %833 = vmatmul.mubr.f32.gmra.mrb[0].mxu0 %v482
        %v834 = vpop.f32.mrb[0].mxu0
        %v835 = vadd.f32 %v478, %v834
        %v836 = vpop.f32.mrb[0].mxu0
        %v837 = vadd.f32 %v478, %v836
        %838 = vdwg.mxu0
        %839 = vmatprep.subr.mxu0 %v468
        %840 = vmatpush1.msra.mxu0 %v467
        %841 = vmatprep.subr.mxu0 0.0
        %842 = vmatpush1.msra.mxu0 0.0
        %843 = vmatprep.subr.mxu0 0.0
        %844 = vmatpush1.msra.mxu0 0.0
        %845 = vmatprep.subr.mxu0 0.0
        %846 = vmatpush1.msra.mxu0 0.0
        %847 = vmatprep.subr.mxu0 0.0
        %848 = vmatpush1.msra.mxu0 0.0
        %849 = vmatprep.subr.mxu0 0.0
        %850 = vmatpush1.msra.mxu0 0.0
        %851 = vmatprep.subr.mxu0 0.0
        %852 = vmatpush1.msra.mxu0 0.0
        %853 = vmatprep.subr.mxu0 0.0
        %854 = vmatpush1.msra.mxu0 0.0
        %855 = vmatprep.subr.mxu0 0.0
        %856 = vmatpush1.msra.mxu0 0.0
        %857 = vmatprep.subr.mxu0 0.0
        %858 = vmatpush1.msra.mxu0 0.0
        %859 = vmatprep.subr.mxu0 0.0
        %860 = vmatpush1.msra.mxu0 0.0
        %861 = vmatprep.subr.mxu0 0.0
        %862 = vmatpush1.msra.mxu0 0.0
        %863 = vmatprep.subr.mxu0 0.0
        %864 = vmatpush1.msra.mxu0 0.0
        %865 = vmatprep.subr.mxu0 0.0
        %866 = vmatpush1.msra.mxu0 0.0
        %867 = vmatprep.subr.mxu0 0.0
        %868 = vmatpush1.msra.mxu0 0.0
        %869 = vmatprep.subr.mxu0 0.0
        %870 = vmatpush1.msra.mxu0 0.0
        %871 = vmatprep.subr.mxu0 0.0
        %872 = vmatpush1.msra.mxu0 0.0
        %873 = vmatprep.subr.mxu0 0.0
        %874 = vmatpush1.msra.mxu0 0.0
        %875 = vmatprep.subr.mxu0 0.0
        %876 = vmatpush1.msra.mxu0 0.0
        %877 = vmatprep.subr.mxu0 0.0
        %878 = vmatpush1.msra.mxu0 0.0
        %879 = vmatprep.subr.mxu0 0.0
        %880 = vmatpush1.msra.mxu0 0.0
        %881 = vmatprep.subr.mxu0 0.0
        %882 = vmatpush1.msra.mxu0 0.0
        %883 = vmatprep.subr.mxu0 0.0
        %884 = vmatpush1.msra.mxu0 0.0
        %885 = vmatprep.subr.mxu0 0.0
        %886 = vmatpush1.msra.mxu0 0.0
        %887 = vmatprep.subr.mxu0 0.0
        %888 = vmatpush1.msra.mxu0 0.0
        %889 = vmatprep.subr.mxu0 0.0
        %890 = vmatpush1.msra.mxu0 0.0
        %891 = vmatprep.subr.mxu0 0.0
        %892 = vmatpush1.msra.mxu0 0.0
        %893 = vmatprep.subr.mxu0 0.0
        %894 = vmatpush1.msra.mxu0 0.0
        %895 = vmatprep.subr.mxu0 0.0
        %896 = vmatpush1.msra.mxu0 0.0
        %897 = vmatprep.subr.mxu0 0.0
        %898 = vmatpush1.msra.mxu0 0.0
        %899 = vmatprep.subr.mxu0 0.0
        %900 = vmatpush1.msra.mxu0 0.0
        %901 = vmatprep.subr.mxu0 0.0
        %902 = vmatpush1.msra.mxu0 0.0
        %903 = vmatprep.mubr.f32.mxu0 0.0
        %904 = vmatmul.mubr.f32.gmra.mrb[0].mxu0 %v482
        %v905 = vpop.f32.mrb[0].mxu0
        %v906 = vadd.f32 %v478, %v905
        %v907 = vpop.f32.mrb[0].mxu0
        %v908 = vadd.f32 %v478, %v907
        %909 = vdwg.mxu0
        %910 = vmatprep.subr.mxu0 %v470
        %911 = vmatpush1.msra.mxu0 %v469
        %912 = vmatprep.subr.mxu0 0.0
        %913 = vmatpush1.msra.mxu0 0.0
        %914 = vmatprep.subr.mxu0 0.0
        %915 = vmatpush1.msra.mxu0 0.0
        %916 = vmatprep.subr.mxu0 0.0
        %917 = vmatpush1.msra.mxu0 0.0
        %918 = vmatprep.subr.mxu0 0.0
        %919 = vmatpush1.msra.mxu0 0.0
        %920 = vmatprep.subr.mxu0 0.0
        %921 = vmatpush1.msra.mxu0 0.0
        %922 = vmatprep.subr.mxu0 0.0
        %923 = vmatpush1.msra.mxu0 0.0
        %924 = vmatprep.subr.mxu0 0.0
        %925 = vmatpush1.msra.mxu0 0.0
        %926 = vmatprep.subr.mxu0 0.0
        %927 = vmatpush1.msra.mxu0 0.0
        %928 = vmatprep.subr.mxu0 0.0
        %929 = vmatpush1.msra.mxu0 0.0
        %930 = vmatprep.subr.mxu0 0.0
        %931 = vmatpush1.msra.mxu0 0.0
        %932 = vmatprep.subr.mxu0 0.0
        %933 = vmatpush1.msra.mxu0 0.0
        %934 = vmatprep.subr.mxu0 0.0
        %935 = vmatpush1.msra.mxu0 0.0
        %936 = vmatprep.subr.mxu0 0.0
        %937 = vmatpush1.msra.mxu0 0.0
        %938 = vmatprep.subr.mxu0 0.0
        %939 = vmatpush1.msra.mxu0 0.0
        %940 = vmatprep.subr.mxu0 0.0
        %941 = vmatpush1.msra.mxu0 0.0
        %942 = vmatprep.subr.mxu0 0.0
        %943 = vmatpush1.msra.mxu0 0.0
        %944 = vmatprep.subr.mxu0 0.0
        %945 = vmatpush1.msra.mxu0 0.0
        %946 = vmatprep.subr.mxu0 0.0
        %947 = vmatpush1.msra.mxu0 0.0
        %948 = vmatprep.subr.mxu0 0.0
        %949 = vmatpush1.msra.mxu0 0.0
        %950 = vmatprep.subr.mxu0 0.0
        %951 = vmatpush1.msra.mxu0 0.0
        %952 = vmatprep.subr.mxu0 0.0
        %953 = vmatpush1.msra.mxu0 0.0
        %954 = vmatprep.subr.mxu0 0.0
        %955 = vmatpush1.msra.mxu0 0.0
        %956 = vmatprep.subr.mxu0 0.0
        %957 = vmatpush1.msra.mxu0 0.0
        %958 = vmatprep.subr.mxu0 0.0
        %959 = vmatpush1.msra.mxu0 0.0
        %960 = vmatprep.subr.mxu0 0.0
        %961 = vmatpush1.msra.mxu0 0.0
        %962 = vmatprep.subr.mxu0 0.0
        %963 = vmatpush1.msra.mxu0 0.0
        %964 = vmatprep.subr.mxu0 0.0
        %965 = vmatpush1.msra.mxu0 0.0
        %966 = vmatprep.subr.mxu0 0.0
        %967 = vmatpush1.msra.mxu0 0.0
        %968 = vmatprep.subr.mxu0 0.0
        %969 = vmatpush1.msra.mxu0 0.0
        %970 = vmatprep.subr.mxu0 0.0
        %971 = vmatpush1.msra.mxu0 0.0
        %972 = vmatprep.subr.mxu0 0.0
        %973 = vmatpush1.msra.mxu0 0.0
        %974 = vmatprep.mubr.f32.mxu0 0.0
        %975 = vmatmul.mubr.f32.gmra.mrb[0].mxu0 %v482
        %v976 = vpop.f32.mrb[0].mxu0
        %v977 = vadd.f32 %v478, %v976
        %v978 = vpop.f32.mrb[0].mxu0
        %v979 = vadd.f32 %v478, %v978
        %980 = vdwg.mxu0
        %981 = vmatprep.subr.mxu0 %v472
        %982 = vmatpush1.msra.mxu0 %v471
        %983 = vmatprep.subr.mxu0 0.0
        %984 = vmatpush1.msra.mxu0 0.0
        %985 = vmatprep.subr.mxu0 0.0
        %986 = vmatpush1.msra.mxu0 0.0
        %987 = vmatprep.subr.mxu0 0.0
        %988 = vmatpush1.msra.mxu0 0.0
        %989 = vmatprep.subr.mxu0 0.0
        %990 = vmatpush1.msra.mxu0 0.0
        %991 = vmatprep.subr.mxu0 0.0
        %992 = vmatpush1.msra.mxu0 0.0
        %993 = vmatprep.subr.mxu0 0.0
        %994 = vmatpush1.msra.mxu0 0.0
        %995 = vmatprep.subr.mxu0 0.0
        %996 = vmatpush1.msra.mxu0 0.0
        %997 = vmatprep.subr.mxu0 0.0
        %998 = vmatpush1.msra.mxu0 0.0
        %999 = vmatprep.subr.mxu0 0.0
        %1000 = vmatpush1.msra.mxu0 0.0
        %1001 = vmatprep.subr.mxu0 0.0
        %1002 = vmatpush1.msra.mxu0 0.0
        %1003 = vmatprep.subr.mxu0 0.0
        %1004 = vmatpush1.msra.mxu0 0.0
        %1005 = vmatprep.subr.mxu0 0.0
        %1006 = vmatpush1.msra.mxu0 0.0
        %1007 = vmatprep.subr.mxu0 0.0
        %1008 = vmatpush1.msra.mxu0 0.0
        %1009 = vmatprep.subr.mxu0 0.0
        %1010 = vmatpush1.msra.mxu0 0.0
        %1011 = vmatprep.subr.mxu0 0.0
        %1012 = vmatpush1.msra.mxu0 0.0
        %1013 = vmatprep.subr.mxu0 0.0
        %1014 = vmatpush1.msra.mxu0 0.0
        %1015 = vmatprep.subr.mxu0 0.0
        %1016 = vmatpush1.msra.mxu0 0.0
        %1017 = vmatprep.subr.mxu0 0.0
        %1018 = vmatpush1.msra.mxu0 0.0
        %1019 = vmatprep.subr.mxu0 0.0
        %1020 = vmatpush1.msra.mxu0 0.0
        %1021 = vmatprep.subr.mxu0 0.0
        %1022 = vmatpush1.msra.mxu0 0.0
        %1023 = vmatprep.subr.mxu0 0.0
        %1024 = vmatpush1.msra.mxu0 0.0
        %1025 = vmatprep.subr.mxu0 0.0
        %1026 = vmatpush1.msra.mxu0 0.0
        %1027 = vmatprep.subr.mxu0 0.0
        %1028 = vmatpush1.msra.mxu0 0.0
        %1029 = vmatprep.subr.mxu0 0.0
        %1030 = vmatpush1.msra.mxu0 0.0
        %1031 = vmatprep.subr.mxu0 0.0
        %1032 = vmatpush1.msra.mxu0 0.0
        %1033 = vmatprep.subr.mxu0 0.0
        %1034 = vmatpush1.msra.mxu0 0.0
        %1035 = vmatprep.subr.mxu0 0.0
        %1036 = vmatpush1.msra.mxu0 0.0
        %1037 = vmatprep.subr.mxu0 0.0
        %1038 = vmatpush1.msra.mxu0 0.0
        %1039 = vmatprep.subr.mxu0 0.0
        %1040 = vmatpush1.msra.mxu0 0.0
        %1041 = vmatprep.subr.mxu0 0.0
        %1042 = vmatpush1.msra.mxu0 0.0
        %1043 = vmatprep.subr.mxu0 0.0
        %1044 = vmatpush1.msra.mxu0 0.0
        %1045 = vmatprep.mubr.f32.mxu0 0.0
        %1046 = vmatmul.mubr.f32.gmra.mrb[0].mxu0 %v482
        %v1047 = vpop.f32.mrb[0].mxu0
        %v1048 = vadd.f32 %v478, %v1047
        %v1049 = vpop.f32.mrb[0].mxu0
        %v1050 = vadd.f32 %v478, %v1049
        %1051 = vdwg.mxu0
        %v1068 = vcombine.low %v551, %v553
        %v1069 = vcombine.low %v622, %v624
        %v1070 = vcombine.low %v693, %v695
        %v1071 = vcombine.low %v764, %v766
        %v1072 = vcombine.low %v835, %v837
        %v1073 = vcombine.low %v906, %v908
        %v1074 = vcombine.low %v977, %v979
        %v1075 = vcombine.low %v1048, %v1050
        %1084 = vst [vmem:[%s435] sm:$0xff] %v1068
        %1085 = vst [vmem:[%s435 + $0x8] sm:$0xff] %v1069
        %1086 = vst [vmem:[%s435 + $0x10] sm:$0xff] %v1070
        %1087 = vst [vmem:[%s435 + $0x18] sm:$0xff] %v1071
        %1088 = vst [vmem:[%s435 + $0x20] sm:$0xff] %v1072
        %1089 = vst [vmem:[%s435 + $0x28] sm:$0xff] %v1073
        %1090 = vst [vmem:[%s435 + $0x30] sm:$0xff] %v1074
        %1091 = vst [vmem:[%s435 + $0x38] sm:$0xff] %v1075
        %v1092 = vld [vmem:[#allocation4] sm:$0xf]
        %v1093 = vld [vmem:[%s4] sm:$0xf]
        %1095 = vset.pattern.permute.xlu0 0
        %1096 = vperm.xlu0 %1095, %v1093
        %v1097 = vpop.permute.xlu0 %1096
        %v1100 = vsel %vm480, %v1092, 0
        %1102 = vmatprep.subr.mxu0 %v458
        %1103 = vmatpush1.msra.mxu0 %v457
        %1104 = vmatprep.subr.mxu0 0.0
        %1105 = vmatpush1.msra.mxu0 0.0
        %1106 = vmatprep.subr.mxu0 0.0
        %1107 = vmatpush1.msra.mxu0 0.0
        %1108 = vmatprep.subr.mxu0 0.0
        %1109 = vmatpush1.msra.mxu0 0.0
        %1110 = vmatprep.subr.mxu0 0.0
        %1111 = vmatpush1.msra.mxu0 0.0
        %1112 = vmatprep.subr.mxu0 0.0
        %1113 = vmatpush1.msra.mxu0 0.0
        %1114 = vmatprep.subr.mxu0 0.0
        %1115 = vmatpush1.msra.mxu0 0.0
        %1116 = vmatprep.subr.mxu0 0.0
        %1117 = vmatpush1.msra.mxu0 0.0
        %1118 = vmatprep.subr.mxu0 0.0
        %1119 = vmatpush1.msra.mxu0 0.0
        %1120 = vmatprep.subr.mxu0 0.0
        %1121 = vmatpush1.msra.mxu0 0.0
        %1122 = vmatprep.subr.mxu0 0.0
        %1123 = vmatpush1.msra.mxu0 0.0
        %1124 = vmatprep.subr.mxu0 0.0
        %1125 = vmatpush1.msra.mxu0 0.0
        %1126 = vmatprep.subr.mxu0 0.0
        %1127 = vmatpush1.msra.mxu0 0.0
        %1128 = vmatprep.subr.mxu0 0.0
        %1129 = vmatpush1.msra.mxu0 0.0
        %1130 = vmatprep.subr.mxu0 0.0
        %1131 = vmatpush1.msra.mxu0 0.0
        %1132 = vmatprep.subr.mxu0 0.0
        %1133 = vmatpush1.msra.mxu0 0.0
        %1134 = vmatprep.subr.mxu0 0.0
        %1135 = vmatpush1.msra.mxu0 0.0
        %1136 = vmatprep.subr.mxu0 0.0
        %1137 = vmatpush1.msra.mxu0 0.0
        %1138 = vmatprep.subr.mxu0 0.0
        %1139 = vmatpush1.msra.mxu0 0.0
        %1140 = vmatprep.subr.mxu0 0.0
        %1141 = vmatpush1.msra.mxu0 0.0
        %1142 = vmatprep.subr.mxu0 0.0
        %1143 = vmatpush1.msra.mxu0 0.0
        %1144 = vmatprep.subr.mxu0 0.0
        %1145 = vmatpush1.msra.mxu0 0.0
        %1146 = vmatprep.subr.mxu0 0.0
        %1147 = vmatpush1.msra.mxu0 0.0
        %1148 = vmatprep.subr.mxu0 0.0
        %1149 = vmatpush1.msra.mxu0 0.0
        %1150 = vmatprep.subr.mxu0 0.0
        %1151 = vmatpush1.msra.mxu0 0.0
        %1152 = vmatprep.subr.mxu0 0.0
        %1153 = vmatpush1.msra.mxu0 0.0
        %1154 = vmatprep.subr.mxu0 0.0
        %1155 = vmatpush1.msra.mxu0 0.0
        %1156 = vmatprep.subr.mxu0 0.0
        %1157 = vmatpush1.msra.mxu0 0.0
        %1158 = vmatprep.subr.mxu0 0.0
        %1159 = vmatpush1.msra.mxu0 0.0
        %1160 = vmatprep.subr.mxu0 0.0
        %1161 = vmatpush1.msra.mxu0 0.0
        %1162 = vmatprep.subr.mxu0 0.0
        %1163 = vmatpush1.msra.mxu0 0.0
        %1164 = vmatprep.subr.mxu0 0.0
        %1165 = vmatpush1.msra.mxu0 0.0
        %1166 = vmatprep.mubr.f32.mxu0 0.0
        %1167 = vmatmul.mubr.f32.gmra.mrb[0].mxu0 %v1100
        %v1168 = vpop.f32.mrb[0].mxu0
        %v1169 = vadd.f32 %v1097, %v1168
        %v1170 = vpop.f32.mrb[0].mxu0
        %v1171 = vadd.f32 %v1097, %v1170
        %1172 = vdwg.mxu0
        %1173 = vmatprep.subr.mxu0 %v460
        %1174 = vmatpush1.msra.mxu0 %v459
        %1175 = vmatprep.subr.mxu0 0.0
        %1176 = vmatpush1.msra.mxu0 0.0
        %1177 = vmatprep.subr.mxu0 0.0
        %1178 = vmatpush1.msra.mxu0 0.0
        %1179 = vmatprep.subr.mxu0 0.0
        %1180 = vmatpush1.msra.mxu0 0.0
        %1181 = vmatprep.subr.mxu0 0.0
        %1182 = vmatpush1.msra.mxu0 0.0
        %1183 = vmatprep.subr.mxu0 0.0
        %1184 = vmatpush1.msra.mxu0 0.0
        %1185 = vmatprep.subr.mxu0 0.0
        %1186 = vmatpush1.msra.mxu0 0.0
        %1187 = vmatprep.subr.mxu0 0.0
        %1188 = vmatpush1.msra.mxu0 0.0
        %1189 = vmatprep.subr.mxu0 0.0
        %1190 = vmatpush1.msra.mxu0 0.0
        %1191 = vmatprep.subr.mxu0 0.0
        %1192 = vmatpush1.msra.mxu0 0.0
        %1193 = vmatprep.subr.mxu0 0.0
        %1194 = vmatpush1.msra.mxu0 0.0
        %1195 = vmatprep.subr.mxu0 0.0
        %1196 = vmatpush1.msra.mxu0 0.0
        %1197 = vmatprep.subr.mxu0 0.0
        %1198 = vmatpush1.msra.mxu0 0.0
        %1199 = vmatprep.subr.mxu0 0.0
        %1200 = vmatpush1.msra.mxu0 0.0
        %1201 = vmatprep.subr.mxu0 0.0
        %1202 = vmatpush1.msra.mxu0 0.0
        %1203 = vmatprep.subr.mxu0 0.0
        %1204 = vmatpush1.msra.mxu0 0.0
        %1205 = vmatprep.subr.mxu0 0.0
        %1206 = vmatpush1.msra.mxu0 0.0
        %1207 = vmatprep.subr.mxu0 0.0
        %1208 = vmatpush1.msra.mxu0 0.0
        %1209 = vmatprep.subr.mxu0 0.0
        %1210 = vmatpush1.msra.mxu0 0.0
        %1211 = vmatprep.subr.mxu0 0.0
        %1212 = vmatpush1.msra.mxu0 0.0
        %1213 = vmatprep.subr.mxu0 0.0
        %1214 = vmatpush1.msra.mxu0 0.0
        %1215 = vmatprep.subr.mxu0 0.0
        %1216 = vmatpush1.msra.mxu0 0.0
        %1217 = vmatprep.subr.mxu0 0.0
        %1218 = vmatpush1.msra.mxu0 0.0
        %1219 = vmatprep.subr.mxu0 0.0
        %1220 = vmatpush1.msra.mxu0 0.0
        %1221 = vmatprep.subr.mxu0 0.0
        %1222 = vmatpush1.msra.mxu0 0.0
        %1223 = vmatprep.subr.mxu0 0.0
        %1224 = vmatpush1.msra.mxu0 0.0
        %1225 = vmatprep.subr.mxu0 0.0
        %1226 = vmatpush1.msra.mxu0 0.0
        %1227 = vmatprep.subr.mxu0 0.0
        %1228 = vmatpush1.msra.mxu0 0.0
        %1229 = vmatprep.subr.mxu0 0.0
        %1230 = vmatpush1.msra.mxu0 0.0
        %1231 = vmatprep.subr.mxu0 0.0
        %1232 = vmatpush1.msra.mxu0 0.0
        %1233 = vmatprep.subr.mxu0 0.0
        %1234 = vmatpush1.msra.mxu0 0.0
        %1235 = vmatprep.subr.mxu0 0.0
        %1236 = vmatpush1.msra.mxu0 0.0
        %1237 = vmatprep.mubr.f32.mxu0 0.0
        %1238 = vmatmul.mubr.f32.gmra.mrb[0].mxu0 %v1100
        %v1239 = vpop.f32.mrb[0].mxu0
        %v1240 = vadd.f32 %v1097, %v1239
        %v1241 = vpop.f32.mrb[0].mxu0
        %v1242 = vadd.f32 %v1097, %v1241
        %1243 = vdwg.mxu0
        %1244 = vmatprep.subr.mxu0 %v462
        %1245 = vmatpush1.msra.mxu0 %v461
        %1246 = vmatprep.subr.mxu0 0.0
        %1247 = vmatpush1.msra.mxu0 0.0
        %1248 = vmatprep.subr.mxu0 0.0
        %1249 = vmatpush1.msra.mxu0 0.0
        %1250 = vmatprep.subr.mxu0 0.0
        %1251 = vmatpush1.msra.mxu0 0.0
        %1252 = vmatprep.subr.mxu0 0.0
        %1253 = vmatpush1.msra.mxu0 0.0
        %1254 = vmatprep.subr.mxu0 0.0
        %1255 = vmatpush1.msra.mxu0 0.0
        %1256 = vmatprep.subr.mxu0 0.0
        %1257 = vmatpush1.msra.mxu0 0.0
        %1258 = vmatprep.subr.mxu0 0.0
        %1259 = vmatpush1.msra.mxu0 0.0
        %1260 = vmatprep.subr.mxu0 0.0
        %1261 = vmatpush1.msra.mxu0 0.0
        %1262 = vmatprep.subr.mxu0 0.0
        %1263 = vmatpush1.msra.mxu0 0.0
        %1264 = vmatprep.subr.mxu0 0.0
        %1265 = vmatpush1.msra.mxu0 0.0
        %1266 = vmatprep.subr.mxu0 0.0
        %1267 = vmatpush1.msra.mxu0 0.0
        %1268 = vmatprep.subr.mxu0 0.0
        %1269 = vmatpush1.msra.mxu0 0.0
        %1270 = vmatprep.subr.mxu0 0.0
        %1271 = vmatpush1.msra.mxu0 0.0
        %1272 = vmatprep.subr.mxu0 0.0
        %1273 = vmatpush1.msra.mxu0 0.0
        %1274 = vmatprep.subr.mxu0 0.0
        %1275 = vmatpush1.msra.mxu0 0.0
        %1276 = vmatprep.subr.mxu0 0.0
        %1277 = vmatpush1.msra.mxu0 0.0
        %1278 = vmatprep.subr.mxu0 0.0
        %1279 = vmatpush1.msra.mxu0 0.0
        %1280 = vmatprep.subr.mxu0 0.0
        %1281 = vmatpush1.msra.mxu0 0.0
        %1282 = vmatprep.subr.mxu0 0.0
        %1283 = vmatpush1.msra.mxu0 0.0
        %1284 = vmatprep.subr.mxu0 0.0
        %1285 = vmatpush1.msra.mxu0 0.0
        %1286 = vmatprep.subr.mxu0 0.0
        %1287 = vmatpush1.msra.mxu0 0.0
        %1288 = vmatprep.subr.mxu0 0.0
        %1289 = vmatpush1.msra.mxu0 0.0
        %1290 = vmatprep.subr.mxu0 0.0
        %1291 = vmatpush1.msra.mxu0 0.0
        %1292 = vmatprep.subr.mxu0 0.0
        %1293 = vmatpush1.msra.mxu0 0.0
        %1294 = vmatprep.subr.mxu0 0.0
        %1295 = vmatpush1.msra.mxu0 0.0
        %1296 = vmatprep.subr.mxu0 0.0
        %1297 = vmatpush1.msra.mxu0 0.0
        %1298 = vmatprep.subr.mxu0 0.0
        %1299 = vmatpush1.msra.mxu0 0.0
        %1300 = vmatprep.subr.mxu0 0.0
        %1301 = vmatpush1.msra.mxu0 0.0
        %1302 = vmatprep.subr.mxu0 0.0
        %1303 = vmatpush1.msra.mxu0 0.0
        %1304 = vmatprep.subr.mxu0 0.0
        %1305 = vmatpush1.msra.mxu0 0.0
        %1306 = vmatprep.subr.mxu0 0.0
        %1307 = vmatpush1.msra.mxu0 0.0
        %1308 = vmatprep.mubr.f32.mxu0 0.0
        %1309 = vmatmul.mubr.f32.gmra.mrb[0].mxu0 %v1100
        %v1310 = vpop.f32.mrb[0].mxu0
        %v1311 = vadd.f32 %v1097, %v1310
        %v1312 = vpop.f32.mrb[0].mxu0
        %v1313 = vadd.f32 %v1097, %v1312
        %1314 = vdwg.mxu0
        %1315 = vmatprep.subr.mxu0 %v464
        %1316 = vmatpush1.msra.mxu0 %v463
        %1317 = vmatprep.subr.mxu0 0.0
        %1318 = vmatpush1.msra.mxu0 0.0
        %1319 = vmatprep.subr.mxu0 0.0
        %1320 = vmatpush1.msra.mxu0 0.0
        %1321 = vmatprep.subr.mxu0 0.0
        %1322 = vmatpush1.msra.mxu0 0.0
        %1323 = vmatprep.subr.mxu0 0.0
        %1324 = vmatpush1.msra.mxu0 0.0
        %1325 = vmatprep.subr.mxu0 0.0
        %1326 = vmatpush1.msra.mxu0 0.0
        %1327 = vmatprep.subr.mxu0 0.0
        %1328 = vmatpush1.msra.mxu0 0.0
        %1329 = vmatprep.subr.mxu0 0.0
        %1330 = vmatpush1.msra.mxu0 0.0
        %1331 = vmatprep.subr.mxu0 0.0
        %1332 = vmatpush1.msra.mxu0 0.0
        %1333 = vmatprep.subr.mxu0 0.0
        %1334 = vmatpush1.msra.mxu0 0.0
        %1335 = vmatprep.subr.mxu0 0.0
        %1336 = vmatpush1.msra.mxu0 0.0
        %1337 = vmatprep.subr.mxu0 0.0
        %1338 = vmatpush1.msra.mxu0 0.0
        %1339 = vmatprep.subr.mxu0 0.0
        %1340 = vmatpush1.msra.mxu0 0.0
        %1341 = vmatprep.subr.mxu0 0.0
        %1342 = vmatpush1.msra.mxu0 0.0
        %1343 = vmatprep.subr.mxu0 0.0
        %1344 = vmatpush1.msra.mxu0 0.0
        %1345 = vmatprep.subr.mxu0 0.0
        %1346 = vmatpush1.msra.mxu0 0.0
        %1347 = vmatprep.subr.mxu0 0.0
        %1348 = vmatpush1.msra.mxu0 0.0
        %1349 = vmatprep.subr.mxu0 0.0
        %1350 = vmatpush1.msra.mxu0 0.0
        %1351 = vmatprep.subr.mxu0 0.0
        %1352 = vmatpush1.msra.mxu0 0.0
        %1353 = vmatprep.subr.mxu0 0.0
        %1354 = vmatpush1.msra.mxu0 0.0
        %1355 = vmatprep.subr.mxu0 0.0
        %1356 = vmatpush1.msra.mxu0 0.0
        %1357 = vmatprep.subr.mxu0 0.0
        %1358 = vmatpush1.msra.mxu0 0.0
        %1359 = vmatprep.subr.mxu0 0.0
        %1360 = vmatpush1.msra.mxu0 0.0
        %1361 = vmatprep.subr.mxu0 0.0
        %1362 = vmatpush1.msra.mxu0 0.0
        %1363 = vmatprep.subr.mxu0 0.0
        %1364 = vmatpush1.msra.mxu0 0.0
        %1365 = vmatprep.subr.mxu0 0.0
        %1366 = vmatpush1.msra.mxu0 0.0
        %1367 = vmatprep.subr.mxu0 0.0
        %1368 = vmatpush1.msra.mxu0 0.0
        %1369 = vmatprep.subr.mxu0 0.0
        %1370 = vmatpush1.msra.mxu0 0.0
        %1371 = vmatprep.subr.mxu0 0.0
        %1372 = vmatpush1.msra.mxu0 0.0
        %1373 = vmatprep.subr.mxu0 0.0
        %1374 = vmatpush1.msra.mxu0 0.0
        %1375 = vmatprep.subr.mxu0 0.0
        %1376 = vmatpush1.msra.mxu0 0.0
        %1377 = vmatprep.subr.mxu0 0.0
        %1378 = vmatpush1.msra.mxu0 0.0
        %1379 = vmatprep.mubr.f32.mxu0 0.0
        %1380 = vmatmul.mubr.f32.gmra.mrb[0].mxu0 %v1100
        %v1381 = vpop.f32.mrb[0].mxu0
        %v1382 = vadd.f32 %v1097, %v1381
        %v1383 = vpop.f32.mrb[0].mxu0
        %v1384 = vadd.f32 %v1097, %v1383
        %1385 = vdwg.mxu0
        %1386 = vmatprep.subr.mxu0 %v466
        %1387 = vmatpush1.msra.mxu0 %v465
        %1388 = vmatprep.subr.mxu0 0.0
        %1389 = vmatpush1.msra.mxu0 0.0
        %1390 = vmatprep.subr.mxu0 0.0
        %1391 = vmatpush1.msra.mxu0 0.0
        %1392 = vmatprep.subr.mxu0 0.0
        %1393 = vmatpush1.msra.mxu0 0.0
        %1394 = vmatprep.subr.mxu0 0.0
        %1395 = vmatpush1.msra.mxu0 0.0
        %1396 = vmatprep.subr.mxu0 0.0
        %1397 = vmatpush1.msra.mxu0 0.0
        %1398 = vmatprep.subr.mxu0 0.0
        %1399 = vmatpush1.msra.mxu0 0.0
        %1400 = vmatprep.subr.mxu0 0.0
        %1401 = vmatpush1.msra.mxu0 0.0
        %1402 = vmatprep.subr.mxu0 0.0
        %1403 = vmatpush1.msra.mxu0 0.0
        %1404 = vmatprep.subr.mxu0 0.0
        %1405 = vmatpush1.msra.mxu0 0.0
        %1406 = vmatprep.subr.mxu0 0.0
        %1407 = vmatpush1.msra.mxu0 0.0
        %1408 = vmatprep.subr.mxu0 0.0
        %1409 = vmatpush1.msra.mxu0 0.0
        %1410 = vmatprep.subr.mxu0 0.0
        %1411 = vmatpush1.msra.mxu0 0.0
        %1412 = vmatprep.subr.mxu0 0.0
        %1413 = vmatpush1.msra.mxu0 0.0
        %1414 = vmatprep.subr.mxu0 0.0
        %1415 = vmatpush1.msra.mxu0 0.0
        %1416 = vmatprep.subr.mxu0 0.0
        %1417 = vmatpush1.msra.mxu0 0.0
        %1418 = vmatprep.subr.mxu0 0.0
        %1419 = vmatpush1.msra.mxu0 0.0
        %1420 = vmatprep.subr.mxu0 0.0
        %1421 = vmatpush1.msra.mxu0 0.0
        %1422 = vmatprep.subr.mxu0 0.0
        %1423 = vmatpush1.msra.mxu0 0.0
        %1424 = vmatprep.subr.mxu0 0.0
        %1425 = vmatpush1.msra.mxu0 0.0
        %1426 = vmatprep.subr.mxu0 0.0
        %1427 = vmatpush1.msra.mxu0 0.0
        %1428 = vmatprep.subr.mxu0 0.0
        %1429 = vmatpush1.msra.mxu0 0.0
        %1430 = vmatprep.subr.mxu0 0.0
        %1431 = vmatpush1.msra.mxu0 0.0
        %1432 = vmatprep.subr.mxu0 0.0
        %1433 = vmatpush1.msra.mxu0 0.0
        %1434 = vmatprep.subr.mxu0 0.0
        %1435 = vmatpush1.msra.mxu0 0.0
        %1436 = vmatprep.subr.mxu0 0.0
        %1437 = vmatpush1.msra.mxu0 0.0
        %1438 = vmatprep.subr.mxu0 0.0
        %1439 = vmatpush1.msra.mxu0 0.0
        %1440 = vmatprep.subr.mxu0 0.0
        %1441 = vmatpush1.msra.mxu0 0.0
        %1442 = vmatprep.subr.mxu0 0.0
        %1443 = vmatpush1.msra.mxu0 0.0
        %1444 = vmatprep.subr.mxu0 0.0
        %1445 = vmatpush1.msra.mxu0 0.0
        %1446 = vmatprep.subr.mxu0 0.0
        %1447 = vmatpush1.msra.mxu0 0.0
        %1448 = vmatprep.subr.mxu0 0.0
        %1449 = vmatpush1.msra.mxu0 0.0
        %1450 = vmatprep.mubr.f32.mxu0 0.0
        %1451 = vmatmul.mubr.f32.gmra.mrb[0].mxu0 %v1100
        %v1452 = vpop.f32.mrb[0].mxu0
        %v1453 = vadd.f32 %v1097, %v1452
        %v1454 = vpop.f32.mrb[0].mxu0
        %v1455 = vadd.f32 %v1097, %v1454
        %1456 = vdwg.mxu0
        %1457 = vmatprep.subr.mxu0 %v468
        %1458 = vmatpush1.msra.mxu0 %v467
        %1459 = vmatprep.subr.mxu0 0.0
        %1460 = vmatpush1.msra.mxu0 0.0
        %1461 = vmatprep.subr.mxu0 0.0
        %1462 = vmatpush1.msra.mxu0 0.0
        %1463 = vmatprep.subr.mxu0 0.0
        %1464 = vmatpush1.msra.mxu0 0.0
        %1465 = vmatprep.subr.mxu0 0.0
        %1466 = vmatpush1.msra.mxu0 0.0
        %1467 = vmatprep.subr.mxu0 0.0
        %1468 = vmatpush1.msra.mxu0 0.0
        %1469 = vmatprep.subr.mxu0 0.0
        %1470 = vmatpush1.msra.mxu0 0.0
        %1471 = vmatprep.subr.mxu0 0.0
        %1472 = vmatpush1.msra.mxu0 0.0
        %1473 = vmatprep.subr.mxu0 0.0
        %1474 = vmatpush1.msra.mxu0 0.0
        %1475 = vmatprep.subr.mxu0 0.0
        %1476 = vmatpush1.msra.mxu0 0.0
        %1477 = vmatprep.subr.mxu0 0.0
        %1478 = vmatpush1.msra.mxu0 0.0
        %1479 = vmatprep.subr.mxu0 0.0
        %1480 = vmatpush1.msra.mxu0 0.0
        %1481 = vmatprep.subr.mxu0 0.0
        %1482 = vmatpush1.msra.mxu0 0.0
        %1483 = vmatprep.subr.mxu0 0.0
        %1484 = vmatpush1.msra.mxu0 0.0
        %1485 = vmatprep.subr.mxu0 0.0
        %1486 = vmatpush1.msra.mxu0 0.0
        %1487 = vmatprep.subr.mxu0 0.0
        %1488 = vmatpush1.msra.mxu0 0.0
        %1489 = vmatprep.subr.mxu0 0.0
        %1490 = vmatpush1.msra.mxu0 0.0
        %1491 = vmatprep.subr.mxu0 0.0
        %1492 = vmatpush1.msra.mxu0 0.0
        %1493 = vmatprep.subr.mxu0 0.0
        %1494 = vmatpush1.msra.mxu0 0.0
        %1495 = vmatprep.subr.mxu0 0.0
        %1496 = vmatpush1.msra.mxu0 0.0
        %1497 = vmatprep.subr.mxu0 0.0
        %1498 = vmatpush1.msra.mxu0 0.0
        %1499 = vmatprep.subr.mxu0 0.0
        %1500 = vmatpush1.msra.mxu0 0.0
        %1501 = vmatprep.subr.mxu0 0.0
        %1502 = vmatpush1.msra.mxu0 0.0
        %1503 = vmatprep.subr.mxu0 0.0
        %1504 = vmatpush1.msra.mxu0 0.0
        %1505 = vmatprep.subr.mxu0 0.0
        %1506 = vmatpush1.msra.mxu0 0.0
        %1507 = vmatprep.subr.mxu0 0.0
        %1508 = vmatpush1.msra.mxu0 0.0
        %1509 = vmatprep.subr.mxu0 0.0
        %1510 = vmatpush1.msra.mxu0 0.0
        %1511 = vmatprep.subr.mxu0 0.0
        %1512 = vmatpush1.msra.mxu0 0.0
        %1513 = vmatprep.subr.mxu0 0.0
        %1514 = vmatpush1.msra.mxu0 0.0
        %1515 = vmatprep.subr.mxu0 0.0
        %1516 = vmatpush1.msra.mxu0 0.0
        %1517 = vmatprep.subr.mxu0 0.0
        %1518 = vmatpush1.msra.mxu0 0.0
        %1519 = vmatprep.subr.mxu0 0.0
        %1520 = vmatpush1.msra.mxu0 0.0
        %1521 = vmatprep.mubr.f32.mxu0 0.0
        %1522 = vmatmul.mubr.f32.gmra.mrb[0].mxu0 %v1100
        %v1523 = vpop.f32.mrb[0].mxu0
        %v1524 = vadd.f32 %v1097, %v1523
        %v1525 = vpop.f32.mrb[0].mxu0
        %v1526 = vadd.f32 %v1097, %v1525
        %1527 = vdwg.mxu0
        %1528 = vmatprep.subr.mxu0 %v470
        %1529 = vmatpush1.msra.mxu0 %v469
        %1530 = vmatprep.subr.mxu0 0.0
        %1531 = vmatpush1.msra.mxu0 0.0
        %1532 = vmatprep.subr.mxu0 0.0
        %1533 = vmatpush1.msra.mxu0 0.0
        %1534 = vmatprep.subr.mxu0 0.0
        %1535 = vmatpush1.msra.mxu0 0.0
        %1536 = vmatprep.subr.mxu0 0.0
        %1537 = vmatpush1.msra.mxu0 0.0
        %1538 = vmatprep.subr.mxu0 0.0
        %1539 = vmatpush1.msra.mxu0 0.0
        %1540 = vmatprep.subr.mxu0 0.0
        %1541 = vmatpush1.msra.mxu0 0.0
        %1542 = vmatprep.subr.mxu0 0.0
        %1543 = vmatpush1.msra.mxu0 0.0
        %1544 = vmatprep.subr.mxu0 0.0
        %1545 = vmatpush1.msra.mxu0 0.0
        %1546 = vmatprep.subr.mxu0 0.0
        %1547 = vmatpush1.msra.mxu0 0.0
        %1548 = vmatprep.subr.mxu0 0.0
        %1549 = vmatpush1.msra.mxu0 0.0
        %1550 = vmatprep.subr.mxu0 0.0
        %1551 = vmatpush1.msra.mxu0 0.0
        %1552 = vmatprep.subr.mxu0 0.0
        %1553 = vmatpush1.msra.mxu0 0.0
        %1554 = vmatprep.subr.mxu0 0.0
        %1555 = vmatpush1.msra.mxu0 0.0
        %1556 = vmatprep.subr.mxu0 0.0
        %1557 = vmatpush1.msra.mxu0 0.0
        %1558 = vmatprep.subr.mxu0 0.0
        %1559 = vmatpush1.msra.mxu0 0.0
        %1560 = vmatprep.subr.mxu0 0.0
        %1561 = vmatpush1.msra.mxu0 0.0
        %1562 = vmatprep.subr.mxu0 0.0
        %1563 = vmatpush1.msra.mxu0 0.0
        %1564 = vmatprep.subr.mxu0 0.0
        %1565 = vmatpush1.msra.mxu0 0.0
        %1566 = vmatprep.subr.mxu0 0.0
        %1567 = vmatpush1.msra.mxu0 0.0
        %1568 = vmatprep.subr.mxu0 0.0
        %1569 = vmatpush1.msra.mxu0 0.0
        %1570 = vmatprep.subr.mxu0 0.0
        %1571 = vmatpush1.msra.mxu0 0.0
        %1572 = vmatprep.subr.mxu0 0.0
        %1573 = vmatpush1.msra.mxu0 0.0
        %1574 = vmatprep.subr.mxu0 0.0
        %1575 = vmatpush1.msra.mxu0 0.0
        %1576 = vmatprep.subr.mxu0 0.0
        %1577 = vmatpush1.msra.mxu0 0.0
        %1578 = vmatprep.subr.mxu0 0.0
        %1579 = vmatpush1.msra.mxu0 0.0
        %1580 = vmatprep.subr.mxu0 0.0
        %1581 = vmatpush1.msra.mxu0 0.0
        %1582 = vmatprep.subr.mxu0 0.0
        %1583 = vmatpush1.msra.mxu0 0.0
        %1584 = vmatprep.subr.mxu0 0.0
        %1585 = vmatpush1.msra.mxu0 0.0
        %1586 = vmatprep.subr.mxu0 0.0
        %1587 = vmatpush1.msra.mxu0 0.0
        %1588 = vmatprep.subr.mxu0 0.0
        %1589 = vmatpush1.msra.mxu0 0.0
        %1590 = vmatprep.subr.mxu0 0.0
        %1591 = vmatpush1.msra.mxu0 0.0
        %1592 = vmatprep.mubr.f32.mxu0 0.0
        %1593 = vmatmul.mubr.f32.gmra.mrb[0].mxu0 %v1100
        %v1594 = vpop.f32.mrb[0].mxu0
        %v1595 = vadd.f32 %v1097, %v1594
        %v1596 = vpop.f32.mrb[0].mxu0
        %v1597 = vadd.f32 %v1097, %v1596
        %1598 = vdwg.mxu0
        %1599 = vmatprep.subr.mxu0 %v472
        %1600 = vmatpush1.msra.mxu0 %v471
        %1601 = vmatprep.subr.mxu0 0.0
        %1602 = vmatpush1.msra.mxu0 0.0
        %1603 = vmatprep.subr.mxu0 0.0
        %1604 = vmatpush1.msra.mxu0 0.0
        %1605 = vmatprep.subr.mxu0 0.0
        %1606 = vmatpush1.msra.mxu0 0.0
        %1607 = vmatprep.subr.mxu0 0.0
        %1608 = vmatpush1.msra.mxu0 0.0
        %1609 = vmatprep.subr.mxu0 0.0
        %1610 = vmatpush1.msra.mxu0 0.0
        %1611 = vmatprep.subr.mxu0 0.0
        %1612 = vmatpush1.msra.mxu0 0.0
        %1613 = vmatprep.subr.mxu0 0.0
        %1614 = vmatpush1.msra.mxu0 0.0
        %1615 = vmatprep.subr.mxu0 0.0
        %1616 = vmatpush1.msra.mxu0 0.0
        %1617 = vmatprep.subr.mxu0 0.0
        %1618 = vmatpush1.msra.mxu0 0.0
        %1619 = vmatprep.subr.mxu0 0.0
        %1620 = vmatpush1.msra.mxu0 0.0
        %1621 = vmatprep.subr.mxu0 0.0
        %1622 = vmatpush1.msra.mxu0 0.0
        %1623 = vmatprep.subr.mxu0 0.0
        %1624 = vmatpush1.msra.mxu0 0.0
        %1625 = vmatprep.subr.mxu0 0.0
        %1626 = vmatpush1.msra.mxu0 0.0
        %1627 = vmatprep.subr.mxu0 0.0
        %1628 = vmatpush1.msra.mxu0 0.0
        %1629 = vmatprep.subr.mxu0 0.0
        %1630 = vmatpush1.msra.mxu0 0.0
        %1631 = vmatprep.subr.mxu0 0.0
        %1632 = vmatpush1.msra.mxu0 0.0
        %1633 = vmatprep.subr.mxu0 0.0
        %1634 = vmatpush1.msra.mxu0 0.0
        %1635 = vmatprep.subr.mxu0 0.0
        %1636 = vmatpush1.msra.mxu0 0.0
        %1637 = vmatprep.subr.mxu0 0.0
        %1638 = vmatpush1.msra.mxu0 0.0
        %1639 = vmatprep.subr.mxu0 0.0
        %1640 = vmatpush1.msra.mxu0 0.0
        %1641 = vmatprep.subr.mxu0 0.0
        %1642 = vmatpush1.msra.mxu0 0.0
        %1643 = vmatprep.subr.mxu0 0.0
        %1644 = vmatpush1.msra.mxu0 0.0
        %1645 = vmatprep.subr.mxu0 0.0
        %1646 = vmatpush1.msra.mxu0 0.0
        %1647 = vmatprep.subr.mxu0 0.0
        %1648 = vmatpush1.msra.mxu0 0.0
        %1649 = vmatprep.subr.mxu0 0.0
        %1650 = vmatpush1.msra.mxu0 0.0
        %1651 = vmatprep.subr.mxu0 0.0
        %1652 = vmatpush1.msra.mxu0 0.0
        %1653 = vmatprep.subr.mxu0 0.0
        %1654 = vmatpush1.msra.mxu0 0.0
        %1655 = vmatprep.subr.mxu0 0.0
        %1656 = vmatpush1.msra.mxu0 0.0
        %1657 = vmatprep.subr.mxu0 0.0
        %1658 = vmatpush1.msra.mxu0 0.0
        %1659 = vmatprep.subr.mxu0 0.0
        %1660 = vmatpush1.msra.mxu0 0.0
        %1661 = vmatprep.subr.mxu0 0.0
        %1662 = vmatpush1.msra.mxu0 0.0
        %1663 = vmatprep.mubr.f32.mxu0 0.0
        %1664 = vmatmul.mubr.f32.gmra.mrb[0].mxu0 %v1100
        %v1665 = vpop.f32.mrb[0].mxu0
        %v1666 = vadd.f32 %v1097, %v1665
        %v1667 = vpop.f32.mrb[0].mxu0
        %v1668 = vadd.f32 %v1097, %v1667
        %1669 = vdwg.mxu0
        %v1670 = vld [vmem:[#allocation6] sm:$0xff]
        %v1671 = vld [vmem:[%s6] sm:$0xff]
        %1673 = vset.pattern.permute.xlu0 0
        %1674 = vperm.xlu0 %1673, %v1671
        %v1675 = vpop.permute.xlu0 %1674
        %v1678 = vsel %vm480, %v1670, 0
        %1680 = vmatprep.subr.mxu0 %v458
        %1681 = vmatpush1.msra.mxu0 %v457
        %1682 = vmatprep.subr.mxu0 0.0
        %1683 = vmatpush1.msra.mxu0 0.0
        %1684 = vmatprep.subr.mxu0 0.0
        %1685 = vmatpush1.msra.mxu0 0.0
        %1686 = vmatprep.subr.mxu0 0.0
        %1687 = vmatpush1.msra.mxu0 0.0
        %1688 = vmatprep.subr.mxu0 0.0
        %1689 = vmatpush1.msra.mxu0 0.0
        %1690 = vmatprep.subr.mxu0 0.0
        %1691 = vmatpush1.msra.mxu0 0.0
        %1692 = vmatprep.subr.mxu0 0.0
        %1693 = vmatpush1.msra.mxu0 0.0
        %1694 = vmatprep.subr.mxu0 0.0
        %1695 = vmatpush1.msra.mxu0 0.0
        %1696 = vmatprep.subr.mxu0 0.0
        %1697 = vmatpush1.msra.mxu0 0.0
        %1698 = vmatprep.subr.mxu0 0.0
        %1699 = vmatpush1.msra.mxu0 0.0
        %1700 = vmatprep.subr.mxu0 0.0
        %1701 = vmatpush1.msra.mxu0 0.0
        %1702 = vmatprep.subr.mxu0 0.0
        %1703 = vmatpush1.msra.mxu0 0.0
        %1704 = vmatprep.subr.mxu0 0.0
        %1705 = vmatpush1.msra.mxu0 0.0
        %1706 = vmatprep.subr.mxu0 0.0
        %1707 = vmatpush1.msra.mxu0 0.0
        %1708 = vmatprep.subr.mxu0 0.0
        %1709 = vmatpush1.msra.mxu0 0.0
        %1710 = vmatprep.subr.mxu0 0.0
        %1711 = vmatpush1.msra.mxu0 0.0
        %1712 = vmatprep.subr.mxu0 0.0
        %1713 = vmatpush1.msra.mxu0 0.0
        %1714 = vmatprep.subr.mxu0 0.0
        %1715 = vmatpush1.msra.mxu0 0.0
        %1716 = vmatprep.subr.mxu0 0.0
        %1717 = vmatpush1.msra.mxu0 0.0
        %1718 = vmatprep.subr.mxu0 0.0
        %1719 = vmatpush1.msra.mxu0 0.0
        %1720 = vmatprep.subr.mxu0 0.0
        %1721 = vmatpush1.msra.mxu0 0.0
        %1722 = vmatprep.subr.mxu0 0.0
        %1723 = vmatpush1.msra.mxu0 0.0
        %1724 = vmatprep.subr.mxu0 0.0
        %1725 = vmatpush1.msra.mxu0 0.0
        %1726 = vmatprep.subr.mxu0 0.0
        %1727 = vmatpush1.msra.mxu0 0.0
        %1728 = vmatprep.subr.mxu0 0.0
        %1729 = vmatpush1.msra.mxu0 0.0
        %1730 = vmatprep.subr.mxu0 0.0
        %1731 = vmatpush1.msra.mxu0 0.0
        %1732 = vmatprep.subr.mxu0 0.0
        %1733 = vmatpush1.msra.mxu0 0.0
        %1734 = vmatprep.subr.mxu0 0.0
        %1735 = vmatpush1.msra.mxu0 0.0
        %1736 = vmatprep.subr.mxu0 0.0
        %1737 = vmatpush1.msra.mxu0 0.0
        %1738 = vmatprep.subr.mxu0 0.0
        %1739 = vmatpush1.msra.mxu0 0.0
        %1740 = vmatprep.subr.mxu0 0.0
        %1741 = vmatpush1.msra.mxu0 0.0
        %1742 = vmatprep.subr.mxu0 0.0
        %1743 = vmatpush1.msra.mxu0 0.0
        %1744 = vmatprep.mubr.f32.mxu0 0.0
        %1745 = vmatmul.mubr.f32.gmra.mrb[0].mxu0 %v1678
        %v1746 = vpop.f32.mrb[0].mxu0
        %v1747 = vadd.f32 %v1675, %v1746
        %v1748 = vpop.f32.mrb[0].mxu0
        %v1749 = vadd.f32 %v1675, %v1748
        %1750 = vdwg.mxu0
        %1751 = vmatprep.subr.mxu0 %v460
        %1752 = vmatpush1.msra.mxu0 %v459
        %1753 = vmatprep.subr.mxu0 0.0
        %1754 = vmatpush1.msra.mxu0 0.0
        %1755 = vmatprep.subr.mxu0 0.0
        %1756 = vmatpush1.msra.mxu0 0.0
        %1757 = vmatprep.subr.mxu0 0.0
        %1758 = vmatpush1.msra.mxu0 0.0
        %1759 = vmatprep.subr.mxu0 0.0
        %1760 = vmatpush1.msra.mxu0 0.0
        %1761 = vmatprep.subr.mxu0 0.0
        %1762 = vmatpush1.msra.mxu0 0.0
        %1763 = vmatprep.subr.mxu0 0.0
        %1764 = vmatpush1.msra.mxu0 0.0
        %1765 = vmatprep.subr.mxu0 0.0
        %1766 = vmatpush1.msra.mxu0 0.0
        %1767 = vmatprep.subr.mxu0 0.0
        %1768 = vmatpush1.msra.mxu0 0.0
        %1769 = vmatprep.subr.mxu0 0.0
        %1770 = vmatpush1.msra.mxu0 0.0
        %1771 = vmatprep.subr.mxu0 0.0
        %1772 = vmatpush1.msra.mxu0 0.0
        %1773 = vmatprep.subr.mxu0 0.0
        %1774 = vmatpush1.msra.mxu0 0.0
        %1775 = vmatprep.subr.mxu0 0.0
        %1776 = vmatpush1.msra.mxu0 0.0
        %1777 = vmatprep.subr.mxu0 0.0
        %1778 = vmatpush1.msra.mxu0 0.0
        %1779 = vmatprep.subr.mxu0 0.0
        %1780 = vmatpush1.msra.mxu0 0.0
        %1781 = vmatprep.subr.mxu0 0.0
        %1782 = vmatpush1.msra.mxu0 0.0
        %1783 = vmatprep.subr.mxu0 0.0
        %1784 = vmatpush1.msra.mxu0 0.0
        %1785 = vmatprep.subr.mxu0 0.0
        %1786 = vmatpush1.msra.mxu0 0.0
        %1787 = vmatprep.subr.mxu0 0.0
        %1788 = vmatpush1.msra.mxu0 0.0
        %1789 = vmatprep.subr.mxu0 0.0
        %1790 = vmatpush1.msra.mxu0 0.0
        %1791 = vmatprep.subr.mxu0 0.0
        %1792 = vmatpush1.msra.mxu0 0.0
        %1793 = vmatprep.subr.mxu0 0.0
        %1794 = vmatpush1.msra.mxu0 0.0
        %1795 = vmatprep.subr.mxu0 0.0
        %1796 = vmatpush1.msra.mxu0 0.0
        %1797 = vmatprep.subr.mxu0 0.0
        %1798 = vmatpush1.msra.mxu0 0.0
        %1799 = vmatprep.subr.mxu0 0.0
        %1800 = vmatpush1.msra.mxu0 0.0
        %1801 = vmatprep.subr.mxu0 0.0
        %1802 = vmatpush1.msra.mxu0 0.0
        %1803 = vmatprep.subr.mxu0 0.0
        %1804 = vmatpush1.msra.mxu0 0.0
        %1805 = vmatprep.subr.mxu0 0.0
        %1806 = vmatpush1.msra.mxu0 0.0
        %1807 = vmatprep.subr.mxu0 0.0
        %1808 = vmatpush1.msra.mxu0 0.0
        %1809 = vmatprep.subr.mxu0 0.0
        %1810 = vmatpush1.msra.mxu0 0.0
        %1811 = vmatprep.subr.mxu0 0.0
        %1812 = vmatpush1.msra.mxu0 0.0
        %1813 = vmatprep.subr.mxu0 0.0
        %1814 = vmatpush1.msra.mxu0 0.0
        %1815 = vmatprep.mubr.f32.mxu0 0.0
        %1816 = vmatmul.mubr.f32.gmra.mrb[0].mxu0 %v1678
        %v1817 = vpop.f32.mrb[0].mxu0
        %v1818 = vadd.f32 %v1675, %v1817
        %v1819 = vpop.f32.mrb[0].mxu0
        %v1820 = vadd.f32 %v1675, %v1819
        %1821 = vdwg.mxu0
        %1822 = vmatprep.subr.mxu0 %v462
        %1823 = vmatpush1.msra.mxu0 %v461
        %1824 = vmatprep.subr.mxu0 0.0
        %1825 = vmatpush1.msra.mxu0 0.0
        %1826 = vmatprep.subr.mxu0 0.0
        %1827 = vmatpush1.msra.mxu0 0.0
        %1828 = vmatprep.subr.mxu0 0.0
        %1829 = vmatpush1.msra.mxu0 0.0
        %1830 = vmatprep.subr.mxu0 0.0
        %1831 = vmatpush1.msra.mxu0 0.0
        %1832 = vmatprep.subr.mxu0 0.0
        %1833 = vmatpush1.msra.mxu0 0.0
        %1834 = vmatprep.subr.mxu0 0.0
        %1835 = vmatpush1.msra.mxu0 0.0
        %1836 = vmatprep.subr.mxu0 0.0
        %1837 = vmatpush1.msra.mxu0 0.0
        %1838 = vmatprep.subr.mxu0 0.0
        %1839 = vmatpush1.msra.mxu0 0.0
        %1840 = vmatprep.subr.mxu0 0.0
        %1841 = vmatpush1.msra.mxu0 0.0
        %1842 = vmatprep.subr.mxu0 0.0
        %1843 = vmatpush1.msra.mxu0 0.0
        %1844 = vmatprep.subr.mxu0 0.0
        %1845 = vmatpush1.msra.mxu0 0.0
        %1846 = vmatprep.subr.mxu0 0.0
        %1847 = vmatpush1.msra.mxu0 0.0
        %1848 = vmatprep.subr.mxu0 0.0
        %1849 = vmatpush1.msra.mxu0 0.0
        %1850 = vmatprep.subr.mxu0 0.0
        %1851 = vmatpush1.msra.mxu0 0.0
        %1852 = vmatprep.subr.mxu0 0.0
        %1853 = vmatpush1.msra.mxu0 0.0
        %1854 = vmatprep.subr.mxu0 0.0
        %1855 = vmatpush1.msra.mxu0 0.0
        %1856 = vmatprep.subr.mxu0 0.0
        %1857 = vmatpush1.msra.mxu0 0.0
        %1858 = vmatprep.subr.mxu0 0.0
        %1859 = vmatpush1.msra.mxu0 0.0
        %1860 = vmatprep.subr.mxu0 0.0
        %1861 = vmatpush1.msra.mxu0 0.0
        %1862 = vmatprep.subr.mxu0 0.0
        %1863 = vmatpush1.msra.mxu0 0.0
        %1864 = vmatprep.subr.mxu0 0.0
        %1865 = vmatpush1.msra.mxu0 0.0
        %1866 = vmatprep.subr.mxu0 0.0
        %1867 = vmatpush1.msra.mxu0 0.0
        %1868 = vmatprep.subr.mxu0 0.0
        %1869 = vmatpush1.msra.mxu0 0.0
        %1870 = vmatprep.subr.mxu0 0.0
        %1871 = vmatpush1.msra.mxu0 0.0
        %1872 = vmatprep.subr.mxu0 0.0
        %1873 = vmatpush1.msra.mxu0 0.0
        %1874 = vmatprep.subr.mxu0 0.0
        %1875 = vmatpush1.msra.mxu0 0.0
        %1876 = vmatprep.subr.mxu0 0.0
        %1877 = vmatpush1.msra.mxu0 0.0
        %1878 = vmatprep.subr.mxu0 0.0
        %1879 = vmatpush1.msra.mxu0 0.0
        %1880 = vmatprep.subr.mxu0 0.0
        %1881 = vmatpush1.msra.mxu0 0.0
        %1882 = vmatprep.subr.mxu0 0.0
        %1883 = vmatpush1.msra.mxu0 0.0
        %1884 = vmatprep.subr.mxu0 0.0
        %1885 = vmatpush1.msra.mxu0 0.0
        %1886 = vmatprep.mubr.f32.mxu0 0.0
        %1887 = vmatmul.mubr.f32.gmra.mrb[0].mxu0 %v1678
        %v1888 = vpop.f32.mrb[0].mxu0
        %v1889 = vadd.f32 %v1675, %v1888
        %v1890 = vpop.f32.mrb[0].mxu0
        %v1891 = vadd.f32 %v1675, %v1890
        %1892 = vdwg.mxu0
        %1893 = vmatprep.subr.mxu0 %v464
        %1894 = vmatpush1.msra.mxu0 %v463
        %1895 = vmatprep.subr.mxu0 0.0
        %1896 = vmatpush1.msra.mxu0 0.0
        %1897 = vmatprep.subr.mxu0 0.0
        %1898 = vmatpush1.msra.mxu0 0.0
        %1899 = vmatprep.subr.mxu0 0.0
        %1900 = vmatpush1.msra.mxu0 0.0
        %1901 = vmatprep.subr.mxu0 0.0
        %1902 = vmatpush1.msra.mxu0 0.0
        %1903 = vmatprep.subr.mxu0 0.0
        %1904 = vmatpush1.msra.mxu0 0.0
        %1905 = vmatprep.subr.mxu0 0.0
        %1906 = vmatpush1.msra.mxu0 0.0
        %1907 = vmatprep.subr.mxu0 0.0
        %1908 = vmatpush1.msra.mxu0 0.0
        %1909 = vmatprep.subr.mxu0 0.0
        %1910 = vmatpush1.msra.mxu0 0.0
        %1911 = vmatprep.subr.mxu0 0.0
        %1912 = vmatpush1.msra.mxu0 0.0
        %1913 = vmatprep.subr.mxu0 0.0
        %1914 = vmatpush1.msra.mxu0 0.0
        %1915 = vmatprep.subr.mxu0 0.0
        %1916 = vmatpush1.msra.mxu0 0.0
        %1917 = vmatprep.subr.mxu0 0.0
        %1918 = vmatpush1.msra.mxu0 0.0
        %1919 = vmatprep.subr.mxu0 0.0
        %1920 = vmatpush1.msra.mxu0 0.0
        %1921 = vmatprep.subr.mxu0 0.0
        %1922 = vmatpush1.msra.mxu0 0.0
        %1923 = vmatprep.subr.mxu0 0.0
        %1924 = vmatpush1.msra.mxu0 0.0
        %1925 = vmatprep.subr.mxu0 0.0
        %1926 = vmatpush1.msra.mxu0 0.0
        %1927 = vmatprep.subr.mxu0 0.0
        %1928 = vmatpush1.msra.mxu0 0.0
        %1929 = vmatprep.subr.mxu0 0.0
        %1930 = vmatpush1.msra.mxu0 0.0
        %1931 = vmatprep.subr.mxu0 0.0
        %1932 = vmatpush1.msra.mxu0 0.0
        %1933 = vmatprep.subr.mxu0 0.0
        %1934 = vmatpush1.msra.mxu0 0.0
        %1935 = vmatprep.subr.mxu0 0.0
        %1936 = vmatpush1.msra.mxu0 0.0
        %1937 = vmatprep.subr.mxu0 0.0
        %1938 = vmatpush1.msra.mxu0 0.0
        %1939 = vmatprep.subr.mxu0 0.0
        %1940 = vmatpush1.msra.mxu0 0.0
        %1941 = vmatprep.subr.mxu0 0.0
        %1942 = vmatpush1.msra.mxu0 0.0
        %1943 = vmatprep.subr.mxu0 0.0
        %1944 = vmatpush1.msra.mxu0 0.0
        %1945 = vmatprep.subr.mxu0 0.0
        %1946 = vmatpush1.msra.mxu0 0.0
        %1947 = vmatprep.subr.mxu0 0.0
        %1948 = vmatpush1.msra.mxu0 0.0
        %1949 = vmatprep.subr.mxu0 0.0
        %1950 = vmatpush1.msra.mxu0 0.0
        %1951 = vmatprep.subr.mxu0 0.0
        %1952 = vmatpush1.msra.mxu0 0.0
        %1953 = vmatprep.subr.mxu0 0.0
        %1954 = vmatpush1.msra.mxu0 0.0
        %1955 = vmatprep.subr.mxu0 0.0
        %1956 = vmatpush1.msra.mxu0 0.0
        %1957 = vmatprep.mubr.f32.mxu0 0.0
        %1958 = vmatmul.mubr.f32.gmra.mrb[0].mxu0 %v1678
        %v1959 = vpop.f32.mrb[0].mxu0
        %v1960 = vadd.f32 %v1675, %v1959
        %v1961 = vpop.f32.mrb[0].mxu0
        %v1962 = vadd.f32 %v1675, %v1961
        %1963 = vdwg.mxu0
        %1964 = vmatprep.subr.mxu0 %v466
        %1965 = vmatpush1.msra.mxu0 %v465
        %1966 = vmatprep.subr.mxu0 0.0
        %1967 = vmatpush1.msra.mxu0 0.0
        %1968 = vmatprep.subr.mxu0 0.0
        %1969 = vmatpush1.msra.mxu0 0.0
        %1970 = vmatprep.subr.mxu0 0.0
        %1971 = vmatpush1.msra.mxu0 0.0
        %1972 = vmatprep.subr.mxu0 0.0
        %1973 = vmatpush1.msra.mxu0 0.0
        %1974 = vmatprep.subr.mxu0 0.0
        %1975 = vmatpush1.msra.mxu0 0.0
        %1976 = vmatprep.subr.mxu0 0.0
        %1977 = vmatpush1.msra.mxu0 0.0
        %1978 = vmatprep.subr.mxu0 0.0
        %1979 = vmatpush1.msra.mxu0 0.0
        %1980 = vmatprep.subr.mxu0 0.0
        %1981 = vmatpush1.msra.mxu0 0.0
        %1982 = vmatprep.subr.mxu0 0.0
        %1983 = vmatpush1.msra.mxu0 0.0
        %1984 = vmatprep.subr.mxu0 0.0
        %1985 = vmatpush1.msra.mxu0 0.0
        %1986 = vmatprep.subr.mxu0 0.0
        %1987 = vmatpush1.msra.mxu0 0.0
        %1988 = vmatprep.subr.mxu0 0.0
        %1989 = vmatpush1.msra.mxu0 0.0
        %1990 = vmatprep.subr.mxu0 0.0
        %1991 = vmatpush1.msra.mxu0 0.0
        %1992 = vmatprep.subr.mxu0 0.0
        %1993 = vmatpush1.msra.mxu0 0.0
        %1994 = vmatprep.subr.mxu0 0.0
        %1995 = vmatpush1.msra.mxu0 0.0
        %1996 = vmatprep.subr.mxu0 0.0
        %1997 = vmatpush1.msra.mxu0 0.0
        %1998 = vmatprep.subr.mxu0 0.0
        %1999 = vmatpush1.msra.mxu0 0.0
        %2000 = vmatprep.subr.mxu0 0.0
        %2001 = vmatpush1.msra.mxu0 0.0
        %2002 = vmatprep.subr.mxu0 0.0
        %2003 = vmatpush1.msra.mxu0 0.0
        %2004 = vmatprep.subr.mxu0 0.0
        %2005 = vmatpush1.msra.mxu0 0.0
        %2006 = vmatprep.subr.mxu0 0.0
        %2007 = vmatpush1.msra.mxu0 0.0
        %2008 = vmatprep.subr.mxu0 0.0
        %2009 = vmatpush1.msra.mxu0 0.0
        %2010 = vmatprep.subr.mxu0 0.0
        %2011 = vmatpush1.msra.mxu0 0.0
        %2012 = vmatprep.subr.mxu0 0.0
        %2013 = vmatpush1.msra.mxu0 0.0
        %2014 = vmatprep.subr.mxu0 0.0
        %2015 = vmatpush1.msra.mxu0 0.0
        %2016 = vmatprep.subr.mxu0 0.0
        %2017 = vmatpush1.msra.mxu0 0.0
        %2018 = vmatprep.subr.mxu0 0.0
        %2019 = vmatpush1.msra.mxu0 0.0
        %2020 = vmatprep.subr.mxu0 0.0
        %2021 = vmatpush1.msra.mxu0 0.0
        %2022 = vmatprep.subr.mxu0 0.0
        %2023 = vmatpush1.msra.mxu0 0.0
        %2024 = vmatprep.subr.mxu0 0.0
        %2025 = vmatpush1.msra.mxu0 0.0
        %2026 = vmatprep.subr.mxu0 0.0
        %2027 = vmatpush1.msra.mxu0 0.0
        %2028 = vmatprep.mubr.f32.mxu0 0.0
        %2029 = vmatmul.mubr.f32.gmra.mrb[0].mxu0 %v1678
        %v2030 = vpop.f32.mrb[0].mxu0
        %v2031 = vadd.f32 %v1675, %v2030
        %v2032 = vpop.f32.mrb[0].mxu0
        %v2033 = vadd.f32 %v1675, %v2032
        %2034 = vdwg.mxu0
        %2035 = vmatprep.subr.mxu0 %v468
        %2036 = vmatpush1.msra.mxu0 %v467
        %2037 = vmatprep.subr.mxu0 0.0
        %2038 = vmatpush1.msra.mxu0 0.0
        %2039 = vmatprep.subr.mxu0 0.0
        %2040 = vmatpush1.msra.mxu0 0.0
        %2041 = vmatprep.subr.mxu0 0.0
        %2042 = vmatpush1.msra.mxu0 0.0
        %2043 = vmatprep.subr.mxu0 0.0
        %2044 = vmatpush1.msra.mxu0 0.0
        %2045 = vmatprep.subr.mxu0 0.0
        %2046 = vmatpush1.msra.mxu0 0.0
        %2047 = vmatprep.subr.mxu0 0.0
        %2048 = vmatpush1.msra.mxu0 0.0
        %2049 = vmatprep.subr.mxu0 0.0
        %2050 = vmatpush1.msra.mxu0 0.0
        %2051 = vmatprep.subr.mxu0 0.0
        %2052 = vmatpush1.msra.mxu0 0.0
        %2053 = vmatprep.subr.mxu0 0.0
        %2054 = vmatpush1.msra.mxu0 0.0
        %2055 = vmatprep.subr.mxu0 0.0
        %2056 = vmatpush1.msra.mxu0 0.0
        %2057 = vmatprep.subr.mxu0 0.0
        %2058 = vmatpush1.msra.mxu0 0.0
        %2059 = vmatprep.subr.mxu0 0.0
        %2060 = vmatpush1.msra.mxu0 0.0
        %2061 = vmatprep.subr.mxu0 0.0
        %2062 = vmatpush1.msra.mxu0 0.0
        %2063 = vmatprep.subr.mxu0 0.0
        %2064 = vmatpush1.msra.mxu0 0.0
        %2065 = vmatprep.subr.mxu0 0.0
        %2066 = vmatpush1.msra.mxu0 0.0
        %2067 = vmatprep.subr.mxu0 0.0
        %2068 = vmatpush1.msra.mxu0 0.0
        %2069 = vmatprep.subr.mxu0 0.0
        %2070 = vmatpush1.msra.mxu0 0.0
        %2071 = vmatprep.subr.mxu0 0.0
        %2072 = vmatpush1.msra.mxu0 0.0
        %2073 = vmatprep.subr.mxu0 0.0
        %2074 = vmatpush1.msra.mxu0 0.0
        %2075 = vmatprep.subr.mxu0 0.0
        %2076 = vmatpush1.msra.mxu0 0.0
        %2077 = vmatprep.subr.mxu0 0.0
        %2078 = vmatpush1.msra.mxu0 0.0
        %2079 = vmatprep.subr.mxu0 0.0
        %2080 = vmatpush1.msra.mxu0 0.0
        %2081 = vmatprep.subr.mxu0 0.0
        %2082 = vmatpush1.msra.mxu0 0.0
        %2083 = vmatprep.subr.mxu0 0.0
        %2084 = vmatpush1.msra.mxu0 0.0
        %2085 = vmatprep.subr.mxu0 0.0
        %2086 = vmatpush1.msra.mxu0 0.0
        %2087 = vmatprep.subr.mxu0 0.0
        %2088 = vmatpush1.msra.mxu0 0.0
        %2089 = vmatprep.subr.mxu0 0.0
        %2090 = vmatpush1.msra.mxu0 0.0
        %2091 = vmatprep.subr.mxu0 0.0
        %2092 = vmatpush1.msra.mxu0 0.0
        %2093 = vmatprep.subr.mxu0 0.0
        %2094 = vmatpush1.msra.mxu0 0.0
        %2095 = vmatprep.subr.mxu0 0.0
        %2096 = vmatpush1.msra.mxu0 0.0
        %2097 = vmatprep.subr.mxu0 0.0
        %2098 = vmatpush1.msra.mxu0 0.0
        %2099 = vmatprep.mubr.f32.mxu0 0.0
        %2100 = vmatmul.mubr.f32.gmra.mrb[0].mxu0 %v1678
        %v2101 = vpop.f32.mrb[0].mxu0
        %v2102 = vadd.f32 %v1675, %v2101
        %v2103 = vpop.f32.mrb[0].mxu0
        %v2104 = vadd.f32 %v1675, %v2103
        %2105 = vdwg.mxu0
        %2106 = vmatprep.subr.mxu0 %v470
        %2107 = vmatpush1.msra.mxu0 %v469
        %2108 = vmatprep.subr.mxu0 0.0
        %2109 = vmatpush1.msra.mxu0 0.0
        %2110 = vmatprep.subr.mxu0 0.0
        %2111 = vmatpush1.msra.mxu0 0.0
        %2112 = vmatprep.subr.mxu0 0.0
        %2113 = vmatpush1.msra.mxu0 0.0
        %2114 = vmatprep.subr.mxu0 0.0
        %2115 = vmatpush1.msra.mxu0 0.0
        %2116 = vmatprep.subr.mxu0 0.0
        %2117 = vmatpush1.msra.mxu0 0.0
        %2118 = vmatprep.subr.mxu0 0.0
        %2119 = vmatpush1.msra.mxu0 0.0
        %2120 = vmatprep.subr.mxu0 0.0
        %2121 = vmatpush1.msra.mxu0 0.0
        %2122 = vmatprep.subr.mxu0 0.0
        %2123 = vmatpush1.msra.mxu0 0.0
        %2124 = vmatprep.subr.mxu0 0.0
        %2125 = vmatpush1.msra.mxu0 0.0
        %2126 = vmatprep.subr.mxu0 0.0
        %2127 = vmatpush1.msra.mxu0 0.0
        %2128 = vmatprep.subr.mxu0 0.0
        %2129 = vmatpush1.msra.mxu0 0.0
        %2130 = vmatprep.subr.mxu0 0.0
        %2131 = vmatpush1.msra.mxu0 0.0
        %2132 = vmatprep.subr.mxu0 0.0
        %2133 = vmatpush1.msra.mxu0 0.0
        %2134 = vmatprep.subr.mxu0 0.0
        %2135 = vmatpush1.msra.mxu0 0.0
        %2136 = vmatprep.subr.mxu0 0.0
        %2137 = vmatpush1.msra.mxu0 0.0
        %2138 = vmatprep.subr.mxu0 0.0
        %2139 = vmatpush1.msra.mxu0 0.0
        %2140 = vmatprep.subr.mxu0 0.0
        %2141 = vmatpush1.msra.mxu0 0.0
        %2142 = vmatprep.subr.mxu0 0.0
        %2143 = vmatpush1.msra.mxu0 0.0
        %2144 = vmatprep.subr.mxu0 0.0
        %2145 = vmatpush1.msra.mxu0 0.0
        %2146 = vmatprep.subr.mxu0 0.0
        %2147 = vmatpush1.msra.mxu0 0.0
        %2148 = vmatprep.subr.mxu0 0.0
        %2149 = vmatpush1.msra.mxu0 0.0
        %2150 = vmatprep.subr.mxu0 0.0
        %2151 = vmatpush1.msra.mxu0 0.0
        %2152 = vmatprep.subr.mxu0 0.0
        %2153 = vmatpush1.msra.mxu0 0.0
        %2154 = vmatprep.subr.mxu0 0.0
        %2155 = vmatpush1.msra.mxu0 0.0
        %2156 = vmatprep.subr.mxu0 0.0
        %2157 = vmatpush1.msra.mxu0 0.0
        %2158 = vmatprep.subr.mxu0 0.0
        %2159 = vmatpush1.msra.mxu0 0.0
        %2160 = vmatprep.subr.mxu0 0.0
        %2161 = vmatpush1.msra.mxu0 0.0
        %2162 = vmatprep.subr.mxu0 0.0
        %2163 = vmatpush1.msra.mxu0 0.0
        %2164 = vmatprep.subr.mxu0 0.0
        %2165 = vmatpush1.msra.mxu0 0.0
        %2166 = vmatprep.subr.mxu0 0.0
        %2167 = vmatpush1.msra.mxu0 0.0
        %2168 = vmatprep.subr.mxu0 0.0
        %2169 = vmatpush1.msra.mxu0 0.0
        %2170 = vmatprep.mubr.f32.mxu0 0.0
        %2171 = vmatmul.mubr.f32.gmra.mrb[0].mxu0 %v1678
        %v2172 = vpop.f32.mrb[0].mxu0
        %v2173 = vadd.f32 %v1675, %v2172
        %v2174 = vpop.f32.mrb[0].mxu0
        %v2175 = vadd.f32 %v1675, %v2174
        %2176 = vdwg.mxu0
        %2177 = vmatprep.subr.mxu0 %v472
        %2178 = vmatpush1.msra.mxu0 %v471
        %2179 = vmatprep.subr.mxu0 0.0
        %2180 = vmatpush1.msra.mxu0 0.0
        %2181 = vmatprep.subr.mxu0 0.0
        %2182 = vmatpush1.msra.mxu0 0.0
        %2183 = vmatprep.subr.mxu0 0.0
        %2184 = vmatpush1.msra.mxu0 0.0
        %2185 = vmatprep.subr.mxu0 0.0
        %2186 = vmatpush1.msra.mxu0 0.0
        %2187 = vmatprep.subr.mxu0 0.0
        %2188 = vmatpush1.msra.mxu0 0.0
        %2189 = vmatprep.subr.mxu0 0.0
        %2190 = vmatpush1.msra.mxu0 0.0
        %2191 = vmatprep.subr.mxu0 0.0
        %2192 = vmatpush1.msra.mxu0 0.0
        %2193 = vmatprep.subr.mxu0 0.0
        %2194 = vmatpush1.msra.mxu0 0.0
        %2195 = vmatprep.subr.mxu0 0.0
        %2196 = vmatpush1.msra.mxu0 0.0
        %2197 = vmatprep.subr.mxu0 0.0
        %2198 = vmatpush1.msra.mxu0 0.0
        %2199 = vmatprep.subr.mxu0 0.0
        %2200 = vmatpush1.msra.mxu0 0.0
        %2201 = vmatprep.subr.mxu0 0.0
        %2202 = vmatpush1.msra.mxu0 0.0
        %2203 = vmatprep.subr.mxu0 0.0
        %2204 = vmatpush1.msra.mxu0 0.0
        %2205 = vmatprep.subr.mxu0 0.0
        %2206 = vmatpush1.msra.mxu0 0.0
        %2207 = vmatprep.subr.mxu0 0.0
        %2208 = vmatpush1.msra.mxu0 0.0
        %2209 = vmatprep.subr.mxu0 0.0
        %2210 = vmatpush1.msra.mxu0 0.0
        %2211 = vmatprep.subr.mxu0 0.0
        %2212 = vmatpush1.msra.mxu0 0.0
        %2213 = vmatprep.subr.mxu0 0.0
        %2214 = vmatpush1.msra.mxu0 0.0
        %2215 = vmatprep.subr.mxu0 0.0
        %2216 = vmatpush1.msra.mxu0 0.0
        %2217 = vmatprep.subr.mxu0 0.0
        %2218 = vmatpush1.msra.mxu0 0.0
        %2219 = vmatprep.subr.mxu0 0.0
        %2220 = vmatpush1.msra.mxu0 0.0
        %2221 = vmatprep.subr.mxu0 0.0
        %2222 = vmatpush1.msra.mxu0 0.0
        %2223 = vmatprep.subr.mxu0 0.0
        %2224 = vmatpush1.msra.mxu0 0.0
        %2225 = vmatprep.subr.mxu0 0.0
        %2226 = vmatpush1.msra.mxu0 0.0
        %2227 = vmatprep.subr.mxu0 0.0
        %2228 = vmatpush1.msra.mxu0 0.0
        %2229 = vmatprep.subr.mxu0 0.0
        %2230 = vmatpush1.msra.mxu0 0.0
        %2231 = vmatprep.subr.mxu0 0.0
        %2232 = vmatpush1.msra.mxu0 0.0
        %2233 = vmatprep.subr.mxu0 0.0
        %2234 = vmatpush1.msra.mxu0 0.0
        %2235 = vmatprep.subr.mxu0 0.0
        %2236 = vmatpush1.msra.mxu0 0.0
        %2237 = vmatprep.subr.mxu0 0.0
        %2238 = vmatpush1.msra.mxu0 0.0
        %2239 = vmatprep.subr.mxu0 0.0
        %2240 = vmatpush1.msra.mxu0 0.0
        %2241 = vmatprep.mubr.f32.mxu0 0.0
        %2242 = vmatmul.mubr.f32.gmra.mrb[0].mxu0 %v1678
        %v2243 = vpop.f32.mrb[0].mxu0
        %v2244 = vadd.f32 %v1675, %v2243
        %v2245 = vpop.f32.mrb[0].mxu0
        %v2246 = vadd.f32 %v1675, %v2245
        %2247 = vdwg.mxu0
        %v2248 = vmax.f32 %v1169, %v1240
        %v2249 = vmax.f32 %v1171, %v1242
        %v2252 = vcombine.low %v2248, %v2249
        %2254 = vst [vmem:[%s445] sm:$0xff] %v2252
        %v2255 = vmax.f32 %v1747, %v1818
        %v2256 = vmax.f32 %v1749, %v1820
        %2257 = vst [vmem:[%s455] sm:$0xff] %v2255
        %2258 = vst [vmem:[%s455 + $0x8] sm:$0xff] %v2256
        %v2259 = vmax.f32 %v1311, %v1382
        %v2260 = vmax.f32 %v1313, %v1384
        %v2263 = vcombine.low %v2259, %v2260
        %2265 = vst [vmem:[%s445 + $0x8] sm:$0xff] %v2263
        %v2266 = vmax.f32 %v1889, %v1960
        %v2267 = vmax.f32 %v1891, %v1962
        %2268 = vst [vmem:[%s455 + $0x10] sm:$0xff] %v2266
        %2269 = vst [vmem:[%s455 + $0x18] sm:$0xff] %v2267
        %v2270 = vmax.f32 %v1453, %v1524
        %v2271 = vmax.f32 %v1455, %v1526
        %v2274 = vcombine.low %v2270, %v2271
        %2276 = vst [vmem:[%s445 + $0x10] sm:$0xff] %v2274
        %v2277 = vmax.f32 %v2031, %v2102
        %v2278 = vmax.f32 %v2033, %v2104
        %2279 = vst [vmem:[%s455 + $0x20] sm:$0xff] %v2277
        %2280 = vst [vmem:[%s455 + $0x28] sm:$0xff] %v2278
        %v2281 = vmax.f32 %v1595, %v1666
        %v2282 = vmax.f32 %v1597, %v1668
        %v2285 = vcombine.low %v2281, %v2282
        %2287 = vst [vmem:[%s445 + $0x18] sm:$0xff] %v2285
        %v2288 = vmax.f32 %v2173, %v2244
        %v2289 = vmax.f32 %v2175, %v2246
        %2290 = vst [vmem:[%s455 + $0x30] sm:$0xff] %v2288
        %2291 = vst [vmem:[%s455 + $0x38] sm:$0xff] %v2289
        %s2292 = smul.u32 16, %s28
        %p2293 = scmp.lt.s32.totalorder %s27, 1
        %s2294 = scalar_select %p2293, %s27, 1
        %p2295 = scmp.lt.s32.totalorder %s2292, 15
        %s2296 = scalar_select %p2295, %s2292, 15
        %s2297 = smul.addr %s2294, 16
        %s2298 = sadd.s32 %s2296, %s2297
        %s2299 = smul.addr %s2298, 4
        %s2300 = scalar_lea.vmem %s7, %s2299
        %s2301 = smul.u32 8, %s28
        %p2302 = scmp.lt.s32.totalorder %s27, 1
        %s2303 = scalar_select %p2302, %s27, 1
        %p2304 = scmp.lt.s32.totalorder %s2301, 7
        %s2305 = scalar_select %p2304, %s2301, 7
        %s2306 = smul.addr %s2303, 8
        %s2307 = sadd.s32 %s2305, %s2306
        %s2308 = smul.addr %s2307, 4
        %s2309 = scalar_lea.vmem %s8, %s2308
        %s2310 = smul.u32 8, %s28
        %p2311 = scmp.lt.s32.totalorder %s27, 1
        %s2312 = scalar_select %p2311, %s27, 1
        %p2313 = scmp.lt.s32.totalorder %s2310, 7
        %s2314 = scalar_select %p2313, %s2310, 7
        %s2315 = smul.addr %s2312, 8
        %s2316 = sadd.s32 %s2314, %s2315
        %s2317 = smul.addr %s2316, 8
        %s2318 = scalar_lea.vmem %s9, %s2317
        // Predicated region
        $region61: #{separable_attn.9} parent=47 // pred_check
          %p2319 = pneg %p209
        $region62: #{separable_attn.9} parent=47 // pred_check_branch
          %2321 = sbr.rel (%p2319) target = $region64
        $region63: #{separable_attn.9} parent=47 // pred_region
          %s2322 = smul.u32 16, %s28
        $region64: #{separable_attn.9} parent=47 // pred_fallthru
          _
        // Predicated region
        $region65: #{separable_attn.9} parent=47 // pred_check
          %p2323 = pneg %p237
        $region66: #{separable_attn.9} parent=47 // pred_check_branch
          %2325 = sbr.rel (%p2323) target = $region68
        $region67: #{separable_attn.9} parent=47 // pred_region
          %s2326 = smul.u32 8, %s28
        $region68: #{separable_attn.9} parent=47 // pred_fallthru
          _
        // Predicated region
        $region69: #{separable_attn.9} parent=47 // pred_check
          %p2327 = pneg %p265
        $region70: #{separable_attn.9} parent=47 // pred_check_branch
          %2329 = sbr.rel (%p2327) target = $region72
        $region71: #{separable_attn.9} parent=47 // pred_region
          %s2330 = smul.u32 8, %s28
        $region72: #{separable_attn.9} parent=47 // pred_fallthru
          _
      $region48: #{separable_attn.9} parent=5 // pred_fallthru
        _
      %p2331 = scmp.le.s32.totalorder 2, %s18
      // Predicated region
      $region73: #{separable_attn.9} parent=5 // pred_check
        %p2332 = pneg %p2331
      $region74: #{separable_attn.9} parent=5 // pred_check_branch
        %2334 = sbr.rel (%p2332) target = $region76
      $region75: #{separable_attn.9} parent=5 // pred_region
        %s2335 = ssub.s32 %s18, 2
        // Predicated region
        $region77: #{separable_attn.9} parent=75 // pred_check
          %p2336 = pneg %p215
        $region78: #{separable_attn.9} parent=75 // pred_check_branch
          %2338 = sbr.rel (%p2336) target = $region80
        $region79: #{separable_attn.9} parent=75 // pred_region
          %s2339 = smul.u32 16, %s30
          %p2340 = scmp.lt.s32.totalorder %s29, 1
          %s2341 = scalar_select %p2340, %s29, 1
          %p2342 = scmp.lt.s32.totalorder %s2339, 15
          %s2343 = scalar_select %p2342, %s2339, 15
          %s2344 = smul.addr %s2341, 16
          %s2345 = sadd.s32 %s2343, %s2344
          %s2346 = smul.addr %s2345, 4
          %s2347 = scalar_lea.vmem %s7, %s2346
        $region80: #{separable_attn.9} parent=75 // pred_fallthru
          _
        // Predicated region
        $region81: #{separable_attn.9} parent=75 // pred_check
          %p2348 = pneg %p243
        $region82: #{separable_attn.9} parent=75 // pred_check_branch
          %2350 = sbr.rel (%p2348) target = $region84
        $region83: #{separable_attn.9} parent=75 // pred_region
          %s2351 = smul.u32 8, %s30
          %p2352 = scmp.lt.s32.totalorder %s29, 1
          %s2353 = scalar_select %p2352, %s29, 1
          %p2354 = scmp.lt.s32.totalorder %s2351, 7
          %s2355 = scalar_select %p2354, %s2351, 7
          %s2356 = smul.addr %s2353, 8
          %s2357 = sadd.s32 %s2355, %s2356
          %s2358 = smul.addr %s2357, 4
          %s2359 = scalar_lea.vmem %s8, %s2358
        $region84: #{separable_attn.9} parent=75 // pred_fallthru
          _
        // Predicated region
        $region85: #{separable_attn.9} parent=75 // pred_check
          %p2360 = pneg %p271
        $region86: #{separable_attn.9} parent=75 // pred_check_branch
          %2362 = sbr.rel (%p2360) target = $region88
        $region87: #{separable_attn.9} parent=75 // pred_region
          %s2363 = smul.u32 8, %s30
          %p2364 = scmp.lt.s32.totalorder %s29, 1
          %s2365 = scalar_select %p2364, %s29, 1
          %p2366 = scmp.lt.s32.totalorder %s2363, 7
          %s2367 = scalar_select %p2366, %s2363, 7
          %s2368 = smul.addr %s2365, 8
          %s2369 = sadd.s32 %s2367, %s2368
          %s2370 = smul.addr %s2369, 8
          %s2371 = scalar_lea.vmem %s9, %s2370
        $region88: #{separable_attn.9} parent=75 // pred_fallthru
          _
      $region76: #{separable_attn.9} parent=5 // pred_fallthru
        _
    $region6: #{separable_attn.9} parent=1 // loop_footer
      %s22 = sadd.s32 1, %s18
    $region7: #{separable_attn.9} parent=1 // loop_footer_branch
      %17 = sbr.rel target = $region3
    $region8: #{separable_attn.9} parent=1 // loop_exit
      _
    %2372 = vsyncpa [#allocation3], 1
    %s2373 = scalar_lea.sflag [#allocation3], 1
    %2374 = vsyncpa %s2373, 1
    %2375 = vsyncpa [#allocation5], 1

// kernel: separable_attn.11
$region0: #{separable_attn.11}
  #allocation0 [shape = 'u32[]', space=smem, size = 0x4, offset = 0x4, fixed_abs, tag = 'smem constant byte address 0x4 - core index']
  #allocation1 [shape = 'u32[144,128]{1,0:T(1,128)}', space=vmem, size = 0x12000, scoped, tag = 'internal scratch']
  #allocation2 [shape = 'f32[1,1]{1,0:T(1,128)S(6)}', space=smem, size = 0x200, scoped, tag = 'scoped memory for separable_attn.11']
  %s0 = inlined_call_operand.<no memory space> [shape: f32[1,1], index: 0, kind: input, shape index: {}]
  %s1 = inlined_call_operand.vmem [shape: f32[2,8,4], index: 1, kind: input, shape index: {}]
  %s2 = inlined_call_operand.vmem [shape: f32[2,2048,4], index: 2, kind: input, shape index: {}]
  %s3 = inlined_call_operand.vmem [shape: f32[2,8,8,256], index: 3, kind: output, shape index: {}]
  %s4 = sld [smem:[#allocation0]]
  $region45: #{separable_attn.11} parent=0
    _
  %s6 = ssub.s32 1, %s4
  %s7 = scalar_select 0, %s6, %s4
  %8 = sst [smem:[#allocation2]] %s0
  loop: start=0, step=1, limit=4
  $region2: #{separable_attn.11} parent=0 // loop_pre_header
    _
  $region3: #{separable_attn.11} parent=0 // loop_header
    %s10 = sphi 0, %s14
    %p11 = scmp.ge.s32.totalorder %s10, 4
    %s17 = sphi 0, %s29
    %s18 = sphi 0, %s25
    %s19 = sphi 0, %s17
    %s20 = sphi 0, %s18
    %s21 = sphi 0, %s19
    %s22 = sphi 0, %s20
    %s30 = sphi 0, %s30
    %s32 = sphi 0, %s30
    %s33 = sphi 0, %s32
    %s47 = sphi 0, %s33
    %s53 = sphi 0, %s55
    %s56 = sphi 0, %s53
    %s57 = sphi 0, %s56
    %s73 = sphi 0, %s57
    %s81 = sphi 0, %s83
    %s84 = sphi 0, %s81
    %s85 = sphi 0, %s84
    %s101 = sphi 0, %s85
    %s109 = sphi 0, %s111
    %s112 = sphi 0, %s109
    %s113 = sphi 0, %s112
    %s129 = sphi 0, %s113
  $region4: #{separable_attn.11} parent=0 // loop_header_branch
    %13 = sbr.rel (%p11) target = $region8
  $region5: #{separable_attn.11} parent=0 // loop_body
    %s15 = ssub.s32 %s10, 1
    %s16 = ssub.s32 %s10, 2
    %s23 = sadd.s32 1, %s18
    %p24 = scmp.ge.s32.totalorder %s23, 1
    %s25 = scalar_select %p24, 0, %s23
    %s26 = sadd.s32 1, %s17
    %s27 = scalar_select %p24, %s26, %s17
    %p28 = scmp.ge.s32.totalorder %s27, 2
    %s29 = scalar_select %p28, 0, %s27
    %s31 = sadd.s32 %s30, 1
    %p34 = scmp.eq.s32.totalorder %s10, 1
    %p35 = scmp.ne.s32.totalorder %s30, %s32
    %p36 = scmp.eq.s32.totalorder %s10, 0
    %p37 = por %p35, %p36
    %p38 = scmp.ne.s32.totalorder %s30, %s32
    %p39 = scmp.eq.s32.totalorder %s15, 1
    %p40 = por %p38, %p39
    %p41 = scmp.ne.s32.totalorder %s32, %s33
    %p42 = scmp.eq.s32.totalorder %s15, 0
    %p43 = por %p41, %p42
    %p44 = scmp.ne.s32.totalorder %s32, %s33
    %p45 = scmp.eq.s32.totalorder %s16, 1
    %p46 = por %p44, %p45
    %p48 = scmp.ne.s32.totalorder %s33, %s47
    %p49 = scmp.eq.s32.totalorder %s16, 0
    %p50 = por %p48, %p49
    %s51 = ssub.s32 %s17, %s29
    %p52 = scmp.eq.s32.totalorder %s51, 0
    %s54 = sadd.s32 %s53, 1
    %s55 = scalar_select %p52, %s53, %s54
    %p58 = pneg %p52
    %p59 = scmp.eq.s32.totalorder %s10, 1
    %p60 = por %p58, %p59
    %p61 = scmp.ne.s32.totalorder %s53, %s56
    %p62 = scmp.eq.s32.totalorder %s10, 0
    %p63 = por %p61, %p62
    %p64 = scmp.ne.s32.totalorder %s53, %s56
    %p65 = scmp.eq.s32.totalorder %s15, 1
    %p66 = por %p64, %p65
    %p67 = scmp.ne.s32.totalorder %s56, %s57
    %p68 = scmp.eq.s32.totalorder %s15, 0
    %p69 = por %p67, %p68
    %p70 = scmp.ne.s32.totalorder %s56, %s57
    %p71 = scmp.eq.s32.totalorder %s16, 1
    %p72 = por %p70, %p71
    %p74 = scmp.ne.s32.totalorder %s57, %s73
    %p75 = scmp.eq.s32.totalorder %s16, 0
    %p76 = por %p74, %p75
    %s77 = ssub.s32 %s17, %s29
    %s78 = ssub.s32 %s18, %s25
    %s79 = sor.u32 %s77, %s78
    %p80 = scmp.eq.s32.totalorder %s79, 0
    %s82 = sadd.s32 %s81, 1
    %s83 = scalar_select %p80, %s81, %s82
    %p86 = pneg %p80
    %p87 = scmp.eq.s32.totalorder %s10, 1
    %p88 = por %p86, %p87
    %p89 = scmp.ne.s32.totalorder %s81, %s84
    %p90 = scmp.eq.s32.totalorder %s10, 0
    %p91 = por %p89, %p90
    %p92 = scmp.ne.s32.totalorder %s81, %s84
    %p93 = scmp.eq.s32.totalorder %s15, 1
    %p94 = por %p92, %p93
    %p95 = scmp.ne.s32.totalorder %s84, %s85
    %p96 = scmp.eq.s32.totalorder %s15, 0
    %p97 = por %p95, %p96
    %p98 = scmp.ne.s32.totalorder %s84, %s85
    %p99 = scmp.eq.s32.totalorder %s16, 1
    %p100 = por %p98, %p99
    %p102 = scmp.ne.s32.totalorder %s85, %s101
    %p103 = scmp.eq.s32.totalorder %s16, 0
    %p104 = por %p102, %p103
    %s105 = ssub.s32 %s17, %s29
    %s106 = ssub.s32 %s18, %s25
    %s107 = sor.u32 %s105, %s106
    %p108 = scmp.eq.s32.totalorder %s107, 0
    %s110 = sadd.s32 %s109, 1
    %s111 = scalar_select %p108, %s109, %s110
    %p114 = pneg %p108
    %p115 = scmp.eq.s32.totalorder %s10, 1
    %p116 = por %p114, %p115
    %p117 = scmp.ne.s32.totalorder %s109, %s112
    %p118 = scmp.eq.s32.totalorder %s10, 0
    %p119 = por %p117, %p118
    %p120 = scmp.ne.s32.totalorder %s109, %s112
    %p121 = scmp.eq.s32.totalorder %s15, 1
    %p122 = por %p120, %p121
    %p123 = scmp.ne.s32.totalorder %s112, %s113
    %p124 = scmp.eq.s32.totalorder %s15, 0
    %p125 = por %p123, %p124
    %p126 = scmp.ne.s32.totalorder %s112, %s113
    %p127 = scmp.eq.s32.totalorder %s16, 1
    %p128 = por %p126, %p127
    %p130 = scmp.ne.s32.totalorder %s113, %s129
    %p131 = scmp.eq.s32.totalorder %s16, 0
    %p132 = por %p130, %p131
    %p133 = scmp.le.s32.totalorder 1, %s10
    %p134 = scmp.lt.s32.totalorder %s10, 3
    %p135 = pnand %p133, %p134
    %p136 = pneg %p135
    // Predicated region
    $region9: #{separable_attn.11} parent=5 // pred_check
      _
    $region10: #{separable_attn.11} parent=5 // pred_check_branch
      %138 = sbr.rel (%p135) target = $region12
    $region11: #{separable_attn.11} parent=5 // pred_region
      %s139 = ssub.s32 %s10, 1
      // Predicated region
      $region13: #{separable_attn.11} parent=11 // pred_check
        %p140 = pneg %p43
      $region14: #{separable_attn.11} parent=11 // pred_check_branch
        %142 = sbr.rel (%p140) target = $region16
      $region15: #{separable_attn.11} parent=11 // pred_region
        _
      $region16: #{separable_attn.11} parent=11 // pred_fallthru
        _
    $region12: #{separable_attn.11} parent=5 // pred_fallthru
      _
    %p143 = scmp.lt.s32.totalorder %s10, 2
    // Predicated region
    $region17: #{separable_attn.11} parent=5 // pred_check
      %p144 = pneg %p143
    $region18: #{separable_attn.11} parent=5 // pred_check_branch
      %146 = sbr.rel (%p144) target = $region20
    $region19: #{separable_attn.11} parent=5 // pred_region
      // Predicated region
      $region21: #{separable_attn.11} parent=19 // pred_check
        %p147 = pneg %p63
      $region22: #{separable_attn.11} parent=19 // pred_check_branch
        %149 = sbr.rel (%p147) target = $region24
      $region23: #{separable_attn.11} parent=19 // pred_region
        %p150 = scmp.lt.s32.totalorder %s17, 1
        %s151 = scalar_select %p150, %s17, 1
        %s152 = smul.addr %s151, 8
        %s153 = scalar_lea.vmem %s1, %s152
      $region24: #{separable_attn.11} parent=19 // pred_fallthru
        _
      // Predicated region
      $region25: #{separable_attn.11} parent=19 // pred_check
        %p154 = pneg %p91
      $region26: #{separable_attn.11} parent=19 // pred_check_branch
        %156 = sbr.rel (%p154) target = $region28
      $region27: #{separable_attn.11} parent=19 // pred_region
        %s157 = smul.u32 256, %s18
        %p158 = scmp.lt.s32.totalorder %s17, 1
        %s159 = scalar_select %p158, %s17, 1
        %p160 = scmp.lt.s32.totalorder %s157, 255
        %s161 = scalar_select %p160, %s157, 255
        %s162 = smul.addr %s159, 256
        %s163 = sadd.s32 %s161, %s162
        %s164 = smul.addr %s163, 8
        %s165 = scalar_lea.vmem %s2, %s164
        %s166 = smul.u32 256, %s18
      $region28: #{separable_attn.11} parent=19 // pred_fallthru
        _
    $region20: #{separable_attn.11} parent=5 // pred_fallthru
      _
    %p167 = scmp.le.s32.totalorder 1, %s10
    %p168 = scmp.lt.s32.totalorder %s10, 3
    %p169 = pnand %p167, %p168
    %p170 = pneg %p169
    // Predicated region
    $region29: #{separable_attn.11} parent=5 // pred_check
      _
    $region30: #{separable_attn.11} parent=5 // pred_check_branch
      %172 = sbr.rel (%p169) target = $region32
    $region31: #{separable_attn.11} parent=5 // pred_region
      %s173 = ssub.s32 %s10, 1
      %p174 = pneg %p43
      %p175 = pneg %p40
      %p176 = scmp.lt.s32.totalorder %s19, 1
      %s177 = scalar_select %p176, %s19, 1
      %s178 = smul.addr %s177, 8
      %s179 = scalar_lea.vmem %s1, %s178
      %p180 = pneg %p69
      %p181 = pneg %p66
      %s182 = smul.u32 256, %s20
      %p183 = scmp.lt.s32.totalorder %s19, 1
      %s184 = scalar_select %p183, %s19, 1
      %p185 = scmp.lt.s32.totalorder %s182, 255
      %s186 = scalar_select %p185, %s182, 255
      %s187 = smul.addr %s184, 256
      %s188 = sadd.s32 %s186, %s187
      %s189 = smul.addr %s188, 8
      %s190 = scalar_lea.vmem %s2, %s189
      %p191 = pneg %p97
      %p192 = pneg %p94
      %p193 = pneg %p125
      %p194 = pneg %p122
      %s195 = smul.u32 8, %s20
      %p196 = scmp.lt.s32.totalorder %s19, 1
      %s197 = scalar_select %p196, %s19, 1
      %p198 = scmp.lt.s32.totalorder %s195, 7
      %s199 = scalar_select %p198, %s195, 7
      %s200 = smul.addr %s199, 2
      %s201 = smul.addr %s197, 16
      %s202 = sadd.s32 %s200, %s201
      %s203 = smul.addr %s202, 8
      %s204 = scalar_lea.vmem %s3, %s203
      %p205 = scmp.lt.s32.totalorder %s19, 1
      %s206 = scalar_select %p205, %s19, 1
      %s207 = smul.addr %s206, 8
      %s208 = scalar_lea.vmem %s1, %s207
      %s209 = smul.u32 256, %s20
      %p210 = scmp.lt.s32.totalorder %s19, 1
      %s211 = scalar_select %p210, %s19, 1
      %p212 = scmp.lt.s32.totalorder %s209, 255
      %s213 = scalar_select %p212, %s209, 255
      %s214 = smul.addr %s211, 256
      %s215 = sadd.s32 %s213, %s214
      %s216 = smul.addr %s215, 8
      %s217 = scalar_lea.vmem %s2, %s216
      %s218 = smul.u32 256, %s20
      %s219 = smul.u32 8, %s20
      %p220 = scmp.lt.s32.totalorder %s19, 1
      %s221 = scalar_select %p220, %s19, 1
      %p222 = scmp.lt.s32.totalorder %s219, 7
      %s223 = scalar_select %p222, %s219, 7
      %s224 = smul.addr %s223, 2
      %s225 = smul.addr %s221, 16
      %s226 = sadd.s32 %s224, %s225
      %s227 = smul.addr %s226, 8
      %s228 = scalar_lea.vmem %s3, %s227
      %s229 = smul.u32 8, %s20
      %v230 = vld [vmem:[%s208] sm:$0xff]
      %v231 = vld [vmem:[%s217] sm:$0xff]
      %v232 = vld [vmem:[%s217 + $0x8] sm:$0xff]
      %v233 = vld [vmem:[%s217 + $0x10] sm:$0xff]
      %v234 = vld [vmem:[%s217 + $0x18] sm:$0xff]
      %v235 = vld [vmem:[%s217 + $0x20] sm:$0xff]
      %v236 = vld [vmem:[%s217 + $0x28] sm:$0xff]
      %v237 = vld [vmem:[%s217 + $0x30] sm:$0xff]
      %v238 = vld [vmem:[%s217 + $0x38] sm:$0xff]
      %v239 = vld [vmem:[%s217 + $0x40] sm:$0xff]
      %v240 = vld [vmem:[%s217 + $0x48] sm:$0xff]
      %v241 = vld [vmem:[%s217 + $0x50] sm:$0xff]
      %v242 = vld [vmem:[%s217 + $0x58] sm:$0xff]
      %v243 = vld [vmem:[%s217 + $0x60] sm:$0xff]
      %v244 = vld [vmem:[%s217 + $0x68] sm:$0xff]
      %v245 = vld [vmem:[%s217 + $0x70] sm:$0xff]
      %v246 = vld [vmem:[%s217 + $0x78] sm:$0xff]
      %v247 = vld [vmem:[%s217 + $0x80] sm:$0xff]
      %v248 = vld [vmem:[%s217 + $0x88] sm:$0xff]
      %v249 = vld [vmem:[%s217 + $0x90] sm:$0xff]
      %v250 = vld [vmem:[%s217 + $0x98] sm:$0xff]
      %v251 = vld [vmem:[%s217 + $0xa0] sm:$0xff]
      %v252 = vld [vmem:[%s217 + $0xa8] sm:$0xff]
      %v253 = vld [vmem:[%s217 + $0xb0] sm:$0xff]
      %v254 = vld [vmem:[%s217 + $0xb8] sm:$0xff]
      %v255 = vld [vmem:[%s217 + $0xc0] sm:$0xff]
      %v256 = vld [vmem:[%s217 + $0xc8] sm:$0xff]
      %v257 = vld [vmem:[%s217 + $0xd0] sm:$0xff]
      %v258 = vld [vmem:[%s217 + $0xd8] sm:$0xff]
      %v259 = vld [vmem:[%s217 + $0xe0] sm:$0xff]
      %v260 = vld [vmem:[%s217 + $0xe8] sm:$0xff]
      %v261 = vld [vmem:[%s217 + $0xf0] sm:$0xff]
      %v262 = vld [vmem:[%s217 + $0xf8] sm:$0xff]
      %v263 = vld [vmem:[%s217 + $0x100] sm:$0xff]
      %v264 = vld [vmem:[%s217 + $0x108] sm:$0xff]
      %v265 = vld [vmem:[%s217 + $0x110] sm:$0xff]
      %v266 = vld [vmem:[%s217 + $0x118] sm:$0xff]
      %v267 = vld [vmem:[%s217 + $0x120] sm:$0xff]
      %v268 = vld [vmem:[%s217 + $0x128] sm:$0xff]
      %v269 = vld [vmem:[%s217 + $0x130] sm:$0xff]
      %v270 = vld [vmem:[%s217 + $0x138] sm:$0xff]
      %v271 = vld [vmem:[%s217 + $0x140] sm:$0xff]
      %v272 = vld [vmem:[%s217 + $0x148] sm:$0xff]
      %v273 = vld [vmem:[%s217 + $0x150] sm:$0xff]
      %v274 = vld [vmem:[%s217 + $0x158] sm:$0xff]
      %v275 = vld [vmem:[%s217 + $0x160] sm:$0xff]
      %v276 = vld [vmem:[%s217 + $0x168] sm:$0xff]
      %v277 = vld [vmem:[%s217 + $0x170] sm:$0xff]
      %v278 = vld [vmem:[%s217 + $0x178] sm:$0xff]
      %v279 = vld [vmem:[%s217 + $0x180] sm:$0xff]
      %v280 = vld [vmem:[%s217 + $0x188] sm:$0xff]
      %v281 = vld [vmem:[%s217 + $0x190] sm:$0xff]
      %v282 = vld [vmem:[%s217 + $0x198] sm:$0xff]
      %v283 = vld [vmem:[%s217 + $0x1a0] sm:$0xff]
      %v284 = vld [vmem:[%s217 + $0x1a8] sm:$0xff]
      %v285 = vld [vmem:[%s217 + $0x1b0] sm:$0xff]
      %v286 = vld [vmem:[%s217 + $0x1b8] sm:$0xff]
      %v287 = vld [vmem:[%s217 + $0x1c0] sm:$0xff]
      %v288 = vld [vmem:[%s217 + $0x1c8] sm:$0xff]
      %v289 = vld [vmem:[%s217 + $0x1d0] sm:$0xff]
      %v290 = vld [vmem:[%s217 + $0x1d8] sm:$0xff]
      %v291 = vld [vmem:[%s217 + $0x1e0] sm:$0xff]
      %v292 = vld [vmem:[%s217 + $0x1e8] sm:$0xff]
      %v293 = vld [vmem:[%s217 + $0x1f0] sm:$0xff]
      %v294 = vld [vmem:[%s217 + $0x1f8] sm:$0xff]
      %v295 = vld [vmem:[%s217 + $0x200] sm:$0xff]
      %v296 = vld [vmem:[%s217 + $0x208] sm:$0xff]
      %v297 = vld [vmem:[%s217 + $0x210] sm:$0xff]
      %v298 = vld [vmem:[%s217 + $0x218] sm:$0xff]
      %v299 = vld [vmem:[%s217 + $0x220] sm:$0xff]
      %v300 = vld [vmem:[%s217 + $0x228] sm:$0xff]
      %v301 = vld [vmem:[%s217 + $0x230] sm:$0xff]
      %v302 = vld [vmem:[%s217 + $0x238] sm:$0xff]
      %v303 = vld [vmem:[%s217 + $0x240] sm:$0xff]
      %v304 = vld [vmem:[%s217 + $0x248] sm:$0xff]
      %v305 = vld [vmem:[%s217 + $0x250] sm:$0xff]
      %v306 = vld [vmem:[%s217 + $0x258] sm:$0xff]
      %v307 = vld [vmem:[%s217 + $0x260] sm:$0xff]
      %v308 = vld [vmem:[%s217 + $0x268] sm:$0xff]
      %v309 = vld [vmem:[%s217 + $0x270] sm:$0xff]
      %v310 = vld [vmem:[%s217 + $0x278] sm:$0xff]
      %v311 = vld [vmem:[%s217 + $0x280] sm:$0xff]
      %v312 = vld [vmem:[%s217 + $0x288] sm:$0xff]
      %v313 = vld [vmem:[%s217 + $0x290] sm:$0xff]
      %v314 = vld [vmem:[%s217 + $0x298] sm:$0xff]
      %v315 = vld [vmem:[%s217 + $0x2a0] sm:$0xff]
      %v316 = vld [vmem:[%s217 + $0x2a8] sm:$0xff]
      %v317 = vld [vmem:[%s217 + $0x2b0] sm:$0xff]
      %v318 = vld [vmem:[%s217 + $0x2b8] sm:$0xff]
      %v319 = vld [vmem:[%s217 + $0x2c0] sm:$0xff]
      %v320 = vld [vmem:[%s217 + $0x2c8] sm:$0xff]
      %v321 = vld [vmem:[%s217 + $0x2d0] sm:$0xff]
      %v322 = vld [vmem:[%s217 + $0x2d8] sm:$0xff]
      %v323 = vld [vmem:[%s217 + $0x2e0] sm:$0xff]
      %v324 = vld [vmem:[%s217 + $0x2e8] sm:$0xff]
      %v325 = vld [vmem:[%s217 + $0x2f0] sm:$0xff]
      %v326 = vld [vmem:[%s217 + $0x2f8] sm:$0xff]
      %v327 = vld [vmem:[%s217 + $0x300] sm:$0xff]
      %v328 = vld [vmem:[%s217 + $0x308] sm:$0xff]
      %v329 = vld [vmem:[%s217 + $0x310] sm:$0xff]
      %v330 = vld [vmem:[%s217 + $0x318] sm:$0xff]
      %v331 = vld [vmem:[%s217 + $0x320] sm:$0xff]
      %v332 = vld [vmem:[%s217 + $0x328] sm:$0xff]
      %v333 = vld [vmem:[%s217 + $0x330] sm:$0xff]
      %v334 = vld [vmem:[%s217 + $0x338] sm:$0xff]
      %v335 = vld [vmem:[%s217 + $0x340] sm:$0xff]
      %v336 = vld [vmem:[%s217 + $0x348] sm:$0xff]
      %v337 = vld [vmem:[%s217 + $0x350] sm:$0xff]
      %v338 = vld [vmem:[%s217 + $0x358] sm:$0xff]
      %v339 = vld [vmem:[%s217 + $0x360] sm:$0xff]
      %v340 = vld [vmem:[%s217 + $0x368] sm:$0xff]
      %v341 = vld [vmem:[%s217 + $0x370] sm:$0xff]
      %v342 = vld [vmem:[%s217 + $0x378] sm:$0xff]
      %v343 = vld [vmem:[%s217 + $0x380] sm:$0xff]
      %v344 = vld [vmem:[%s217 + $0x388] sm:$0xff]
      %v345 = vld [vmem:[%s217 + $0x390] sm:$0xff]
      %v346 = vld [vmem:[%s217 + $0x398] sm:$0xff]
      %v347 = vld [vmem:[%s217 + $0x3a0] sm:$0xff]
      %v348 = vld [vmem:[%s217 + $0x3a8] sm:$0xff]
      %v349 = vld [vmem:[%s217 + $0x3b0] sm:$0xff]
      %v350 = vld [vmem:[%s217 + $0x3b8] sm:$0xff]
      %v351 = vld [vmem:[%s217 + $0x3c0] sm:$0xff]
      %v352 = vld [vmem:[%s217 + $0x3c8] sm:$0xff]
      %v353 = vld [vmem:[%s217 + $0x3d0] sm:$0xff]
      %v354 = vld [vmem:[%s217 + $0x3d8] sm:$0xff]
      %v355 = vld [vmem:[%s217 + $0x3e0] sm:$0xff]
      %v356 = vld [vmem:[%s217 + $0x3e8] sm:$0xff]
      %v357 = vld [vmem:[%s217 + $0x3f0] sm:$0xff]
      %v358 = vld [vmem:[%s217 + $0x3f8] sm:$0xff]
      %v359 = vld [vmem:[%s217 + $0x400] sm:$0xff]
      %v360 = vld [vmem:[%s217 + $0x408] sm:$0xff]
      %v361 = vld [vmem:[%s217 + $0x410] sm:$0xff]
      %v362 = vld [vmem:[%s217 + $0x418] sm:$0xff]
      %v363 = vld [vmem:[%s217 + $0x420] sm:$0xff]
      %v364 = vld [vmem:[%s217 + $0x428] sm:$0xff]
      %v365 = vld [vmem:[%s217 + $0x430] sm:$0xff]
      %v366 = vld [vmem:[%s217 + $0x438] sm:$0xff]
      %v367 = vld [vmem:[%s217 + $0x440] sm:$0xff]
      %v368 = vld [vmem:[%s217 + $0x448] sm:$0xff]
      %v369 = vld [vmem:[%s217 + $0x450] sm:$0xff]
      %v370 = vld [vmem:[%s217 + $0x458] sm:$0xff]
      %v371 = vld [vmem:[%s217 + $0x460] sm:$0xff]
      %v372 = vld [vmem:[%s217 + $0x468] sm:$0xff]
      %v373 = vld [vmem:[%s217 + $0x470] sm:$0xff]
      %v374 = vld [vmem:[%s217 + $0x478] sm:$0xff]
      %v375 = vld [vmem:[%s217 + $0x480] sm:$0xff]
      %v376 = vld [vmem:[%s217 + $0x488] sm:$0xff]
      %v377 = vld [vmem:[%s217 + $0x490] sm:$0xff]
      %v378 = vld [vmem:[%s217 + $0x498] sm:$0xff]
      %v379 = vld [vmem:[%s217 + $0x4a0] sm:$0xff]
      %v380 = vld [vmem:[%s217 + $0x4a8] sm:$0xff]
      %v381 = vld [vmem:[%s217 + $0x4b0] sm:$0xff]
      %v382 = vld [vmem:[%s217 + $0x4b8] sm:$0xff]
      %v383 = vld [vmem:[%s217 + $0x4c0] sm:$0xff]
      %v384 = vld [vmem:[%s217 + $0x4c8] sm:$0xff]
      %v385 = vld [vmem:[%s217 + $0x4d0] sm:$0xff]
      %v386 = vld [vmem:[%s217 + $0x4d8] sm:$0xff]
      %v387 = vld [vmem:[%s217 + $0x4e0] sm:$0xff]
      %v388 = vld [vmem:[%s217 + $0x4e8] sm:$0xff]
      %v389 = vld [vmem:[%s217 + $0x4f0] sm:$0xff]
      %v390 = vld [vmem:[%s217 + $0x4f8] sm:$0xff]
      %v391 = vld [vmem:[%s217 + $0x500] sm:$0xff]
      %v392 = vld [vmem:[%s217 + $0x508] sm:$0xff]
      %v393 = vld [vmem:[%s217 + $0x510] sm:$0xff]
      %v394 = vld [vmem:[%s217 + $0x518] sm:$0xff]
      %v395 = vld [vmem:[%s217 + $0x520] sm:$0xff]
      %v396 = vld [vmem:[%s217 + $0x528] sm:$0xff]
      %v397 = vld [vmem:[%s217 + $0x530] sm:$0xff]
      %v398 = vld [vmem:[%s217 + $0x538] sm:$0xff]
      %v399 = vld [vmem:[%s217 + $0x540] sm:$0xff]
      %v400 = vld [vmem:[%s217 + $0x548] sm:$0xff]
      %v401 = vld [vmem:[%s217 + $0x550] sm:$0xff]
      %v402 = vld [vmem:[%s217 + $0x558] sm:$0xff]
      %v403 = vld [vmem:[%s217 + $0x560] sm:$0xff]
      %v404 = vld [vmem:[%s217 + $0x568] sm:$0xff]
      %v405 = vld [vmem:[%s217 + $0x570] sm:$0xff]
      %v406 = vld [vmem:[%s217 + $0x578] sm:$0xff]
      %v407 = vld [vmem:[%s217 + $0x580] sm:$0xff]
      %v408 = vld [vmem:[%s217 + $0x588] sm:$0xff]
      %v409 = vld [vmem:[%s217 + $0x590] sm:$0xff]
      %v410 = vld [vmem:[%s217 + $0x598] sm:$0xff]
      %v411 = vld [vmem:[%s217 + $0x5a0] sm:$0xff]
      %v412 = vld [vmem:[%s217 + $0x5a8] sm:$0xff]
      %v413 = vld [vmem:[%s217 + $0x5b0] sm:$0xff]
      %v414 = vld [vmem:[%s217 + $0x5b8] sm:$0xff]
      %v415 = vld [vmem:[%s217 + $0x5c0] sm:$0xff]
      %v416 = vld [vmem:[%s217 + $0x5c8] sm:$0xff]
      %v417 = vld [vmem:[%s217 + $0x5d0] sm:$0xff]
      %v418 = vld [vmem:[%s217 + $0x5d8] sm:$0xff]
      %v419 = vld [vmem:[%s217 + $0x5e0] sm:$0xff]
      %v420 = vld [vmem:[%s217 + $0x5e8] sm:$0xff]
      %v421 = vld [vmem:[%s217 + $0x5f0] sm:$0xff]
      %v422 = vld [vmem:[%s217 + $0x5f8] sm:$0xff]
      %v423 = vld [vmem:[%s217 + $0x600] sm:$0xff]
      %v424 = vld [vmem:[%s217 + $0x608] sm:$0xff]
      %v425 = vld [vmem:[%s217 + $0x610] sm:$0xff]
      %v426 = vld [vmem:[%s217 + $0x618] sm:$0xff]
      %v427 = vld [vmem:[%s217 + $0x620] sm:$0xff]
      %v428 = vld [vmem:[%s217 + $0x628] sm:$0xff]
      %v429 = vld [vmem:[%s217 + $0x630] sm:$0xff]
      %v430 = vld [vmem:[%s217 + $0x638] sm:$0xff]
      %v431 = vld [vmem:[%s217 + $0x640] sm:$0xff]
      %v432 = vld [vmem:[%s217 + $0x648] sm:$0xff]
      %v433 = vld [vmem:[%s217 + $0x650] sm:$0xff]
      %v434 = vld [vmem:[%s217 + $0x658] sm:$0xff]
      %v435 = vld [vmem:[%s217 + $0x660] sm:$0xff]
      %v436 = vld [vmem:[%s217 + $0x668] sm:$0xff]
      %v437 = vld [vmem:[%s217 + $0x670] sm:$0xff]
      %v438 = vld [vmem:[%s217 + $0x678] sm:$0xff]
      %v439 = vld [vmem:[%s217 + $0x680] sm:$0xff]
      %v440 = vld [vmem:[%s217 + $0x688] sm:$0xff]
      %v441 = vld [vmem:[%s217 + $0x690] sm:$0xff]
      %v442 = vld [vmem:[%s217 + $0x698] sm:$0xff]
      %v443 = vld [vmem:[%s217 + $0x6a0] sm:$0xff]
      %v444 = vld [vmem:[%s217 + $0x6a8] sm:$0xff]
      %v445 = vld [vmem:[%s217 + $0x6b0] sm:$0xff]
      %v446 = vld [vmem:[%s217 + $0x6b8] sm:$0xff]
      %v447 = vld [vmem:[%s217 + $0x6c0] sm:$0xff]
      %v448 = vld [vmem:[%s217 + $0x6c8] sm:$0xff]
      %v449 = vld [vmem:[%s217 + $0x6d0] sm:$0xff]
      %v450 = vld [vmem:[%s217 + $0x6d8] sm:$0xff]
      %v451 = vld [vmem:[%s217 + $0x6e0] sm:$0xff]
      %v452 = vld [vmem:[%s217 + $0x6e8] sm:$0xff]
      %v453 = vld [vmem:[%s217 + $0x6f0] sm:$0xff]
      %v454 = vld [vmem:[%s217 + $0x6f8] sm:$0xff]
      %v455 = vld [vmem:[%s217 + $0x700] sm:$0xff]
      %v456 = vld [vmem:[%s217 + $0x708] sm:$0xff]
      %v457 = vld [vmem:[%s217 + $0x710] sm:$0xff]
      %v458 = vld [vmem:[%s217 + $0x718] sm:$0xff]
      %v459 = vld [vmem:[%s217 + $0x720] sm:$0xff]
      %v460 = vld [vmem:[%s217 + $0x728] sm:$0xff]
      %v461 = vld [vmem:[%s217 + $0x730] sm:$0xff]
      %v462 = vld [vmem:[%s217 + $0x738] sm:$0xff]
      %v463 = vld [vmem:[%s217 + $0x740] sm:$0xff]
      %v464 = vld [vmem:[%s217 + $0x748] sm:$0xff]
      %v465 = vld [vmem:[%s217 + $0x750] sm:$0xff]
      %v466 = vld [vmem:[%s217 + $0x758] sm:$0xff]
      %v467 = vld [vmem:[%s217 + $0x760] sm:$0xff]
      %v468 = vld [vmem:[%s217 + $0x768] sm:$0xff]
      %v469 = vld [vmem:[%s217 + $0x770] sm:$0xff]
      %v470 = vld [vmem:[%s217 + $0x778] sm:$0xff]
      %v471 = vld [vmem:[%s217 + $0x780] sm:$0xff]
      %v472 = vld [vmem:[%s217 + $0x788] sm:$0xff]
      %v473 = vld [vmem:[%s217 + $0x790] sm:$0xff]
      %v474 = vld [vmem:[%s217 + $0x798] sm:$0xff]
      %v475 = vld [vmem:[%s217 + $0x7a0] sm:$0xff]
      %v476 = vld [vmem:[%s217 + $0x7a8] sm:$0xff]
      %v477 = vld [vmem:[%s217 + $0x7b0] sm:$0xff]
      %v478 = vld [vmem:[%s217 + $0x7b8] sm:$0xff]
      %v479 = vld [vmem:[%s217 + $0x7c0] sm:$0xff]
      %v480 = vld [vmem:[%s217 + $0x7c8] sm:$0xff]
      %v481 = vld [vmem:[%s217 + $0x7d0] sm:$0xff]
      %v482 = vld [vmem:[%s217 + $0x7d8] sm:$0xff]
      %v483 = vld [vmem:[%s217 + $0x7e0] sm:$0xff]
      %v484 = vld [vmem:[%s217 + $0x7e8] sm:$0xff]
      %v485 = vld [vmem:[%s217 + $0x7f0] sm:$0xff]
      %v486 = vld [vmem:[%s217 + $0x7f8] sm:$0xff]
      %vm487 = vcmask 31744
      %v489 = vsel %vm487, %v230, 0
      %v492 = vsel %vm487, %v231, 0
      %v495 = vsel %vm487, %v232, 0
      %v498 = vsel %vm487, %v233, 0
      %v501 = vsel %vm487, %v234, 0
      %v504 = vsel %vm487, %v235, 0
      %v507 = vsel %vm487, %v236, 0
      %v510 = vsel %vm487, %v237, 0
      %v513 = vsel %vm487, %v238, 0
      %v516 = vsel %vm487, %v239, 0
      %v519 = vsel %vm487, %v240, 0
      %v522 = vsel %vm487, %v241, 0
      %v525 = vsel %vm487, %v242, 0
      %v528 = vsel %vm487, %v243, 0
      %v531 = vsel %vm487, %v244, 0
      %v534 = vsel %vm487, %v245, 0
      %v537 = vsel %vm487, %v246, 0
      %v540 = vsel %vm487, %v247, 0
      %v543 = vsel %vm487, %v248, 0
      %v546 = vsel %vm487, %v249, 0
      %v549 = vsel %vm487, %v250, 0
      %v552 = vsel %vm487, %v251, 0
      %v555 = vsel %vm487, %v252, 0
      %v558 = vsel %vm487, %v253, 0
      %v561 = vsel %vm487, %v254, 0
      %v564 = vsel %vm487, %v255, 0
      %v567 = vsel %vm487, %v256, 0
      %v570 = vsel %vm487, %v257, 0
      %v573 = vsel %vm487, %v258, 0
      %v576 = vsel %vm487, %v259, 0
      %v579 = vsel %vm487, %v260, 0
      %v582 = vsel %vm487, %v261, 0
      %v585 = vsel %vm487, %v262, 0
      %v588 = vsel %vm487, %v263, 0
      %v591 = vsel %vm487, %v264, 0
      %v594 = vsel %vm487, %v265, 0
      %v597 = vsel %vm487, %v266, 0
      %v600 = vsel %vm487, %v267, 0
      %v603 = vsel %vm487, %v268, 0
      %v606 = vsel %vm487, %v269, 0
      %v609 = vsel %vm487, %v270, 0
      %v612 = vsel %vm487, %v271, 0
      %v615 = vsel %vm487, %v272, 0
      %v618 = vsel %vm487, %v273, 0
      %v621 = vsel %vm487, %v274, 0
      %v624 = vsel %vm487, %v275, 0
      %v627 = vsel %vm487, %v276, 0
      %v630 = vsel %vm487, %v277, 0
      %v633 = vsel %vm487, %v278, 0
      %v636 = vsel %vm487, %v279, 0
      %v639 = vsel %vm487, %v280, 0
      %v642 = vsel %vm487, %v281, 0
      %v645 = vsel %vm487, %v282, 0
      %v648 = vsel %vm487, %v283, 0
      %v651 = vsel %vm487, %v284, 0
      %v654 = vsel %vm487, %v285, 0
      %v657 = vsel %vm487, %v286, 0
      %v660 = vsel %vm487, %v287, 0
      %v663 = vsel %vm487, %v288, 0
      %v666 = vsel %vm487, %v289, 0
      %v669 = vsel %vm487, %v290, 0
      %v672 = vsel %vm487, %v291, 0
      %v675 = vsel %vm487, %v292, 0
      %v678 = vsel %vm487, %v293, 0
      %v681 = vsel %vm487, %v294, 0
      %v684 = vsel %vm487, %v295, 0
      %v687 = vsel %vm487, %v296, 0
      %v690 = vsel %vm487, %v297, 0
      %v693 = vsel %vm487, %v298, 0
      %v696 = vsel %vm487, %v299, 0
      %v699 = vsel %vm487, %v300, 0
      %v702 = vsel %vm487, %v301, 0
      %v705 = vsel %vm487, %v302, 0
      %v708 = vsel %vm487, %v303, 0
      %v711 = vsel %vm487, %v304, 0
      %v714 = vsel %vm487, %v305, 0
      %v717 = vsel %vm487, %v306, 0
      %v720 = vsel %vm487, %v307, 0
      %v723 = vsel %vm487, %v308, 0
      %v726 = vsel %vm487, %v309, 0
      %v729 = vsel %vm487, %v310, 0
      %v732 = vsel %vm487, %v311, 0
      %v735 = vsel %vm487, %v312, 0
      %v738 = vsel %vm487, %v313, 0
      %v741 = vsel %vm487, %v314, 0
      %v744 = vsel %vm487, %v315, 0
      %v747 = vsel %vm487, %v316, 0
      %v750 = vsel %vm487, %v317, 0
      %v753 = vsel %vm487, %v318, 0
      %v756 = vsel %vm487, %v319, 0
      %v759 = vsel %vm487, %v320, 0
      %v762 = vsel %vm487, %v321, 0
      %v765 = vsel %vm487, %v322, 0
      %v768 = vsel %vm487, %v323, 0
      %v771 = vsel %vm487, %v324, 0
      %v774 = vsel %vm487, %v325, 0
      %v777 = vsel %vm487, %v326, 0
      %v780 = vsel %vm487, %v327, 0
      %v783 = vsel %vm487, %v328, 0
      %v786 = vsel %vm487, %v329, 0
      %v789 = vsel %vm487, %v330, 0
      %v792 = vsel %vm487, %v331, 0
      %v795 = vsel %vm487, %v332, 0
      %v798 = vsel %vm487, %v333, 0
      %v801 = vsel %vm487, %v334, 0
      %v804 = vsel %vm487, %v335, 0
      %v807 = vsel %vm487, %v336, 0
      %v810 = vsel %vm487, %v337, 0
      %v813 = vsel %vm487, %v338, 0
      %v816 = vsel %vm487, %v339, 0
      %v819 = vsel %vm487, %v340, 0
      %v822 = vsel %vm487, %v341, 0
      %v825 = vsel %vm487, %v342, 0
      %v828 = vsel %vm487, %v343, 0
      %v831 = vsel %vm487, %v344, 0
      %v834 = vsel %vm487, %v345, 0
      %v837 = vsel %vm487, %v346, 0
      %v840 = vsel %vm487, %v347, 0
      %v843 = vsel %vm487, %v348, 0
      %v846 = vsel %vm487, %v349, 0
      %v849 = vsel %vm487, %v350, 0
      %v852 = vsel %vm487, %v351, 0
      %v855 = vsel %vm487, %v352, 0
      %v858 = vsel %vm487, %v353, 0
      %v861 = vsel %vm487, %v354, 0
      %v864 = vsel %vm487, %v355, 0
      %v867 = vsel %vm487, %v356, 0
      %v870 = vsel %vm487, %v357, 0
      %v873 = vsel %vm487, %v358, 0
      %v876 = vsel %vm487, %v359, 0
      %v879 = vsel %vm487, %v360, 0
      %v882 = vsel %vm487, %v361, 0
      %v885 = vsel %vm487, %v362, 0
      %v888 = vsel %vm487, %v363, 0
      %v891 = vsel %vm487, %v364, 0
      %v894 = vsel %vm487, %v365, 0
      %v897 = vsel %vm487, %v366, 0
      %v900 = vsel %vm487, %v367, 0
      %v903 = vsel %vm487, %v368, 0
      %v906 = vsel %vm487, %v369, 0
      %v909 = vsel %vm487, %v370, 0
      %v912 = vsel %vm487, %v371, 0
      %v915 = vsel %vm487, %v372, 0
      %v918 = vsel %vm487, %v373, 0
      %v921 = vsel %vm487, %v374, 0
      %v924 = vsel %vm487, %v375, 0
      %v927 = vsel %vm487, %v376, 0
      %v930 = vsel %vm487, %v377, 0
      %v933 = vsel %vm487, %v378, 0
      %v936 = vsel %vm487, %v379, 0
      %v939 = vsel %vm487, %v380, 0
      %v942 = vsel %vm487, %v381, 0
      %v945 = vsel %vm487, %v382, 0
      %v948 = vsel %vm487, %v383, 0
      %v951 = vsel %vm487, %v384, 0
      %v954 = vsel %vm487, %v385, 0
      %v957 = vsel %vm487, %v386, 0
      %v960 = vsel %vm487, %v387, 0
      %v963 = vsel %vm487, %v388, 0
      %v966 = vsel %vm487, %v389, 0
      %v969 = vsel %vm487, %v390, 0
      %v972 = vsel %vm487, %v391, 0
      %v975 = vsel %vm487, %v392, 0
      %v978 = vsel %vm487, %v393, 0
      %v981 = vsel %vm487, %v394, 0
      %v984 = vsel %vm487, %v395, 0
      %v987 = vsel %vm487, %v396, 0
      %v990 = vsel %vm487, %v397, 0
      %v993 = vsel %vm487, %v398, 0
      %v996 = vsel %vm487, %v399, 0
      %v999 = vsel %vm487, %v400, 0
      %v1002 = vsel %vm487, %v401, 0
      %v1005 = vsel %vm487, %v402, 0
      %v1008 = vsel %vm487, %v403, 0
      %v1011 = vsel %vm487, %v404, 0
      %v1014 = vsel %vm487, %v405, 0
      %v1017 = vsel %vm487, %v406, 0
      %v1020 = vsel %vm487, %v407, 0
      %v1023 = vsel %vm487, %v408, 0
      %v1026 = vsel %vm487, %v409, 0
      %v1029 = vsel %vm487, %v410, 0
      %v1032 = vsel %vm487, %v411, 0
      %v1035 = vsel %vm487, %v412, 0
      %v1038 = vsel %vm487, %v413, 0
      %v1041 = vsel %vm487, %v414, 0
      %v1044 = vsel %vm487, %v415, 0
      %v1047 = vsel %vm487, %v416, 0
      %v1050 = vsel %vm487, %v417, 0
      %v1053 = vsel %vm487, %v418, 0
      %v1056 = vsel %vm487, %v419, 0
      %v1059 = vsel %vm487, %v420, 0
      %v1062 = vsel %vm487, %v421, 0
      %v1065 = vsel %vm487, %v422, 0
      %v1068 = vsel %vm487, %v423, 0
      %v1071 = vsel %vm487, %v424, 0
      %v1074 = vsel %vm487, %v425, 0
      %v1077 = vsel %vm487, %v426, 0
      %v1080 = vsel %vm487, %v427, 0
      %v1083 = vsel %vm487, %v428, 0
      %v1086 = vsel %vm487, %v429, 0
      %v1089 = vsel %vm487, %v430, 0
      %v1092 = vsel %vm487, %v431, 0
      %v1095 = vsel %vm487, %v432, 0
      %v1098 = vsel %vm487, %v433, 0
      %v1101 = vsel %vm487, %v434, 0
      %v1104 = vsel %vm487, %v435, 0
      %v1107 = vsel %vm487, %v436, 0
      %v1110 = vsel %vm487, %v437, 0
      %v1113 = vsel %vm487, %v438, 0
      %v1116 = vsel %vm487, %v439, 0
      %v1119 = vsel %vm487, %v440, 0
      %v1122 = vsel %vm487, %v441, 0
      %v1125 = vsel %vm487, %v442, 0
      %v1128 = vsel %vm487, %v443, 0
      %v1131 = vsel %vm487, %v444, 0
      %v1134 = vsel %vm487, %v445, 0
      %v1137 = vsel %vm487, %v446, 0
      %v1140 = vsel %vm487, %v447, 0
      %v1143 = vsel %vm487, %v448, 0
      %v1146 = vsel %vm487, %v449, 0
      %v1149 = vsel %vm487, %v450, 0
      %v1152 = vsel %vm487, %v451, 0
      %v1155 = vsel %vm487, %v452, 0
      %v1158 = vsel %vm487, %v453, 0
      %v1161 = vsel %vm487, %v454, 0
      %v1164 = vsel %vm487, %v455, 0
      %v1167 = vsel %vm487, %v456, 0
      %v1170 = vsel %vm487, %v457, 0
      %v1173 = vsel %vm487, %v458, 0
      %v1176 = vsel %vm487, %v459, 0
      %v1179 = vsel %vm487, %v460, 0
      %v1182 = vsel %vm487, %v461, 0
      %v1185 = vsel %vm487, %v462, 0
      %v1188 = vsel %vm487, %v463, 0
      %v1191 = vsel %vm487, %v464, 0
      %v1194 = vsel %vm487, %v465, 0
      %v1197 = vsel %vm487, %v466, 0
      %v1200 = vsel %vm487, %v467, 0
      %v1203 = vsel %vm487, %v468, 0
      %v1206 = vsel %vm487, %v469, 0
      %v1209 = vsel %vm487, %v470, 0
      %v1212 = vsel %vm487, %v471, 0
      %v1215 = vsel %vm487, %v472, 0
      %v1218 = vsel %vm487, %v473, 0
      %v1221 = vsel %vm487, %v474, 0
      %v1224 = vsel %vm487, %v475, 0
      %v1227 = vsel %vm487, %v476, 0
      %v1230 = vsel %vm487, %v477, 0
      %v1233 = vsel %vm487, %v478, 0
      %v1236 = vsel %vm487, %v479, 0
      %v1239 = vsel %vm487, %v480, 0
      %v1242 = vsel %vm487, %v481, 0
      %v1245 = vsel %vm487, %v482, 0
      %v1248 = vsel %vm487, %v483, 0
      %v1251 = vsel %vm487, %v484, 0
      %v1254 = vsel %vm487, %v485, 0
      %v1257 = vsel %vm487, %v486, 0
      %1259 = vmatprep.subr.mxu0 0.0
      %1260 = vmatpush1.xpose.msra.mxu0 %v492
      %1261 = vmatprep.subr.mxu0 0.0
      %1262 = vmatpush1.xpose.msra.mxu0 %v495
      %1263 = vmatprep.subr.mxu0 0.0
      %1264 = vmatpush1.xpose.msra.mxu0 %v498
      %1265 = vmatprep.subr.mxu0 0.0
      %1266 = vmatpush1.xpose.msra.mxu0 %v501
      %1267 = vmatprep.subr.mxu0 0.0
      %1268 = vmatpush1.xpose.msra.mxu0 %v504
      %1269 = vmatprep.subr.mxu0 0.0
      %1270 = vmatpush1.xpose.msra.mxu0 %v507
      %1271 = vmatprep.subr.mxu0 0.0
      %1272 = vmatpush1.xpose.msra.mxu0 %v510
      %1273 = vmatprep.subr.mxu0 0.0
      %1274 = vmatpush1.xpose.msra.mxu0 %v513
      %1275 = vmatprep.subr.mxu0 0.0
      %1276 = vmatpush1.xpose.msra.mxu0 %v516
      %1277 = vmatprep.subr.mxu0 0.0
      %1278 = vmatpush1.xpose.msra.mxu0 %v519
      %1279 = vmatprep.subr.mxu0 0.0
      %1280 = vmatpush1.xpose.msra.mxu0 %v522
      %1281 = vmatprep.subr.mxu0 0.0
      %1282 = vmatpush1.xpose.msra.mxu0 %v525
      %1283 = vmatprep.subr.mxu0 0.0
      %1284 = vmatpush1.xpose.msra.mxu0 %v528
      %1285 = vmatprep.subr.mxu0 0.0
      %1286 = vmatpush1.xpose.msra.mxu0 %v531
      %1287 = vmatprep.subr.mxu0 0.0
      %1288 = vmatpush1.xpose.msra.mxu0 %v534
      %1289 = vmatprep.subr.mxu0 0.0
      %1290 = vmatpush1.xpose.msra.mxu0 %v537
      %1291 = vmatprep.subr.mxu0 0.0
      %1292 = vmatpush1.xpose.msra.mxu0 %v540
      %1293 = vmatprep.subr.mxu0 0.0
      %1294 = vmatpush1.xpose.msra.mxu0 %v543
      %1295 = vmatprep.subr.mxu0 0.0
      %1296 = vmatpush1.xpose.msra.mxu0 %v546
      %1297 = vmatprep.subr.mxu0 0.0
      %1298 = vmatpush1.xpose.msra.mxu0 %v549
      %1299 = vmatprep.subr.mxu0 0.0
      %1300 = vmatpush1.xpose.msra.mxu0 %v552
      %1301 = vmatprep.subr.mxu0 0.0
      %1302 = vmatpush1.xpose.msra.mxu0 %v555
      %1303 = vmatprep.subr.mxu0 0.0
      %1304 = vmatpush1.xpose.msra.mxu0 %v558
      %1305 = vmatprep.subr.mxu0 0.0
      %1306 = vmatpush1.xpose.msra.mxu0 %v561
      %1307 = vmatprep.subr.mxu0 0.0
      %1308 = vmatpush1.xpose.msra.mxu0 %v564
      %1309 = vmatprep.subr.mxu0 0.0
      %1310 = vmatpush1.xpose.msra.mxu0 %v567
      %1311 = vmatprep.subr.mxu0 0.0
      %1312 = vmatpush1.xpose.msra.mxu0 %v570
      %1313 = vmatprep.subr.mxu0 0.0
      %1314 = vmatpush1.xpose.msra.mxu0 %v573
      %1315 = vmatprep.subr.mxu0 0.0
      %1316 = vmatpush1.xpose.msra.mxu0 %v576
      %1317 = vmatprep.subr.mxu0 0.0
      %1318 = vmatpush1.xpose.msra.mxu0 %v579
      %1319 = vmatprep.subr.mxu0 0.0
      %1320 = vmatpush1.xpose.msra.mxu0 %v582
      %1321 = vmatprep.subr.mxu0 0.0
      %1322 = vmatpush1.xpose.msra.mxu0 %v585
      %1323 = vmatprep.mubr.f32.mxu0 0.0
      %1324 = vmatmul.mubr.f32.gmra.mrb[0].mxu0 %v489
      %v1325 = vpop.f32.mrb[0].mxu0
      %v1326 = vadd.f32 0.0, %v1325
      %v1327 = vpop.f32.mrb[0].mxu0
      %v1328 = vadd.f32 0.0, %v1327
      %1329 = vdwg.mxu0
      %1330 = vmatprep.subr.mxu0 0.0
      %1331 = vmatpush1.xpose.msra.mxu0 %v588
      %1332 = vmatprep.subr.mxu0 0.0
      %1333 = vmatpush1.xpose.msra.mxu0 %v591
      %1334 = vmatprep.subr.mxu0 0.0
      %1335 = vmatpush1.xpose.msra.mxu0 %v594
      %1336 = vmatprep.subr.mxu0 0.0
      %1337 = vmatpush1.xpose.msra.mxu0 %v597
      %1338 = vmatprep.subr.mxu0 0.0
      %1339 = vmatpush1.xpose.msra.mxu0 %v600
      %1340 = vmatprep.subr.mxu0 0.0
      %1341 = vmatpush1.xpose.msra.mxu0 %v603
      %1342 = vmatprep.subr.mxu0 0.0
      %1343 = vmatpush1.xpose.msra.mxu0 %v606
      %1344 = vmatprep.subr.mxu0 0.0
      %1345 = vmatpush1.xpose.msra.mxu0 %v609
      %1346 = vmatprep.subr.mxu0 0.0
      %1347 = vmatpush1.xpose.msra.mxu0 %v612
      %1348 = vmatprep.subr.mxu0 0.0
      %1349 = vmatpush1.xpose.msra.mxu0 %v615
      %1350 = vmatprep.subr.mxu0 0.0
      %1351 = vmatpush1.xpose.msra.mxu0 %v618
      %1352 = vmatprep.subr.mxu0 0.0
      %1353 = vmatpush1.xpose.msra.mxu0 %v621
      %1354 = vmatprep.subr.mxu0 0.0
      %1355 = vmatpush1.xpose.msra.mxu0 %v624
      %1356 = vmatprep.subr.mxu0 0.0
      %1357 = vmatpush1.xpose.msra.mxu0 %v627
      %1358 = vmatprep.subr.mxu0 0.0
      %1359 = vmatpush1.xpose.msra.mxu0 %v630
      %1360 = vmatprep.subr.mxu0 0.0
      %1361 = vmatpush1.xpose.msra.mxu0 %v633
      %1362 = vmatprep.subr.mxu0 0.0
      %1363 = vmatpush1.xpose.msra.mxu0 %v636
      %1364 = vmatprep.subr.mxu0 0.0
      %1365 = vmatpush1.xpose.msra.mxu0 %v639
      %1366 = vmatprep.subr.mxu0 0.0
      %1367 = vmatpush1.xpose.msra.mxu0 %v642
      %1368 = vmatprep.subr.mxu0 0.0
      %1369 = vmatpush1.xpose.msra.mxu0 %v645
      %1370 = vmatprep.subr.mxu0 0.0
      %1371 = vmatpush1.xpose.msra.mxu0 %v648
      %1372 = vmatprep.subr.mxu0 0.0
      %1373 = vmatpush1.xpose.msra.mxu0 %v651
      %1374 = vmatprep.subr.mxu0 0.0
      %1375 = vmatpush1.xpose.msra.mxu0 %v654
      %1376 = vmatprep.subr.mxu0 0.0
      %1377 = vmatpush1.xpose.msra.mxu0 %v657
      %1378 = vmatprep.subr.mxu0 0.0
      %1379 = vmatpush1.xpose.msra.mxu0 %v660
      %1380 = vmatprep.subr.mxu0 0.0
      %1381 = vmatpush1.xpose.msra.mxu0 %v663
      %1382 = vmatprep.subr.mxu0 0.0
      %1383 = vmatpush1.xpose.msra.mxu0 %v666
      %1384 = vmatprep.subr.mxu0 0.0
      %1385 = vmatpush1.xpose.msra.mxu0 %v669
      %1386 = vmatprep.subr.mxu0 0.0
      %1387 = vmatpush1.xpose.msra.mxu0 %v672
      %1388 = vmatprep.subr.mxu0 0.0
      %1389 = vmatpush1.xpose.msra.mxu0 %v675
      %1390 = vmatprep.subr.mxu0 0.0
      %1391 = vmatpush1.xpose.msra.mxu0 %v678
      %1392 = vmatprep.subr.mxu0 0.0
      %1393 = vmatpush1.xpose.msra.mxu0 %v681
      %1394 = vmatprep.mubr.f32.mxu0 0.0
      %1395 = vmatmul.mubr.f32.gmra.mrb[0].mxu0 %v489
      %v1396 = vpop.f32.mrb[0].mxu0
      %v1397 = vadd.f32 0.0, %v1396
      %v1398 = vpop.f32.mrb[0].mxu0
      %v1399 = vadd.f32 0.0, %v1398
      %1400 = vdwg.mxu0
      %1401 = vmatprep.subr.mxu0 0.0
      %1402 = vmatpush1.xpose.msra.mxu0 %v684
      %1403 = vmatprep.subr.mxu0 0.0
      %1404 = vmatpush1.xpose.msra.mxu0 %v687
      %1405 = vmatprep.subr.mxu0 0.0
      %1406 = vmatpush1.xpose.msra.mxu0 %v690
      %1407 = vmatprep.subr.mxu0 0.0
      %1408 = vmatpush1.xpose.msra.mxu0 %v693
      %1409 = vmatprep.subr.mxu0 0.0
      %1410 = vmatpush1.xpose.msra.mxu0 %v696
      %1411 = vmatprep.subr.mxu0 0.0
      %1412 = vmatpush1.xpose.msra.mxu0 %v699
      %1413 = vmatprep.subr.mxu0 0.0
      %1414 = vmatpush1.xpose.msra.mxu0 %v702
      %1415 = vmatprep.subr.mxu0 0.0
      %1416 = vmatpush1.xpose.msra.mxu0 %v705
      %1417 = vmatprep.subr.mxu0 0.0
      %1418 = vmatpush1.xpose.msra.mxu0 %v708
      %1419 = vmatprep.subr.mxu0 0.0
      %1420 = vmatpush1.xpose.msra.mxu0 %v711
      %1421 = vmatprep.subr.mxu0 0.0
      %1422 = vmatpush1.xpose.msra.mxu0 %v714
      %1423 = vmatprep.subr.mxu0 0.0
      %1424 = vmatpush1.xpose.msra.mxu0 %v717
      %1425 = vmatprep.subr.mxu0 0.0
      %1426 = vmatpush1.xpose.msra.mxu0 %v720
      %1427 = vmatprep.subr.mxu0 0.0
      %1428 = vmatpush1.xpose.msra.mxu0 %v723
      %1429 = vmatprep.subr.mxu0 0.0
      %1430 = vmatpush1.xpose.msra.mxu0 %v726
      %1431 = vmatprep.subr.mxu0 0.0
      %1432 = vmatpush1.xpose.msra.mxu0 %v729
      %1433 = vmatprep.subr.mxu0 0.0
      %1434 = vmatpush1.xpose.msra.mxu0 %v732
      %1435 = vmatprep.subr.mxu0 0.0
      %1436 = vmatpush1.xpose.msra.mxu0 %v735
      %1437 = vmatprep.subr.mxu0 0.0
      %1438 = vmatpush1.xpose.msra.mxu0 %v738
      %1439 = vmatprep.subr.mxu0 0.0
      %1440 = vmatpush1.xpose.msra.mxu0 %v741
      %1441 = vmatprep.subr.mxu0 0.0
      %1442 = vmatpush1.xpose.msra.mxu0 %v744
      %1443 = vmatprep.subr.mxu0 0.0
      %1444 = vmatpush1.xpose.msra.mxu0 %v747
      %1445 = vmatprep.subr.mxu0 0.0
      %1446 = vmatpush1.xpose.msra.mxu0 %v750
      %1447 = vmatprep.subr.mxu0 0.0
      %1448 = vmatpush1.xpose.msra.mxu0 %v753
      %1449 = vmatprep.subr.mxu0 0.0
      %1450 = vmatpush1.xpose.msra.mxu0 %v756
      %1451 = vmatprep.subr.mxu0 0.0
      %1452 = vmatpush1.xpose.msra.mxu0 %v759
      %1453 = vmatprep.subr.mxu0 0.0
      %1454 = vmatpush1.xpose.msra.mxu0 %v762
      %1455 = vmatprep.subr.mxu0 0.0
      %1456 = vmatpush1.xpose.msra.mxu0 %v765
      %1457 = vmatprep.subr.mxu0 0.0
      %1458 = vmatpush1.xpose.msra.mxu0 %v768
      %1459 = vmatprep.subr.mxu0 0.0
      %1460 = vmatpush1.xpose.msra.mxu0 %v771
      %1461 = vmatprep.subr.mxu0 0.0
      %1462 = vmatpush1.xpose.msra.mxu0 %v774
      %1463 = vmatprep.subr.mxu0 0.0
      %1464 = vmatpush1.xpose.msra.mxu0 %v777
      %1465 = vmatprep.mubr.f32.mxu0 0.0
      %1466 = vmatmul.mubr.f32.gmra.mrb[0].mxu0 %v489
      %v1467 = vpop.f32.mrb[0].mxu0
      %v1468 = vadd.f32 0.0, %v1467
      %v1469 = vpop.f32.mrb[0].mxu0
      %v1470 = vadd.f32 0.0, %v1469
      %1471 = vdwg.mxu0
      %1472 = vmatprep.subr.mxu0 0.0
      %1473 = vmatpush1.xpose.msra.mxu0 %v780
      %1474 = vmatprep.subr.mxu0 0.0
      %1475 = vmatpush1.xpose.msra.mxu0 %v783
      %1476 = vmatprep.subr.mxu0 0.0
      %1477 = vmatpush1.xpose.msra.mxu0 %v786
      %1478 = vmatprep.subr.mxu0 0.0
      %1479 = vmatpush1.xpose.msra.mxu0 %v789
      %1480 = vmatprep.subr.mxu0 0.0
      %1481 = vmatpush1.xpose.msra.mxu0 %v792
      %1482 = vmatprep.subr.mxu0 0.0
      %1483 = vmatpush1.xpose.msra.mxu0 %v795
      %1484 = vmatprep.subr.mxu0 0.0
      %1485 = vmatpush1.xpose.msra.mxu0 %v798
      %1486 = vmatprep.subr.mxu0 0.0
      %1487 = vmatpush1.xpose.msra.mxu0 %v801
      %1488 = vmatprep.subr.mxu0 0.0
      %1489 = vmatpush1.xpose.msra.mxu0 %v804
      %1490 = vmatprep.subr.mxu0 0.0
      %1491 = vmatpush1.xpose.msra.mxu0 %v807
      %1492 = vmatprep.subr.mxu0 0.0
      %1493 = vmatpush1.xpose.msra.mxu0 %v810
      %1494 = vmatprep.subr.mxu0 0.0
      %1495 = vmatpush1.xpose.msra.mxu0 %v813
      %1496 = vmatprep.subr.mxu0 0.0
      %1497 = vmatpush1.xpose.msra.mxu0 %v816
      %1498 = vmatprep.subr.mxu0 0.0
      %1499 = vmatpush1.xpose.msra.mxu0 %v819
      %1500 = vmatprep.subr.mxu0 0.0
      %1501 = vmatpush1.xpose.msra.mxu0 %v822
      %1502 = vmatprep.subr.mxu0 0.0
      %1503 = vmatpush1.xpose.msra.mxu0 %v825
      %1504 = vmatprep.subr.mxu0 0.0
      %1505 = vmatpush1.xpose.msra.mxu0 %v828
      %1506 = vmatprep.subr.mxu0 0.0
      %1507 = vmatpush1.xpose.msra.mxu0 %v831
      %1508 = vmatprep.subr.mxu0 0.0
      %1509 = vmatpush1.xpose.msra.mxu0 %v834
      %1510 = vmatprep.subr.mxu0 0.0
      %1511 = vmatpush1.xpose.msra.mxu0 %v837
      %1512 = vmatprep.subr.mxu0 0.0
      %1513 = vmatpush1.xpose.msra.mxu0 %v840
      %1514 = vmatprep.subr.mxu0 0.0
      %1515 = vmatpush1.xpose.msra.mxu0 %v843
      %1516 = vmatprep.subr.mxu0 0.0
      %1517 = vmatpush1.xpose.msra.mxu0 %v846
      %1518 = vmatprep.subr.mxu0 0.0
      %1519 = vmatpush1.xpose.msra.mxu0 %v849
      %1520 = vmatprep.subr.mxu0 0.0
      %1521 = vmatpush1.xpose.msra.mxu0 %v852
      %1522 = vmatprep.subr.mxu0 0.0
      %1523 = vmatpush1.xpose.msra.mxu0 %v855
      %1524 = vmatprep.subr.mxu0 0.0
      %1525 = vmatpush1.xpose.msra.mxu0 %v858
      %1526 = vmatprep.subr.mxu0 0.0
      %1527 = vmatpush1.xpose.msra.mxu0 %v861
      %1528 = vmatprep.subr.mxu0 0.0
      %1529 = vmatpush1.xpose.msra.mxu0 %v864
      %1530 = vmatprep.subr.mxu0 0.0
      %1531 = vmatpush1.xpose.msra.mxu0 %v867
      %1532 = vmatprep.subr.mxu0 0.0
      %1533 = vmatpush1.xpose.msra.mxu0 %v870
      %1534 = vmatprep.subr.mxu0 0.0
      %1535 = vmatpush1.xpose.msra.mxu0 %v873
      %1536 = vmatprep.mubr.f32.mxu0 0.0
      %1537 = vmatmul.mubr.f32.gmra.mrb[0].mxu0 %v489
      %v1538 = vpop.f32.mrb[0].mxu0
      %v1539 = vadd.f32 0.0, %v1538
      %v1540 = vpop.f32.mrb[0].mxu0
      %v1541 = vadd.f32 0.0, %v1540
      %1542 = vdwg.mxu0
      %1543 = vmatprep.subr.mxu0 0.0
      %1544 = vmatpush1.xpose.msra.mxu0 %v876
      %1545 = vmatprep.subr.mxu0 0.0
      %1546 = vmatpush1.xpose.msra.mxu0 %v879
      %1547 = vmatprep.subr.mxu0 0.0
      %1548 = vmatpush1.xpose.msra.mxu0 %v882
      %1549 = vmatprep.subr.mxu0 0.0
      %1550 = vmatpush1.xpose.msra.mxu0 %v885
      %1551 = vmatprep.subr.mxu0 0.0
      %1552 = vmatpush1.xpose.msra.mxu0 %v888
      %1553 = vmatprep.subr.mxu0 0.0
      %1554 = vmatpush1.xpose.msra.mxu0 %v891
      %1555 = vmatprep.subr.mxu0 0.0
      %1556 = vmatpush1.xpose.msra.mxu0 %v894
      %1557 = vmatprep.subr.mxu0 0.0
      %1558 = vmatpush1.xpose.msra.mxu0 %v897
      %1559 = vmatprep.subr.mxu0 0.0
      %1560 = vmatpush1.xpose.msra.mxu0 %v900
      %1561 = vmatprep.subr.mxu0 0.0
      %1562 = vmatpush1.xpose.msra.mxu0 %v903
      %1563 = vmatprep.subr.mxu0 0.0
      %1564 = vmatpush1.xpose.msra.mxu0 %v906
      %1565 = vmatprep.subr.mxu0 0.0
      %1566 = vmatpush1.xpose.msra.mxu0 %v909
      %1567 = vmatprep.subr.mxu0 0.0
      %1568 = vmatpush1.xpose.msra.mxu0 %v912
      %1569 = vmatprep.subr.mxu0 0.0
      %1570 = vmatpush1.xpose.msra.mxu0 %v915
      %1571 = vmatprep.subr.mxu0 0.0
      %1572 = vmatpush1.xpose.msra.mxu0 %v918
      %1573 = vmatprep.subr.mxu0 0.0
      %1574 = vmatpush1.xpose.msra.mxu0 %v921
      %1575 = vmatprep.subr.mxu0 0.0
      %1576 = vmatpush1.xpose.msra.mxu0 %v924
      %1577 = vmatprep.subr.mxu0 0.0
      %1578 = vmatpush1.xpose.msra.mxu0 %v927
      %1579 = vmatprep.subr.mxu0 0.0
      %1580 = vmatpush1.xpose.msra.mxu0 %v930
      %1581 = vmatprep.subr.mxu0 0.0
      %1582 = vmatpush1.xpose.msra.mxu0 %v933
      %1583 = vmatprep.subr.mxu0 0.0
      %1584 = vmatpush1.xpose.msra.mxu0 %v936
      %1585 = vmatprep.subr.mxu0 0.0
      %1586 = vmatpush1.xpose.msra.mxu0 %v939
      %1587 = vmatprep.subr.mxu0 0.0
      %1588 = vmatpush1.xpose.msra.mxu0 %v942
      %1589 = vmatprep.subr.mxu0 0.0
      %1590 = vmatpush1.xpose.msra.mxu0 %v945
      %1591 = vmatprep.subr.mxu0 0.0
      %1592 = vmatpush1.xpose.msra.mxu0 %v948
      %1593 = vmatprep.subr.mxu0 0.0
      %1594 = vmatpush1.xpose.msra.mxu0 %v951
      %1595 = vmatprep.subr.mxu0 0.0
      %1596 = vmatpush1.xpose.msra.mxu0 %v954
      %1597 = vmatprep.subr.mxu0 0.0
      %1598 = vmatpush1.xpose.msra.mxu0 %v957
      %1599 = vmatprep.subr.mxu0 0.0
      %1600 = vmatpush1.xpose.msra.mxu0 %v960
      %1601 = vmatprep.subr.mxu0 0.0
      %1602 = vmatpush1.xpose.msra.mxu0 %v963
      %1603 = vmatprep.subr.mxu0 0.0
      %1604 = vmatpush1.xpose.msra.mxu0 %v966
      %1605 = vmatprep.subr.mxu0 0.0
      %1606 = vmatpush1.xpose.msra.mxu0 %v969
      %1607 = vmatprep.mubr.f32.mxu0 0.0
      %1608 = vmatmul.mubr.f32.gmra.mrb[0].mxu0 %v489
      %v1609 = vpop.f32.mrb[0].mxu0
      %v1610 = vadd.f32 0.0, %v1609
      %v1611 = vpop.f32.mrb[0].mxu0
      %v1612 = vadd.f32 0.0, %v1611
      %1613 = vdwg.mxu0
      %1614 = vmatprep.subr.mxu0 0.0
      %1615 = vmatpush1.xpose.msra.mxu0 %v972
      %1616 = vmatprep.subr.mxu0 0.0
      %1617 = vmatpush1.xpose.msra.mxu0 %v975
      %1618 = vmatprep.subr.mxu0 0.0
      %1619 = vmatpush1.xpose.msra.mxu0 %v978
      %1620 = vmatprep.subr.mxu0 0.0
      %1621 = vmatpush1.xpose.msra.mxu0 %v981
      %1622 = vmatprep.subr.mxu0 0.0
      %1623 = vmatpush1.xpose.msra.mxu0 %v984
      %1624 = vmatprep.subr.mxu0 0.0
      %1625 = vmatpush1.xpose.msra.mxu0 %v987
      %1626 = vmatprep.subr.mxu0 0.0
      %1627 = vmatpush1.xpose.msra.mxu0 %v990
      %1628 = vmatprep.subr.mxu0 0.0
      %1629 = vmatpush1.xpose.msra.mxu0 %v993
      %1630 = vmatprep.subr.mxu0 0.0
      %1631 = vmatpush1.xpose.msra.mxu0 %v996
      %1632 = vmatprep.subr.mxu0 0.0
      %1633 = vmatpush1.xpose.msra.mxu0 %v999
      %1634 = vmatprep.subr.mxu0 0.0
      %1635 = vmatpush1.xpose.msra.mxu0 %v1002
      %1636 = vmatprep.subr.mxu0 0.0
      %1637 = vmatpush1.xpose.msra.mxu0 %v1005
      %1638 = vmatprep.subr.mxu0 0.0
      %1639 = vmatpush1.xpose.msra.mxu0 %v1008
      %1640 = vmatprep.subr.mxu0 0.0
      %1641 = vmatpush1.xpose.msra.mxu0 %v1011
      %1642 = vmatprep.subr.mxu0 0.0
      %1643 = vmatpush1.xpose.msra.mxu0 %v1014
      %1644 = vmatprep.subr.mxu0 0.0
      %1645 = vmatpush1.xpose.msra.mxu0 %v1017
      %1646 = vmatprep.subr.mxu0 0.0
      %1647 = vmatpush1.xpose.msra.mxu0 %v1020
      %1648 = vmatprep.subr.mxu0 0.0
      %1649 = vmatpush1.xpose.msra.mxu0 %v1023
      %1650 = vmatprep.subr.mxu0 0.0
      %1651 = vmatpush1.xpose.msra.mxu0 %v1026
      %1652 = vmatprep.subr.mxu0 0.0
      %1653 = vmatpush1.xpose.msra.mxu0 %v1029
      %1654 = vmatprep.subr.mxu0 0.0
      %1655 = vmatpush1.xpose.msra.mxu0 %v1032
      %1656 = vmatprep.subr.mxu0 0.0
      %1657 = vmatpush1.xpose.msra.mxu0 %v1035
      %1658 = vmatprep.subr.mxu0 0.0
      %1659 = vmatpush1.xpose.msra.mxu0 %v1038
      %1660 = vmatprep.subr.mxu0 0.0
      %1661 = vmatpush1.xpose.msra.mxu0 %v1041
      %1662 = vmatprep.subr.mxu0 0.0
      %1663 = vmatpush1.xpose.msra.mxu0 %v1044
      %1664 = vmatprep.subr.mxu0 0.0
      %1665 = vmatpush1.xpose.msra.mxu0 %v1047
      %1666 = vmatprep.subr.mxu0 0.0
      %1667 = vmatpush1.xpose.msra.mxu0 %v1050
      %1668 = vmatprep.subr.mxu0 0.0
      %1669 = vmatpush1.xpose.msra.mxu0 %v1053
      %1670 = vmatprep.subr.mxu0 0.0
      %1671 = vmatpush1.xpose.msra.mxu0 %v1056
      %1672 = vmatprep.subr.mxu0 0.0
      %1673 = vmatpush1.xpose.msra.mxu0 %v1059
      %1674 = vmatprep.subr.mxu0 0.0
      %1675 = vmatpush1.xpose.msra.mxu0 %v1062
      %1676 = vmatprep.subr.mxu0 0.0
      %1677 = vmatpush1.xpose.msra.mxu0 %v1065
      %1678 = vmatprep.mubr.f32.mxu0 0.0
      %1679 = vmatmul.mubr.f32.gmra.mrb[0].mxu0 %v489
      %v1680 = vpop.f32.mrb[0].mxu0
      %v1681 = vadd.f32 0.0, %v1680
      %v1682 = vpop.f32.mrb[0].mxu0
      %v1683 = vadd.f32 0.0, %v1682
      %1684 = vdwg.mxu0
      %1685 = vmatprep.subr.mxu0 0.0
      %1686 = vmatpush1.xpose.msra.mxu0 %v1068
      %1687 = vmatprep.subr.mxu0 0.0
      %1688 = vmatpush1.xpose.msra.mxu0 %v1071
      %1689 = vmatprep.subr.mxu0 0.0
      %1690 = vmatpush1.xpose.msra.mxu0 %v1074
      %1691 = vmatprep.subr.mxu0 0.0
      %1692 = vmatpush1.xpose.msra.mxu0 %v1077
      %1693 = vmatprep.subr.mxu0 0.0
      %1694 = vmatpush1.xpose.msra.mxu0 %v1080
      %1695 = vmatprep.subr.mxu0 0.0
      %1696 = vmatpush1.xpose.msra.mxu0 %v1083
      %1697 = vmatprep.subr.mxu0 0.0
      %1698 = vmatpush1.xpose.msra.mxu0 %v1086
      %1699 = vmatprep.subr.mxu0 0.0
      %1700 = vmatpush1.xpose.msra.mxu0 %v1089
      %1701 = vmatprep.subr.mxu0 0.0
      %1702 = vmatpush1.xpose.msra.mxu0 %v1092
      %1703 = vmatprep.subr.mxu0 0.0
      %1704 = vmatpush1.xpose.msra.mxu0 %v1095
      %1705 = vmatprep.subr.mxu0 0.0
      %1706 = vmatpush1.xpose.msra.mxu0 %v1098
      %1707 = vmatprep.subr.mxu0 0.0
      %1708 = vmatpush1.xpose.msra.mxu0 %v1101
      %1709 = vmatprep.subr.mxu0 0.0
      %1710 = vmatpush1.xpose.msra.mxu0 %v1104
      %1711 = vmatprep.subr.mxu0 0.0
      %1712 = vmatpush1.xpose.msra.mxu0 %v1107
      %1713 = vmatprep.subr.mxu0 0.0
      %1714 = vmatpush1.xpose.msra.mxu0 %v1110
      %1715 = vmatprep.subr.mxu0 0.0
      %1716 = vmatpush1.xpose.msra.mxu0 %v1113
      %1717 = vmatprep.subr.mxu0 0.0
      %1718 = vmatpush1.xpose.msra.mxu0 %v1116
      %1719 = vmatprep.subr.mxu0 0.0
      %1720 = vmatpush1.xpose.msra.mxu0 %v1119
      %1721 = vmatprep.subr.mxu0 0.0
      %1722 = vmatpush1.xpose.msra.mxu0 %v1122
      %1723 = vmatprep.subr.mxu0 0.0
      %1724 = vmatpush1.xpose.msra.mxu0 %v1125
      %1725 = vmatprep.subr.mxu0 0.0
      %1726 = vmatpush1.xpose.msra.mxu0 %v1128
      %1727 = vmatprep.subr.mxu0 0.0
      %1728 = vmatpush1.xpose.msra.mxu0 %v1131
      %1729 = vmatprep.subr.mxu0 0.0
      %1730 = vmatpush1.xpose.msra.mxu0 %v1134
      %1731 = vmatprep.subr.mxu0 0.0
      %1732 = vmatpush1.xpose.msra.mxu0 %v1137
      %1733 = vmatprep.subr.mxu0 0.0
      %1734 = vmatpush1.xpose.msra.mxu0 %v1140
      %1735 = vmatprep.subr.mxu0 0.0
      %1736 = vmatpush1.xpose.msra.mxu0 %v1143
      %1737 = vmatprep.subr.mxu0 0.0
      %1738 = vmatpush1.xpose.msra.mxu0 %v1146
      %1739 = vmatprep.subr.mxu0 0.0
      %1740 = vmatpush1.xpose.msra.mxu0 %v1149
      %1741 = vmatprep.subr.mxu0 0.0
      %1742 = vmatpush1.xpose.msra.mxu0 %v1152
      %1743 = vmatprep.subr.mxu0 0.0
      %1744 = vmatpush1.xpose.msra.mxu0 %v1155
      %1745 = vmatprep.subr.mxu0 0.0
      %1746 = vmatpush1.xpose.msra.mxu0 %v1158
      %1747 = vmatprep.subr.mxu0 0.0
      %1748 = vmatpush1.xpose.msra.mxu0 %v1161
      %1749 = vmatprep.mubr.f32.mxu0 0.0
      %1750 = vmatmul.mubr.f32.gmra.mrb[0].mxu0 %v489
      %v1751 = vpop.f32.mrb[0].mxu0
      %v1752 = vadd.f32 0.0, %v1751
      %v1753 = vpop.f32.mrb[0].mxu0
      %v1754 = vadd.f32 0.0, %v1753
      %1755 = vdwg.mxu0
      %1756 = vmatprep.subr.mxu0 0.0
      %1757 = vmatpush1.xpose.msra.mxu0 %v1164
      %1758 = vmatprep.subr.mxu0 0.0
      %1759 = vmatpush1.xpose.msra.mxu0 %v1167
      %1760 = vmatprep.subr.mxu0 0.0
      %1761 = vmatpush1.xpose.msra.mxu0 %v1170
      %1762 = vmatprep.subr.mxu0 0.0
      %1763 = vmatpush1.xpose.msra.mxu0 %v1173
      %1764 = vmatprep.subr.mxu0 0.0
      %1765 = vmatpush1.xpose.msra.mxu0 %v1176
      %1766 = vmatprep.subr.mxu0 0.0
      %1767 = vmatpush1.xpose.msra.mxu0 %v1179
      %1768 = vmatprep.subr.mxu0 0.0
      %1769 = vmatpush1.xpose.msra.mxu0 %v1182
      %1770 = vmatprep.subr.mxu0 0.0
      %1771 = vmatpush1.xpose.msra.mxu0 %v1185
      %1772 = vmatprep.subr.mxu0 0.0
      %1773 = vmatpush1.xpose.msra.mxu0 %v1188
      %1774 = vmatprep.subr.mxu0 0.0
      %1775 = vmatpush1.xpose.msra.mxu0 %v1191
      %1776 = vmatprep.subr.mxu0 0.0
      %1777 = vmatpush1.xpose.msra.mxu0 %v1194
      %1778 = vmatprep.subr.mxu0 0.0
      %1779 = vmatpush1.xpose.msra.mxu0 %v1197
      %1780 = vmatprep.subr.mxu0 0.0
      %1781 = vmatpush1.xpose.msra.mxu0 %v1200
      %1782 = vmatprep.subr.mxu0 0.0
      %1783 = vmatpush1.xpose.msra.mxu0 %v1203
      %1784 = vmatprep.subr.mxu0 0.0
      %1785 = vmatpush1.xpose.msra.mxu0 %v1206
      %1786 = vmatprep.subr.mxu0 0.0
      %1787 = vmatpush1.xpose.msra.mxu0 %v1209
      %1788 = vmatprep.subr.mxu0 0.0
      %1789 = vmatpush1.xpose.msra.mxu0 %v1212
      %1790 = vmatprep.subr.mxu0 0.0
      %1791 = vmatpush1.xpose.msra.mxu0 %v1215
      %1792 = vmatprep.subr.mxu0 0.0
      %1793 = vmatpush1.xpose.msra.mxu0 %v1218
      %1794 = vmatprep.subr.mxu0 0.0
      %1795 = vmatpush1.xpose.msra.mxu0 %v1221
      %1796 = vmatprep.subr.mxu0 0.0
      %1797 = vmatpush1.xpose.msra.mxu0 %v1224
      %1798 = vmatprep.subr.mxu0 0.0
      %1799 = vmatpush1.xpose.msra.mxu0 %v1227
      %1800 = vmatprep.subr.mxu0 0.0
      %1801 = vmatpush1.xpose.msra.mxu0 %v1230
      %1802 = vmatprep.subr.mxu0 0.0
      %1803 = vmatpush1.xpose.msra.mxu0 %v1233
      %1804 = vmatprep.subr.mxu0 0.0
      %1805 = vmatpush1.xpose.msra.mxu0 %v1236
      %1806 = vmatprep.subr.mxu0 0.0
      %1807 = vmatpush1.xpose.msra.mxu0 %v1239
      %1808 = vmatprep.subr.mxu0 0.0
      %1809 = vmatpush1.xpose.msra.mxu0 %v1242
      %1810 = vmatprep.subr.mxu0 0.0
      %1811 = vmatpush1.xpose.msra.mxu0 %v1245
      %1812 = vmatprep.subr.mxu0 0.0
      %1813 = vmatpush1.xpose.msra.mxu0 %v1248
      %1814 = vmatprep.subr.mxu0 0.0
      %1815 = vmatpush1.xpose.msra.mxu0 %v1251
      %1816 = vmatprep.subr.mxu0 0.0
      %1817 = vmatpush1.xpose.msra.mxu0 %v1254
      %1818 = vmatprep.subr.mxu0 0.0
      %1819 = vmatpush1.xpose.msra.mxu0 %v1257
      %1820 = vmatprep.mubr.f32.mxu0 0.0
      %1821 = vmatmul.mubr.f32.gmra.mrb[0].mxu0 %v489
      %v1822 = vpop.f32.mrb[0].mxu0
      %v1823 = vadd.f32 0.0, %v1822
      %v1824 = vpop.f32.mrb[0].mxu0
      %v1825 = vadd.f32 0.0, %v1824
      %1826 = vdwg.mxu0
      %s1827 = sld [smem:[#allocation2]]
      %v1828 = vstv %s1827
      %v1829 = vmul.f32 %v1828, %v1326
      %v1830 = vmul.f32 %v1828, %v1328
      %1831 = vst [vmem:[%s228] sm:$0xff] %v1829
      %1832 = vst [vmem:[%s228 + $0x8] sm:$0xff] %v1830
      %v1833 = vmul.f32 %v1828, %v1397
      %v1834 = vmul.f32 %v1828, %v1399
      %s1835 = scalar_lea.vmem %s228, 16
      %1836 = vst [vmem:[%s1835] sm:$0xff] %v1833
      %1837 = vst [vmem:[%s1835 + $0x8] sm:$0xff] %v1834
      %v1838 = vmul.f32 %v1828, %v1468
      %v1839 = vmul.f32 %v1828, %v1470
      %s1840 = scalar_lea.vmem %s228, 32
      %1841 = vst [vmem:[%s1840] sm:$0xff] %v1838
      %1842 = vst [vmem:[%s1840 + $0x8] sm:$0xff] %v1839
      %v1843 = vmul.f32 %v1828, %v1539
      %v1844 = vmul.f32 %v1828, %v1541
      %s1845 = scalar_lea.vmem %s228, 48
      %1846 = vst [vmem:[%s1845] sm:$0xff] %v1843
      %1847 = vst [vmem:[%s1845 + $0x8] sm:$0xff] %v1844
      %v1848 = vmul.f32 %v1828, %v1610
      %v1849 = vmul.f32 %v1828, %v1612
      %s1850 = scalar_lea.vmem %s228, 64
      %1851 = vst [vmem:[%s1850] sm:$0xff] %v1848
      %1852 = vst [vmem:[%s1850 + $0x8] sm:$0xff] %v1849
      %v1853 = vmul.f32 %v1828, %v1681
      %v1854 = vmul.f32 %v1828, %v1683
      %s1855 = scalar_lea.vmem %s228, 80
      %1856 = vst [vmem:[%s1855] sm:$0xff] %v1853
      %1857 = vst [vmem:[%s1855 + $0x8] sm:$0xff] %v1854
      %v1858 = vmul.f32 %v1828, %v1752
      %v1859 = vmul.f32 %v1828, %v1754
      %s1860 = scalar_lea.vmem %s228, 96
      %1861 = vst [vmem:[%s1860] sm:$0xff] %v1858
      %1862 = vst [vmem:[%s1860 + $0x8] sm:$0xff] %v1859
      %v1863 = vmul.f32 %v1828, %v1823
      %v1864 = vmul.f32 %v1828, %v1825
      %s1865 = scalar_lea.vmem %s228, 112
      %1866 = vst [vmem:[%s1865] sm:$0xff] %v1863
      %1867 = vst [vmem:[%s1865 + $0x8] sm:$0xff] %v1864
      %s1868 = smul.u32 8, %s20
      %p1869 = scmp.lt.s32.totalorder %s19, 1
      %s1870 = scalar_select %p1869, %s19, 1
      %p1871 = scmp.lt.s32.totalorder %s1868, 7
      %s1872 = scalar_select %p1871, %s1868, 7
      %s1873 = smul.addr %s1872, 2
      %s1874 = smul.addr %s1870, 16
      %s1875 = sadd.s32 %s1873, %s1874
      %s1876 = smul.addr %s1875, 8
      %s1877 = scalar_lea.vmem %s3, %s1876
      // Predicated region
      $region33: #{separable_attn.11} parent=31 // pred_check
        %p1878 = pneg %p122
      $region34: #{separable_attn.11} parent=31 // pred_check_branch
        %1880 = sbr.rel (%p1878) target = $region36
      $region35: #{separable_attn.11} parent=31 // pred_region
        %s1881 = smul.u32 8, %s20
      $region36: #{separable_attn.11} parent=31 // pred_fallthru
        _
    $region32: #{separable_attn.11} parent=5 // pred_fallthru
      _
    %p1882 = scmp.le.s32.totalorder 2, %s10
    // Predicated region
    $region37: #{separable_attn.11} parent=5 // pred_check
      %p1883 = pneg %p1882
    $region38: #{separable_attn.11} parent=5 // pred_check_branch
      %1885 = sbr.rel (%p1883) target = $region40
    $region39: #{separable_attn.11} parent=5 // pred_region
      %s1886 = ssub.s32 %s10, 2
      // Predicated region
      $region41: #{separable_attn.11} parent=39 // pred_check
        %p1887 = pneg %p128
      $region42: #{separable_attn.11} parent=39 // pred_check_branch
        %1889 = sbr.rel (%p1887) target = $region44
      $region43: #{separable_attn.11} parent=39 // pred_region
        %s1890 = smul.u32 8, %s22
        %p1891 = scmp.lt.s32.totalorder %s21, 1
        %s1892 = scalar_select %p1891, %s21, 1
        %p1893 = scmp.lt.s32.totalorder %s1890, 7
        %s1894 = scalar_select %p1893, %s1890, 7
        %s1895 = smul.addr %s1894, 2
        %s1896 = smul.addr %s1892, 16
        %s1897 = sadd.s32 %s1895, %s1896
        %s1898 = smul.addr %s1897, 8
        %s1899 = scalar_lea.vmem %s3, %s1898
      $region44: #{separable_attn.11} parent=39 // pred_fallthru
        _
    $region40: #{separable_attn.11} parent=5 // pred_fallthru
      _
  $region6: #{separable_attn.11} parent=0 // loop_footer
    %s14 = sadd.s32 1, %s10
  $region7: #{separable_attn.11} parent=0 // loop_footer_branch
    %9 = sbr.rel target = $region3
  $region8: #{separable_attn.11} parent=0 // loop_exit
    _

// kernel: separable_attn.12
$region0: #{separable_attn.12}
  #allocation0 [shape = 'u32[]', space=smem, size = 0x4, offset = 0x4, fixed_abs, tag = 'smem constant byte address 0x4 - core index']
  #allocation1 [shape = 'u32[144,128]{1,0:T(1,128)}', space=vmem, size = 0x12000, scoped, tag = 'internal scratch']
  %s0 = inlined_call_operand.vmem [shape: f32[2,8,2048], index: 0, kind: input, shape index: {}]
  %s1 = inlined_call_operand.vmem [shape: f32[4,8], index: 1, kind: input, shape index: {}]
  %s2 = inlined_call_operand.vmem [shape: f32[4,1], index: 2, kind: input, shape index: {}]
  %s3 = inlined_call_operand.vmem [shape: f32[4,8], index: 3, kind: input, shape index: {}]
  %s4 = inlined_call_operand.vmem [shape: f32[4,1], index: 4, kind: input, shape index: {}]
  %s5 = inlined_call_operand.vmem [shape: f32[8,8], index: 5, kind: input, shape index: {}]
  %s6 = inlined_call_operand.vmem [shape: f32[8,1], index: 6, kind: input, shape index: {}]
  %s7 = inlined_call_operand.vmem [shape: f32[2,4,2048], index: 7, kind: output, shape index: {0}]
  %s8 = inlined_call_operand.vmem [shape: f32[2,4,1024], index: 8, kind: output, shape index: {1}]
  %s9 = inlined_call_operand.vmem [shape: f32[2,8,1024], index: 9, kind: output, shape index: {2}]
  %10 = xla_tuple %s7, %s8, %s9
  %s11 = sld [smem:[#allocation0]]
  $region77: #{separable_attn.12} parent=0
    _
  %s13 = ssub.s32 1, %s11
  %s14 = scalar_select 0, %s13, %s11
  loop: start=0, step=1, limit=4
  $region2: #{separable_attn.12} parent=0 // loop_pre_header
    _
  $region3: #{separable_attn.12} parent=0 // loop_header
    %s16 = sphi 0, %s20
    %p17 = scmp.ge.s32.totalorder %s16, 4
    %s23 = sphi 0, %s35
    %s24 = sphi 0, %s31
    %s25 = sphi 0, %s23
    %s26 = sphi 0, %s24
    %s27 = sphi 0, %s25
    %s28 = sphi 0, %s26
    %s40 = sphi 0, %s42
    %s43 = sphi 0, %s40
    %s44 = sphi 0, %s43
    %s60 = sphi 0, %s44
    %s64 = sphi 0, %s64
    %s66 = sphi 0, %s64
    %s67 = sphi 0, %s66
    %s81 = sphi 0, %s67
    %s85 = sphi 0, %s85
    %s87 = sphi 0, %s85
    %s88 = sphi 0, %s87
    %s102 = sphi 0, %s88
    %s106 = sphi 0, %s106
    %s108 = sphi 0, %s106
    %s109 = sphi 0, %s108
    %s123 = sphi 0, %s109
    %s127 = sphi 0, %s127
    %s129 = sphi 0, %s127
    %s130 = sphi 0, %s129
    %s144 = sphi 0, %s130
    %s148 = sphi 0, %s148
    %s150 = sphi 0, %s148
    %s151 = sphi 0, %s150
    %s165 = sphi 0, %s151
    %s169 = sphi 0, %s169
    %s171 = sphi 0, %s169
    %s172 = sphi 0, %s171
    %s186 = sphi 0, %s172
    %s194 = sphi 0, %s196
    %s197 = sphi 0, %s194
    %s198 = sphi 0, %s197
    %s214 = sphi 0, %s198
    %s222 = sphi 0, %s224
    %s225 = sphi 0, %s222
    %s226 = sphi 0, %s225
    %s242 = sphi 0, %s226
    %s250 = sphi 0, %s252
    %s253 = sphi 0, %s250
    %s254 = sphi 0, %s253
    %s270 = sphi 0, %s254
  $region4: #{separable_attn.12} parent=0 // loop_header_branch
    %19 = sbr.rel (%p17) target = $region8
  $region5: #{separable_attn.12} parent=0 // loop_body
    %s21 = ssub.s32 %s16, 1
    %s22 = ssub.s32 %s16, 2
    %s29 = sadd.s32 1, %s24
    %p30 = scmp.ge.s32.totalorder %s29, 1
    %s31 = scalar_select %p30, 0, %s29
    %s32 = sadd.s32 1, %s23
    %s33 = scalar_select %p30, %s32, %s23
    %p34 = scmp.ge.s32.totalorder %s33, 2
    %s35 = scalar_select %p34, 0, %s33
    %s36 = ssub.s32 %s23, %s35
    %s37 = ssub.s32 %s24, %s31
    %s38 = sor.u32 %s36, %s37
    %p39 = scmp.eq.s32.totalorder %s38, 0
    %s41 = sadd.s32 %s40, 1
    %s42 = scalar_select %p39, %s40, %s41
    %p45 = pneg %p39
    %p46 = scmp.eq.s32.totalorder %s16, 1
    %p47 = por %p45, %p46
    %p48 = scmp.ne.s32.totalorder %s40, %s43
    %p49 = scmp.eq.s32.totalorder %s16, 0
    %p50 = por %p48, %p49
    %p51 = scmp.ne.s32.totalorder %s40, %s43
    %p52 = scmp.eq.s32.totalorder %s21, 1
    %p53 = por %p51, %p52
    %p54 = scmp.ne.s32.totalorder %s43, %s44
    %p55 = scmp.eq.s32.totalorder %s21, 0
    %p56 = por %p54, %p55
    %p57 = scmp.ne.s32.totalorder %s43, %s44
    %p58 = scmp.eq.s32.totalorder %s22, 1
    %p59 = por %p57, %p58
    %p61 = scmp.ne.s32.totalorder %s44, %s60
    %p62 = scmp.eq.s32.totalorder %s22, 0
    %p63 = por %p61, %p62
    %s65 = sadd.s32 %s64, 1
    %p68 = scmp.eq.s32.totalorder %s16, 1
    %p69 = scmp.ne.s32.totalorder %s64, %s66
    %p70 = scmp.eq.s32.totalorder %s16, 0
    %p71 = por %p69, %p70
    %p72 = scmp.ne.s32.totalorder %s64, %s66
    %p73 = scmp.eq.s32.totalorder %s21, 1
    %p74 = por %p72, %p73
    %p75 = scmp.ne.s32.totalorder %s66, %s67
    %p76 = scmp.eq.s32.totalorder %s21, 0
    %p77 = por %p75, %p76
    %p78 = scmp.ne.s32.totalorder %s66, %s67
    %p79 = scmp.eq.s32.totalorder %s22, 1
    %p80 = por %p78, %p79
    %p82 = scmp.ne.s32.totalorder %s67, %s81
    %p83 = scmp.eq.s32.totalorder %s22, 0
    %p84 = por %p82, %p83
    %s86 = sadd.s32 %s85, 1
    %p89 = scmp.eq.s32.totalorder %s16, 1
    %p90 = scmp.ne.s32.totalorder %s85, %s87
    %p91 = scmp.eq.s32.totalorder %s16, 0
    %p92 = por %p90, %p91
    %p93 = scmp.ne.s32.totalorder %s85, %s87
    %p94 = scmp.eq.s32.totalorder %s21, 1
    %p95 = por %p93, %p94
    %p96 = scmp.ne.s32.totalorder %s87, %s88
    %p97 = scmp.eq.s32.totalorder %s21, 0
    %p98 = por %p96, %p97
    %p99 = scmp.ne.s32.totalorder %s87, %s88
    %p100 = scmp.eq.s32.totalorder %s22, 1
    %p101 = por %p99, %p100
    %p103 = scmp.ne.s32.totalorder %s88, %s102
    %p104 = scmp.eq.s32.totalorder %s22, 0
    %p105 = por %p103, %p104
    %s107 = sadd.s32 %s106, 1
    %p110 = scmp.eq.s32.totalorder %s16, 1
    %p111 = scmp.ne.s32.totalorder %s106, %s108
    %p112 = scmp.eq.s32.totalorder %s16, 0
    %p113 = por %p111, %p112
    %p114 = scmp.ne.s32.totalorder %s106, %s108
    %p115 = scmp.eq.s32.totalorder %s21, 1
    %p116 = por %p114, %p115
    %p117 = scmp.ne.s32.totalorder %s108, %s109
    %p118 = scmp.eq.s32.totalorder %s21, 0
    %p119 = por %p117, %p118
    %p120 = scmp.ne.s32.totalorder %s108, %s109
    %p121 = scmp.eq.s32.totalorder %s22, 1
    %p122 = por %p120, %p121
    %p124 = scmp.ne.s32.totalorder %s109, %s123
    %p125 = scmp.eq.s32.totalorder %s22, 0
    %p126 = por %p124, %p125
    %s128 = sadd.s32 %s127, 1
    %p131 = scmp.eq.s32.totalorder %s16, 1
    %p132 = scmp.ne.s32.totalorder %s127, %s129
    %p133 = scmp.eq.s32.totalorder %s16, 0
    %p134 = por %p132, %p133
    %p135 = scmp.ne.s32.totalorder %s127, %s129
    %p136 = scmp.eq.s32.totalorder %s21, 1
    %p137 = por %p135, %p136
    %p138 = scmp.ne.s32.totalorder %s129, %s130
    %p139 = scmp.eq.s32.totalorder %s21, 0
    %p140 = por %p138, %p139
    %p141 = scmp.ne.s32.totalorder %s129, %s130
    %p142 = scmp.eq.s32.totalorder %s22, 1
    %p143 = por %p141, %p142
    %p145 = scmp.ne.s32.totalorder %s130, %s144
    %p146 = scmp.eq.s32.totalorder %s22, 0
    %p147 = por %p145, %p146
    %s149 = sadd.s32 %s148, 1
    %p152 = scmp.eq.s32.totalorder %s16, 1
    %p153 = scmp.ne.s32.totalorder %s148, %s150
    %p154 = scmp.eq.s32.totalorder %s16, 0
    %p155 = por %p153, %p154
    %p156 = scmp.ne.s32.totalorder %s148, %s150
    %p157 = scmp.eq.s32.totalorder %s21, 1
    %p158 = por %p156, %p157
    %p159 = scmp.ne.s32.totalorder %s150, %s151
    %p160 = scmp.eq.s32.totalorder %s21, 0
    %p161 = por %p159, %p160
    %p162 = scmp.ne.s32.totalorder %s150, %s151
    %p163 = scmp.eq.s32.totalorder %s22, 1
    %p164 = por %p162, %p163
    %p166 = scmp.ne.s32.totalorder %s151, %s165
    %p167 = scmp.eq.s32.totalorder %s22, 0
    %p168 = por %p166, %p167
    %s170 = sadd.s32 %s169, 1
    %p173 = scmp.eq.s32.totalorder %s16, 1
    %p174 = scmp.ne.s32.totalorder %s169, %s171
    %p175 = scmp.eq.s32.totalorder %s16, 0
    %p176 = por %p174, %p175
    %p177 = scmp.ne.s32.totalorder %s169, %s171
    %p178 = scmp.eq.s32.totalorder %s21, 1
    %p179 = por %p177, %p178
    %p180 = scmp.ne.s32.totalorder %s171, %s172
    %p181 = scmp.eq.s32.totalorder %s21, 0
    %p182 = por %p180, %p181
    %p183 = scmp.ne.s32.totalorder %s171, %s172
    %p184 = scmp.eq.s32.totalorder %s22, 1
    %p185 = por %p183, %p184
    %p187 = scmp.ne.s32.totalorder %s172, %s186
    %p188 = scmp.eq.s32.totalorder %s22, 0
    %p189 = por %p187, %p188
    %s190 = ssub.s32 %s23, %s35
    %s191 = ssub.s32 %s24, %s31
    %s192 = sor.u32 %s190, %s191
    %p193 = scmp.eq.s32.totalorder %s192, 0
    %s195 = sadd.s32 %s194, 1
    %s196 = scalar_select %p193, %s194, %s195
    %p199 = pneg %p193
    %p200 = scmp.eq.s32.totalorder %s16, 1
    %p201 = por %p199, %p200
    %p202 = scmp.ne.s32.totalorder %s194, %s197
    %p203 = scmp.eq.s32.totalorder %s16, 0
    %p204 = por %p202, %p203
    %p205 = scmp.ne.s32.totalorder %s194, %s197
    %p206 = scmp.eq.s32.totalorder %s21, 1
    %p207 = por %p205, %p206
    %p208 = scmp.ne.s32.totalorder %s197, %s198
    %p209 = scmp.eq.s32.totalorder %s21, 0
    %p210 = por %p208, %p209
    %p211 = scmp.ne.s32.totalorder %s197, %s198
    %p212 = scmp.eq.s32.totalorder %s22, 1
    %p213 = por %p211, %p212
    %p215 = scmp.ne.s32.totalorder %s198, %s214
    %p216 = scmp.eq.s32.totalorder %s22, 0
    %p217 = por %p215, %p216
    %s218 = ssub.s32 %s23, %s35
    %s219 = ssub.s32 %s24, %s31
    %s220 = sor.u32 %s218, %s219
    %p221 = scmp.eq.s32.totalorder %s220, 0
    %s223 = sadd.s32 %s222, 1
    %s224 = scalar_select %p221, %s222, %s223
    %p227 = pneg %p221
    %p228 = scmp.eq.s32.totalorder %s16, 1
    %p229 = por %p227, %p228
    %p230 = scmp.ne.s32.totalorder %s222, %s225
    %p231 = scmp.eq.s32.totalorder %s16, 0
    %p232 = por %p230, %p231
    %p233 = scmp.ne.s32.totalorder %s222, %s225
    %p234 = scmp.eq.s32.totalorder %s21, 1
    %p235 = por %p233, %p234
    %p236 = scmp.ne.s32.totalorder %s225, %s226
    %p237 = scmp.eq.s32.totalorder %s21, 0
    %p238 = por %p236, %p237
    %p239 = scmp.ne.s32.totalorder %s225, %s226
    %p240 = scmp.eq.s32.totalorder %s22, 1
    %p241 = por %p239, %p240
    %p243 = scmp.ne.s32.totalorder %s226, %s242
    %p244 = scmp.eq.s32.totalorder %s22, 0
    %p245 = por %p243, %p244
    %s246 = ssub.s32 %s23, %s35
    %s247 = ssub.s32 %s24, %s31
    %s248 = sor.u32 %s246, %s247
    %p249 = scmp.eq.s32.totalorder %s248, 0
    %s251 = sadd.s32 %s250, 1
    %s252 = scalar_select %p249, %s250, %s251
    %p255 = pneg %p249
    %p256 = scmp.eq.s32.totalorder %s16, 1
    %p257 = por %p255, %p256
    %p258 = scmp.ne.s32.totalorder %s250, %s253
    %p259 = scmp.eq.s32.totalorder %s16, 0
    %p260 = por %p258, %p259
    %p261 = scmp.ne.s32.totalorder %s250, %s253
    %p262 = scmp.eq.s32.totalorder %s21, 1
    %p263 = por %p261, %p262
    %p264 = scmp.ne.s32.totalorder %s253, %s254
    %p265 = scmp.eq.s32.totalorder %s21, 0
    %p266 = por %p264, %p265
    %p267 = scmp.ne.s32.totalorder %s253, %s254
    %p268 = scmp.eq.s32.totalorder %s22, 1
    %p269 = por %p267, %p268
    %p271 = scmp.ne.s32.totalorder %s254, %s270
    %p272 = scmp.eq.s32.totalorder %s22, 0
    %p273 = por %p271, %p272
    %p274 = scmp.le.s32.totalorder 1, %s16
    %p275 = scmp.lt.s32.totalorder %s16, 3
    %p276 = pnand %p274, %p275
    %p277 = pneg %p276
    // Predicated region
    $region9: #{separable_attn.12} parent=5 // pred_check
      _
    $region10: #{separable_attn.12} parent=5 // pred_check_branch
      %279 = sbr.rel (%p276) target = $region12
    $region11: #{separable_attn.12} parent=5 // pred_region
      %s280 = ssub.s32 %s16, 1
      // Predicated region
      $region13: #{separable_attn.12} parent=11 // pred_check
        %p281 = pneg %p77
      $region14: #{separable_attn.12} parent=11 // pred_check_branch
        %283 = sbr.rel (%p281) target = $region16
      $region15: #{separable_attn.12} parent=11 // pred_region
        _
      $region16: #{separable_attn.12} parent=11 // pred_fallthru
        _
      // Predicated region
      $region17: #{separable_attn.12} parent=11 // pred_check
        %p284 = pneg %p98
      $region18: #{separable_attn.12} parent=11 // pred_check_branch
        %286 = sbr.rel (%p284) target = $region20
      $region19: #{separable_attn.12} parent=11 // pred_region
        _
      $region20: #{separable_attn.12} parent=11 // pred_fallthru
        _
      // Predicated region
      $region21: #{separable_attn.12} parent=11 // pred_check
        %p287 = pneg %p119
      $region22: #{separable_attn.12} parent=11 // pred_check_branch
        %289 = sbr.rel (%p287) target = $region24
      $region23: #{separable_attn.12} parent=11 // pred_region
        _
      $region24: #{separable_attn.12} parent=11 // pred_fallthru
        _
      // Predicated region
      $region25: #{separable_attn.12} parent=11 // pred_check
        %p290 = pneg %p140
      $region26: #{separable_attn.12} parent=11 // pred_check_branch
        %292 = sbr.rel (%p290) target = $region28
      $region27: #{separable_attn.12} parent=11 // pred_region
        _
      $region28: #{separable_attn.12} parent=11 // pred_fallthru
        _
      // Predicated region
      $region29: #{separable_attn.12} parent=11 // pred_check
        %p293 = pneg %p161
      $region30: #{separable_attn.12} parent=11 // pred_check_branch
        %295 = sbr.rel (%p293) target = $region32
      $region31: #{separable_attn.12} parent=11 // pred_region
        _
      $region32: #{separable_attn.12} parent=11 // pred_fallthru
        _
      // Predicated region
      $region33: #{separable_attn.12} parent=11 // pred_check
        %p296 = pneg %p182
      $region34: #{separable_attn.12} parent=11 // pred_check_branch
        %298 = sbr.rel (%p296) target = $region36
      $region35: #{separable_attn.12} parent=11 // pred_region
        _
      $region36: #{separable_attn.12} parent=11 // pred_fallthru
        _
    $region12: #{separable_attn.12} parent=5 // pred_fallthru
      _
    %p299 = scmp.lt.s32.totalorder %s16, 2
    // Predicated region
    $region37: #{separable_attn.12} parent=5 // pred_check
      %p300 = pneg %p299
    $region38: #{separable_attn.12} parent=5 // pred_check_branch
      %302 = sbr.rel (%p300) target = $region40
    $region39: #{separable_attn.12} parent=5 // pred_region
      // Predicated region
      $region41: #{separable_attn.12} parent=39 // pred_check
        %p303 = pneg %p50
      $region42: #{separable_attn.12} parent=39 // pred_check_branch
        %305 = sbr.rel (%p303) target = $region44
      $region43: #{separable_attn.12} parent=39 // pred_region
        %s306 = smul.u32 16, %s24
        %p307 = scmp.lt.s32.totalorder %s23, 1
        %s308 = scalar_select %p307, %s23, 1
        %p309 = scmp.lt.s32.totalorder %s306, 15
        %s310 = scalar_select %p309, %s306, 15
        %s311 = smul.addr %s308, 16
        %s312 = sadd.s32 %s310, %s311
        %s313 = smul.addr %s312, 8
        %s314 = scalar_lea.vmem %s0, %s313
        %s315 = smul.u32 16, %s24
      $region44: #{separable_attn.12} parent=39 // pred_fallthru
        _
    $region40: #{separable_attn.12} parent=5 // pred_fallthru
      _
    %p316 = scmp.le.s32.totalorder 1, %s16
    %p317 = scmp.lt.s32.totalorder %s16, 3
    %p318 = pnand %p316, %p317
    %p319 = pneg %p318
    // Predicated region
    $region45: #{separable_attn.12} parent=5 // pred_check
      _
    $region46: #{separable_attn.12} parent=5 // pred_check_branch
      %321 = sbr.rel (%p318) target = $region48
    $region47: #{separable_attn.12} parent=5 // pred_region
      %s322 = ssub.s32 %s16, 1
      %s323 = smul.u32 16, %s26
      %p324 = scmp.lt.s32.totalorder %s25, 1
      %s325 = scalar_select %p324, %s25, 1
      %p326 = scmp.lt.s32.totalorder %s323, 15
      %s327 = scalar_select %p326, %s323, 15
      %s328 = smul.addr %s325, 16
      %s329 = sadd.s32 %s327, %s328
      %s330 = smul.addr %s329, 8
      %s331 = scalar_lea.vmem %s0, %s330
      %p332 = pneg %p56
      %p333 = pneg %p53
      %p334 = pneg %p77
      %p335 = pneg %p74
      %p336 = pneg %p98
      %p337 = pneg %p95
      %p338 = pneg %p119
      %p339 = pneg %p116
      %p340 = pneg %p140
      %p341 = pneg %p137
      %p342 = pneg %p161
      %p343 = pneg %p158
      %p344 = pneg %p182
      %p345 = pneg %p179
      %p346 = pneg %p210
      %p347 = pneg %p207
      %s348 = smul.u32 16, %s26
      %p349 = scmp.lt.s32.totalorder %s25, 1
      %s350 = scalar_select %p349, %s25, 1
      %p351 = scmp.lt.s32.totalorder %s348, 15
      %s352 = scalar_select %p351, %s348, 15
      %s353 = smul.addr %s350, 16
      %s354 = sadd.s32 %s352, %s353
      %s355 = smul.addr %s354, 4
      %s356 = scalar_lea.vmem %s7, %s355
      %p357 = pneg %p238
      %p358 = pneg %p235
      %s359 = smul.u32 8, %s26
      %p360 = scmp.lt.s32.totalorder %s25, 1
      %s361 = scalar_select %p360, %s25, 1
      %p362 = scmp.lt.s32.totalorder %s359, 7
      %s363 = scalar_select %p362, %s359, 7
      %s364 = smul.addr %s361, 8
      %s365 = sadd.s32 %s363, %s364
      %s366 = smul.addr %s365, 4
      %s367 = scalar_lea.vmem %s8, %s366
      %p368 = pneg %p266
      %p369 = pneg %p263
      %s370 = smul.u32 8, %s26
      %p371 = scmp.lt.s32.totalorder %s25, 1
      %s372 = scalar_select %p371, %s25, 1
      %p373 = scmp.lt.s32.totalorder %s370, 7
      %s374 = scalar_select %p373, %s370, 7
      %s375 = smul.addr %s372, 8
      %s376 = sadd.s32 %s374, %s375
      %s377 = smul.addr %s376, 8
      %s378 = scalar_lea.vmem %s9, %s377
      %s379 = smul.u32 16, %s26
      %p380 = scmp.lt.s32.totalorder %s25, 1
      %s381 = scalar_select %p380, %s25, 1
      %p382 = scmp.lt.s32.totalorder %s379, 15
      %s383 = scalar_select %p382, %s379, 15
      %s384 = smul.addr %s381, 16
      %s385 = sadd.s32 %s383, %s384
      %s386 = smul.addr %s385, 8
      %s387 = scalar_lea.vmem %s0, %s386
      %s388 = smul.u32 16, %s26
      %s389 = smul.u32 16, %s26
      %p390 = scmp.lt.s32.totalorder %s25, 1
      %s391 = scalar_select %p390, %s25, 1
      %p392 = scmp.lt.s32.totalorder %s389, 15
      %s393 = scalar_select %p392, %s389, 15
      %s394 = smul.addr %s391, 16
      %s395 = sadd.s32 %s393, %s394
      %s396 = smul.addr %s395, 4
      %s397 = scalar_lea.vmem %s7, %s396
      %s398 = smul.u32 16, %s26
      %s399 = smul.u32 8, %s26
      %p400 = scmp.lt.s32.totalorder %s25, 1
      %s401 = scalar_select %p400, %s25, 1
      %p402 = scmp.lt.s32.totalorder %s399, 7
      %s403 = scalar_select %p402, %s399, 7
      %s404 = smul.addr %s401, 8
      %s405 = sadd.s32 %s403, %s404
      %s406 = smul.addr %s405, 4
      %s407 = scalar_lea.vmem %s8, %s406
      %s408 = smul.u32 8, %s26
      %s409 = smul.u32 8, %s26
      %p410 = scmp.lt.s32.totalorder %s25, 1
      %s411 = scalar_select %p410, %s25, 1
      %p412 = scmp.lt.s32.totalorder %s409, 7
      %s413 = scalar_select %p412, %s409, 7
      %s414 = smul.addr %s411, 8
      %s415 = sadd.s32 %s413, %s414
      %s416 = smul.addr %s415, 8
      %s417 = scalar_lea.vmem %s9, %s416
      %s418 = smul.u32 8, %s26
      %v419 = vld [vmem:[%s387] sm:$0xff]
      %v420 = vld [vmem:[%s387 + $0x8] sm:$0xff]
      %v421 = vld [vmem:[%s387 + $0x10] sm:$0xff]
      %v422 = vld [vmem:[%s387 + $0x18] sm:$0xff]
      %v423 = vld [vmem:[%s387 + $0x20] sm:$0xff]
      %v424 = vld [vmem:[%s387 + $0x28] sm:$0xff]
      %v425 = vld [vmem:[%s387 + $0x30] sm:$0xff]
      %v426 = vld [vmem:[%s387 + $0x38] sm:$0xff]
      %v427 = vld [vmem:[%s387 + $0x40] sm:$0xff]
      %v428 = vld [vmem:[%s387 + $0x48] sm:$0xff]
      %v429 = vld [vmem:[%s387 + $0x50] sm:$0xff]
      %v430 = vld [vmem:[%s387 + $0x58] sm:$0xff]
      %v431 = vld [vmem:[%s387 + $0x60] sm:$0xff]
      %v432 = vld [vmem:[%s387 + $0x68] sm:$0xff]
      %v433 = vld [vmem:[%s387 + $0x70] sm:$0xff]
      %v434 = vld [vmem:[%s387 + $0x78] sm:$0xff]
      %v435 = vld [vmem:[%s1] sm:$0xf]
      %v436 = vld [vmem:[%s2] sm:$0xf]
      %438 = vset.pattern.permute.xlu0 0
      %439 = vperm.xlu0 %438, %v436
      %v440 = vpop.permute.xlu0 %439
      %vm442 = vcmask 64512
      %v444 = vsel %vm442, %v435, 0
      %446 = vmatprep.subr.mxu0 %v420
      %447 = vmatpush1.msra.mxu0 %v419
      %448 = vmatprep.subr.mxu0 0.0
      %449 = vmatpush1.msra.mxu0 0.0
      %450 = vmatprep.subr.mxu0 0.0
      %451 = vmatpush1.msra.mxu0 0.0
      %452 = vmatprep.subr.mxu0 0.0
      %453 = vmatpush1.msra.mxu0 0.0
      %454 = vmatprep.subr.mxu0 0.0
      %455 = vmatpush1.msra.mxu0 0.0
      %456 = vmatprep.subr.mxu0 0.0
      %457 = vmatpush1.msra.mxu0 0.0
      %458 = vmatprep.subr.mxu0 0.0
      %459 = vmatpush1.msra.mxu0 0.0
      %460 = vmatprep.subr.mxu0 0.0
      %461 = vmatpush1.msra.mxu0 0.0
      %462 = vmatprep.subr.mxu0 0.0
      %463 = vmatpush1.msra.mxu0 0.0
      %464 = vmatprep.subr.mxu0 0.0
      %465 = vmatpush1.msra.mxu0 0.0
      %466 = vmatprep.subr.mxu0 0.0
      %467 = vmatpush1.msra.mxu0 0.0
      %468 = vmatprep.subr.mxu0 0.0
      %469 = vmatpush1.msra.mxu0 0.0
      %470 = vmatprep.subr.mxu0 0.0
      %471 = vmatpush1.msra.mxu0 0.0
      %472 = vmatprep.subr.mxu0 0.0
      %473 = vmatpush1.msra.mxu0 0.0
      %474 = vmatprep.subr.mxu0 0.0
      %475 = vmatpush1.msra.mxu0 0.0
      %476 = vmatprep.subr.mxu0 0.0
      %477 = vmatpush1.msra.mxu0 0.0
      %478 = vmatprep.subr.mxu0 0.0
      %479 = vmatpush1.msra.mxu0 0.0
      %480 = vmatprep.subr.mxu0 0.0
      %481 = vmatpush1.msra.mxu0 0.0
      %482 = vmatprep.subr.mxu0 0.0
      %483 = vmatpush1.msra.mxu0 0.0
      %484 = vmatprep.subr.mxu0 0.0
      %485 = vmatpush1.msra.mxu0 0.0
      %486 = vmatprep.subr.mxu0 0.0
      %487 = vmatpush1.msra.mxu0 0.0
      %488 = vmatprep.subr.mxu0 0.0
      %489 = vmatpush1.msra.mxu0 0.0
      %490 = vmatprep.subr.mxu0 0.0
      %491 = vmatpush1.msra.mxu0 0.0
      %492 = vmatprep.subr.mxu0 0.0
      %493 = vmatpush1.msra.mxu0 0.0
      %494 = vmatprep.subr.mxu0 0.0
      %495 = vmatpush1.msra.mxu0 0.0
      %496 = vmatprep.subr.mxu0 0.0
      %497 = vmatpush1.msra.mxu0 0.0
      %498 = vmatprep.subr.mxu0 0.0
      %499 = vmatpush1.msra.mxu0 0.0
      %500 = vmatprep.subr.mxu0 0.0
      %501 = vmatpush1.msra.mxu0 0.0
      %502 = vmatprep.subr.mxu0 0.0
      %503 = vmatpush1.msra.mxu0 0.0
      %504 = vmatprep.subr.mxu0 0.0
      %505 = vmatpush1.msra.mxu0 0.0
      %506 = vmatprep.subr.mxu0 0.0
      %507 = vmatpush1.msra.mxu0 0.0
      %508 = vmatprep.subr.mxu0 0.0
      %509 = vmatpush1.msra.mxu0 0.0
      %510 = vmatprep.mubr.f32.mxu0 0.0
      %511 = vmatmul.mubr.f32.gmra.mrb[0].mxu0 %v444
      %v512 = vpop.f32.mrb[0].mxu0
      %v513 = vadd.f32 %v440, %v512
      %v514 = vpop.f32.mrb[0].mxu0
      %v515 = vadd.f32 %v440, %v514
      %516 = vdwg.mxu0
      %517 = vmatprep.subr.mxu0 %v422
      %518 = vmatpush1.msra.mxu0 %v421
      %519 = vmatprep.subr.mxu0 0.0
      %520 = vmatpush1.msra.mxu0 0.0
      %521 = vmatprep.subr.mxu0 0.0
      %522 = vmatpush1.msra.mxu0 0.0
      %523 = vmatprep.subr.mxu0 0.0
      %524 = vmatpush1.msra.mxu0 0.0
      %525 = vmatprep.subr.mxu0 0.0
      %526 = vmatpush1.msra.mxu0 0.0
      %527 = vmatprep.subr.mxu0 0.0
      %528 = vmatpush1.msra.mxu0 0.0
      %529 = vmatprep.subr.mxu0 0.0
      %530 = vmatpush1.msra.mxu0 0.0
      %531 = vmatprep.subr.mxu0 0.0
      %532 = vmatpush1.msra.mxu0 0.0
      %533 = vmatprep.subr.mxu0 0.0
      %534 = vmatpush1.msra.mxu0 0.0
      %535 = vmatprep.subr.mxu0 0.0
      %536 = vmatpush1.msra.mxu0 0.0
      %537 = vmatprep.subr.mxu0 0.0
      %538 = vmatpush1.msra.mxu0 0.0
      %539 = vmatprep.subr.mxu0 0.0
      %540 = vmatpush1.msra.mxu0 0.0
      %541 = vmatprep.subr.mxu0 0.0
      %542 = vmatpush1.msra.mxu0 0.0
      %543 = vmatprep.subr.mxu0 0.0
      %544 = vmatpush1.msra.mxu0 0.0
      %545 = vmatprep.subr.mxu0 0.0
      %546 = vmatpush1.msra.mxu0 0.0
      %547 = vmatprep.subr.mxu0 0.0
      %548 = vmatpush1.msra.mxu0 0.0
      %549 = vmatprep.subr.mxu0 0.0
      %550 = vmatpush1.msra.mxu0 0.0
      %551 = vmatprep.subr.mxu0 0.0
      %552 = vmatpush1.msra.mxu0 0.0
      %553 = vmatprep.subr.mxu0 0.0
      %554 = vmatpush1.msra.mxu0 0.0
      %555 = vmatprep.subr.mxu0 0.0
      %556 = vmatpush1.msra.mxu0 0.0
      %557 = vmatprep.subr.mxu0 0.0
      %558 = vmatpush1.msra.mxu0 0.0
      %559 = vmatprep.subr.mxu0 0.0
      %560 = vmatpush1.msra.mxu0 0.0
      %561 = vmatprep.subr.mxu0 0.0
      %562 = vmatpush1.msra.mxu0 0.0
      %563 = vmatprep.subr.mxu0 0.0
      %564 = vmatpush1.msra.mxu0 0.0
      %565 = vmatprep.subr.mxu0 0.0
      %566 = vmatpush1.msra.mxu0 0.0
      %567 = vmatprep.subr.mxu0 0.0
      %568 = vmatpush1.msra.mxu0 0.0
      %569 = vmatprep.subr.mxu0 0.0
      %570 = vmatpush1.msra.mxu0 0.0
      %571 = vmatprep.subr.mxu0 0.0
      %572 = vmatpush1.msra.mxu0 0.0
      %573 = vmatprep.subr.mxu0 0.0
      %574 = vmatpush1.msra.mxu0 0.0
      %575 = vmatprep.subr.mxu0 0.0
      %576 = vmatpush1.msra.mxu0 0.0
      %577 = vmatprep.subr.mxu0 0.0
      %578 = vmatpush1.msra.mxu0 0.0
      %579 = vmatprep.subr.mxu0 0.0
      %580 = vmatpush1.msra.mxu0 0.0
      %581 = vmatprep.mubr.f32.mxu0 0.0
      %582 = vmatmul.mubr.f32.gmra.mrb[0].mxu0 %v444
      %v583 = vpop.f32.mrb[0].mxu0
      %v584 = vadd.f32 %v440, %v583
      %v585 = vpop.f32.mrb[0].mxu0
      %v586 = vadd.f32 %v440, %v585
      %587 = vdwg.mxu0
      %588 = vmatprep.subr.mxu0 %v424
      %589 = vmatpush1.msra.mxu0 %v423
      %590 = vmatprep.subr.mxu0 0.0
      %591 = vmatpush1.msra.mxu0 0.0
      %592 = vmatprep.subr.mxu0 0.0
      %593 = vmatpush1.msra.mxu0 0.0
      %594 = vmatprep.subr.mxu0 0.0
      %595 = vmatpush1.msra.mxu0 0.0
      %596 = vmatprep.subr.mxu0 0.0
      %597 = vmatpush1.msra.mxu0 0.0
      %598 = vmatprep.subr.mxu0 0.0
      %599 = vmatpush1.msra.mxu0 0.0
      %600 = vmatprep.subr.mxu0 0.0
      %601 = vmatpush1.msra.mxu0 0.0
      %602 = vmatprep.subr.mxu0 0.0
      %603 = vmatpush1.msra.mxu0 0.0
      %604 = vmatprep.subr.mxu0 0.0
      %605 = vmatpush1.msra.mxu0 0.0
      %606 = vmatprep.subr.mxu0 0.0
      %607 = vmatpush1.msra.mxu0 0.0
      %608 = vmatprep.subr.mxu0 0.0
      %609 = vmatpush1.msra.mxu0 0.0
      %610 = vmatprep.subr.mxu0 0.0
      %611 = vmatpush1.msra.mxu0 0.0
      %612 = vmatprep.subr.mxu0 0.0
      %613 = vmatpush1.msra.mxu0 0.0
      %614 = vmatprep.subr.mxu0 0.0
      %615 = vmatpush1.msra.mxu0 0.0
      %616 = vmatprep.subr.mxu0 0.0
      %617 = vmatpush1.msra.mxu0 0.0
      %618 = vmatprep.subr.mxu0 0.0
      %619 = vmatpush1.msra.mxu0 0.0
      %620 = vmatprep.subr.mxu0 0.0
      %621 = vmatpush1.msra.mxu0 0.0
      %622 = vmatprep.subr.mxu0 0.0
      %623 = vmatpush1.msra.mxu0 0.0
      %624 = vmatprep.subr.mxu0 0.0
      %625 = vmatpush1.msra.mxu0 0.0
      %626 = vmatprep.subr.mxu0 0.0
      %627 = vmatpush1.msra.mxu0 0.0
      %628 = vmatprep.subr.mxu0 0.0
      %629 = vmatpush1.msra.mxu0 0.0
      %630 = vmatprep.subr.mxu0 0.0
      %631 = vmatpush1.msra.mxu0 0.0
      %632 = vmatprep.subr.mxu0 0.0
      %633 = vmatpush1.msra.mxu0 0.0
      %634 = vmatprep.subr.mxu0 0.0
      %635 = vmatpush1.msra.mxu0 0.0
      %636 = vmatprep.subr.mxu0 0.0
      %637 = vmatpush1.msra.mxu0 0.0
      %638 = vmatprep.subr.mxu0 0.0
      %639 = vmatpush1.msra.mxu0 0.0
      %640 = vmatprep.subr.mxu0 0.0
      %641 = vmatpush1.msra.mxu0 0.0
      %642 = vmatprep.subr.mxu0 0.0
      %643 = vmatpush1.msra.mxu0 0.0
      %644 = vmatprep.subr.mxu0 0.0
      %645 = vmatpush1.msra.mxu0 0.0
      %646 = vmatprep.subr.mxu0 0.0
      %647 = vmatpush1.msra.mxu0 0.0
      %648 = vmatprep.subr.mxu0 0.0
      %649 = vmatpush1.msra.mxu0 0.0
      %650 = vmatprep.subr.mxu0 0.0
      %651 = vmatpush1.msra.mxu0 0.0
      %652 = vmatprep.mubr.f32.mxu0 0.0
      %653 = vmatmul.mubr.f32.gmra.mrb[0].mxu0 %v444
      %v654 = vpop.f32.mrb[0].mxu0
      %v655 = vadd.f32 %v440, %v654
      %v656 = vpop.f32.mrb[0].mxu0
      %v657 = vadd.f32 %v440, %v656
      %658 = vdwg.mxu0
      %659 = vmatprep.subr.mxu0 %v426
      %660 = vmatpush1.msra.mxu0 %v425
      %661 = vmatprep.subr.mxu0 0.0
      %662 = vmatpush1.msra.mxu0 0.0
      %663 = vmatprep.subr.mxu0 0.0
      %664 = vmatpush1.msra.mxu0 0.0
      %665 = vmatprep.subr.mxu0 0.0
      %666 = vmatpush1.msra.mxu0 0.0
      %667 = vmatprep.subr.mxu0 0.0
      %668 = vmatpush1.msra.mxu0 0.0
      %669 = vmatprep.subr.mxu0 0.0
      %670 = vmatpush1.msra.mxu0 0.0
      %671 = vmatprep.subr.mxu0 0.0
      %672 = vmatpush1.msra.mxu0 0.0
      %673 = vmatprep.subr.mxu0 0.0
      %674 = vmatpush1.msra.mxu0 0.0
      %675 = vmatprep.subr.mxu0 0.0
      %676 = vmatpush1.msra.mxu0 0.0
      %677 = vmatprep.subr.mxu0 0.0
      %678 = vmatpush1.msra.mxu0 0.0
      %679 = vmatprep.subr.mxu0 0.0
      %680 = vmatpush1.msra.mxu0 0.0
      %681 = vmatprep.subr.mxu0 0.0
      %682 = vmatpush1.msra.mxu0 0.0
      %683 = vmatprep.subr.mxu0 0.0
      %684 = vmatpush1.msra.mxu0 0.0
      %685 = vmatprep.subr.mxu0 0.0
      %686 = vmatpush1.msra.mxu0 0.0
      %687 = vmatprep.subr.mxu0 0.0
      %688 = vmatpush1.msra.mxu0 0.0
      %689 = vmatprep.subr.mxu0 0.0
      %690 = vmatpush1.msra.mxu0 0.0
      %691 = vmatprep.subr.mxu0 0.0
      %692 = vmatpush1.msra.mxu0 0.0
      %693 = vmatprep.subr.mxu0 0.0
      %694 = vmatpush1.msra.mxu0 0.0
      %695 = vmatprep.subr.mxu0 0.0
      %696 = vmatpush1.msra.mxu0 0.0
      %697 = vmatprep.subr.mxu0 0.0
      %698 = vmatpush1.msra.mxu0 0.0
      %699 = vmatprep.subr.mxu0 0.0
      %700 = vmatpush1.msra.mxu0 0.0
      %701 = vmatprep.subr.mxu0 0.0
      %702 = vmatpush1.msra.mxu0 0.0
      %703 = vmatprep.subr.mxu0 0.0
      %704 = vmatpush1.msra.mxu0 0.0
      %705 = vmatprep.subr.mxu0 0.0
      %706 = vmatpush1.msra.mxu0 0.0
      %707 = vmatprep.subr.mxu0 0.0
      %708 = vmatpush1.msra.mxu0 0.0
      %709 = vmatprep.subr.mxu0 0.0
      %710 = vmatpush1.msra.mxu0 0.0
      %711 = vmatprep.subr.mxu0 0.0
      %712 = vmatpush1.msra.mxu0 0.0
      %713 = vmatprep.subr.mxu0 0.0
      %714 = vmatpush1.msra.mxu0 0.0
      %715 = vmatprep.subr.mxu0 0.0
      %716 = vmatpush1.msra.mxu0 0.0
      %717 = vmatprep.subr.mxu0 0.0
      %718 = vmatpush1.msra.mxu0 0.0
      %719 = vmatprep.subr.mxu0 0.0
      %720 = vmatpush1.msra.mxu0 0.0
      %721 = vmatprep.subr.mxu0 0.0
      %722 = vmatpush1.msra.mxu0 0.0
      %723 = vmatprep.mubr.f32.mxu0 0.0
      %724 = vmatmul.mubr.f32.gmra.mrb[0].mxu0 %v444
      %v725 = vpop.f32.mrb[0].mxu0
      %v726 = vadd.f32 %v440, %v725
      %v727 = vpop.f32.mrb[0].mxu0
      %v728 = vadd.f32 %v440, %v727
      %729 = vdwg.mxu0
      %730 = vmatprep.subr.mxu0 %v428
      %731 = vmatpush1.msra.mxu0 %v427
      %732 = vmatprep.subr.mxu0 0.0
      %733 = vmatpush1.msra.mxu0 0.0
      %734 = vmatprep.subr.mxu0 0.0
      %735 = vmatpush1.msra.mxu0 0.0
      %736 = vmatprep.subr.mxu0 0.0
      %737 = vmatpush1.msra.mxu0 0.0
      %738 = vmatprep.subr.mxu0 0.0
      %739 = vmatpush1.msra.mxu0 0.0
      %740 = vmatprep.subr.mxu0 0.0
      %741 = vmatpush1.msra.mxu0 0.0
      %742 = vmatprep.subr.mxu0 0.0
      %743 = vmatpush1.msra.mxu0 0.0
      %744 = vmatprep.subr.mxu0 0.0
      %745 = vmatpush1.msra.mxu0 0.0
      %746 = vmatprep.subr.mxu0 0.0
      %747 = vmatpush1.msra.mxu0 0.0
      %748 = vmatprep.subr.mxu0 0.0
      %749 = vmatpush1.msra.mxu0 0.0
      %750 = vmatprep.subr.mxu0 0.0
      %751 = vmatpush1.msra.mxu0 0.0
      %752 = vmatprep.subr.mxu0 0.0
      %753 = vmatpush1.msra.mxu0 0.0
      %754 = vmatprep.subr.mxu0 0.0
      %755 = vmatpush1.msra.mxu0 0.0
      %756 = vmatprep.subr.mxu0 0.0
      %757 = vmatpush1.msra.mxu0 0.0
      %758 = vmatprep.subr.mxu0 0.0
      %759 = vmatpush1.msra.mxu0 0.0
      %760 = vmatprep.subr.mxu0 0.0
      %761 = vmatpush1.msra.mxu0 0.0
      %762 = vmatprep.subr.mxu0 0.0
      %763 = vmatpush1.msra.mxu0 0.0
      %764 = vmatprep.subr.mxu0 0.0
      %765 = vmatpush1.msra.mxu0 0.0
      %766 = vmatprep.subr.mxu0 0.0
      %767 = vmatpush1.msra.mxu0 0.0
      %768 = vmatprep.subr.mxu0 0.0
      %769 = vmatpush1.msra.mxu0 0.0
      %770 = vmatprep.subr.mxu0 0.0
      %771 = vmatpush1.msra.mxu0 0.0
      %772 = vmatprep.subr.mxu0 0.0
      %773 = vmatpush1.msra.mxu0 0.0
      %774 = vmatprep.subr.mxu0 0.0
      %775 = vmatpush1.msra.mxu0 0.0
      %776 = vmatprep.subr.mxu0 0.0
      %777 = vmatpush1.msra.mxu0 0.0
      %778 = vmatprep.subr.mxu0 0.0
      %779 = vmatpush1.msra.mxu0 0.0
      %780 = vmatprep.subr.mxu0 0.0
      %781 = vmatpush1.msra.mxu0 0.0
      %782 = vmatprep.subr.mxu0 0.0
      %783 = vmatpush1.msra.mxu0 0.0
      %784 = vmatprep.subr.mxu0 0.0
      %785 = vmatpush1.msra.mxu0 0.0
      %786 = vmatprep.subr.mxu0 0.0
      %787 = vmatpush1.msra.mxu0 0.0
      %788 = vmatprep.subr.mxu0 0.0
      %789 = vmatpush1.msra.mxu0 0.0
      %790 = vmatprep.subr.mxu0 0.0
      %791 = vmatpush1.msra.mxu0 0.0
      %792 = vmatprep.subr.mxu0 0.0
      %793 = vmatpush1.msra.mxu0 0.0
      %794 = vmatprep.mubr.f32.mxu0 0.0
      %795 = vmatmul.mubr.f32.gmra.mrb[0].mxu0 %v444
      %v796 = vpop.f32.mrb[0].mxu0
      %v797 = vadd.f32 %v440, %v796
      %v798 = vpop.f32.mrb[0].mxu0
      %v799 = vadd.f32 %v440, %v798
      %800 = vdwg.mxu0
      %801 = vmatprep.subr.mxu0 %v430
      %802 = vmatpush1.msra.mxu0 %v429
      %803 = vmatprep.subr.mxu0 0.0
      %804 = vmatpush1.msra.mxu0 0.0
      %805 = vmatprep.subr.mxu0 0.0
      %806 = vmatpush1.msra.mxu0 0.0
      %807 = vmatprep.subr.mxu0 0.0
      %808 = vmatpush1.msra.mxu0 0.0
      %809 = vmatprep.subr.mxu0 0.0
      %810 = vmatpush1.msra.mxu0 0.0
      %811 = vmatprep.subr.mxu0 0.0
      %812 = vmatpush1.msra.mxu0 0.0
      %813 = vmatprep.subr.mxu0 0.0
      %814 = vmatpush1.msra.mxu0 0.0
      %815 = vmatprep.subr.mxu0 0.0
      %816 = vmatpush1.msra.mxu0 0.0
      %817 = vmatprep.subr.mxu0 0.0
      %818 = vmatpush1.msra.mxu0 0.0
      %819 = vmatprep.subr.mxu0 0.0
      %820 = vmatpush1.msra.mxu0 0.0
      %821 = vmatprep.subr.mxu0 0.0
      %822 = vmatpush1.msra.mxu0 0.0
      %823 = vmatprep.subr.mxu0 0.0
      %824 = vmatpush1.msra.mxu0 0.0
      %825 = vmatprep.subr.mxu0 0.0
      %826 = vmatpush1.msra.mxu0 0.0
      %827 = vmatprep.subr.mxu0 0.0
      %828 = vmatpush1.msra.mxu0 0.0
      %829 = vmatprep.subr.mxu0 0.0
      %830 = vmatpush1.msra.mxu0 0.0
      %831 = vmatprep.subr.mxu0 0.0
      %832 = vmatpush1.msra.mxu0 0.0
      %833 = vmatprep.subr.mxu0 0.0
      %834 = vmatpush1.msra.mxu0 0.0
      %835 = vmatprep.subr.mxu0 0.0
      %836 = vmatpush1.msra.mxu0 0.0
      %837 = vmatprep.subr.mxu0 0.0
      %838 = vmatpush1.msra.mxu0 0.0
      %839 = vmatprep.subr.mxu0 0.0
      %840 = vmatpush1.msra.mxu0 0.0
      %841 = vmatprep.subr.mxu0 0.0
      %842 = vmatpush1.msra.mxu0 0.0
      %843 = vmatprep.subr.mxu0 0.0
      %844 = vmatpush1.msra.mxu0 0.0
      %845 = vmatprep.subr.mxu0 0.0
      %846 = vmatpush1.msra.mxu0 0.0
      %847 = vmatprep.subr.mxu0 0.0
      %848 = vmatpush1.msra.mxu0 0.0
      %849 = vmatprep.subr.mxu0 0.0
      %850 = vmatpush1.msra.mxu0 0.0
      %851 = vmatprep.subr.mxu0 0.0
      %852 = vmatpush1.msra.mxu0 0.0
      %853 = vmatprep.subr.mxu0 0.0
      %854 = vmatpush1.msra.mxu0 0.0
      %855 = vmatprep.subr.mxu0 0.0
      %856 = vmatpush1.msra.mxu0 0.0
      %857 = vmatprep.subr.mxu0 0.0
      %858 = vmatpush1.msra.mxu0 0.0
      %859 = vmatprep.subr.mxu0 0.0
      %860 = vmatpush1.msra.mxu0 0.0
      %861 = vmatprep.subr.mxu0 0.0
      %862 = vmatpush1.msra.mxu0 0.0
      %863 = vmatprep.subr.mxu0 0.0
      %864 = vmatpush1.msra.mxu0 0.0
      %865 = vmatprep.mubr.f32.mxu0 0.0
      %866 = vmatmul.mubr.f32.gmra.mrb[0].mxu0 %v444
      %v867 = vpop.f32.mrb[0].mxu0
      %v868 = vadd.f32 %v440, %v867
      %v869 = vpop.f32.mrb[0].mxu0
      %v870 = vadd.f32 %v440, %v869
      %871 = vdwg.mxu0
      %872 = vmatprep.subr.mxu0 %v432
      %873 = vmatpush1.msra.mxu0 %v431
      %874 = vmatprep.subr.mxu0 0.0
      %875 = vmatpush1.msra.mxu0 0.0
      %876 = vmatprep.subr.mxu0 0.0
      %877 = vmatpush1.msra.mxu0 0.0
      %878 = vmatprep.subr.mxu0 0.0
      %879 = vmatpush1.msra.mxu0 0.0
      %880 = vmatprep.subr.mxu0 0.0
      %881 = vmatpush1.msra.mxu0 0.0
      %882 = vmatprep.subr.mxu0 0.0
      %883 = vmatpush1.msra.mxu0 0.0
      %884 = vmatprep.subr.mxu0 0.0
      %885 = vmatpush1.msra.mxu0 0.0
      %886 = vmatprep.subr.mxu0 0.0
      %887 = vmatpush1.msra.mxu0 0.0
      %888 = vmatprep.subr.mxu0 0.0
      %889 = vmatpush1.msra.mxu0 0.0
      %890 = vmatprep.subr.mxu0 0.0
      %891 = vmatpush1.msra.mxu0 0.0
      %892 = vmatprep.subr.mxu0 0.0
      %893 = vmatpush1.msra.mxu0 0.0
      %894 = vmatprep.subr.mxu0 0.0
      %895 = vmatpush1.msra.mxu0 0.0
      %896 = vmatprep.subr.mxu0 0.0
      %897 = vmatpush1.msra.mxu0 0.0
      %898 = vmatprep.subr.mxu0 0.0
      %899 = vmatpush1.msra.mxu0 0.0
      %900 = vmatprep.subr.mxu0 0.0
      %901 = vmatpush1.msra.mxu0 0.0
      %902 = vmatprep.subr.mxu0 0.0
      %903 = vmatpush1.msra.mxu0 0.0
      %904 = vmatprep.subr.mxu0 0.0
      %905 = vmatpush1.msra.mxu0 0.0
      %906 = vmatprep.subr.mxu0 0.0
      %907 = vmatpush1.msra.mxu0 0.0
      %908 = vmatprep.subr.mxu0 0.0
      %909 = vmatpush1.msra.mxu0 0.0
      %910 = vmatprep.subr.mxu0 0.0
      %911 = vmatpush1.msra.mxu0 0.0
      %912 = vmatprep.subr.mxu0 0.0
      %913 = vmatpush1.msra.mxu0 0.0
      %914 = vmatprep.subr.mxu0 0.0
      %915 = vmatpush1.msra.mxu0 0.0
      %916 = vmatprep.subr.mxu0 0.0
      %917 = vmatpush1.msra.mxu0 0.0
      %918 = vmatprep.subr.mxu0 0.0
      %919 = vmatpush1.msra.mxu0 0.0
      %920 = vmatprep.subr.mxu0 0.0
      %921 = vmatpush1.msra.mxu0 0.0
      %922 = vmatprep.subr.mxu0 0.0
      %923 = vmatpush1.msra.mxu0 0.0
      %924 = vmatprep.subr.mxu0 0.0
      %925 = vmatpush1.msra.mxu0 0.0
      %926 = vmatprep.subr.mxu0 0.0
      %927 = vmatpush1.msra.mxu0 0.0
      %928 = vmatprep.subr.mxu0 0.0
      %929 = vmatpush1.msra.mxu0 0.0
      %930 = vmatprep.subr.mxu0 0.0
      %931 = vmatpush1.msra.mxu0 0.0
      %932 = vmatprep.subr.mxu0 0.0
      %933 = vmatpush1.msra.mxu0 0.0
      %934 = vmatprep.subr.mxu0 0.0
      %935 = vmatpush1.msra.mxu0 0.0
      %936 = vmatprep.mubr.f32.mxu0 0.0
      %937 = vmatmul.mubr.f32.gmra.mrb[0].mxu0 %v444
      %v938 = vpop.f32.mrb[0].mxu0
      %v939 = vadd.f32 %v440, %v938
      %v940 = vpop.f32.mrb[0].mxu0
      %v941 = vadd.f32 %v440, %v940
      %942 = vdwg.mxu0
      %943 = vmatprep.subr.mxu0 %v434
      %944 = vmatpush1.msra.mxu0 %v433
      %945 = vmatprep.subr.mxu0 0.0
      %946 = vmatpush1.msra.mxu0 0.0
      %947 = vmatprep.subr.mxu0 0.0
      %948 = vmatpush1.msra.mxu0 0.0
      %949 = vmatprep.subr.mxu0 0.0
      %950 = vmatpush1.msra.mxu0 0.0
      %951 = vmatprep.subr.mxu0 0.0
      %952 = vmatpush1.msra.mxu0 0.0
      %953 = vmatprep.subr.mxu0 0.0
      %954 = vmatpush1.msra.mxu0 0.0
      %955 = vmatprep.subr.mxu0 0.0
      %956 = vmatpush1.msra.mxu0 0.0
      %957 = vmatprep.subr.mxu0 0.0
      %958 = vmatpush1.msra.mxu0 0.0
      %959 = vmatprep.subr.mxu0 0.0
      %960 = vmatpush1.msra.mxu0 0.0
      %961 = vmatprep.subr.mxu0 0.0
      %962 = vmatpush1.msra.mxu0 0.0
      %963 = vmatprep.subr.mxu0 0.0
      %964 = vmatpush1.msra.mxu0 0.0
      %965 = vmatprep.subr.mxu0 0.0
      %966 = vmatpush1.msra.mxu0 0.0
      %967 = vmatprep.subr.mxu0 0.0
      %968 = vmatpush1.msra.mxu0 0.0
      %969 = vmatprep.subr.mxu0 0.0
      %970 = vmatpush1.msra.mxu0 0.0
      %971 = vmatprep.subr.mxu0 0.0
      %972 = vmatpush1.msra.mxu0 0.0
      %973 = vmatprep.subr.mxu0 0.0
      %974 = vmatpush1.msra.mxu0 0.0
      %975 = vmatprep.subr.mxu0 0.0
      %976 = vmatpush1.msra.mxu0 0.0
      %977 = vmatprep.subr.mxu0 0.0
      %978 = vmatpush1.msra.mxu0 0.0
      %979 = vmatprep.subr.mxu0 0.0
      %980 = vmatpush1.msra.mxu0 0.0
      %981 = vmatprep.subr.mxu0 0.0
      %982 = vmatpush1.msra.mxu0 0.0
      %983 = vmatprep.subr.mxu0 0.0
      %984 = vmatpush1.msra.mxu0 0.0
      %985 = vmatprep.subr.mxu0 0.0
      %986 = vmatpush1.msra.mxu0 0.0
      %987 = vmatprep.subr.mxu0 0.0
      %988 = vmatpush1.msra.mxu0 0.0
      %989 = vmatprep.subr.mxu0 0.0
      %990 = vmatpush1.msra.mxu0 0.0
      %991 = vmatprep.subr.mxu0 0.0
      %992 = vmatpush1.msra.mxu0 0.0
      %993 = vmatprep.subr.mxu0 0.0
      %994 = vmatpush1.msra.mxu0 0.0
      %995 = vmatprep.subr.mxu0 0.0
      %996 = vmatpush1.msra.mxu0 0.0
      %997 = vmatprep.subr.mxu0 0.0
      %998 = vmatpush1.msra.mxu0 0.0
      %999 = vmatprep.subr.mxu0 0.0
      %1000 = vmatpush1.msra.mxu0 0.0
      %1001 = vmatprep.subr.mxu0 0.0
      %1002 = vmatpush1.msra.mxu0 0.0
      %1003 = vmatprep.subr.mxu0 0.0
      %1004 = vmatpush1.msra.mxu0 0.0
      %1005 = vmatprep.subr.mxu0 0.0
      %1006 = vmatpush1.msra.mxu0 0.0
      %1007 = vmatprep.mubr.f32.mxu0 0.0
      %1008 = vmatmul.mubr.f32.gmra.mrb[0].mxu0 %v444
      %v1009 = vpop.f32.mrb[0].mxu0
      %v1010 = vadd.f32 %v440, %v1009
      %v1011 = vpop.f32.mrb[0].mxu0
      %v1012 = vadd.f32 %v440, %v1011
      %1013 = vdwg.mxu0
      %v1030 = vcombine.low %v513, %v515
      %v1031 = vcombine.low %v584, %v586
      %v1032 = vcombine.low %v655, %v657
      %v1033 = vcombine.low %v726, %v728
      %v1034 = vcombine.low %v797, %v799
      %v1035 = vcombine.low %v868, %v870
      %v1036 = vcombine.low %v939, %v941
      %v1037 = vcombine.low %v1010, %v1012
      %1046 = vst [vmem:[%s397] sm:$0xff] %v1030
      %1047 = vst [vmem:[%s397 + $0x8] sm:$0xff] %v1031
      %1048 = vst [vmem:[%s397 + $0x10] sm:$0xff] %v1032
      %1049 = vst [vmem:[%s397 + $0x18] sm:$0xff] %v1033
      %1050 = vst [vmem:[%s397 + $0x20] sm:$0xff] %v1034
      %1051 = vst [vmem:[%s397 + $0x28] sm:$0xff] %v1035
      %1052 = vst [vmem:[%s397 + $0x30] sm:$0xff] %v1036
      %1053 = vst [vmem:[%s397 + $0x38] sm:$0xff] %v1037
      %v1054 = vld [vmem:[%s3] sm:$0xf]
      %v1055 = vld [vmem:[%s4] sm:$0xf]
      %1057 = vset.pattern.permute.xlu0 0
      %1058 = vperm.xlu0 %1057, %v1055
      %v1059 = vpop.permute.xlu0 %1058
      %v1062 = vsel %vm442, %v1054, 0
      %1064 = vmatprep.subr.mxu0 %v420
      %1065 = vmatpush1.msra.mxu0 %v419
      %1066 = vmatprep.subr.mxu0 0.0
      %1067 = vmatpush1.msra.mxu0 0.0
      %1068 = vmatprep.subr.mxu0 0.0
      %1069 = vmatpush1.msra.mxu0 0.0
      %1070 = vmatprep.subr.mxu0 0.0
      %1071 = vmatpush1.msra.mxu0 0.0
      %1072 = vmatprep.subr.mxu0 0.0
      %1073 = vmatpush1.msra.mxu0 0.0
      %1074 = vmatprep.subr.mxu0 0.0
      %1075 = vmatpush1.msra.mxu0 0.0
      %1076 = vmatprep.subr.mxu0 0.0
      %1077 = vmatpush1.msra.mxu0 0.0
      %1078 = vmatprep.subr.mxu0 0.0
      %1079 = vmatpush1.msra.mxu0 0.0
      %1080 = vmatprep.subr.mxu0 0.0
      %1081 = vmatpush1.msra.mxu0 0.0
      %1082 = vmatprep.subr.mxu0 0.0
      %1083 = vmatpush1.msra.mxu0 0.0
      %1084 = vmatprep.subr.mxu0 0.0
      %1085 = vmatpush1.msra.mxu0 0.0
      %1086 = vmatprep.subr.mxu0 0.0
      %1087 = vmatpush1.msra.mxu0 0.0
      %1088 = vmatprep.subr.mxu0 0.0
      %1089 = vmatpush1.msra.mxu0 0.0
      %1090 = vmatprep.subr.mxu0 0.0
      %1091 = vmatpush1.msra.mxu0 0.0
      %1092 = vmatprep.subr.mxu0 0.0
      %1093 = vmatpush1.msra.mxu0 0.0
      %1094 = vmatprep.subr.mxu0 0.0
      %1095 = vmatpush1.msra.mxu0 0.0
      %1096 = vmatprep.subr.mxu0 0.0
      %1097 = vmatpush1.msra.mxu0 0.0
      %1098 = vmatprep.subr.mxu0 0.0
      %1099 = vmatpush1.msra.mxu0 0.0
      %1100 = vmatprep.subr.mxu0 0.0
      %1101 = vmatpush1.msra.mxu0 0.0
      %1102 = vmatprep.subr.mxu0 0.0
      %1103 = vmatpush1.msra.mxu0 0.0
      %1104 = vmatprep.subr.mxu0 0.0
      %1105 = vmatpush1.msra.mxu0 0.0
      %1106 = vmatprep.subr.mxu0 0.0
      %1107 = vmatpush1.msra.mxu0 0.0
      %1108 = vmatprep.subr.mxu0 0.0
      %1109 = vmatpush1.msra.mxu0 0.0
      %1110 = vmatprep.subr.mxu0 0.0
      %1111 = vmatpush1.msra.mxu0 0.0
      %1112 = vmatprep.subr.mxu0 0.0
      %1113 = vmatpush1.msra.mxu0 0.0
      %1114 = vmatprep.subr.mxu0 0.0
      %1115 = vmatpush1.msra.mxu0 0.0
      %1116 = vmatprep.subr.mxu0 0.0
      %1117 = vmatpush1.msra.mxu0 0.0
      %1118 = vmatprep.subr.mxu0 0.0
      %1119 = vmatpush1.msra.mxu0 0.0
      %1120 = vmatprep.subr.mxu0 0.0
      %1121 = vmatpush1.msra.mxu0 0.0
      %1122 = vmatprep.subr.mxu0 0.0
      %1123 = vmatpush1.msra.mxu0 0.0
      %1124 = vmatprep.subr.mxu0 0.0
      %1125 = vmatpush1.msra.mxu0 0.0
      %1126 = vmatprep.subr.mxu0 0.0
      %1127 = vmatpush1.msra.mxu0 0.0
      %1128 = vmatprep.mubr.f32.mxu0 0.0
      %1129 = vmatmul.mubr.f32.gmra.mrb[0].mxu0 %v1062
      %v1130 = vpop.f32.mrb[0].mxu0
      %v1131 = vadd.f32 %v1059, %v1130
      %v1132 = vpop.f32.mrb[0].mxu0
      %v1133 = vadd.f32 %v1059, %v1132
      %1134 = vdwg.mxu0
      %1135 = vmatprep.subr.mxu0 %v422
      %1136 = vmatpush1.msra.mxu0 %v421
      %1137 = vmatprep.subr.mxu0 0.0
      %1138 = vmatpush1.msra.mxu0 0.0
      %1139 = vmatprep.subr.mxu0 0.0
      %1140 = vmatpush1.msra.mxu0 0.0
      %1141 = vmatprep.subr.mxu0 0.0
      %1142 = vmatpush1.msra.mxu0 0.0
      %1143 = vmatprep.subr.mxu0 0.0
      %1144 = vmatpush1.msra.mxu0 0.0
      %1145 = vmatprep.subr.mxu0 0.0
      %1146 = vmatpush1.msra.mxu0 0.0
      %1147 = vmatprep.subr.mxu0 0.0
      %1148 = vmatpush1.msra.mxu0 0.0
      %1149 = vmatprep.subr.mxu0 0.0
      %1150 = vmatpush1.msra.mxu0 0.0
      %1151 = vmatprep.subr.mxu0 0.0
      %1152 = vmatpush1.msra.mxu0 0.0
      %1153 = vmatprep.subr.mxu0 0.0
      %1154 = vmatpush1.msra.mxu0 0.0
      %1155 = vmatprep.subr.mxu0 0.0
      %1156 = vmatpush1.msra.mxu0 0.0
      %1157 = vmatprep.subr.mxu0 0.0
      %1158 = vmatpush1.msra.mxu0 0.0
      %1159 = vmatprep.subr.mxu0 0.0
      %1160 = vmatpush1.msra.mxu0 0.0
      %1161 = vmatprep.subr.mxu0 0.0
      %1162 = vmatpush1.msra.mxu0 0.0
      %1163 = vmatprep.subr.mxu0 0.0
      %1164 = vmatpush1.msra.mxu0 0.0
      %1165 = vmatprep.subr.mxu0 0.0
      %1166 = vmatpush1.msra.mxu0 0.0
      %1167 = vmatprep.subr.mxu0 0.0
      %1168 = vmatpush1.msra.mxu0 0.0
      %1169 = vmatprep.subr.mxu0 0.0
      %1170 = vmatpush1.msra.mxu0 0.0
      %1171 = vmatprep.subr.mxu0 0.0
      %1172 = vmatpush1.msra.mxu0 0.0
      %1173 = vmatprep.subr.mxu0 0.0
      %1174 = vmatpush1.msra.mxu0 0.0
      %1175 = vmatprep.subr.mxu0 0.0
      %1176 = vmatpush1.msra.mxu0 0.0
      %1177 = vmatprep.subr.mxu0 0.0
      %1178 = vmatpush1.msra.mxu0 0.0
      %1179 = vmatprep.subr.mxu0 0.0
      %1180 = vmatpush1.msra.mxu0 0.0
      %1181 = vmatprep.subr.mxu0 0.0
      %1182 = vmatpush1.msra.mxu0 0.0
      %1183 = vmatprep.subr.mxu0 0.0
      %1184 = vmatpush1.msra.mxu0 0.0
      %1185 = vmatprep.subr.mxu0 0.0
      %1186 = vmatpush1.msra.mxu0 0.0
      %1187 = vmatprep.subr.mxu0 0.0
      %1188 = vmatpush1.msra.mxu0 0.0
      %1189 = vmatprep.subr.mxu0 0.0
      %1190 = vmatpush1.msra.mxu0 0.0
      %1191 = vmatprep.subr.mxu0 0.0
      %1192 = vmatpush1.msra.mxu0 0.0
      %1193 = vmatprep.subr.mxu0 0.0
      %1194 = vmatpush1.msra.mxu0 0.0
      %1195 = vmatprep.subr.mxu0 0.0
      %1196 = vmatpush1.msra.mxu0 0.0
      %1197 = vmatprep.subr.mxu0 0.0
      %1198 = vmatpush1.msra.mxu0 0.0
      %1199 = vmatprep.mubr.f32.mxu0 0.0
      %1200 = vmatmul.mubr.f32.gmra.mrb[0].mxu0 %v1062
      %v1201 = vpop.f32.mrb[0].mxu0
      %v1202 = vadd.f32 %v1059, %v1201
      %v1203 = vpop.f32.mrb[0].mxu0
      %v1204 = vadd.f32 %v1059, %v1203
      %1205 = vdwg.mxu0
      %1206 = vmatprep.subr.mxu0 %v424
      %1207 = vmatpush1.msra.mxu0 %v423
      %1208 = vmatprep.subr.mxu0 0.0
      %1209 = vmatpush1.msra.mxu0 0.0
      %1210 = vmatprep.subr.mxu0 0.0
      %1211 = vmatpush1.msra.mxu0 0.0
      %1212 = vmatprep.subr.mxu0 0.0
      %1213 = vmatpush1.msra.mxu0 0.0
      %1214 = vmatprep.subr.mxu0 0.0
      %1215 = vmatpush1.msra.mxu0 0.0
      %1216 = vmatprep.subr.mxu0 0.0
      %1217 = vmatpush1.msra.mxu0 0.0
      %1218 = vmatprep.subr.mxu0 0.0
      %1219 = vmatpush1.msra.mxu0 0.0
      %1220 = vmatprep.subr.mxu0 0.0
      %1221 = vmatpush1.msra.mxu0 0.0
      %1222 = vmatprep.subr.mxu0 0.0
      %1223 = vmatpush1.msra.mxu0 0.0
      %1224 = vmatprep.subr.mxu0 0.0
      %1225 = vmatpush1.msra.mxu0 0.0
      %1226 = vmatprep.subr.mxu0 0.0
      %1227 = vmatpush1.msra.mxu0 0.0
      %1228 = vmatprep.subr.mxu0 0.0
      %1229 = vmatpush1.msra.mxu0 0.0
      %1230 = vmatprep.subr.mxu0 0.0
      %1231 = vmatpush1.msra.mxu0 0.0
      %1232 = vmatprep.subr.mxu0 0.0
      %1233 = vmatpush1.msra.mxu0 0.0
      %1234 = vmatprep.subr.mxu0 0.0
      %1235 = vmatpush1.msra.mxu0 0.0
      %1236 = vmatprep.subr.mxu0 0.0
      %1237 = vmatpush1.msra.mxu0 0.0
      %1238 = vmatprep.subr.mxu0 0.0
      %1239 = vmatpush1.msra.mxu0 0.0
      %1240 = vmatprep.subr.mxu0 0.0
      %1241 = vmatpush1.msra.mxu0 0.0
      %1242 = vmatprep.subr.mxu0 0.0
      %1243 = vmatpush1.msra.mxu0 0.0
      %1244 = vmatprep.subr.mxu0 0.0
      %1245 = vmatpush1.msra.mxu0 0.0
      %1246 = vmatprep.subr.mxu0 0.0
      %1247 = vmatpush1.msra.mxu0 0.0
      %1248 = vmatprep.subr.mxu0 0.0
      %1249 = vmatpush1.msra.mxu0 0.0
      %1250 = vmatprep.subr.mxu0 0.0
      %1251 = vmatpush1.msra.mxu0 0.0
      %1252 = vmatprep.subr.mxu0 0.0
      %1253 = vmatpush1.msra.mxu0 0.0
      %1254 = vmatprep.subr.mxu0 0.0
      %1255 = vmatpush1.msra.mxu0 0.0
      %1256 = vmatprep.subr.mxu0 0.0
      %1257 = vmatpush1.msra.mxu0 0.0
      %1258 = vmatprep.subr.mxu0 0.0
      %1259 = vmatpush1.msra.mxu0 0.0
      %1260 = vmatprep.subr.mxu0 0.0
      %1261 = vmatpush1.msra.mxu0 0.0
      %1262 = vmatprep.subr.mxu0 0.0
      %1263 = vmatpush1.msra.mxu0 0.0
      %1264 = vmatprep.subr.mxu0 0.0
      %1265 = vmatpush1.msra.mxu0 0.0
      %1266 = vmatprep.subr.mxu0 0.0
      %1267 = vmatpush1.msra.mxu0 0.0
      %1268 = vmatprep.subr.mxu0 0.0
      %1269 = vmatpush1.msra.mxu0 0.0
      %1270 = vmatprep.mubr.f32.mxu0 0.0
      %1271 = vmatmul.mubr.f32.gmra.mrb[0].mxu0 %v1062
      %v1272 = vpop.f32.mrb[0].mxu0
      %v1273 = vadd.f32 %v1059, %v1272
      %v1274 = vpop.f32.mrb[0].mxu0
      %v1275 = vadd.f32 %v1059, %v1274
      %1276 = vdwg.mxu0
      %1277 = vmatprep.subr.mxu0 %v426
      %1278 = vmatpush1.msra.mxu0 %v425
      %1279 = vmatprep.subr.mxu0 0.0
      %1280 = vmatpush1.msra.mxu0 0.0
      %1281 = vmatprep.subr.mxu0 0.0
      %1282 = vmatpush1.msra.mxu0 0.0
      %1283 = vmatprep.subr.mxu0 0.0
      %1284 = vmatpush1.msra.mxu0 0.0
      %1285 = vmatprep.subr.mxu0 0.0
      %1286 = vmatpush1.msra.mxu0 0.0
      %1287 = vmatprep.subr.mxu0 0.0
      %1288 = vmatpush1.msra.mxu0 0.0
      %1289 = vmatprep.subr.mxu0 0.0
      %1290 = vmatpush1.msra.mxu0 0.0
      %1291 = vmatprep.subr.mxu0 0.0
      %1292 = vmatpush1.msra.mxu0 0.0
      %1293 = vmatprep.subr.mxu0 0.0
      %1294 = vmatpush1.msra.mxu0 0.0
      %1295 = vmatprep.subr.mxu0 0.0
      %1296 = vmatpush1.msra.mxu0 0.0
      %1297 = vmatprep.subr.mxu0 0.0
      %1298 = vmatpush1.msra.mxu0 0.0
      %1299 = vmatprep.subr.mxu0 0.0
      %1300 = vmatpush1.msra.mxu0 0.0
      %1301 = vmatprep.subr.mxu0 0.0
      %1302 = vmatpush1.msra.mxu0 0.0
      %1303 = vmatprep.subr.mxu0 0.0
      %1304 = vmatpush1.msra.mxu0 0.0
      %1305 = vmatprep.subr.mxu0 0.0
      %1306 = vmatpush1.msra.mxu0 0.0
      %1307 = vmatprep.subr.mxu0 0.0
      %1308 = vmatpush1.msra.mxu0 0.0
      %1309 = vmatprep.subr.mxu0 0.0
      %1310 = vmatpush1.msra.mxu0 0.0
      %1311 = vmatprep.subr.mxu0 0.0
      %1312 = vmatpush1.msra.mxu0 0.0
      %1313 = vmatprep.subr.mxu0 0.0
      %1314 = vmatpush1.msra.mxu0 0.0
      %1315 = vmatprep.subr.mxu0 0.0
      %1316 = vmatpush1.msra.mxu0 0.0
      %1317 = vmatprep.subr.mxu0 0.0
      %1318 = vmatpush1.msra.mxu0 0.0
      %1319 = vmatprep.subr.mxu0 0.0
      %1320 = vmatpush1.msra.mxu0 0.0
      %1321 = vmatprep.subr.mxu0 0.0
      %1322 = vmatpush1.msra.mxu0 0.0
      %1323 = vmatprep.subr.mxu0 0.0
      %1324 = vmatpush1.msra.mxu0 0.0
      %1325 = vmatprep.subr.mxu0 0.0
      %1326 = vmatpush1.msra.mxu0 0.0
      %1327 = vmatprep.subr.mxu0 0.0
      %1328 = vmatpush1.msra.mxu0 0.0
      %1329 = vmatprep.subr.mxu0 0.0
      %1330 = vmatpush1.msra.mxu0 0.0
      %1331 = vmatprep.subr.mxu0 0.0
      %1332 = vmatpush1.msra.mxu0 0.0
      %1333 = vmatprep.subr.mxu0 0.0
      %1334 = vmatpush1.msra.mxu0 0.0
      %1335 = vmatprep.subr.mxu0 0.0
      %1336 = vmatpush1.msra.mxu0 0.0
      %1337 = vmatprep.subr.mxu0 0.0
      %1338 = vmatpush1.msra.mxu0 0.0
      %1339 = vmatprep.subr.mxu0 0.0
      %1340 = vmatpush1.msra.mxu0 0.0
      %1341 = vmatprep.mubr.f32.mxu0 0.0
      %1342 = vmatmul.mubr.f32.gmra.mrb[0].mxu0 %v1062
      %v1343 = vpop.f32.mrb[0].mxu0
      %v1344 = vadd.f32 %v1059, %v1343
      %v1345 = vpop.f32.mrb[0].mxu0
      %v1346 = vadd.f32 %v1059, %v1345
      %1347 = vdwg.mxu0
      %1348 = vmatprep.subr.mxu0 %v428
      %1349 = vmatpush1.msra.mxu0 %v427
      %1350 = vmatprep.subr.mxu0 0.0
      %1351 = vmatpush1.msra.mxu0 0.0
      %1352 = vmatprep.subr.mxu0 0.0
      %1353 = vmatpush1.msra.mxu0 0.0
      %1354 = vmatprep.subr.mxu0 0.0
      %1355 = vmatpush1.msra.mxu0 0.0
      %1356 = vmatprep.subr.mxu0 0.0
      %1357 = vmatpush1.msra.mxu0 0.0
      %1358 = vmatprep.subr.mxu0 0.0
      %1359 = vmatpush1.msra.mxu0 0.0
      %1360 = vmatprep.subr.mxu0 0.0
      %1361 = vmatpush1.msra.mxu0 0.0
      %1362 = vmatprep.subr.mxu0 0.0
      %1363 = vmatpush1.msra.mxu0 0.0
      %1364 = vmatprep.subr.mxu0 0.0
      %1365 = vmatpush1.msra.mxu0 0.0
      %1366 = vmatprep.subr.mxu0 0.0
      %1367 = vmatpush1.msra.mxu0 0.0
      %1368 = vmatprep.subr.mxu0 0.0
      %1369 = vmatpush1.msra.mxu0 0.0
      %1370 = vmatprep.subr.mxu0 0.0
      %1371 = vmatpush1.msra.mxu0 0.0
      %1372 = vmatprep.subr.mxu0 0.0
      %1373 = vmatpush1.msra.mxu0 0.0
      %1374 = vmatprep.subr.mxu0 0.0
      %1375 = vmatpush1.msra.mxu0 0.0
      %1376 = vmatprep.subr.mxu0 0.0
      %1377 = vmatpush1.msra.mxu0 0.0
      %1378 = vmatprep.subr.mxu0 0.0
      %1379 = vmatpush1.msra.mxu0 0.0
      %1380 = vmatprep.subr.mxu0 0.0
      %1381 = vmatpush1.msra.mxu0 0.0
      %1382 = vmatprep.subr.mxu0 0.0
      %1383 = vmatpush1.msra.mxu0 0.0
      %1384 = vmatprep.subr.mxu0 0.0
      %1385 = vmatpush1.msra.mxu0 0.0
      %1386 = vmatprep.subr.mxu0 0.0
      %1387 = vmatpush1.msra.mxu0 0.0
      %1388 = vmatprep.subr.mxu0 0.0
      %1389 = vmatpush1.msra.mxu0 0.0
      %1390 = vmatprep.subr.mxu0 0.0
      %1391 = vmatpush1.msra.mxu0 0.0
      %1392 = vmatprep.subr.mxu0 0.0
      %1393 = vmatpush1.msra.mxu0 0.0
      %1394 = vmatprep.subr.mxu0 0.0
      %1395 = vmatpush1.msra.mxu0 0.0
      %1396 = vmatprep.subr.mxu0 0.0
      %1397 = vmatpush1.msra.mxu0 0.0
      %1398 = vmatprep.subr.mxu0 0.0
      %1399 = vmatpush1.msra.mxu0 0.0
      %1400 = vmatprep.subr.mxu0 0.0
      %1401 = vmatpush1.msra.mxu0 0.0
      %1402 = vmatprep.subr.mxu0 0.0
      %1403 = vmatpush1.msra.mxu0 0.0
      %1404 = vmatprep.subr.mxu0 0.0
      %1405 = vmatpush1.msra.mxu0 0.0
      %1406 = vmatprep.subr.mxu0 0.0
      %1407 = vmatpush1.msra.mxu0 0.0
      %1408 = vmatprep.subr.mxu0 0.0
      %1409 = vmatpush1.msra.mxu0 0.0
      %1410 = vmatprep.subr.mxu0 0.0
      %1411 = vmatpush1.msra.mxu0 0.0
      %1412 = vmatprep.mubr.f32.mxu0 0.0
      %1413 = vmatmul.mubr.f32.gmra.mrb[0].mxu0 %v1062
      %v1414 = vpop.f32.mrb[0].mxu0
      %v1415 = vadd.f32 %v1059, %v1414
      %v1416 = vpop.f32.mrb[0].mxu0
      %v1417 = vadd.f32 %v1059, %v1416
      %1418 = vdwg.mxu0
      %1419 = vmatprep.subr.mxu0 %v430
      %1420 = vmatpush1.msra.mxu0 %v429
      %1421 = vmatprep.subr.mxu0 0.0
      %1422 = vmatpush1.msra.mxu0 0.0
      %1423 = vmatprep.subr.mxu0 0.0
      %1424 = vmatpush1.msra.mxu0 0.0
      %1425 = vmatprep.subr.mxu0 0.0
      %1426 = vmatpush1.msra.mxu0 0.0
      %1427 = vmatprep.subr.mxu0 0.0
      %1428 = vmatpush1.msra.mxu0 0.0
      %1429 = vmatprep.subr.mxu0 0.0
      %1430 = vmatpush1.msra.mxu0 0.0
      %1431 = vmatprep.subr.mxu0 0.0
      %1432 = vmatpush1.msra.mxu0 0.0
      %1433 = vmatprep.subr.mxu0 0.0
      %1434 = vmatpush1.msra.mxu0 0.0
      %1435 = vmatprep.subr.mxu0 0.0
      %1436 = vmatpush1.msra.mxu0 0.0
      %1437 = vmatprep.subr.mxu0 0.0
      %1438 = vmatpush1.msra.mxu0 0.0
      %1439 = vmatprep.subr.mxu0 0.0
      %1440 = vmatpush1.msra.mxu0 0.0
      %1441 = vmatprep.subr.mxu0 0.0
      %1442 = vmatpush1.msra.mxu0 0.0
      %1443 = vmatprep.subr.mxu0 0.0
      %1444 = vmatpush1.msra.mxu0 0.0
      %1445 = vmatprep.subr.mxu0 0.0
      %1446 = vmatpush1.msra.mxu0 0.0
      %1447 = vmatprep.subr.mxu0 0.0
      %1448 = vmatpush1.msra.mxu0 0.0
      %1449 = vmatprep.subr.mxu0 0.0
      %1450 = vmatpush1.msra.mxu0 0.0
      %1451 = vmatprep.subr.mxu0 0.0
      %1452 = vmatpush1.msra.mxu0 0.0
      %1453 = vmatprep.subr.mxu0 0.0
      %1454 = vmatpush1.msra.mxu0 0.0
      %1455 = vmatprep.subr.mxu0 0.0
      %1456 = vmatpush1.msra.mxu0 0.0
      %1457 = vmatprep.subr.mxu0 0.0
      %1458 = vmatpush1.msra.mxu0 0.0
      %1459 = vmatprep.subr.mxu0 0.0
      %1460 = vmatpush1.msra.mxu0 0.0
      %1461 = vmatprep.subr.mxu0 0.0
      %1462 = vmatpush1.msra.mxu0 0.0
      %1463 = vmatprep.subr.mxu0 0.0
      %1464 = vmatpush1.msra.mxu0 0.0
      %1465 = vmatprep.subr.mxu0 0.0
      %1466 = vmatpush1.msra.mxu0 0.0
      %1467 = vmatprep.subr.mxu0 0.0
      %1468 = vmatpush1.msra.mxu0 0.0
      %1469 = vmatprep.subr.mxu0 0.0
      %1470 = vmatpush1.msra.mxu0 0.0
      %1471 = vmatprep.subr.mxu0 0.0
      %1472 = vmatpush1.msra.mxu0 0.0
      %1473 = vmatprep.subr.mxu0 0.0
      %1474 = vmatpush1.msra.mxu0 0.0
      %1475 = vmatprep.subr.mxu0 0.0
      %1476 = vmatpush1.msra.mxu0 0.0
      %1477 = vmatprep.subr.mxu0 0.0
      %1478 = vmatpush1.msra.mxu0 0.0
      %1479 = vmatprep.subr.mxu0 0.0
      %1480 = vmatpush1.msra.mxu0 0.0
      %1481 = vmatprep.subr.mxu0 0.0
      %1482 = vmatpush1.msra.mxu0 0.0
      %1483 = vmatprep.mubr.f32.mxu0 0.0
      %1484 = vmatmul.mubr.f32.gmra.mrb[0].mxu0 %v1062
      %v1485 = vpop.f32.mrb[0].mxu0
      %v1486 = vadd.f32 %v1059, %v1485
      %v1487 = vpop.f32.mrb[0].mxu0
      %v1488 = vadd.f32 %v1059, %v1487
      %1489 = vdwg.mxu0
      %1490 = vmatprep.subr.mxu0 %v432
      %1491 = vmatpush1.msra.mxu0 %v431
      %1492 = vmatprep.subr.mxu0 0.0
      %1493 = vmatpush1.msra.mxu0 0.0
      %1494 = vmatprep.subr.mxu0 0.0
      %1495 = vmatpush1.msra.mxu0 0.0
      %1496 = vmatprep.subr.mxu0 0.0
      %1497 = vmatpush1.msra.mxu0 0.0
      %1498 = vmatprep.subr.mxu0 0.0
      %1499 = vmatpush1.msra.mxu0 0.0
      %1500 = vmatprep.subr.mxu0 0.0
      %1501 = vmatpush1.msra.mxu0 0.0
      %1502 = vmatprep.subr.mxu0 0.0
      %1503 = vmatpush1.msra.mxu0 0.0
      %1504 = vmatprep.subr.mxu0 0.0
      %1505 = vmatpush1.msra.mxu0 0.0
      %1506 = vmatprep.subr.mxu0 0.0
      %1507 = vmatpush1.msra.mxu0 0.0
      %1508 = vmatprep.subr.mxu0 0.0
      %1509 = vmatpush1.msra.mxu0 0.0
      %1510 = vmatprep.subr.mxu0 0.0
      %1511 = vmatpush1.msra.mxu0 0.0
      %1512 = vmatprep.subr.mxu0 0.0
      %1513 = vmatpush1.msra.mxu0 0.0
      %1514 = vmatprep.subr.mxu0 0.0
      %1515 = vmatpush1.msra.mxu0 0.0
      %1516 = vmatprep.subr.mxu0 0.0
      %1517 = vmatpush1.msra.mxu0 0.0
      %1518 = vmatprep.subr.mxu0 0.0
      %1519 = vmatpush1.msra.mxu0 0.0
      %1520 = vmatprep.subr.mxu0 0.0
      %1521 = vmatpush1.msra.mxu0 0.0
      %1522 = vmatprep.subr.mxu0 0.0
      %1523 = vmatpush1.msra.mxu0 0.0
      %1524 = vmatprep.subr.mxu0 0.0
      %1525 = vmatpush1.msra.mxu0 0.0
      %1526 = vmatprep.subr.mxu0 0.0
      %1527 = vmatpush1.msra.mxu0 0.0
      %1528 = vmatprep.subr.mxu0 0.0
      %1529 = vmatpush1.msra.mxu0 0.0
      %1530 = vmatprep.subr.mxu0 0.0
      %1531 = vmatpush1.msra.mxu0 0.0
      %1532 = vmatprep.subr.mxu0 0.0
      %1533 = vmatpush1.msra.mxu0 0.0
      %1534 = vmatprep.subr.mxu0 0.0
      %1535 = vmatpush1.msra.mxu0 0.0
      %1536 = vmatprep.subr.mxu0 0.0
      %1537 = vmatpush1.msra.mxu0 0.0
      %1538 = vmatprep.subr.mxu0 0.0
      %1539 = vmatpush1.msra.mxu0 0.0
      %1540 = vmatprep.subr.mxu0 0.0
      %1541 = vmatpush1.msra.mxu0 0.0
      %1542 = vmatprep.subr.mxu0 0.0
      %1543 = vmatpush1.msra.mxu0 0.0
      %1544 = vmatprep.subr.mxu0 0.0
      %1545 = vmatpush1.msra.mxu0 0.0
      %1546 = vmatprep.subr.mxu0 0.0
      %1547 = vmatpush1.msra.mxu0 0.0
      %1548 = vmatprep.subr.mxu0 0.0
      %1549 = vmatpush1.msra.mxu0 0.0
      %1550 = vmatprep.subr.mxu0 0.0
      %1551 = vmatpush1.msra.mxu0 0.0
      %1552 = vmatprep.subr.mxu0 0.0
      %1553 = vmatpush1.msra.mxu0 0.0
      %1554 = vmatprep.mubr.f32.mxu0 0.0
      %1555 = vmatmul.mubr.f32.gmra.mrb[0].mxu0 %v1062
      %v1556 = vpop.f32.mrb[0].mxu0
      %v1557 = vadd.f32 %v1059, %v1556
      %v1558 = vpop.f32.mrb[0].mxu0
      %v1559 = vadd.f32 %v1059, %v1558
      %1560 = vdwg.mxu0
      %1561 = vmatprep.subr.mxu0 %v434
      %1562 = vmatpush1.msra.mxu0 %v433
      %1563 = vmatprep.subr.mxu0 0.0
      %1564 = vmatpush1.msra.mxu0 0.0
      %1565 = vmatprep.subr.mxu0 0.0
      %1566 = vmatpush1.msra.mxu0 0.0
      %1567 = vmatprep.subr.mxu0 0.0
      %1568 = vmatpush1.msra.mxu0 0.0
      %1569 = vmatprep.subr.mxu0 0.0
      %1570 = vmatpush1.msra.mxu0 0.0
      %1571 = vmatprep.subr.mxu0 0.0
      %1572 = vmatpush1.msra.mxu0 0.0
      %1573 = vmatprep.subr.mxu0 0.0
      %1574 = vmatpush1.msra.mxu0 0.0
      %1575 = vmatprep.subr.mxu0 0.0
      %1576 = vmatpush1.msra.mxu0 0.0
      %1577 = vmatprep.subr.mxu0 0.0
      %1578 = vmatpush1.msra.mxu0 0.0
      %1579 = vmatprep.subr.mxu0 0.0
      %1580 = vmatpush1.msra.mxu0 0.0
      %1581 = vmatprep.subr.mxu0 0.0
      %1582 = vmatpush1.msra.mxu0 0.0
      %1583 = vmatprep.subr.mxu0 0.0
      %1584 = vmatpush1.msra.mxu0 0.0
      %1585 = vmatprep.subr.mxu0 0.0
      %1586 = vmatpush1.msra.mxu0 0.0
      %1587 = vmatprep.subr.mxu0 0.0
      %1588 = vmatpush1.msra.mxu0 0.0
      %1589 = vmatprep.subr.mxu0 0.0
      %1590 = vmatpush1.msra.mxu0 0.0
      %1591 = vmatprep.subr.mxu0 0.0
      %1592 = vmatpush1.msra.mxu0 0.0
      %1593 = vmatprep.subr.mxu0 0.0
      %1594 = vmatpush1.msra.mxu0 0.0
      %1595 = vmatprep.subr.mxu0 0.0
      %1596 = vmatpush1.msra.mxu0 0.0
      %1597 = vmatprep.subr.mxu0 0.0
      %1598 = vmatpush1.msra.mxu0 0.0
      %1599 = vmatprep.subr.mxu0 0.0
      %1600 = vmatpush1.msra.mxu0 0.0
      %1601 = vmatprep.subr.mxu0 0.0
      %1602 = vmatpush1.msra.mxu0 0.0
      %1603 = vmatprep.subr.mxu0 0.0
      %1604 = vmatpush1.msra.mxu0 0.0
      %1605 = vmatprep.subr.mxu0 0.0
      %1606 = vmatpush1.msra.mxu0 0.0
      %1607 = vmatprep.subr.mxu0 0.0
      %1608 = vmatpush1.msra.mxu0 0.0
      %1609 = vmatprep.subr.mxu0 0.0
      %1610 = vmatpush1.msra.mxu0 0.0
      %1611 = vmatprep.subr.mxu0 0.0
      %1612 = vmatpush1.msra.mxu0 0.0
      %1613 = vmatprep.subr.mxu0 0.0
      %1614 = vmatpush1.msra.mxu0 0.0
      %1615 = vmatprep.subr.mxu0 0.0
      %1616 = vmatpush1.msra.mxu0 0.0
      %1617 = vmatprep.subr.mxu0 0.0
      %1618 = vmatpush1.msra.mxu0 0.0
      %1619 = vmatprep.subr.mxu0 0.0
      %1620 = vmatpush1.msra.mxu0 0.0
      %1621 = vmatprep.subr.mxu0 0.0
      %1622 = vmatpush1.msra.mxu0 0.0
      %1623 = vmatprep.subr.mxu0 0.0
      %1624 = vmatpush1.msra.mxu0 0.0
      %1625 = vmatprep.mubr.f32.mxu0 0.0
      %1626 = vmatmul.mubr.f32.gmra.mrb[0].mxu0 %v1062
      %v1627 = vpop.f32.mrb[0].mxu0
      %v1628 = vadd.f32 %v1059, %v1627
      %v1629 = vpop.f32.mrb[0].mxu0
      %v1630 = vadd.f32 %v1059, %v1629
      %1631 = vdwg.mxu0
      %v1632 = vld [vmem:[%s5] sm:$0xff]
      %v1633 = vld [vmem:[%s6] sm:$0xff]
      %1635 = vset.pattern.permute.xlu0 0
      %1636 = vperm.xlu0 %1635, %v1633
      %v1637 = vpop.permute.xlu0 %1636
      %v1640 = vsel %vm442, %v1632, 0
      %1642 = vmatprep.subr.mxu0 %v420
      %1643 = vmatpush1.msra.mxu0 %v419
      %1644 = vmatprep.subr.mxu0 0.0
      %1645 = vmatpush1.msra.mxu0 0.0
      %1646 = vmatprep.subr.mxu0 0.0
      %1647 = vmatpush1.msra.mxu0 0.0
      %1648 = vmatprep.subr.mxu0 0.0
      %1649 = vmatpush1.msra.mxu0 0.0
      %1650 = vmatprep.subr.mxu0 0.0
      %1651 = vmatpush1.msra.mxu0 0.0
      %1652 = vmatprep.subr.mxu0 0.0
      %1653 = vmatpush1.msra.mxu0 0.0
      %1654 = vmatprep.subr.mxu0 0.0
      %1655 = vmatpush1.msra.mxu0 0.0
      %1656 = vmatprep.subr.mxu0 0.0
      %1657 = vmatpush1.msra.mxu0 0.0
      %1658 = vmatprep.subr.mxu0 0.0
      %1659 = vmatpush1.msra.mxu0 0.0
      %1660 = vmatprep.subr.mxu0 0.0
      %1661 = vmatpush1.msra.mxu0 0.0
      %1662 = vmatprep.subr.mxu0 0.0
      %1663 = vmatpush1.msra.mxu0 0.0
      %1664 = vmatprep.subr.mxu0 0.0
      %1665 = vmatpush1.msra.mxu0 0.0
      %1666 = vmatprep.subr.mxu0 0.0
      %1667 = vmatpush1.msra.mxu0 0.0
      %1668 = vmatprep.subr.mxu0 0.0
      %1669 = vmatpush1.msra.mxu0 0.0
      %1670 = vmatprep.subr.mxu0 0.0
      %1671 = vmatpush1.msra.mxu0 0.0
      %1672 = vmatprep.subr.mxu0 0.0
      %1673 = vmatpush1.msra.mxu0 0.0
      %1674 = vmatprep.subr.mxu0 0.0
      %1675 = vmatpush1.msra.mxu0 0.0
      %1676 = vmatprep.subr.mxu0 0.0
      %1677 = vmatpush1.msra.mxu0 0.0
      %1678 = vmatprep.subr.mxu0 0.0
      %1679 = vmatpush1.msra.mxu0 0.0
      %1680 = vmatprep.subr.mxu0 0.0
      %1681 = vmatpush1.msra.mxu0 0.0
      %1682 = vmatprep.subr.mxu0 0.0
      %1683 = vmatpush1.msra.mxu0 0.0
      %1684 = vmatprep.subr.mxu0 0.0
      %1685 = vmatpush1.msra.mxu0 0.0
      %1686 = vmatprep.subr.mxu0 0.0
      %1687 = vmatpush1.msra.mxu0 0.0
      %1688 = vmatprep.subr.mxu0 0.0
      %1689 = vmatpush1.msra.mxu0 0.0
      %1690 = vmatprep.subr.mxu0 0.0
      %1691 = vmatpush1.msra.mxu0 0.0
      %1692 = vmatprep.subr.mxu0 0.0
      %1693 = vmatpush1.msra.mxu0 0.0
      %1694 = vmatprep.subr.mxu0 0.0
      %1695 = vmatpush1.msra.mxu0 0.0
      %1696 = vmatprep.subr.mxu0 0.0
      %1697 = vmatpush1.msra.mxu0 0.0
      %1698 = vmatprep.subr.mxu0 0.0
      %1699 = vmatpush1.msra.mxu0 0.0
      %1700 = vmatprep.subr.mxu0 0.0
      %1701 = vmatpush1.msra.mxu0 0.0
      %1702 = vmatprep.subr.mxu0 0.0
      %1703 = vmatpush1.msra.mxu0 0.0
      %1704 = vmatprep.subr.mxu0 0.0
      %1705 = vmatpush1.msra.mxu0 0.0
      %1706 = vmatprep.mubr.f32.mxu0 0.0
      %1707 = vmatmul.mubr.f32.gmra.mrb[0].mxu0 %v1640
      %v1708 = vpop.f32.mrb[0].mxu0
      %v1709 = vadd.f32 %v1637, %v1708
      %v1710 = vpop.f32.mrb[0].mxu0
      %v1711 = vadd.f32 %v1637, %v1710
      %1712 = vdwg.mxu0
      %1713 = vmatprep.subr.mxu0 %v422
      %1714 = vmatpush1.msra.mxu0 %v421
      %1715 = vmatprep.subr.mxu0 0.0
      %1716 = vmatpush1.msra.mxu0 0.0
      %1717 = vmatprep.subr.mxu0 0.0
      %1718 = vmatpush1.msra.mxu0 0.0
      %1719 = vmatprep.subr.mxu0 0.0
      %1720 = vmatpush1.msra.mxu0 0.0
      %1721 = vmatprep.subr.mxu0 0.0
      %1722 = vmatpush1.msra.mxu0 0.0
      %1723 = vmatprep.subr.mxu0 0.0
      %1724 = vmatpush1.msra.mxu0 0.0
      %1725 = vmatprep.subr.mxu0 0.0
      %1726 = vmatpush1.msra.mxu0 0.0
      %1727 = vmatprep.subr.mxu0 0.0
      %1728 = vmatpush1.msra.mxu0 0.0
      %1729 = vmatprep.subr.mxu0 0.0
      %1730 = vmatpush1.msra.mxu0 0.0
      %1731 = vmatprep.subr.mxu0 0.0
      %1732 = vmatpush1.msra.mxu0 0.0
      %1733 = vmatprep.subr.mxu0 0.0
      %1734 = vmatpush1.msra.mxu0 0.0
      %1735 = vmatprep.subr.mxu0 0.0
      %1736 = vmatpush1.msra.mxu0 0.0
      %1737 = vmatprep.subr.mxu0 0.0
      %1738 = vmatpush1.msra.mxu0 0.0
      %1739 = vmatprep.subr.mxu0 0.0
      %1740 = vmatpush1.msra.mxu0 0.0
      %1741 = vmatprep.subr.mxu0 0.0
      %1742 = vmatpush1.msra.mxu0 0.0
      %1743 = vmatprep.subr.mxu0 0.0
      %1744 = vmatpush1.msra.mxu0 0.0
      %1745 = vmatprep.subr.mxu0 0.0
      %1746 = vmatpush1.msra.mxu0 0.0
      %1747 = vmatprep.subr.mxu0 0.0
      %1748 = vmatpush1.msra.mxu0 0.0
      %1749 = vmatprep.subr.mxu0 0.0
      %1750 = vmatpush1.msra.mxu0 0.0
      %1751 = vmatprep.subr.mxu0 0.0
      %1752 = vmatpush1.msra.mxu0 0.0
      %1753 = vmatprep.subr.mxu0 0.0
      %1754 = vmatpush1.msra.mxu0 0.0
      %1755 = vmatprep.subr.mxu0 0.0
      %1756 = vmatpush1.msra.mxu0 0.0
      %1757 = vmatprep.subr.mxu0 0.0
      %1758 = vmatpush1.msra.mxu0 0.0
      %1759 = vmatprep.subr.mxu0 0.0
      %1760 = vmatpush1.msra.mxu0 0.0
      %1761 = vmatprep.subr.mxu0 0.0
      %1762 = vmatpush1.msra.mxu0 0.0
      %1763 = vmatprep.subr.mxu0 0.0
      %1764 = vmatpush1.msra.mxu0 0.0
      %1765 = vmatprep.subr.mxu0 0.0
      %1766 = vmatpush1.msra.mxu0 0.0
      %1767 = vmatprep.subr.mxu0 0.0
      %1768 = vmatpush1.msra.mxu0 0.0
      %1769 = vmatprep.subr.mxu0 0.0
      %1770 = vmatpush1.msra.mxu0 0.0
      %1771 = vmatprep.subr.mxu0 0.0
      %1772 = vmatpush1.msra.mxu0 0.0
      %1773 = vmatprep.subr.mxu0 0.0
      %1774 = vmatpush1.msra.mxu0 0.0
      %1775 = vmatprep.subr.mxu0 0.0
      %1776 = vmatpush1.msra.mxu0 0.0
      %1777 = vmatprep.mubr.f32.mxu0 0.0
      %1778 = vmatmul.mubr.f32.gmra.mrb[0].mxu0 %v1640
      %v1779 = vpop.f32.mrb[0].mxu0
      %v1780 = vadd.f32 %v1637, %v1779
      %v1781 = vpop.f32.mrb[0].mxu0
      %v1782 = vadd.f32 %v1637, %v1781
      %1783 = vdwg.mxu0
      %1784 = vmatprep.subr.mxu0 %v424
      %1785 = vmatpush1.msra.mxu0 %v423
      %1786 = vmatprep.subr.mxu0 0.0
      %1787 = vmatpush1.msra.mxu0 0.0
      %1788 = vmatprep.subr.mxu0 0.0
      %1789 = vmatpush1.msra.mxu0 0.0
      %1790 = vmatprep.subr.mxu0 0.0
      %1791 = vmatpush1.msra.mxu0 0.0
      %1792 = vmatprep.subr.mxu0 0.0
      %1793 = vmatpush1.msra.mxu0 0.0
      %1794 = vmatprep.subr.mxu0 0.0
      %1795 = vmatpush1.msra.mxu0 0.0
      %1796 = vmatprep.subr.mxu0 0.0
      %1797 = vmatpush1.msra.mxu0 0.0
      %1798 = vmatprep.subr.mxu0 0.0
      %1799 = vmatpush1.msra.mxu0 0.0
      %1800 = vmatprep.subr.mxu0 0.0
      %1801 = vmatpush1.msra.mxu0 0.0
      %1802 = vmatprep.subr.mxu0 0.0
      %1803 = vmatpush1.msra.mxu0 0.0
      %1804 = vmatprep.subr.mxu0 0.0
      %1805 = vmatpush1.msra.mxu0 0.0
      %1806 = vmatprep.subr.mxu0 0.0
      %1807 = vmatpush1.msra.mxu0 0.0
      %1808 = vmatprep.subr.mxu0 0.0
      %1809 = vmatpush1.msra.mxu0 0.0
      %1810 = vmatprep.subr.mxu0 0.0
      %1811 = vmatpush1.msra.mxu0 0.0
      %1812 = vmatprep.subr.mxu0 0.0
      %1813 = vmatpush1.msra.mxu0 0.0
      %1814 = vmatprep.subr.mxu0 0.0
      %1815 = vmatpush1.msra.mxu0 0.0
      %1816 = vmatprep.subr.mxu0 0.0
      %1817 = vmatpush1.msra.mxu0 0.0
      %1818 = vmatprep.subr.mxu0 0.0
      %1819 = vmatpush1.msra.mxu0 0.0
      %1820 = vmatprep.subr.mxu0 0.0
      %1821 = vmatpush1.msra.mxu0 0.0
      %1822 = vmatprep.subr.mxu0 0.0
      %1823 = vmatpush1.msra.mxu0 0.0
      %1824 = vmatprep.subr.mxu0 0.0
      %1825 = vmatpush1.msra.mxu0 0.0
      %1826 = vmatprep.subr.mxu0 0.0
      %1827 = vmatpush1.msra.mxu0 0.0
      %1828 = vmatprep.subr.mxu0 0.0
      %1829 = vmatpush1.msra.mxu0 0.0
      %1830 = vmatprep.subr.mxu0 0.0
      %1831 = vmatpush1.msra.mxu0 0.0
      %1832 = vmatprep.subr.mxu0 0.0
      %1833 = vmatpush1.msra.mxu0 0.0
      %1834 = vmatprep.subr.mxu0 0.0
      %1835 = vmatpush1.msra.mxu0 0.0
      %1836 = vmatprep.subr.mxu0 0.0
      %1837 = vmatpush1.msra.mxu0 0.0
      %1838 = vmatprep.subr.mxu0 0.0
      %1839 = vmatpush1.msra.mxu0 0.0
      %1840 = vmatprep.subr.mxu0 0.0
      %1841 = vmatpush1.msra.mxu0 0.0
      %1842 = vmatprep.subr.mxu0 0.0
      %1843 = vmatpush1.msra.mxu0 0.0
      %1844 = vmatprep.subr.mxu0 0.0
      %1845 = vmatpush1.msra.mxu0 0.0
      %1846 = vmatprep.subr.mxu0 0.0
      %1847 = vmatpush1.msra.mxu0 0.0
      %1848 = vmatprep.mubr.f32.mxu0 0.0
      %1849 = vmatmul.mubr.f32.gmra.mrb[0].mxu0 %v1640
      %v1850 = vpop.f32.mrb[0].mxu0
      %v1851 = vadd.f32 %v1637, %v1850
      %v1852 = vpop.f32.mrb[0].mxu0
      %v1853 = vadd.f32 %v1637, %v1852
      %1854 = vdwg.mxu0
      %1855 = vmatprep.subr.mxu0 %v426
      %1856 = vmatpush1.msra.mxu0 %v425
      %1857 = vmatprep.subr.mxu0 0.0
      %1858 = vmatpush1.msra.mxu0 0.0
      %1859 = vmatprep.subr.mxu0 0.0
      %1860 = vmatpush1.msra.mxu0 0.0
      %1861 = vmatprep.subr.mxu0 0.0
      %1862 = vmatpush1.msra.mxu0 0.0
      %1863 = vmatprep.subr.mxu0 0.0
      %1864 = vmatpush1.msra.mxu0 0.0
      %1865 = vmatprep.subr.mxu0 0.0
      %1866 = vmatpush1.msra.mxu0 0.0
      %1867 = vmatprep.subr.mxu0 0.0
      %1868 = vmatpush1.msra.mxu0 0.0
      %1869 = vmatprep.subr.mxu0 0.0
      %1870 = vmatpush1.msra.mxu0 0.0
      %1871 = vmatprep.subr.mxu0 0.0
      %1872 = vmatpush1.msra.mxu0 0.0
      %1873 = vmatprep.subr.mxu0 0.0
      %1874 = vmatpush1.msra.mxu0 0.0
      %1875 = vmatprep.subr.mxu0 0.0
      %1876 = vmatpush1.msra.mxu0 0.0
      %1877 = vmatprep.subr.mxu0 0.0
      %1878 = vmatpush1.msra.mxu0 0.0
      %1879 = vmatprep.subr.mxu0 0.0
      %1880 = vmatpush1.msra.mxu0 0.0
      %1881 = vmatprep.subr.mxu0 0.0
      %1882 = vmatpush1.msra.mxu0 0.0
      %1883 = vmatprep.subr.mxu0 0.0
      %1884 = vmatpush1.msra.mxu0 0.0
      %1885 = vmatprep.subr.mxu0 0.0
      %1886 = vmatpush1.msra.mxu0 0.0
      %1887 = vmatprep.subr.mxu0 0.0
      %1888 = vmatpush1.msra.mxu0 0.0
      %1889 = vmatprep.subr.mxu0 0.0
      %1890 = vmatpush1.msra.mxu0 0.0
      %1891 = vmatprep.subr.mxu0 0.0
      %1892 = vmatpush1.msra.mxu0 0.0
      %1893 = vmatprep.subr.mxu0 0.0
      %1894 = vmatpush1.msra.mxu0 0.0
      %1895 = vmatprep.subr.mxu0 0.0
      %1896 = vmatpush1.msra.mxu0 0.0
      %1897 = vmatprep.subr.mxu0 0.0
      %1898 = vmatpush1.msra.mxu0 0.0
      %1899 = vmatprep.subr.mxu0 0.0
      %1900 = vmatpush1.msra.mxu0 0.0
      %1901 = vmatprep.subr.mxu0 0.0
      %1902 = vmatpush1.msra.mxu0 0.0
      %1903 = vmatprep.subr.mxu0 0.0
      %1904 = vmatpush1.msra.mxu0 0.0
      %1905 = vmatprep.subr.mxu0 0.0
      %1906 = vmatpush1.msra.mxu0 0.0
      %1907 = vmatprep.subr.mxu0 0.0
      %1908 = vmatpush1.msra.mxu0 0.0
      %1909 = vmatprep.subr.mxu0 0.0
      %1910 = vmatpush1.msra.mxu0 0.0
      %1911 = vmatprep.subr.mxu0 0.0
      %1912 = vmatpush1.msra.mxu0 0.0
      %1913 = vmatprep.subr.mxu0 0.0
      %1914 = vmatpush1.msra.mxu0 0.0
      %1915 = vmatprep.subr.mxu0 0.0
      %1916 = vmatpush1.msra.mxu0 0.0
      %1917 = vmatprep.subr.mxu0 0.0
      %1918 = vmatpush1.msra.mxu0 0.0
      %1919 = vmatprep.mubr.f32.mxu0 0.0
      %1920 = vmatmul.mubr.f32.gmra.mrb[0].mxu0 %v1640
      %v1921 = vpop.f32.mrb[0].mxu0
      %v1922 = vadd.f32 %v1637, %v1921
      %v1923 = vpop.f32.mrb[0].mxu0
      %v1924 = vadd.f32 %v1637, %v1923
      %1925 = vdwg.mxu0
      %1926 = vmatprep.subr.mxu0 %v428
      %1927 = vmatpush1.msra.mxu0 %v427
      %1928 = vmatprep.subr.mxu0 0.0
      %1929 = vmatpush1.msra.mxu0 0.0
      %1930 = vmatprep.subr.mxu0 0.0
      %1931 = vmatpush1.msra.mxu0 0.0
      %1932 = vmatprep.subr.mxu0 0.0
      %1933 = vmatpush1.msra.mxu0 0.0
      %1934 = vmatprep.subr.mxu0 0.0
      %1935 = vmatpush1.msra.mxu0 0.0
      %1936 = vmatprep.subr.mxu0 0.0
      %1937 = vmatpush1.msra.mxu0 0.0
      %1938 = vmatprep.subr.mxu0 0.0
      %1939 = vmatpush1.msra.mxu0 0.0
      %1940 = vmatprep.subr.mxu0 0.0
      %1941 = vmatpush1.msra.mxu0 0.0
      %1942 = vmatprep.subr.mxu0 0.0
      %1943 = vmatpush1.msra.mxu0 0.0
      %1944 = vmatprep.subr.mxu0 0.0
      %1945 = vmatpush1.msra.mxu0 0.0
      %1946 = vmatprep.subr.mxu0 0.0
      %1947 = vmatpush1.msra.mxu0 0.0
      %1948 = vmatprep.subr.mxu0 0.0
      %1949 = vmatpush1.msra.mxu0 0.0
      %1950 = vmatprep.subr.mxu0 0.0
      %1951 = vmatpush1.msra.mxu0 0.0
      %1952 = vmatprep.subr.mxu0 0.0
      %1953 = vmatpush1.msra.mxu0 0.0
      %1954 = vmatprep.subr.mxu0 0.0
      %1955 = vmatpush1.msra.mxu0 0.0
      %1956 = vmatprep.subr.mxu0 0.0
      %1957 = vmatpush1.msra.mxu0 0.0
      %1958 = vmatprep.subr.mxu0 0.0
      %1959 = vmatpush1.msra.mxu0 0.0
      %1960 = vmatprep.subr.mxu0 0.0
      %1961 = vmatpush1.msra.mxu0 0.0
      %1962 = vmatprep.subr.mxu0 0.0
      %1963 = vmatpush1.msra.mxu0 0.0
      %1964 = vmatprep.subr.mxu0 0.0
      %1965 = vmatpush1.msra.mxu0 0.0
      %1966 = vmatprep.subr.mxu0 0.0
      %1967 = vmatpush1.msra.mxu0 0.0
      %1968 = vmatprep.subr.mxu0 0.0
      %1969 = vmatpush1.msra.mxu0 0.0
      %1970 = vmatprep.subr.mxu0 0.0
      %1971 = vmatpush1.msra.mxu0 0.0
      %1972 = vmatprep.subr.mxu0 0.0
      %1973 = vmatpush1.msra.mxu0 0.0
      %1974 = vmatprep.subr.mxu0 0.0
      %1975 = vmatpush1.msra.mxu0 0.0
      %1976 = vmatprep.subr.mxu0 0.0
      %1977 = vmatpush1.msra.mxu0 0.0
      %1978 = vmatprep.subr.mxu0 0.0
      %1979 = vmatpush1.msra.mxu0 0.0
      %1980 = vmatprep.subr.mxu0 0.0
      %1981 = vmatpush1.msra.mxu0 0.0
      %1982 = vmatprep.subr.mxu0 0.0
      %1983 = vmatpush1.msra.mxu0 0.0
      %1984 = vmatprep.subr.mxu0 0.0
      %1985 = vmatpush1.msra.mxu0 0.0
      %1986 = vmatprep.subr.mxu0 0.0
      %1987 = vmatpush1.msra.mxu0 0.0
      %1988 = vmatprep.subr.mxu0 0.0
      %1989 = vmatpush1.msra.mxu0 0.0
      %1990 = vmatprep.mubr.f32.mxu0 0.0
      %1991 = vmatmul.mubr.f32.gmra.mrb[0].mxu0 %v1640
      %v1992 = vpop.f32.mrb[0].mxu0
      %v1993 = vadd.f32 %v1637, %v1992
      %v1994 = vpop.f32.mrb[0].mxu0
      %v1995 = vadd.f32 %v1637, %v1994
      %1996 = vdwg.mxu0
      %1997 = vmatprep.subr.mxu0 %v430
      %1998 = vmatpush1.msra.mxu0 %v429
      %1999 = vmatprep.subr.mxu0 0.0
      %2000 = vmatpush1.msra.mxu0 0.0
      %2001 = vmatprep.subr.mxu0 0.0
      %2002 = vmatpush1.msra.mxu0 0.0
      %2003 = vmatprep.subr.mxu0 0.0
      %2004 = vmatpush1.msra.mxu0 0.0
      %2005 = vmatprep.subr.mxu0 0.0
      %2006 = vmatpush1.msra.mxu0 0.0
      %2007 = vmatprep.subr.mxu0 0.0
      %2008 = vmatpush1.msra.mxu0 0.0
      %2009 = vmatprep.subr.mxu0 0.0
      %2010 = vmatpush1.msra.mxu0 0.0
      %2011 = vmatprep.subr.mxu0 0.0
      %2012 = vmatpush1.msra.mxu0 0.0
      %2013 = vmatprep.subr.mxu0 0.0
      %2014 = vmatpush1.msra.mxu0 0.0
      %2015 = vmatprep.subr.mxu0 0.0
      %2016 = vmatpush1.msra.mxu0 0.0
      %2017 = vmatprep.subr.mxu0 0.0
      %2018 = vmatpush1.msra.mxu0 0.0
      %2019 = vmatprep.subr.mxu0 0.0
      %2020 = vmatpush1.msra.mxu0 0.0
      %2021 = vmatprep.subr.mxu0 0.0
      %2022 = vmatpush1.msra.mxu0 0.0
      %2023 = vmatprep.subr.mxu0 0.0
      %2024 = vmatpush1.msra.mxu0 0.0
      %2025 = vmatprep.subr.mxu0 0.0
      %2026 = vmatpush1.msra.mxu0 0.0
      %2027 = vmatprep.subr.mxu0 0.0
      %2028 = vmatpush1.msra.mxu0 0.0
      %2029 = vmatprep.subr.mxu0 0.0
      %2030 = vmatpush1.msra.mxu0 0.0
      %2031 = vmatprep.subr.mxu0 0.0
      %2032 = vmatpush1.msra.mxu0 0.0
      %2033 = vmatprep.subr.mxu0 0.0
      %2034 = vmatpush1.msra.mxu0 0.0
      %2035 = vmatprep.subr.mxu0 0.0
      %2036 = vmatpush1.msra.mxu0 0.0
      %2037 = vmatprep.subr.mxu0 0.0
      %2038 = vmatpush1.msra.mxu0 0.0
      %2039 = vmatprep.subr.mxu0 0.0
      %2040 = vmatpush1.msra.mxu0 0.0
      %2041 = vmatprep.subr.mxu0 0.0
      %2042 = vmatpush1.msra.mxu0 0.0
      %2043 = vmatprep.subr.mxu0 0.0
      %2044 = vmatpush1.msra.mxu0 0.0
      %2045 = vmatprep.subr.mxu0 0.0
      %2046 = vmatpush1.msra.mxu0 0.0
      %2047 = vmatprep.subr.mxu0 0.0
      %2048 = vmatpush1.msra.mxu0 0.0
      %2049 = vmatprep.subr.mxu0 0.0
      %2050 = vmatpush1.msra.mxu0 0.0
      %2051 = vmatprep.subr.mxu0 0.0
      %2052 = vmatpush1.msra.mxu0 0.0
      %2053 = vmatprep.subr.mxu0 0.0
      %2054 = vmatpush1.msra.mxu0 0.0
      %2055 = vmatprep.subr.mxu0 0.0
      %2056 = vmatpush1.msra.mxu0 0.0
      %2057 = vmatprep.subr.mxu0 0.0
      %2058 = vmatpush1.msra.mxu0 0.0
      %2059 = vmatprep.subr.mxu0 0.0
      %2060 = vmatpush1.msra.mxu0 0.0
      %2061 = vmatprep.mubr.f32.mxu0 0.0
      %2062 = vmatmul.mubr.f32.gmra.mrb[0].mxu0 %v1640
      %v2063 = vpop.f32.mrb[0].mxu0
      %v2064 = vadd.f32 %v1637, %v2063
      %v2065 = vpop.f32.mrb[0].mxu0
      %v2066 = vadd.f32 %v1637, %v2065
      %2067 = vdwg.mxu0
      %2068 = vmatprep.subr.mxu0 %v432
      %2069 = vmatpush1.msra.mxu0 %v431
      %2070 = vmatprep.subr.mxu0 0.0
      %2071 = vmatpush1.msra.mxu0 0.0
      %2072 = vmatprep.subr.mxu0 0.0
      %2073 = vmatpush1.msra.mxu0 0.0
      %2074 = vmatprep.subr.mxu0 0.0
      %2075 = vmatpush1.msra.mxu0 0.0
      %2076 = vmatprep.subr.mxu0 0.0
      %2077 = vmatpush1.msra.mxu0 0.0
      %2078 = vmatprep.subr.mxu0 0.0
      %2079 = vmatpush1.msra.mxu0 0.0
      %2080 = vmatprep.subr.mxu0 0.0
      %2081 = vmatpush1.msra.mxu0 0.0
      %2082 = vmatprep.subr.mxu0 0.0
      %2083 = vmatpush1.msra.mxu0 0.0
      %2084 = vmatprep.subr.mxu0 0.0
      %2085 = vmatpush1.msra.mxu0 0.0
      %2086 = vmatprep.subr.mxu0 0.0
      %2087 = vmatpush1.msra.mxu0 0.0
      %2088 = vmatprep.subr.mxu0 0.0
      %2089 = vmatpush1.msra.mxu0 0.0
      %2090 = vmatprep.subr.mxu0 0.0
      %2091 = vmatpush1.msra.mxu0 0.0
      %2092 = vmatprep.subr.mxu0 0.0
      %2093 = vmatpush1.msra.mxu0 0.0
      %2094 = vmatprep.subr.mxu0 0.0
      %2095 = vmatpush1.msra.mxu0 0.0
      %2096 = vmatprep.subr.mxu0 0.0
      %2097 = vmatpush1.msra.mxu0 0.0
      %2098 = vmatprep.subr.mxu0 0.0
      %2099 = vmatpush1.msra.mxu0 0.0
      %2100 = vmatprep.subr.mxu0 0.0
      %2101 = vmatpush1.msra.mxu0 0.0
      %2102 = vmatprep.subr.mxu0 0.0
      %2103 = vmatpush1.msra.mxu0 0.0
      %2104 = vmatprep.subr.mxu0 0.0
      %2105 = vmatpush1.msra.mxu0 0.0
      %2106 = vmatprep.subr.mxu0 0.0
      %2107 = vmatpush1.msra.mxu0 0.0
      %2108 = vmatprep.subr.mxu0 0.0
      %2109 = vmatpush1.msra.mxu0 0.0
      %2110 = vmatprep.subr.mxu0 0.0
      %2111 = vmatpush1.msra.mxu0 0.0
      %2112 = vmatprep.subr.mxu0 0.0
      %2113 = vmatpush1.msra.mxu0 0.0
      %2114 = vmatprep.subr.mxu0 0.0
      %2115 = vmatpush1.msra.mxu0 0.0
      %2116 = vmatprep.subr.mxu0 0.0
      %2117 = vmatpush1.msra.mxu0 0.0
      %2118 = vmatprep.subr.mxu0 0.0
      %2119 = vmatpush1.msra.mxu0 0.0
      %2120 = vmatprep.subr.mxu0 0.0
      %2121 = vmatpush1.msra.mxu0 0.0
      %2122 = vmatprep.subr.mxu0 0.0
      %2123 = vmatpush1.msra.mxu0 0.0
      %2124 = vmatprep.subr.mxu0 0.0
      %2125 = vmatpush1.msra.mxu0 0.0
      %2126 = vmatprep.subr.mxu0 0.0
      %2127 = vmatpush1.msra.mxu0 0.0
      %2128 = vmatprep.subr.mxu0 0.0
      %2129 = vmatpush1.msra.mxu0 0.0
      %2130 = vmatprep.subr.mxu0 0.0
      %2131 = vmatpush1.msra.mxu0 0.0
      %2132 = vmatprep.mubr.f32.mxu0 0.0
      %2133 = vmatmul.mubr.f32.gmra.mrb[0].mxu0 %v1640
      %v2134 = vpop.f32.mrb[0].mxu0
      %v2135 = vadd.f32 %v1637, %v2134
      %v2136 = vpop.f32.mrb[0].mxu0
      %v2137 = vadd.f32 %v1637, %v2136
      %2138 = vdwg.mxu0
      %2139 = vmatprep.subr.mxu0 %v434
      %2140 = vmatpush1.msra.mxu0 %v433
      %2141 = vmatprep.subr.mxu0 0.0
      %2142 = vmatpush1.msra.mxu0 0.0
      %2143 = vmatprep.subr.mxu0 0.0
      %2144 = vmatpush1.msra.mxu0 0.0
      %2145 = vmatprep.subr.mxu0 0.0
      %2146 = vmatpush1.msra.mxu0 0.0
      %2147 = vmatprep.subr.mxu0 0.0
      %2148 = vmatpush1.msra.mxu0 0.0
      %2149 = vmatprep.subr.mxu0 0.0
      %2150 = vmatpush1.msra.mxu0 0.0
      %2151 = vmatprep.subr.mxu0 0.0
      %2152 = vmatpush1.msra.mxu0 0.0
      %2153 = vmatprep.subr.mxu0 0.0
      %2154 = vmatpush1.msra.mxu0 0.0
      %2155 = vmatprep.subr.mxu0 0.0
      %2156 = vmatpush1.msra.mxu0 0.0
      %2157 = vmatprep.subr.mxu0 0.0
      %2158 = vmatpush1.msra.mxu0 0.0
      %2159 = vmatprep.subr.mxu0 0.0
      %2160 = vmatpush1.msra.mxu0 0.0
      %2161 = vmatprep.subr.mxu0 0.0
      %2162 = vmatpush1.msra.mxu0 0.0
      %2163 = vmatprep.subr.mxu0 0.0
      %2164 = vmatpush1.msra.mxu0 0.0
      %2165 = vmatprep.subr.mxu0 0.0
      %2166 = vmatpush1.msra.mxu0 0.0
      %2167 = vmatprep.subr.mxu0 0.0
      %2168 = vmatpush1.msra.mxu0 0.0
      %2169 = vmatprep.subr.mxu0 0.0
      %2170 = vmatpush1.msra.mxu0 0.0
      %2171 = vmatprep.subr.mxu0 0.0
      %2172 = vmatpush1.msra.mxu0 0.0
      %2173 = vmatprep.subr.mxu0 0.0
      %2174 = vmatpush1.msra.mxu0 0.0
      %2175 = vmatprep.subr.mxu0 0.0
      %2176 = vmatpush1.msra.mxu0 0.0
      %2177 = vmatprep.subr.mxu0 0.0
      %2178 = vmatpush1.msra.mxu0 0.0
      %2179 = vmatprep.subr.mxu0 0.0
      %2180 = vmatpush1.msra.mxu0 0.0
      %2181 = vmatprep.subr.mxu0 0.0
      %2182 = vmatpush1.msra.mxu0 0.0
      %2183 = vmatprep.subr.mxu0 0.0
      %2184 = vmatpush1.msra.mxu0 0.0
      %2185 = vmatprep.subr.mxu0 0.0
      %2186 = vmatpush1.msra.mxu0 0.0
      %2187 = vmatprep.subr.mxu0 0.0
      %2188 = vmatpush1.msra.mxu0 0.0
      %2189 = vmatprep.subr.mxu0 0.0
      %2190 = vmatpush1.msra.mxu0 0.0
      %2191 = vmatprep.subr.mxu0 0.0
      %2192 = vmatpush1.msra.mxu0 0.0
      %2193 = vmatprep.subr.mxu0 0.0
      %2194 = vmatpush1.msra.mxu0 0.0
      %2195 = vmatprep.subr.mxu0 0.0
      %2196 = vmatpush1.msra.mxu0 0.0
      %2197 = vmatprep.subr.mxu0 0.0
      %2198 = vmatpush1.msra.mxu0 0.0
      %2199 = vmatprep.subr.mxu0 0.0
      %2200 = vmatpush1.msra.mxu0 0.0
      %2201 = vmatprep.subr.mxu0 0.0
      %2202 = vmatpush1.msra.mxu0 0.0
      %2203 = vmatprep.mubr.f32.mxu0 0.0
      %2204 = vmatmul.mubr.f32.gmra.mrb[0].mxu0 %v1640
      %v2205 = vpop.f32.mrb[0].mxu0
      %v2206 = vadd.f32 %v1637, %v2205
      %v2207 = vpop.f32.mrb[0].mxu0
      %v2208 = vadd.f32 %v1637, %v2207
      %2209 = vdwg.mxu0
      %v2210 = vmax.f32 %v1131, %v1133
      %2211 = vst [vmem:[%s407] sm:$0xf] %v2210
      %v2212 = vmax.f32 %v1709, %v1711
      %2213 = vst [vmem:[%s417] sm:$0xff] %v2212
      %v2214 = vmax.f32 %v1202, %v1204
      %2215 = vst [vmem:[%s407 + $0x4] sm:$0xf] %v2214
      %v2216 = vmax.f32 %v1780, %v1782
      %2217 = vst [vmem:[%s417 + $0x8] sm:$0xff] %v2216
      %v2218 = vmax.f32 %v1273, %v1275
      %2219 = vst [vmem:[%s407 + $0x8] sm:$0xf] %v2218
      %v2220 = vmax.f32 %v1851, %v1853
      %2221 = vst [vmem:[%s417 + $0x10] sm:$0xff] %v2220
      %v2222 = vmax.f32 %v1344, %v1346
      %2223 = vst [vmem:[%s407 + $0xc] sm:$0xf] %v2222
      %v2224 = vmax.f32 %v1922, %v1924
      %2225 = vst [vmem:[%s417 + $0x18] sm:$0xff] %v2224
      %v2226 = vmax.f32 %v1415, %v1417
      %2227 = vst [vmem:[%s407 + $0x10] sm:$0xf] %v2226
      %v2228 = vmax.f32 %v1993, %v1995
      %2229 = vst [vmem:[%s417 + $0x20] sm:$0xff] %v2228
      %v2230 = vmax.f32 %v1486, %v1488
      %2231 = vst [vmem:[%s407 + $0x14] sm:$0xf] %v2230
      %v2232 = vmax.f32 %v2064, %v2066
      %2233 = vst [vmem:[%s417 + $0x28] sm:$0xff] %v2232
      %v2234 = vmax.f32 %v1557, %v1559
      %2235 = vst [vmem:[%s407 + $0x18] sm:$0xf] %v2234
      %v2236 = vmax.f32 %v2135, %v2137
      %2237 = vst [vmem:[%s417 + $0x30] sm:$0xff] %v2236
      %v2238 = vmax.f32 %v1628, %v1630
      %2239 = vst [vmem:[%s407 + $0x1c] sm:$0xf] %v2238
      %v2240 = vmax.f32 %v2206, %v2208
      %2241 = vst [vmem:[%s417 + $0x38] sm:$0xff] %v2240
      %s2242 = smul.u32 16, %s26
      %p2243 = scmp.lt.s32.totalorder %s25, 1
      %s2244 = scalar_select %p2243, %s25, 1
      %p2245 = scmp.lt.s32.totalorder %s2242, 15
      %s2246 = scalar_select %p2245, %s2242, 15
      %s2247 = smul.addr %s2244, 16
      %s2248 = sadd.s32 %s2246, %s2247
      %s2249 = smul.addr %s2248, 4
      %s2250 = scalar_lea.vmem %s7, %s2249
      %s2251 = smul.u32 8, %s26
      %p2252 = scmp.lt.s32.totalorder %s25, 1
      %s2253 = scalar_select %p2252, %s25, 1
      %p2254 = scmp.lt.s32.totalorder %s2251, 7
      %s2255 = scalar_select %p2254, %s2251, 7
      %s2256 = smul.addr %s2253, 8
      %s2257 = sadd.s32 %s2255, %s2256
      %s2258 = smul.addr %s2257, 4
      %s2259 = scalar_lea.vmem %s8, %s2258
      %s2260 = smul.u32 8, %s26
      %p2261 = scmp.lt.s32.totalorder %s25, 1
      %s2262 = scalar_select %p2261, %s25, 1
      %p2263 = scmp.lt.s32.totalorder %s2260, 7
      %s2264 = scalar_select %p2263, %s2260, 7
      %s2265 = smul.addr %s2262, 8
      %s2266 = sadd.s32 %s2264, %s2265
      %s2267 = smul.addr %s2266, 8
      %s2268 = scalar_lea.vmem %s9, %s2267
      // Predicated region
      $region49: #{separable_attn.12} parent=47 // pred_check
        %p2269 = pneg %p207
      $region50: #{separable_attn.12} parent=47 // pred_check_branch
        %2271 = sbr.rel (%p2269) target = $region52
      $region51: #{separable_attn.12} parent=47 // pred_region
        %s2272 = smul.u32 16, %s26
      $region52: #{separable_attn.12} parent=47 // pred_fallthru
        _
      // Predicated region
      $region53: #{separable_attn.12} parent=47 // pred_check
        %p2273 = pneg %p235
      $region54: #{separable_attn.12} parent=47 // pred_check_branch
        %2275 = sbr.rel (%p2273) target = $region56
      $region55: #{separable_attn.12} parent=47 // pred_region
        %s2276 = smul.u32 8, %s26
      $region56: #{separable_attn.12} parent=47 // pred_fallthru
        _
      // Predicated region
      $region57: #{separable_attn.12} parent=47 // pred_check
        %p2277 = pneg %p263
      $region58: #{separable_attn.12} parent=47 // pred_check_branch
        %2279 = sbr.rel (%p2277) target = $region60
      $region59: #{separable_attn.12} parent=47 // pred_region
        %s2280 = smul.u32 8, %s26
      $region60: #{separable_attn.12} parent=47 // pred_fallthru
        _
    $region48: #{separable_attn.12} parent=5 // pred_fallthru
      _
    %p2281 = scmp.le.s32.totalorder 2, %s16
    // Predicated region
    $region61: #{separable_attn.12} parent=5 // pred_check
      %p2282 = pneg %p2281
    $region62: #{separable_attn.12} parent=5 // pred_check_branch
      %2284 = sbr.rel (%p2282) target = $region64
    $region63: #{separable_attn.12} parent=5 // pred_region
      %s2285 = ssub.s32 %s16, 2
      // Predicated region
      $region65: #{separable_attn.12} parent=63 // pred_check
        %p2286 = pneg %p213
      $region66: #{separable_attn.12} parent=63 // pred_check_branch
        %2288 = sbr.rel (%p2286) target = $region68
      $region67: #{separable_attn.12} parent=63 // pred_region
        %s2289 = smul.u32 16, %s28
        %p2290 = scmp.lt.s32.totalorder %s27, 1
        %s2291 = scalar_select %p2290, %s27, 1
        %p2292 = scmp.lt.s32.totalorder %s2289, 15
        %s2293 = scalar_select %p2292, %s2289, 15
        %s2294 = smul.addr %s2291, 16
        %s2295 = sadd.s32 %s2293, %s2294
        %s2296 = smul.addr %s2295, 4
        %s2297 = scalar_lea.vmem %s7, %s2296
      $region68: #{separable_attn.12} parent=63 // pred_fallthru
        _
      // Predicated region
      $region69: #{separable_attn.12} parent=63 // pred_check
        %p2298 = pneg %p241
      $region70: #{separable_attn.12} parent=63 // pred_check_branch
        %2300 = sbr.rel (%p2298) target = $region72
      $region71: #{separable_attn.12} parent=63 // pred_region
        %s2301 = smul.u32 8, %s28
        %p2302 = scmp.lt.s32.totalorder %s27, 1
        %s2303 = scalar_select %p2302, %s27, 1
        %p2304 = scmp.lt.s32.totalorder %s2301, 7
        %s2305 = scalar_select %p2304, %s2301, 7
        %s2306 = smul.addr %s2303, 8
        %s2307 = sadd.s32 %s2305, %s2306
        %s2308 = smul.addr %s2307, 4
        %s2309 = scalar_lea.vmem %s8, %s2308
      $region72: #{separable_attn.12} parent=63 // pred_fallthru
        _
      // Predicated region
      $region73: #{separable_attn.12} parent=63 // pred_check
        %p2310 = pneg %p269
      $region74: #{separable_attn.12} parent=63 // pred_check_branch
        %2312 = sbr.rel (%p2310) target = $region76
      $region75: #{separable_attn.12} parent=63 // pred_region
        %s2313 = smul.u32 8, %s28
        %p2314 = scmp.lt.s32.totalorder %s27, 1
        %s2315 = scalar_select %p2314, %s27, 1
        %p2316 = scmp.lt.s32.totalorder %s2313, 7
        %s2317 = scalar_select %p2316, %s2313, 7
        %s2318 = smul.addr %s2315, 8
        %s2319 = sadd.s32 %s2317, %s2318
        %s2320 = smul.addr %s2319, 8
        %s2321 = scalar_lea.vmem %s9, %s2320
      $region76: #{separable_attn.12} parent=63 // pred_fallthru
        _
    $region64: #{separable_attn.12} parent=5 // pred_fallthru
      _
  $region6: #{separable_attn.12} parent=0 // loop_footer
    %s20 = sadd.s32 1, %s16
  $region7: #{separable_attn.12} parent=0 // loop_footer_branch
    %15 = sbr.rel target = $region3
  $region8: #{separable_attn.12} parent=0 // loop_exit
    _

// kernel: separable_attn.13
$region0: #{separable_attn.13}
  #allocation0 [shape = 'u32[]', space=smem, size = 0x4, offset = 0x4, fixed_abs, tag = 'smem constant byte address 0x4 - core index']
  #allocation1 [shape = 'u32[144,128]{1,0:T(1,128)}', space=vmem, size = 0x12000, scoped, tag = 'internal scratch']
  %s0 = inlined_call_operand.vmem [shape: f32[2,16,512], index: 0, kind: input, shape index: {}]
  %s1 = inlined_call_operand.vmem [shape: f32[2,512,8], index: 1, kind: input, shape index: {}]
  %s2 = inlined_call_operand.vmem [shape: f32[2,16,8], index: 2, kind: output, shape index: {}]
  %s3 = sld [smem:[#allocation0]]
  $region49: #{separable_attn.13} parent=0
    _
  %s5 = ssub.s32 1, %s3
  %s6 = scalar_select 0, %s5, %s3
  loop: start=0, step=1, limit=6
  $region2: #{separable_attn.13} parent=0 // loop_pre_header
    _
  $region3: #{separable_attn.13} parent=0 // loop_header
    %s8 = sphi 0, %s12
    %p9 = scmp.ge.s32.totalorder %s8, 6
    %s15 = sphi 0, %s34
    %s16 = sphi 0, %s30
    %s17 = sphi 0, %s26
    %s18 = sphi 0, %s15
    %s19 = sphi 0, %s16
    %s20 = sphi 0, %s17
    %s21 = sphi 0, %s18
    %s22 = sphi 0, %s19
    %s23 = sphi 0, %s20
    %s41 = sphi 0, %s43
    %s44 = sphi 0, %s41
    %s45 = sphi 0, %s44
    %s61 = sphi 0, %s45
    %s69 = sphi 0, %s71
    %s72 = sphi 0, %s69
    %s73 = sphi 0, %s72
    %s89 = sphi 0, %s73
    %s97 = sphi 0, %s99
    %s100 = sphi 0, %s97
    %s101 = sphi 0, %s100
    %s117 = sphi 0, %s101
  $region4: #{separable_attn.13} parent=0 // loop_header_branch
    %11 = sbr.rel (%p9) target = $region8
  $region5: #{separable_attn.13} parent=0 // loop_body
    %s13 = ssub.s32 %s8, 1
    %s14 = ssub.s32 %s8, 2
    %s24 = sadd.s32 1, %s17
    %p25 = scmp.ge.s32.totalorder %s24, 1
    %s26 = scalar_select %p25, 0, %s24
    %s27 = sadd.s32 1, %s16
    %s28 = scalar_select %p25, %s27, %s16
    %p29 = scmp.ge.s32.totalorder %s28, 2
    %s30 = scalar_select %p29, 0, %s28
    %s31 = sadd.s32 1, %s15
    %s32 = scalar_select %p29, %s31, %s15
    %p33 = scmp.ge.s32.totalorder %s32, 2
    %s34 = scalar_select %p33, 0, %s32
    %s35 = ssub.s32 %s15, %s34
    %s36 = ssub.s32 %s16, %s30
    %s37 = sor.u32 %s35, %s36
    %s38 = ssub.s32 %s17, %s26
    %s39 = sor.u32 %s37, %s38
    %p40 = scmp.eq.s32.totalorder %s39, 0
    %s42 = sadd.s32 %s41, 1
    %s43 = scalar_select %p40, %s41, %s42
    %p46 = pneg %p40
    %p47 = scmp.eq.s32.totalorder %s8, 3
    %p48 = por %p46, %p47
    %p49 = scmp.ne.s32.totalorder %s41, %s44
    %p50 = scmp.eq.s32.totalorder %s8, 0
    %p51 = por %p49, %p50
    %p52 = scmp.ne.s32.totalorder %s41, %s44
    %p53 = scmp.eq.s32.totalorder %s13, 3
    %p54 = por %p52, %p53
    %p55 = scmp.ne.s32.totalorder %s44, %s45
    %p56 = scmp.eq.s32.totalorder %s13, 0
    %p57 = por %p55, %p56
    %p58 = scmp.ne.s32.totalorder %s44, %s45
    %p59 = scmp.eq.s32.totalorder %s14, 3
    %p60 = por %p58, %p59
    %p62 = scmp.ne.s32.totalorder %s45, %s61
    %p63 = scmp.eq.s32.totalorder %s14, 0
    %p64 = por %p62, %p63
    %s65 = ssub.s32 %s15, %s34
    %s66 = ssub.s32 %s17, %s26
    %s67 = sor.u32 %s65, %s66
    %p68 = scmp.eq.s32.totalorder %s67, 0
    %s70 = sadd.s32 %s69, 1
    %s71 = scalar_select %p68, %s69, %s70
    %p74 = pneg %p68
    %p75 = scmp.eq.s32.totalorder %s8, 3
    %p76 = por %p74, %p75
    %p77 = scmp.ne.s32.totalorder %s69, %s72
    %p78 = scmp.eq.s32.totalorder %s8, 0
    %p79 = por %p77, %p78
    %p80 = scmp.ne.s32.totalorder %s69, %s72
    %p81 = scmp.eq.s32.totalorder %s13, 3
    %p82 = por %p80, %p81
    %p83 = scmp.ne.s32.totalorder %s72, %s73
    %p84 = scmp.eq.s32.totalorder %s13, 0
    %p85 = por %p83, %p84
    %p86 = scmp.ne.s32.totalorder %s72, %s73
    %p87 = scmp.eq.s32.totalorder %s14, 3
    %p88 = por %p86, %p87
    %p90 = scmp.ne.s32.totalorder %s73, %s89
    %p91 = scmp.eq.s32.totalorder %s14, 0
    %p92 = por %p90, %p91
    %s93 = ssub.s32 %s15, %s34
    %s94 = ssub.s32 %s16, %s30
    %s95 = sor.u32 %s93, %s94
    %p96 = scmp.eq.s32.totalorder %s95, 0
    %s98 = sadd.s32 %s97, 1
    %s99 = scalar_select %p96, %s97, %s98
    %p102 = pneg %p96
    %p103 = scmp.eq.s32.totalorder %s8, 3
    %p104 = por %p102, %p103
    %p105 = scmp.ne.s32.totalorder %s97, %s100
    %p106 = scmp.eq.s32.totalorder %s8, 0
    %p107 = por %p105, %p106
    %p108 = scmp.ne.s32.totalorder %s97, %s100
    %p109 = scmp.eq.s32.totalorder %s13, 3
    %p110 = por %p108, %p109
    %p111 = scmp.ne.s32.totalorder %s100, %s101
    %p112 = scmp.eq.s32.totalorder %s13, 0
    %p113 = por %p111, %p112
    %p114 = scmp.ne.s32.totalorder %s100, %s101
    %p115 = scmp.eq.s32.totalorder %s14, 3
    %p116 = por %p114, %p115
    %p118 = scmp.ne.s32.totalorder %s101, %s117
    %p119 = scmp.eq.s32.totalorder %s14, 0
    %p120 = por %p118, %p119
    %p121 = scmp.le.s32.totalorder 1, %s8
    %p122 = scmp.lt.s32.totalorder %s8, 5
    %p123 = pnand %p121, %p122
    %p124 = pneg %p123
    // Predicated region
    $region9: #{separable_attn.13} parent=5 // pred_check
      _
    $region10: #{separable_attn.13} parent=5 // pred_check_branch
      %126 = sbr.rel (%p123) target = $region12
    $region11: #{separable_attn.13} parent=5 // pred_region
      %s127 = ssub.s32 %s8, 1
    $region12: #{separable_attn.13} parent=5 // pred_fallthru
      _
    %p128 = scmp.lt.s32.totalorder %s8, 4
    // Predicated region
    $region13: #{separable_attn.13} parent=5 // pred_check
      %p129 = pneg %p128
    $region14: #{separable_attn.13} parent=5 // pred_check_branch
      %131 = sbr.rel (%p129) target = $region16
    $region15: #{separable_attn.13} parent=5 // pred_region
      // Predicated region
      $region17: #{separable_attn.13} parent=15 // pred_check
        %p132 = pneg %p51
      $region18: #{separable_attn.13} parent=15 // pred_check_branch
        %134 = sbr.rel (%p132) target = $region20
      $region19: #{separable_attn.13} parent=15 // pred_region
        %s135 = smul.u32 4, %s17
        %p136 = scmp.lt.s32.totalorder %s15, 1
        %s137 = scalar_select %p136, %s15, 1
        %p138 = scmp.lt.s32.totalorder %s16, 1
        %s139 = scalar_select %p138, %s16, 1
        %p140 = scmp.lt.s32.totalorder %s135, 3
        %s141 = scalar_select %p140, %s135, 3
        %s142 = smul.addr %s139, 4
        %s143 = sadd.s32 %s141, %s142
        %s144 = smul.addr %s137, 8
        %s145 = sadd.s32 %s143, %s144
        %s146 = smul.addr %s145, 8
        %s147 = scalar_lea.vmem %s0, %s146
        %s148 = smul.u32 4, %s17
      $region20: #{separable_attn.13} parent=15 // pred_fallthru
        _
      // Predicated region
      $region21: #{separable_attn.13} parent=15 // pred_check
        %p149 = pneg %p79
      $region22: #{separable_attn.13} parent=15 // pred_check_branch
        %151 = sbr.rel (%p149) target = $region24
      $region23: #{separable_attn.13} parent=15 // pred_region
        %s152 = smul.u32 64, %s17
        %p153 = scmp.lt.s32.totalorder %s15, 1
        %s154 = scalar_select %p153, %s15, 1
        %p155 = scmp.lt.s32.totalorder %s152, 63
        %s156 = scalar_select %p155, %s152, 63
        %s157 = smul.addr %s154, 64
        %s158 = sadd.s32 %s156, %s157
        %s159 = smul.addr %s158, 8
        %s160 = scalar_lea.vmem %s1, %s159
        %s161 = smul.u32 64, %s17
      $region24: #{separable_attn.13} parent=15 // pred_fallthru
        _
    $region16: #{separable_attn.13} parent=5 // pred_fallthru
      _
    %p162 = scmp.le.s32.totalorder 1, %s8
    %p163 = scmp.lt.s32.totalorder %s8, 5
    %p164 = pnand %p162, %p163
    %p165 = pneg %p164
    // Predicated region
    $region25: #{separable_attn.13} parent=5 // pred_check
      _
    $region26: #{separable_attn.13} parent=5 // pred_check_branch
      %167 = sbr.rel (%p164) target = $region28
    $region27: #{separable_attn.13} parent=5 // pred_region
      %s168 = ssub.s32 %s8, 1
      %s169 = smul.u32 4, %s20
      %p170 = scmp.lt.s32.totalorder %s18, 1
      %s171 = scalar_select %p170, %s18, 1
      %p172 = scmp.lt.s32.totalorder %s19, 1
      %s173 = scalar_select %p172, %s19, 1
      %p174 = scmp.lt.s32.totalorder %s169, 3
      %s175 = scalar_select %p174, %s169, 3
      %s176 = smul.addr %s173, 4
      %s177 = sadd.s32 %s175, %s176
      %s178 = smul.addr %s171, 8
      %s179 = sadd.s32 %s177, %s178
      %s180 = smul.addr %s179, 8
      %s181 = scalar_lea.vmem %s0, %s180
      %p182 = pneg %p57
      %p183 = pneg %p54
      %s184 = smul.u32 64, %s20
      %p185 = scmp.lt.s32.totalorder %s18, 1
      %s186 = scalar_select %p185, %s18, 1
      %p187 = scmp.lt.s32.totalorder %s184, 63
      %s188 = scalar_select %p187, %s184, 63
      %s189 = smul.addr %s186, 64
      %s190 = sadd.s32 %s188, %s189
      %s191 = smul.addr %s190, 8
      %s192 = scalar_lea.vmem %s1, %s191
      %p193 = pneg %p85
      %p194 = pneg %p82
      %p195 = pneg %p113
      %p196 = pneg %p110
      %p197 = scmp.lt.s32.totalorder %s18, 1
      %s198 = scalar_select %p197, %s18, 1
      %p199 = scmp.lt.s32.totalorder %s19, 1
      %s200 = scalar_select %p199, %s19, 1
      %s201 = smul.addr %s198, 2
      %s202 = sadd.s32 %s200, %s201
      %s203 = smul.addr %s202, 8
      %s204 = scalar_lea.vmem %s2, %s203
      %s205 = smul.u32 4, %s20
      %p206 = scmp.lt.s32.totalorder %s18, 1
      %s207 = scalar_select %p206, %s18, 1
      %p208 = scmp.lt.s32.totalorder %s19, 1
      %s209 = scalar_select %p208, %s19, 1
      %p210 = scmp.lt.s32.totalorder %s205, 3
      %s211 = scalar_select %p210, %s205, 3
      %s212 = smul.addr %s209, 4
      %s213 = sadd.s32 %s211, %s212
      %s214 = smul.addr %s207, 8
      %s215 = sadd.s32 %s213, %s214
      %s216 = smul.addr %s215, 8
      %s217 = scalar_lea.vmem %s0, %s216
      %s218 = smul.u32 4, %s20
      %s219 = smul.u32 64, %s20
      %p220 = scmp.lt.s32.totalorder %s18, 1
      %s221 = scalar_select %p220, %s18, 1
      %p222 = scmp.lt.s32.totalorder %s219, 63
      %s223 = scalar_select %p222, %s219, 63
      %s224 = smul.addr %s221, 64
      %s225 = sadd.s32 %s223, %s224
      %s226 = smul.addr %s225, 8
      %s227 = scalar_lea.vmem %s1, %s226
      %s228 = smul.u32 64, %s20
      %p229 = scmp.lt.s32.totalorder %s18, 1
      %s230 = scalar_select %p229, %s18, 1
      %p231 = scmp.lt.s32.totalorder %s19, 1
      %s232 = scalar_select %p231, %s19, 1
      %s233 = smul.addr %s230, 2
      %s234 = sadd.s32 %s232, %s233
      %s235 = smul.addr %s234, 8
      %s236 = scalar_lea.vmem %s2, %s235
      %p237 = scmp.eq.s32.totalorder %s20, 0
      // Predicated region
      $region29: #{separable_attn.13} parent=27 // pred_check
        %p238 = pneg %p237
      $region30: #{separable_attn.13} parent=27 // pred_check_branch
        %240 = sbr.rel (%p238) target = $region32
      $region31: #{separable_attn.13} parent=27 // pred_region
        %vm241 = vcmask 64512
        %242 = vst.msk [vmem:[%s236] sm:$0xff] %vm241, 0.0
      $region32: #{separable_attn.13} parent=27 // pred_fallthru
        _
      %v243 = vld [vmem:[%s236] sm:$0xff]
      %v244 = vld [vmem:[%s217] sm:$0xff]
      %v245 = vld [vmem:[%s217 + $0x8] sm:$0xff]
      %v246 = vld [vmem:[%s217 + $0x10] sm:$0xff]
      %v247 = vld [vmem:[%s217 + $0x18] sm:$0xff]
      %v248 = vld [vmem:[%s227] sm:$0xff]
      %v249 = vld [vmem:[%s227 + $0x8] sm:$0xff]
      %v250 = vld [vmem:[%s227 + $0x10] sm:$0xff]
      %v251 = vld [vmem:[%s227 + $0x18] sm:$0xff]
      %v252 = vld [vmem:[%s227 + $0x20] sm:$0xff]
      %v253 = vld [vmem:[%s227 + $0x28] sm:$0xff]
      %v254 = vld [vmem:[%s227 + $0x30] sm:$0xff]
      %v255 = vld [vmem:[%s227 + $0x38] sm:$0xff]
      %v256 = vld [vmem:[%s227 + $0x40] sm:$0xff]
      %v257 = vld [vmem:[%s227 + $0x48] sm:$0xff]
      %v258 = vld [vmem:[%s227 + $0x50] sm:$0xff]
      %v259 = vld [vmem:[%s227 + $0x58] sm:$0xff]
      %v260 = vld [vmem:[%s227 + $0x60] sm:$0xff]
      %v261 = vld [vmem:[%s227 + $0x68] sm:$0xff]
      %v262 = vld [vmem:[%s227 + $0x70] sm:$0xff]
      %v263 = vld [vmem:[%s227 + $0x78] sm:$0xff]
      %v264 = vld [vmem:[%s227 + $0x80] sm:$0xff]
      %v265 = vld [vmem:[%s227 + $0x88] sm:$0xff]
      %v266 = vld [vmem:[%s227 + $0x90] sm:$0xff]
      %v267 = vld [vmem:[%s227 + $0x98] sm:$0xff]
      %v268 = vld [vmem:[%s227 + $0xa0] sm:$0xff]
      %v269 = vld [vmem:[%s227 + $0xa8] sm:$0xff]
      %v270 = vld [vmem:[%s227 + $0xb0] sm:$0xff]
      %v271 = vld [vmem:[%s227 + $0xb8] sm:$0xff]
      %v272 = vld [vmem:[%s227 + $0xc0] sm:$0xff]
      %v273 = vld [vmem:[%s227 + $0xc8] sm:$0xff]
      %v274 = vld [vmem:[%s227 + $0xd0] sm:$0xff]
      %v275 = vld [vmem:[%s227 + $0xd8] sm:$0xff]
      %v276 = vld [vmem:[%s227 + $0xe0] sm:$0xff]
      %v277 = vld [vmem:[%s227 + $0xe8] sm:$0xff]
      %v278 = vld [vmem:[%s227 + $0xf0] sm:$0xff]
      %v279 = vld [vmem:[%s227 + $0xf8] sm:$0xff]
      %v280 = vld [vmem:[%s227 + $0x100] sm:$0xff]
      %v281 = vld [vmem:[%s227 + $0x108] sm:$0xff]
      %v282 = vld [vmem:[%s227 + $0x110] sm:$0xff]
      %v283 = vld [vmem:[%s227 + $0x118] sm:$0xff]
      %v284 = vld [vmem:[%s227 + $0x120] sm:$0xff]
      %v285 = vld [vmem:[%s227 + $0x128] sm:$0xff]
      %v286 = vld [vmem:[%s227 + $0x130] sm:$0xff]
      %v287 = vld [vmem:[%s227 + $0x138] sm:$0xff]
      %v288 = vld [vmem:[%s227 + $0x140] sm:$0xff]
      %v289 = vld [vmem:[%s227 + $0x148] sm:$0xff]
      %v290 = vld [vmem:[%s227 + $0x150] sm:$0xff]
      %v291 = vld [vmem:[%s227 + $0x158] sm:$0xff]
      %v292 = vld [vmem:[%s227 + $0x160] sm:$0xff]
      %v293 = vld [vmem:[%s227 + $0x168] sm:$0xff]
      %v294 = vld [vmem:[%s227 + $0x170] sm:$0xff]
      %v295 = vld [vmem:[%s227 + $0x178] sm:$0xff]
      %v296 = vld [vmem:[%s227 + $0x180] sm:$0xff]
      %v297 = vld [vmem:[%s227 + $0x188] sm:$0xff]
      %v298 = vld [vmem:[%s227 + $0x190] sm:$0xff]
      %v299 = vld [vmem:[%s227 + $0x198] sm:$0xff]
      %v300 = vld [vmem:[%s227 + $0x1a0] sm:$0xff]
      %v301 = vld [vmem:[%s227 + $0x1a8] sm:$0xff]
      %v302 = vld [vmem:[%s227 + $0x1b0] sm:$0xff]
      %v303 = vld [vmem:[%s227 + $0x1b8] sm:$0xff]
      %v304 = vld [vmem:[%s227 + $0x1c0] sm:$0xff]
      %v305 = vld [vmem:[%s227 + $0x1c8] sm:$0xff]
      %v306 = vld [vmem:[%s227 + $0x1d0] sm:$0xff]
      %v307 = vld [vmem:[%s227 + $0x1d8] sm:$0xff]
      %v308 = vld [vmem:[%s227 + $0x1e0] sm:$0xff]
      %v309 = vld [vmem:[%s227 + $0x1e8] sm:$0xff]
      %v310 = vld [vmem:[%s227 + $0x1f0] sm:$0xff]
      %v311 = vld [vmem:[%s227 + $0x1f8] sm:$0xff]
      %312 = vmatprep.subr.mxu0 0.0
      %313 = vmatpush1.msra.mxu0 %v248
      %314 = vmatprep.subr.mxu0 0.0
      %315 = vmatpush1.msra.mxu0 %v249
      %316 = vmatprep.subr.mxu0 0.0
      %317 = vmatpush1.msra.mxu0 %v250
      %318 = vmatprep.subr.mxu0 0.0
      %319 = vmatpush1.msra.mxu0 %v251
      %320 = vmatprep.subr.mxu0 0.0
      %321 = vmatpush1.msra.mxu0 %v252
      %322 = vmatprep.subr.mxu0 0.0
      %323 = vmatpush1.msra.mxu0 %v253
      %324 = vmatprep.subr.mxu0 0.0
      %325 = vmatpush1.msra.mxu0 %v254
      %326 = vmatprep.subr.mxu0 0.0
      %327 = vmatpush1.msra.mxu0 %v255
      %328 = vmatprep.subr.mxu0 0.0
      %329 = vmatpush1.msra.mxu0 %v256
      %330 = vmatprep.subr.mxu0 0.0
      %331 = vmatpush1.msra.mxu0 %v257
      %332 = vmatprep.subr.mxu0 0.0
      %333 = vmatpush1.msra.mxu0 %v258
      %334 = vmatprep.subr.mxu0 0.0
      %335 = vmatpush1.msra.mxu0 %v259
      %336 = vmatprep.subr.mxu0 0.0
      %337 = vmatpush1.msra.mxu0 %v260
      %338 = vmatprep.subr.mxu0 0.0
      %339 = vmatpush1.msra.mxu0 %v261
      %340 = vmatprep.subr.mxu0 0.0
      %341 = vmatpush1.msra.mxu0 %v262
      %342 = vmatprep.subr.mxu0 0.0
      %343 = vmatpush1.msra.mxu0 %v263
      %344 = vmatprep.subr.mxu0 0.0
      %345 = vmatpush1.msra.mxu0 %v264
      %346 = vmatprep.subr.mxu0 0.0
      %347 = vmatpush1.msra.mxu0 %v265
      %348 = vmatprep.subr.mxu0 0.0
      %349 = vmatpush1.msra.mxu0 %v266
      %350 = vmatprep.subr.mxu0 0.0
      %351 = vmatpush1.msra.mxu0 %v267
      %352 = vmatprep.subr.mxu0 0.0
      %353 = vmatpush1.msra.mxu0 %v268
      %354 = vmatprep.subr.mxu0 0.0
      %355 = vmatpush1.msra.mxu0 %v269
      %356 = vmatprep.subr.mxu0 0.0
      %357 = vmatpush1.msra.mxu0 %v270
      %358 = vmatprep.subr.mxu0 0.0
      %359 = vmatpush1.msra.mxu0 %v271
      %360 = vmatprep.subr.mxu0 0.0
      %361 = vmatpush1.msra.mxu0 %v272
      %362 = vmatprep.subr.mxu0 0.0
      %363 = vmatpush1.msra.mxu0 %v273
      %364 = vmatprep.subr.mxu0 0.0
      %365 = vmatpush1.msra.mxu0 %v274
      %366 = vmatprep.subr.mxu0 0.0
      %367 = vmatpush1.msra.mxu0 %v275
      %368 = vmatprep.subr.mxu0 0.0
      %369 = vmatpush1.msra.mxu0 %v276
      %370 = vmatprep.subr.mxu0 0.0
      %371 = vmatpush1.msra.mxu0 %v277
      %372 = vmatprep.subr.mxu0 0.0
      %373 = vmatpush1.msra.mxu0 %v278
      %374 = vmatprep.subr.mxu0 0.0
      %375 = vmatpush1.msra.mxu0 %v279
      %376 = vmatprep.mubr.f32.mxu0 %v245
      %377 = vmatmul.mubr.f32.gmra.mrb[0].mxu0 %v244
      %v378 = vpop.f32.mrb[0].mxu0
      %v379 = vadd.f32 0.0, %v378
      %v380 = vpop.f32.mrb[0].mxu0
      %381 = vdwg.mxu0
      %382 = vmatprep.subr.mxu0 0.0
      %383 = vmatpush1.msra.mxu0 %v280
      %384 = vmatprep.subr.mxu0 0.0
      %385 = vmatpush1.msra.mxu0 %v281
      %386 = vmatprep.subr.mxu0 0.0
      %387 = vmatpush1.msra.mxu0 %v282
      %388 = vmatprep.subr.mxu0 0.0
      %389 = vmatpush1.msra.mxu0 %v283
      %390 = vmatprep.subr.mxu0 0.0
      %391 = vmatpush1.msra.mxu0 %v284
      %392 = vmatprep.subr.mxu0 0.0
      %393 = vmatpush1.msra.mxu0 %v285
      %394 = vmatprep.subr.mxu0 0.0
      %395 = vmatpush1.msra.mxu0 %v286
      %396 = vmatprep.subr.mxu0 0.0
      %397 = vmatpush1.msra.mxu0 %v287
      %398 = vmatprep.subr.mxu0 0.0
      %399 = vmatpush1.msra.mxu0 %v288
      %400 = vmatprep.subr.mxu0 0.0
      %401 = vmatpush1.msra.mxu0 %v289
      %402 = vmatprep.subr.mxu0 0.0
      %403 = vmatpush1.msra.mxu0 %v290
      %404 = vmatprep.subr.mxu0 0.0
      %405 = vmatpush1.msra.mxu0 %v291
      %406 = vmatprep.subr.mxu0 0.0
      %407 = vmatpush1.msra.mxu0 %v292
      %408 = vmatprep.subr.mxu0 0.0
      %409 = vmatpush1.msra.mxu0 %v293
      %410 = vmatprep.subr.mxu0 0.0
      %411 = vmatpush1.msra.mxu0 %v294
      %412 = vmatprep.subr.mxu0 0.0
      %413 = vmatpush1.msra.mxu0 %v295
      %414 = vmatprep.subr.mxu0 0.0
      %415 = vmatpush1.msra.mxu0 %v296
      %416 = vmatprep.subr.mxu0 0.0
      %417 = vmatpush1.msra.mxu0 %v297
      %418 = vmatprep.subr.mxu0 0.0
      %419 = vmatpush1.msra.mxu0 %v298
      %420 = vmatprep.subr.mxu0 0.0
      %421 = vmatpush1.msra.mxu0 %v299
      %422 = vmatprep.subr.mxu0 0.0
      %423 = vmatpush1.msra.mxu0 %v300
      %424 = vmatprep.subr.mxu0 0.0
      %425 = vmatpush1.msra.mxu0 %v301
      %426 = vmatprep.subr.mxu0 0.0
      %427 = vmatpush1.msra.mxu0 %v302
      %428 = vmatprep.subr.mxu0 0.0
      %429 = vmatpush1.msra.mxu0 %v303
      %430 = vmatprep.subr.mxu0 0.0
      %431 = vmatpush1.msra.mxu0 %v304
      %432 = vmatprep.subr.mxu0 0.0
      %433 = vmatpush1.msra.mxu0 %v305
      %434 = vmatprep.subr.mxu0 0.0
      %435 = vmatpush1.msra.mxu0 %v306
      %436 = vmatprep.subr.mxu0 0.0
      %437 = vmatpush1.msra.mxu0 %v307
      %438 = vmatprep.subr.mxu0 0.0
      %439 = vmatpush1.msra.mxu0 %v308
      %440 = vmatprep.subr.mxu0 0.0
      %441 = vmatpush1.msra.mxu0 %v309
      %442 = vmatprep.subr.mxu0 0.0
      %443 = vmatpush1.msra.mxu0 %v310
      %444 = vmatprep.subr.mxu0 0.0
      %445 = vmatpush1.msra.mxu0 %v311
      %446 = vmatprep.mubr.f32.mxu0 %v247
      %447 = vmatmul.mubr.f32.gmra.mrb[0].mxu0 %v246
      %v448 = vpop.f32.mrb[0].mxu0
      %v449 = vadd.f32 %v379, %v448
      %v450 = vpop.f32.mrb[0].mxu0
      %451 = vdwg.mxu0
      %v452 = vadd.f32 %v243, %v449
      %vm453 = vcmask 64512
      %454 = vst.msk [vmem:[%s236] sm:$0xff] %vm453, %v452
      // Predicated region
      $region33: #{separable_attn.13} parent=27 // pred_check
        %p455 = pneg %p237
      $region34: #{separable_attn.13} parent=27 // pred_check_branch
        %457 = sbr.rel (%p455) target = $region36
      $region35: #{separable_attn.13} parent=27 // pred_region
        %v458 = vld [vmem:[%s236] sm:$0xff]
        %v459 = vsel %vm453, %v458, -inf
        %460 = vmax.xlane.f32.xlu0 %v459
        %v461 = vpop.xlane.xlu0 %460
        %v462 = vsub.f32 %v458, %v461
        %v463 = vmul.f32 %v462, 1.442695
        %v464 = vpow.pop %v463
        %v465 = vsel %vm453, %v464, 0.0
        %466 = vadd.xlane.f32.xlu0 %v465
        %v467 = vpop.xlane.xlu0 %466
        %v468 = vrcp.pop %v467
        %v469 = vmul.f32 %v464, %v468
        %470 = vst.msk [vmem:[%s236] sm:$0xff] %vm453, %v469
      $region36: #{separable_attn.13} parent=27 // pred_fallthru
        _
      %p471 = scmp.lt.s32.totalorder %s18, 1
      %s472 = scalar_select %p471, %s18, 1
      %p473 = scmp.lt.s32.totalorder %s19, 1
      %s474 = scalar_select %p473, %s19, 1
      %s475 = smul.addr %s472, 2
      %s476 = sadd.s32 %s474, %s475
      %s477 = smul.addr %s476, 8
      %s478 = scalar_lea.vmem %s2, %s477
      // Predicated region
      $region37: #{separable_attn.13} parent=27 // pred_check
        %p479 = pneg %p110
      $region38: #{separable_attn.13} parent=27 // pred_check_branch
        %481 = sbr.rel (%p479) target = $region40
      $region39: #{separable_attn.13} parent=27 // pred_region
        _
      $region40: #{separable_attn.13} parent=27 // pred_fallthru
        _
    $region28: #{separable_attn.13} parent=5 // pred_fallthru
      _
    %p482 = scmp.le.s32.totalorder 2, %s8
    // Predicated region
    $region41: #{separable_attn.13} parent=5 // pred_check
      %p483 = pneg %p482
    $region42: #{separable_attn.13} parent=5 // pred_check_branch
      %485 = sbr.rel (%p483) target = $region44
    $region43: #{separable_attn.13} parent=5 // pred_region
      %s486 = ssub.s32 %s8, 2
      // Predicated region
      $region45: #{separable_attn.13} parent=43 // pred_check
        %p487 = pneg %p116
      $region46: #{separable_attn.13} parent=43 // pred_check_branch
        %489 = sbr.rel (%p487) target = $region48
      $region47: #{separable_attn.13} parent=43 // pred_region
        %p490 = scmp.lt.s32.totalorder %s21, 1
        %s491 = scalar_select %p490, %s21, 1
        %p492 = scmp.lt.s32.totalorder %s22, 1
        %s493 = scalar_select %p492, %s22, 1
        %s494 = smul.addr %s491, 2
        %s495 = sadd.s32 %s493, %s494
        %s496 = smul.addr %s495, 8
        %s497 = scalar_lea.vmem %s2, %s496
      $region48: #{separable_attn.13} parent=43 // pred_fallthru
        _
    $region44: #{separable_attn.13} parent=5 // pred_fallthru
      _
  $region6: #{separable_attn.13} parent=0 // loop_footer
    %s12 = sadd.s32 1, %s8
  $region7: #{separable_attn.13} parent=0 // loop_footer_branch
    %7 = sbr.rel target = $region3
  $region8: #{separable_attn.13} parent=0 // loop_exit
    _

// kernel: separable_attn.14
$region0: #{separable_attn.14}
  #allocation0 [shape = 'u32[]', space=smem, size = 0x4, offset = 0x4, fixed_abs, tag = 'smem constant byte address 0x4 - core index']
  #allocation1 [shape = 'u32[144,128]{1,0:T(1,128)}', space=vmem, size = 0x12000, scoped, tag = 'internal scratch']
  #allocation2 [shape = 'f32[1,1]{1,0:T(1,128)S(6)}', space=smem, size = 0x200, scoped, tag = 'scoped memory for separable_attn.14']
  %s0 = inlined_call_operand.<no memory space> [shape: f32[1,1], index: 0, kind: input, shape index: {}]
  %s1 = inlined_call_operand.vmem [shape: f32[2,16,8], index: 1, kind: input, shape index: {}]
  %s2 = inlined_call_operand.vmem [shape: f32[2,1024,8], index: 2, kind: input, shape index: {}]
  %s3 = inlined_call_operand.vmem [shape: f32[2,8,16,128], index: 3, kind: output, shape index: {}]
  %s4 = sld [smem:[#allocation0]]
  $region45: #{separable_attn.14} parent=0
    _
  %s6 = ssub.s32 1, %s4
  %s7 = scalar_select 0, %s6, %s4
  %8 = sst [smem:[#allocation2]] %s0
  loop: start=0, step=1, limit=4
  $region2: #{separable_attn.14} parent=0 // loop_pre_header
    _
  $region3: #{separable_attn.14} parent=0 // loop_header
    %s10 = sphi 0, %s14
    %p11 = scmp.ge.s32.totalorder %s10, 4
    %s17 = sphi 0, %s29
    %s18 = sphi 0, %s25
    %s19 = sphi 0, %s17
    %s20 = sphi 0, %s18
    %s21 = sphi 0, %s19
    %s22 = sphi 0, %s20
    %s30 = sphi 0, %s30
    %s32 = sphi 0, %s30
    %s33 = sphi 0, %s32
    %s47 = sphi 0, %s33
    %s53 = sphi 0, %s55
    %s56 = sphi 0, %s53
    %s57 = sphi 0, %s56
    %s73 = sphi 0, %s57
    %s81 = sphi 0, %s83
    %s84 = sphi 0, %s81
    %s85 = sphi 0, %s84
    %s101 = sphi 0, %s85
    %s109 = sphi 0, %s111
    %s112 = sphi 0, %s109
    %s113 = sphi 0, %s112
    %s129 = sphi 0, %s113
  $region4: #{separable_attn.14} parent=0 // loop_header_branch
    %13 = sbr.rel (%p11) target = $region8
  $region5: #{separable_attn.14} parent=0 // loop_body
    %s15 = ssub.s32 %s10, 1
    %s16 = ssub.s32 %s10, 2
    %s23 = sadd.s32 1, %s18
    %p24 = scmp.ge.s32.totalorder %s23, 1
    %s25 = scalar_select %p24, 0, %s23
    %s26 = sadd.s32 1, %s17
    %s27 = scalar_select %p24, %s26, %s17
    %p28 = scmp.ge.s32.totalorder %s27, 2
    %s29 = scalar_select %p28, 0, %s27
    %s31 = sadd.s32 %s30, 1
    %p34 = scmp.eq.s32.totalorder %s10, 1
    %p35 = scmp.ne.s32.totalorder %s30, %s32
    %p36 = scmp.eq.s32.totalorder %s10, 0
    %p37 = por %p35, %p36
    %p38 = scmp.ne.s32.totalorder %s30, %s32
    %p39 = scmp.eq.s32.totalorder %s15, 1
    %p40 = por %p38, %p39
    %p41 = scmp.ne.s32.totalorder %s32, %s33
    %p42 = scmp.eq.s32.totalorder %s15, 0
    %p43 = por %p41, %p42
    %p44 = scmp.ne.s32.totalorder %s32, %s33
    %p45 = scmp.eq.s32.totalorder %s16, 1
    %p46 = por %p44, %p45
    %p48 = scmp.ne.s32.totalorder %s33, %s47
    %p49 = scmp.eq.s32.totalorder %s16, 0
    %p50 = por %p48, %p49
    %s51 = ssub.s32 %s17, %s29
    %p52 = scmp.eq.s32.totalorder %s51, 0
    %s54 = sadd.s32 %s53, 1
    %s55 = scalar_select %p52, %s53, %s54
    %p58 = pneg %p52
    %p59 = scmp.eq.s32.totalorder %s10, 1
    %p60 = por %p58, %p59
    %p61 = scmp.ne.s32.totalorder %s53, %s56
    %p62 = scmp.eq.s32.totalorder %s10, 0
    %p63 = por %p61, %p62
    %p64 = scmp.ne.s32.totalorder %s53, %s56
    %p65 = scmp.eq.s32.totalorder %s15, 1
    %p66 = por %p64, %p65
    %p67 = scmp.ne.s32.totalorder %s56, %s57
    %p68 = scmp.eq.s32.totalorder %s15, 0
    %p69 = por %p67, %p68
    %p70 = scmp.ne.s32.totalorder %s56, %s57
    %p71 = scmp.eq.s32.totalorder %s16, 1
    %p72 = por %p70, %p71
    %p74 = scmp.ne.s32.totalorder %s57, %s73
    %p75 = scmp.eq.s32.totalorder %s16, 0
    %p76 = por %p74, %p75
    %s77 = ssub.s32 %s17, %s29
    %s78 = ssub.s32 %s18, %s25
    %s79 = sor.u32 %s77, %s78
    %p80 = scmp.eq.s32.totalorder %s79, 0
    %s82 = sadd.s32 %s81, 1
    %s83 = scalar_select %p80, %s81, %s82
    %p86 = pneg %p80
    %p87 = scmp.eq.s32.totalorder %s10, 1
    %p88 = por %p86, %p87
    %p89 = scmp.ne.s32.totalorder %s81, %s84
    %p90 = scmp.eq.s32.totalorder %s10, 0
    %p91 = por %p89, %p90
    %p92 = scmp.ne.s32.totalorder %s81, %s84
    %p93 = scmp.eq.s32.totalorder %s15, 1
    %p94 = por %p92, %p93
    %p95 = scmp.ne.s32.totalorder %s84, %s85
    %p96 = scmp.eq.s32.totalorder %s15, 0
    %p97 = por %p95, %p96
    %p98 = scmp.ne.s32.totalorder %s84, %s85
    %p99 = scmp.eq.s32.totalorder %s16, 1
    %p100 = por %p98, %p99
    %p102 = scmp.ne.s32.totalorder %s85, %s101
    %p103 = scmp.eq.s32.totalorder %s16, 0
    %p104 = por %p102, %p103
    %s105 = ssub.s32 %s17, %s29
    %s106 = ssub.s32 %s18, %s25
    %s107 = sor.u32 %s105, %s106
    %p108 = scmp.eq.s32.totalorder %s107, 0
    %s110 = sadd.s32 %s109, 1
    %s111 = scalar_select %p108, %s109, %s110
    %p114 = pneg %p108
    %p115 = scmp.eq.s32.totalorder %s10, 1
    %p116 = por %p114, %p115
    %p117 = scmp.ne.s32.totalorder %s109, %s112
    %p118 = scmp.eq.s32.totalorder %s10, 0
    %p119 = por %p117, %p118
    %p120 = scmp.ne.s32.totalorder %s109, %s112
    %p121 = scmp.eq.s32.totalorder %s15, 1
    %p122 = por %p120, %p121
    %p123 = scmp.ne.s32.totalorder %s112, %s113
    %p124 = scmp.eq.s32.totalorder %s15, 0
    %p125 = por %p123, %p124
    %p126 = scmp.ne.s32.totalorder %s112, %s113
    %p127 = scmp.eq.s32.totalorder %s16, 1
    %p128 = por %p126, %p127
    %p130 = scmp.ne.s32.totalorder %s113, %s129
    %p131 = scmp.eq.s32.totalorder %s16, 0
    %p132 = por %p130, %p131
    %p133 = scmp.le.s32.totalorder 1, %s10
    %p134 = scmp.lt.s32.totalorder %s10, 3
    %p135 = pnand %p133, %p134
    %p136 = pneg %p135
    // Predicated region
    $region9: #{separable_attn.14} parent=5 // pred_check
      _
    $region10: #{separable_attn.14} parent=5 // pred_check_branch
      %138 = sbr.rel (%p135) target = $region12
    $region11: #{separable_attn.14} parent=5 // pred_region
      %s139 = ssub.s32 %s10, 1
      // Predicated region
      $region13: #{separable_attn.14} parent=11 // pred_check
        %p140 = pneg %p43
      $region14: #{separable_attn.14} parent=11 // pred_check_branch
        %142 = sbr.rel (%p140) target = $region16
      $region15: #{separable_attn.14} parent=11 // pred_region
        _
      $region16: #{separable_attn.14} parent=11 // pred_fallthru
        _
    $region12: #{separable_attn.14} parent=5 // pred_fallthru
      _
    %p143 = scmp.lt.s32.totalorder %s10, 2
    // Predicated region
    $region17: #{separable_attn.14} parent=5 // pred_check
      %p144 = pneg %p143
    $region18: #{separable_attn.14} parent=5 // pred_check_branch
      %146 = sbr.rel (%p144) target = $region20
    $region19: #{separable_attn.14} parent=5 // pred_region
      // Predicated region
      $region21: #{separable_attn.14} parent=19 // pred_check
        %p147 = pneg %p63
      $region22: #{separable_attn.14} parent=19 // pred_check_branch
        %149 = sbr.rel (%p147) target = $region24
      $region23: #{separable_attn.14} parent=19 // pred_region
        %p150 = scmp.lt.s32.totalorder %s17, 1
        %s151 = scalar_select %p150, %s17, 1
        %s152 = smul.addr %s151, 2
        %s153 = smul.addr %s152, 8
        %s154 = scalar_lea.vmem %s1, %s153
      $region24: #{separable_attn.14} parent=19 // pred_fallthru
        _
      // Predicated region
      $region25: #{separable_attn.14} parent=19 // pred_check
        %p155 = pneg %p91
      $region26: #{separable_attn.14} parent=19 // pred_check_branch
        %157 = sbr.rel (%p155) target = $region28
      $region27: #{separable_attn.14} parent=19 // pred_region
        %s158 = smul.u32 128, %s18
        %p159 = scmp.lt.s32.totalorder %s17, 1
        %s160 = scalar_select %p159, %s17, 1
        %p161 = scmp.lt.s32.totalorder %s158, 127
        %s162 = scalar_select %p161, %s158, 127
        %s163 = smul.addr %s160, 128
        %s164 = sadd.s32 %s162, %s163
        %s165 = smul.addr %s164, 8
        %s166 = scalar_lea.vmem %s2, %s165
        %s167 = smul.u32 128, %s18
      $region28: #{separable_attn.14} parent=19 // pred_fallthru
        _
    $region20: #{separable_attn.14} parent=5 // pred_fallthru
      _
    %p168 = scmp.le.s32.totalorder 1, %s10
    %p169 = scmp.lt.s32.totalorder %s10, 3
    %p170 = pnand %p168, %p169
    %p171 = pneg %p170
    // Predicated region
    $region29: #{separable_attn.14} parent=5 // pred_check
      _
    $region30: #{separable_attn.14} parent=5 // pred_check_branch
      %173 = sbr.rel (%p170) target = $region32
    $region31: #{separable_attn.14} parent=5 // pred_region
      %s174 = ssub.s32 %s10, 1
      %p175 = pneg %p43
      %p176 = pneg %p40
      %p177 = scmp.lt.s32.totalorder %s19, 1
      %s178 = scalar_select %p177, %s19, 1
      %s179 = smul.addr %s178, 2
      %s180 = smul.addr %s179, 8
      %s181 = scalar_lea.vmem %s1, %s180
      %p182 = pneg %p69
      %p183 = pneg %p66
      %s184 = smul.u32 128, %s20
      %p185 = scmp.lt.s32.totalorder %s19, 1
      %s186 = scalar_select %p185, %s19, 1
      %p187 = scmp.lt.s32.totalorder %s184, 127
      %s188 = scalar_select %p187, %s184, 127
      %s189 = smul.addr %s186, 128
      %s190 = sadd.s32 %s188, %s189
      %s191 = smul.addr %s190, 8
      %s192 = scalar_lea.vmem %s2, %s191
      %p193 = pneg %p97
      %p194 = pneg %p94
      %p195 = pneg %p125
      %p196 = pneg %p122
      %s197 = smul.u32 8, %s20
      %p198 = scmp.lt.s32.totalorder %s19, 1
      %s199 = scalar_select %p198, %s19, 1
      %p200 = scmp.lt.s32.totalorder %s197, 7
      %s201 = scalar_select %p200, %s197, 7
      %s202 = smul.addr %s201, 2
      %s203 = smul.addr %s199, 16
      %s204 = sadd.s32 %s202, %s203
      %s205 = smul.addr %s204, 8
      %s206 = scalar_lea.vmem %s3, %s205
      %p207 = scmp.lt.s32.totalorder %s19, 1
      %s208 = scalar_select %p207, %s19, 1
      %s209 = smul.addr %s208, 2
      %s210 = smul.addr %s209, 8
      %s211 = scalar_lea.vmem %s1, %s210
      %s212 = smul.u32 128, %s20
      %p213 = scmp.lt.s32.totalorder %s19, 1
      %s214 = scalar_select %p213, %s19, 1
      %p215 = scmp.lt.s32.totalorder %s212, 127
      %s216 = scalar_select %p215, %s212, 127
      %s217 = smul.addr %s214, 128
      %s218 = sadd.s32 %s216, %s217
      %s219 = smul.addr %s218, 8
      %s220 = scalar_lea.vmem %s2, %s219
      %s221 = smul.u32 128, %s20
      %s222 = smul.u32 8, %s20
      %p223 = scmp.lt.s32.totalorder %s19, 1
      %s224 = scalar_select %p223, %s19, 1
      %p225 = scmp.lt.s32.totalorder %s222, 7
      %s226 = scalar_select %p225, %s222, 7
      %s227 = smul.addr %s226, 2
      %s228 = smul.addr %s224, 16
      %s229 = sadd.s32 %s227, %s228
      %s230 = smul.addr %s229, 8
      %s231 = scalar_lea.vmem %s3, %s230
      %s232 = smul.u32 8, %s20
      %v233 = vld [vmem:[%s211] sm:$0xff]
      %v234 = vld [vmem:[%s211 + $0x8] sm:$0xff]
      %v235 = vld [vmem:[%s220] sm:$0xff]
      %v236 = vld [vmem:[%s220 + $0x8] sm:$0xff]
      %v237 = vld [vmem:[%s220 + $0x10] sm:$0xff]
      %v238 = vld [vmem:[%s220 + $0x18] sm:$0xff]
      %v239 = vld [vmem:[%s220 + $0x20] sm:$0xff]
      %v240 = vld [vmem:[%s220 + $0x28] sm:$0xff]
      %v241 = vld [vmem:[%s220 + $0x30] sm:$0xff]
      %v242 = vld [vmem:[%s220 + $0x38] sm:$0xff]
      %v243 = vld [vmem:[%s220 + $0x40] sm:$0xff]
      %v244 = vld [vmem:[%s220 + $0x48] sm:$0xff]
      %v245 = vld [vmem:[%s220 + $0x50] sm:$0xff]
      %v246 = vld [vmem:[%s220 + $0x58] sm:$0xff]
      %v247 = vld [vmem:[%s220 + $0x60] sm:$0xff]
      %v248 = vld [vmem:[%s220 + $0x68] sm:$0xff]
      %v249 = vld [vmem:[%s220 + $0x70] sm:$0xff]
      %v250 = vld [vmem:[%s220 + $0x78] sm:$0xff]
      %v251 = vld [vmem:[%s220 + $0x80] sm:$0xff]
      %v252 = vld [vmem:[%s220 + $0x88] sm:$0xff]
      %v253 = vld [vmem:[%s220 + $0x90] sm:$0xff]
      %v254 = vld [vmem:[%s220 + $0x98] sm:$0xff]
      %v255 = vld [vmem:[%s220 + $0xa0] sm:$0xff]
      %v256 = vld [vmem:[%s220 + $0xa8] sm:$0xff]
      %v257 = vld [vmem:[%s220 + $0xb0] sm:$0xff]
      %v258 = vld [vmem:[%s220 + $0xb8] sm:$0xff]
      %v259 = vld [vmem:[%s220 + $0xc0] sm:$0xff]
      %v260 = vld [vmem:[%s220 + $0xc8] sm:$0xff]
      %v261 = vld [vmem:[%s220 + $0xd0] sm:$0xff]
      %v262 = vld [vmem:[%s220 + $0xd8] sm:$0xff]
      %v263 = vld [vmem:[%s220 + $0xe0] sm:$0xff]
      %v264 = vld [vmem:[%s220 + $0xe8] sm:$0xff]
      %v265 = vld [vmem:[%s220 + $0xf0] sm:$0xff]
      %v266 = vld [vmem:[%s220 + $0xf8] sm:$0xff]
      %v267 = vld [vmem:[%s220 + $0x100] sm:$0xff]
      %v268 = vld [vmem:[%s220 + $0x108] sm:$0xff]
      %v269 = vld [vmem:[%s220 + $0x110] sm:$0xff]
      %v270 = vld [vmem:[%s220 + $0x118] sm:$0xff]
      %v271 = vld [vmem:[%s220 + $0x120] sm:$0xff]
      %v272 = vld [vmem:[%s220 + $0x128] sm:$0xff]
      %v273 = vld [vmem:[%s220 + $0x130] sm:$0xff]
      %v274 = vld [vmem:[%s220 + $0x138] sm:$0xff]
      %v275 = vld [vmem:[%s220 + $0x140] sm:$0xff]
      %v276 = vld [vmem:[%s220 + $0x148] sm:$0xff]
      %v277 = vld [vmem:[%s220 + $0x150] sm:$0xff]
      %v278 = vld [vmem:[%s220 + $0x158] sm:$0xff]
      %v279 = vld [vmem:[%s220 + $0x160] sm:$0xff]
      %v280 = vld [vmem:[%s220 + $0x168] sm:$0xff]
      %v281 = vld [vmem:[%s220 + $0x170] sm:$0xff]
      %v282 = vld [vmem:[%s220 + $0x178] sm:$0xff]
      %v283 = vld [vmem:[%s220 + $0x180] sm:$0xff]
      %v284 = vld [vmem:[%s220 + $0x188] sm:$0xff]
      %v285 = vld [vmem:[%s220 + $0x190] sm:$0xff]
      %v286 = vld [vmem:[%s220 + $0x198] sm:$0xff]
      %v287 = vld [vmem:[%s220 + $0x1a0] sm:$0xff]
      %v288 = vld [vmem:[%s220 + $0x1a8] sm:$0xff]
      %v289 = vld [vmem:[%s220 + $0x1b0] sm:$0xff]
      %v290 = vld [vmem:[%s220 + $0x1b8] sm:$0xff]
      %v291 = vld [vmem:[%s220 + $0x1c0] sm:$0xff]
      %v292 = vld [vmem:[%s220 + $0x1c8] sm:$0xff]
      %v293 = vld [vmem:[%s220 + $0x1d0] sm:$0xff]
      %v294 = vld [vmem:[%s220 + $0x1d8] sm:$0xff]
      %v295 = vld [vmem:[%s220 + $0x1e0] sm:$0xff]
      %v296 = vld [vmem:[%s220 + $0x1e8] sm:$0xff]
      %v297 = vld [vmem:[%s220 + $0x1f0] sm:$0xff]
      %v298 = vld [vmem:[%s220 + $0x1f8] sm:$0xff]
      %v299 = vld [vmem:[%s220 + $0x200] sm:$0xff]
      %v300 = vld [vmem:[%s220 + $0x208] sm:$0xff]
      %v301 = vld [vmem:[%s220 + $0x210] sm:$0xff]
      %v302 = vld [vmem:[%s220 + $0x218] sm:$0xff]
      %v303 = vld [vmem:[%s220 + $0x220] sm:$0xff]
      %v304 = vld [vmem:[%s220 + $0x228] sm:$0xff]
      %v305 = vld [vmem:[%s220 + $0x230] sm:$0xff]
      %v306 = vld [vmem:[%s220 + $0x238] sm:$0xff]
      %v307 = vld [vmem:[%s220 + $0x240] sm:$0xff]
      %v308 = vld [vmem:[%s220 + $0x248] sm:$0xff]
      %v309 = vld [vmem:[%s220 + $0x250] sm:$0xff]
      %v310 = vld [vmem:[%s220 + $0x258] sm:$0xff]
      %v311 = vld [vmem:[%s220 + $0x260] sm:$0xff]
      %v312 = vld [vmem:[%s220 + $0x268] sm:$0xff]
      %v313 = vld [vmem:[%s220 + $0x270] sm:$0xff]
      %v314 = vld [vmem:[%s220 + $0x278] sm:$0xff]
      %v315 = vld [vmem:[%s220 + $0x280] sm:$0xff]
      %v316 = vld [vmem:[%s220 + $0x288] sm:$0xff]
      %v317 = vld [vmem:[%s220 + $0x290] sm:$0xff]
      %v318 = vld [vmem:[%s220 + $0x298] sm:$0xff]
      %v319 = vld [vmem:[%s220 + $0x2a0] sm:$0xff]
      %v320 = vld [vmem:[%s220 + $0x2a8] sm:$0xff]
      %v321 = vld [vmem:[%s220 + $0x2b0] sm:$0xff]
      %v322 = vld [vmem:[%s220 + $0x2b8] sm:$0xff]
      %v323 = vld [vmem:[%s220 + $0x2c0] sm:$0xff]
      %v324 = vld [vmem:[%s220 + $0x2c8] sm:$0xff]
      %v325 = vld [vmem:[%s220 + $0x2d0] sm:$0xff]
      %v326 = vld [vmem:[%s220 + $0x2d8] sm:$0xff]
      %v327 = vld [vmem:[%s220 + $0x2e0] sm:$0xff]
      %v328 = vld [vmem:[%s220 + $0x2e8] sm:$0xff]
      %v329 = vld [vmem:[%s220 + $0x2f0] sm:$0xff]
      %v330 = vld [vmem:[%s220 + $0x2f8] sm:$0xff]
      %v331 = vld [vmem:[%s220 + $0x300] sm:$0xff]
      %v332 = vld [vmem:[%s220 + $0x308] sm:$0xff]
      %v333 = vld [vmem:[%s220 + $0x310] sm:$0xff]
      %v334 = vld [vmem:[%s220 + $0x318] sm:$0xff]
      %v335 = vld [vmem:[%s220 + $0x320] sm:$0xff]
      %v336 = vld [vmem:[%s220 + $0x328] sm:$0xff]
      %v337 = vld [vmem:[%s220 + $0x330] sm:$0xff]
      %v338 = vld [vmem:[%s220 + $0x338] sm:$0xff]
      %v339 = vld [vmem:[%s220 + $0x340] sm:$0xff]
      %v340 = vld [vmem:[%s220 + $0x348] sm:$0xff]
      %v341 = vld [vmem:[%s220 + $0x350] sm:$0xff]
      %v342 = vld [vmem:[%s220 + $0x358] sm:$0xff]
      %v343 = vld [vmem:[%s220 + $0x360] sm:$0xff]
      %v344 = vld [vmem:[%s220 + $0x368] sm:$0xff]
      %v345 = vld [vmem:[%s220 + $0x370] sm:$0xff]
      %v346 = vld [vmem:[%s220 + $0x378] sm:$0xff]
      %v347 = vld [vmem:[%s220 + $0x380] sm:$0xff]
      %v348 = vld [vmem:[%s220 + $0x388] sm:$0xff]
      %v349 = vld [vmem:[%s220 + $0x390] sm:$0xff]
      %v350 = vld [vmem:[%s220 + $0x398] sm:$0xff]
      %v351 = vld [vmem:[%s220 + $0x3a0] sm:$0xff]
      %v352 = vld [vmem:[%s220 + $0x3a8] sm:$0xff]
      %v353 = vld [vmem:[%s220 + $0x3b0] sm:$0xff]
      %v354 = vld [vmem:[%s220 + $0x3b8] sm:$0xff]
      %v355 = vld [vmem:[%s220 + $0x3c0] sm:$0xff]
      %v356 = vld [vmem:[%s220 + $0x3c8] sm:$0xff]
      %v357 = vld [vmem:[%s220 + $0x3d0] sm:$0xff]
      %v358 = vld [vmem:[%s220 + $0x3d8] sm:$0xff]
      %v359 = vld [vmem:[%s220 + $0x3e0] sm:$0xff]
      %v360 = vld [vmem:[%s220 + $0x3e8] sm:$0xff]
      %v361 = vld [vmem:[%s220 + $0x3f0] sm:$0xff]
      %v362 = vld [vmem:[%s220 + $0x3f8] sm:$0xff]
      %vm363 = vcmask 64512
      %v365 = vsel %vm363, %v233, 0
      %v368 = vsel %vm363, %v234, 0
      %v371 = vsel %vm363, %v235, 0
      %v374 = vsel %vm363, %v236, 0
      %v377 = vsel %vm363, %v237, 0
      %v380 = vsel %vm363, %v238, 0
      %v383 = vsel %vm363, %v239, 0
      %v386 = vsel %vm363, %v240, 0
      %v389 = vsel %vm363, %v241, 0
      %v392 = vsel %vm363, %v242, 0
      %v395 = vsel %vm363, %v243, 0
      %v398 = vsel %vm363, %v244, 0
      %v401 = vsel %vm363, %v245, 0
      %v404 = vsel %vm363, %v246, 0
      %v407 = vsel %vm363, %v247, 0
      %v410 = vsel %vm363, %v248, 0
      %v413 = vsel %vm363, %v249, 0
      %v416 = vsel %vm363, %v250, 0
      %v419 = vsel %vm363, %v251, 0
      %v422 = vsel %vm363, %v252, 0
      %v425 = vsel %vm363, %v253, 0
      %v428 = vsel %vm363, %v254, 0
      %v431 = vsel %vm363, %v255, 0
      %v434 = vsel %vm363, %v256, 0
      %v437 = vsel %vm363, %v257, 0
      %v440 = vsel %vm363, %v258, 0
      %v443 = vsel %vm363, %v259, 0
      %v446 = vsel %vm363, %v260, 0
      %v449 = vsel %vm363, %v261, 0
      %v452 = vsel %vm363, %v262, 0
      %v455 = vsel %vm363, %v263, 0
      %v458 = vsel %vm363, %v264, 0
      %v461 = vsel %vm363, %v265, 0
      %v464 = vsel %vm363, %v266, 0
      %v467 = vsel %vm363, %v267, 0
      %v470 = vsel %vm363, %v268, 0
      %v473 = vsel %vm363, %v269, 0
      %v476 = vsel %vm363, %v270, 0
      %v479 = vsel %vm363, %v271, 0
      %v482 = vsel %vm363, %v272, 0
      %v485 = vsel %vm363, %v273, 0
      %v488 = vsel %vm363, %v274, 0
      %v491 = vsel %vm363, %v275, 0
      %v494 = vsel %vm363, %v276, 0
      %v497 = vsel %vm363, %v277, 0
      %v500 = vsel %vm363, %v278, 0
      %v503 = vsel %vm363, %v279, 0
      %v506 = vsel %vm363, %v280, 0
      %v509 = vsel %vm363, %v281, 0
      %v512 = vsel %vm363, %v282, 0
      %v515 = vsel %vm363, %v283, 0
      %v518 = vsel %vm363, %v284, 0
      %v521 = vsel %vm363, %v285, 0
      %v524 = vsel %vm363, %v286, 0
      %v527 = vsel %vm363, %v287, 0
      %v530 = vsel %vm363, %v288, 0
      %v533 = vsel %vm363, %v289, 0
      %v536 = vsel %vm363, %v290, 0
      %v539 = vsel %vm363, %v291, 0
      %v542 = vsel %vm363, %v292, 0
      %v545 = vsel %vm363, %v293, 0
      %v548 = vsel %vm363, %v294, 0
      %v551 = vsel %vm363, %v295, 0
      %v554 = vsel %vm363, %v296, 0
      %v557 = vsel %vm363, %v297, 0
      %v560 = vsel %vm363, %v298, 0
      %v563 = vsel %vm363, %v299, 0
      %v566 = vsel %vm363, %v300, 0
      %v569 = vsel %vm363, %v301, 0
      %v572 = vsel %vm363, %v302, 0
      %v575 = vsel %vm363, %v303, 0
      %v578 = vsel %vm363, %v304, 0
      %v581 = vsel %vm363, %v305, 0
      %v584 = vsel %vm363, %v306, 0
      %v587 = vsel %vm363, %v307, 0
      %v590 = vsel %vm363, %v308, 0
      %v593 = vsel %vm363, %v309, 0
      %v596 = vsel %vm363, %v310, 0
      %v599 = vsel %vm363, %v311, 0
      %v602 = vsel %vm363, %v312, 0
      %v605 = vsel %vm363, %v313, 0
      %v608 = vsel %vm363, %v314, 0
      %v611 = vsel %vm363, %v315, 0
      %v614 = vsel %vm363, %v316, 0
      %v617 = vsel %vm363, %v317, 0
      %v620 = vsel %vm363, %v318, 0
      %v623 = vsel %vm363, %v319, 0
      %v626 = vsel %vm363, %v320, 0
      %v629 = vsel %vm363, %v321, 0
      %v632 = vsel %vm363, %v322, 0
      %v635 = vsel %vm363, %v323, 0
      %v638 = vsel %vm363, %v324, 0
      %v641 = vsel %vm363, %v325, 0
      %v644 = vsel %vm363, %v326, 0
      %v647 = vsel %vm363, %v327, 0
      %v650 = vsel %vm363, %v328, 0
      %v653 = vsel %vm363, %v329, 0
      %v656 = vsel %vm363, %v330, 0
      %v659 = vsel %vm363, %v331, 0
      %v662 = vsel %vm363, %v332, 0
      %v665 = vsel %vm363, %v333, 0
      %v668 = vsel %vm363, %v334, 0
      %v671 = vsel %vm363, %v335, 0
      %v674 = vsel %vm363, %v336, 0
      %v677 = vsel %vm363, %v337, 0
      %v680 = vsel %vm363, %v338, 0
      %v683 = vsel %vm363, %v339, 0
      %v686 = vsel %vm363, %v340, 0
      %v689 = vsel %vm363, %v341, 0
      %v692 = vsel %vm363, %v342, 0
      %v695 = vsel %vm363, %v343, 0
      %v698 = vsel %vm363, %v344, 0
      %v701 = vsel %vm363, %v345, 0
      %v704 = vsel %vm363, %v346, 0
      %v707 = vsel %vm363, %v347, 0
      %v710 = vsel %vm363, %v348, 0
      %v713 = vsel %vm363, %v349, 0
      %v716 = vsel %vm363, %v350, 0
      %v719 = vsel %vm363, %v351, 0
      %v722 = vsel %vm363, %v352, 0
      %v725 = vsel %vm363, %v353, 0
      %v728 = vsel %vm363, %v354, 0
      %v731 = vsel %vm363, %v355, 0
      %v734 = vsel %vm363, %v356, 0
      %v737 = vsel %vm363, %v357, 0
      %v740 = vsel %vm363, %v358, 0
      %v743 = vsel %vm363, %v359, 0
      %v746 = vsel %vm363, %v360, 0
      %v749 = vsel %vm363, %v361, 0
      %v752 = vsel %vm363, %v362, 0
      %754 = vmatprep.subr.mxu0 0.0
      %755 = vmatpush1.xpose.msra.mxu0 %v371
      %756 = vmatprep.subr.mxu0 0.0
      %757 = vmatpush1.xpose.msra.mxu0 %v374
      %758 = vmatprep.subr.mxu0 0.0
      %759 = vmatpush1.xpose.msra.mxu0 %v377
      %760 = vmatprep.subr.mxu0 0.0
      %761 = vmatpush1.xpose.msra.mxu0 %v380
      %762 = vmatprep.subr.mxu0 0.0
      %763 = vmatpush1.xpose.msra.mxu0 %v383
      %764 = vmatprep.subr.mxu0 0.0
      %765 = vmatpush1.xpose.msra.mxu0 %v386
      %766 = vmatprep.subr.mxu0 0.0
      %767 = vmatpush1.xpose.msra.mxu0 %v389
      %768 = vmatprep.subr.mxu0 0.0
      %769 = vmatpush1.xpose.msra.mxu0 %v392
      %770 = vmatprep.subr.mxu0 0.0
      %771 = vmatpush1.xpose.msra.mxu0 %v395
      %772 = vmatprep.subr.mxu0 0.0
      %773 = vmatpush1.xpose.msra.mxu0 %v398
      %774 = vmatprep.subr.mxu0 0.0
      %775 = vmatpush1.xpose.msra.mxu0 %v401
      %776 = vmatprep.subr.mxu0 0.0
      %777 = vmatpush1.xpose.msra.mxu0 %v404
      %778 = vmatprep.subr.mxu0 0.0
      %779 = vmatpush1.xpose.msra.mxu0 %v407
      %780 = vmatprep.subr.mxu0 0.0
      %781 = vmatpush1.xpose.msra.mxu0 %v410
      %782 = vmatprep.subr.mxu0 0.0
      %783 = vmatpush1.xpose.msra.mxu0 %v413
      %784 = vmatprep.subr.mxu0 0.0
      %785 = vmatpush1.xpose.msra.mxu0 %v416
      %786 = vmatprep.subr.mxu0 0.0
      %787 = vmatpush1.xpose.msra.mxu0 %v419
      %788 = vmatprep.subr.mxu0 0.0
      %789 = vmatpush1.xpose.msra.mxu0 %v422
      %790 = vmatprep.subr.mxu0 0.0
      %791 = vmatpush1.xpose.msra.mxu0 %v425
      %792 = vmatprep.subr.mxu0 0.0
      %793 = vmatpush1.xpose.msra.mxu0 %v428
      %794 = vmatprep.subr.mxu0 0.0
      %795 = vmatpush1.xpose.msra.mxu0 %v431
      %796 = vmatprep.subr.mxu0 0.0
      %797 = vmatpush1.xpose.msra.mxu0 %v434
      %798 = vmatprep.subr.mxu0 0.0
      %799 = vmatpush1.xpose.msra.mxu0 %v437
      %800 = vmatprep.subr.mxu0 0.0
      %801 = vmatpush1.xpose.msra.mxu0 %v440
      %802 = vmatprep.subr.mxu0 0.0
      %803 = vmatpush1.xpose.msra.mxu0 %v443
      %804 = vmatprep.subr.mxu0 0.0
      %805 = vmatpush1.xpose.msra.mxu0 %v446
      %806 = vmatprep.subr.mxu0 0.0
      %807 = vmatpush1.xpose.msra.mxu0 %v449
      %808 = vmatprep.subr.mxu0 0.0
      %809 = vmatpush1.xpose.msra.mxu0 %v452
      %810 = vmatprep.subr.mxu0 0.0
      %811 = vmatpush1.xpose.msra.mxu0 %v455
      %812 = vmatprep.subr.mxu0 0.0
      %813 = vmatpush1.xpose.msra.mxu0 %v458
      %814 = vmatprep.subr.mxu0 0.0
      %815 = vmatpush1.xpose.msra.mxu0 %v461
      %816 = vmatprep.subr.mxu0 0.0
      %817 = vmatpush1.xpose.msra.mxu0 %v464
      %818 = vmatprep.mubr.f32.mxu0 0.0
      %819 = vmatmul.mubr.f32.gmra.mrb[0].mxu0 %v365
      %v820 = vpop.f32.mrb[0].mxu0
      %v821 = vadd.f32 0.0, %v820
      %v822 = vpop.f32.mrb[0].mxu0
      %v823 = vadd.f32 0.0, %v822
      %824 = vmatprep.mubr.f32.mxu0 0.0
      %825 = vmatmul.mubr.f32.gmra.mrb[0].mxu0 %v368
      %v826 = vpop.f32.mrb[0].mxu0
      %v827 = vadd.f32 0.0, %v826
      %v828 = vpop.f32.mrb[0].mxu0
      %v829 = vadd.f32 0.0, %v828
      %830 = vdwg.mxu0
      %831 = vmatprep.subr.mxu0 0.0
      %832 = vmatpush1.xpose.msra.mxu0 %v467
      %833 = vmatprep.subr.mxu0 0.0
      %834 = vmatpush1.xpose.msra.mxu0 %v470
      %835 = vmatprep.subr.mxu0 0.0
      %836 = vmatpush1.xpose.msra.mxu0 %v473
      %837 = vmatprep.subr.mxu0 0.0
      %838 = vmatpush1.xpose.msra.mxu0 %v476
      %839 = vmatprep.subr.mxu0 0.0
      %840 = vmatpush1.xpose.msra.mxu0 %v479
      %841 = vmatprep.subr.mxu0 0.0
      %842 = vmatpush1.xpose.msra.mxu0 %v482
      %843 = vmatprep.subr.mxu0 0.0
      %844 = vmatpush1.xpose.msra.mxu0 %v485
      %845 = vmatprep.subr.mxu0 0.0
      %846 = vmatpush1.xpose.msra.mxu0 %v488
      %847 = vmatprep.subr.mxu0 0.0
      %848 = vmatpush1.xpose.msra.mxu0 %v491
      %849 = vmatprep.subr.mxu0 0.0
      %850 = vmatpush1.xpose.msra.mxu0 %v494
      %851 = vmatprep.subr.mxu0 0.0
      %852 = vmatpush1.xpose.msra.mxu0 %v497
      %853 = vmatprep.subr.mxu0 0.0
      %854 = vmatpush1.xpose.msra.mxu0 %v500
      %855 = vmatprep.subr.mxu0 0.0
      %856 = vmatpush1.xpose.msra.mxu0 %v503
      %857 = vmatprep.subr.mxu0 0.0
      %858 = vmatpush1.xpose.msra.mxu0 %v506
      %859 = vmatprep.subr.mxu0 0.0
      %860 = vmatpush1.xpose.msra.mxu0 %v509
      %861 = vmatprep.subr.mxu0 0.0
      %862 = vmatpush1.xpose.msra.mxu0 %v512
      %863 = vmatprep.subr.mxu0 0.0
      %864 = vmatpush1.xpose.msra.mxu0 %v515
      %865 = vmatprep.subr.mxu0 0.0
      %866 = vmatpush1.xpose.msra.mxu0 %v518
      %867 = vmatprep.subr.mxu0 0.0
      %868 = vmatpush1.xpose.msra.mxu0 %v521
      %869 = vmatprep.subr.mxu0 0.0
      %870 = vmatpush1.xpose.msra.mxu0 %v524
      %871 = vmatprep.subr.mxu0 0.0
      %872 = vmatpush1.xpose.msra.mxu0 %v527
      %873 = vmatprep.subr.mxu0 0.0
      %874 = vmatpush1.xpose.msra.mxu0 %v530
      %875 = vmatprep.subr.mxu0 0.0
      %876 = vmatpush1.xpose.msra.mxu0 %v533
      %877 = vmatprep.subr.mxu0 0.0
      %878 = vmatpush1.xpose.msra.mxu0 %v536
      %879 = vmatprep.subr.mxu0 0.0
      %880 = vmatpush1.xpose.msra.mxu0 %v539
      %881 = vmatprep.subr.mxu0 0.0
      %882 = vmatpush1.xpose.msra.mxu0 %v542
      %883 = vmatprep.subr.mxu0 0.0
      %884 = vmatpush1.xpose.msra.mxu0 %v545
      %885 = vmatprep.subr.mxu0 0.0
      %886 = vmatpush1.xpose.msra.mxu0 %v548
      %887 = vmatprep.subr.mxu0 0.0
      %888 = vmatpush1.xpose.msra.mxu0 %v551
      %889 = vmatprep.subr.mxu0 0.0
      %890 = vmatpush1.xpose.msra.mxu0 %v554
      %891 = vmatprep.subr.mxu0 0.0
      %892 = vmatpush1.xpose.msra.mxu0 %v557
      %893 = vmatprep.subr.mxu0 0.0
      %894 = vmatpush1.xpose.msra.mxu0 %v560
      %895 = vmatprep.mubr.f32.mxu0 0.0
      %896 = vmatmul.mubr.f32.gmra.mrb[0].mxu0 %v365
      %v897 = vpop.f32.mrb[0].mxu0
      %v898 = vadd.f32 0.0, %v897
      %v899 = vpop.f32.mrb[0].mxu0
      %v900 = vadd.f32 0.0, %v899
      %901 = vmatprep.mubr.f32.mxu0 0.0
      %902 = vmatmul.mubr.f32.gmra.mrb[0].mxu0 %v368
      %v903 = vpop.f32.mrb[0].mxu0
      %v904 = vadd.f32 0.0, %v903
      %v905 = vpop.f32.mrb[0].mxu0
      %v906 = vadd.f32 0.0, %v905
      %907 = vdwg.mxu0
      %908 = vmatprep.subr.mxu0 0.0
      %909 = vmatpush1.xpose.msra.mxu0 %v563
      %910 = vmatprep.subr.mxu0 0.0
      %911 = vmatpush1.xpose.msra.mxu0 %v566
      %912 = vmatprep.subr.mxu0 0.0
      %913 = vmatpush1.xpose.msra.mxu0 %v569
      %914 = vmatprep.subr.mxu0 0.0
      %915 = vmatpush1.xpose.msra.mxu0 %v572
      %916 = vmatprep.subr.mxu0 0.0
      %917 = vmatpush1.xpose.msra.mxu0 %v575
      %918 = vmatprep.subr.mxu0 0.0
      %919 = vmatpush1.xpose.msra.mxu0 %v578
      %920 = vmatprep.subr.mxu0 0.0
      %921 = vmatpush1.xpose.msra.mxu0 %v581
      %922 = vmatprep.subr.mxu0 0.0
      %923 = vmatpush1.xpose.msra.mxu0 %v584
      %924 = vmatprep.subr.mxu0 0.0
      %925 = vmatpush1.xpose.msra.mxu0 %v587
      %926 = vmatprep.subr.mxu0 0.0
      %927 = vmatpush1.xpose.msra.mxu0 %v590
      %928 = vmatprep.subr.mxu0 0.0
      %929 = vmatpush1.xpose.msra.mxu0 %v593
      %930 = vmatprep.subr.mxu0 0.0
      %931 = vmatpush1.xpose.msra.mxu0 %v596
      %932 = vmatprep.subr.mxu0 0.0
      %933 = vmatpush1.xpose.msra.mxu0 %v599
      %934 = vmatprep.subr.mxu0 0.0
      %935 = vmatpush1.xpose.msra.mxu0 %v602
      %936 = vmatprep.subr.mxu0 0.0
      %937 = vmatpush1.xpose.msra.mxu0 %v605
      %938 = vmatprep.subr.mxu0 0.0
      %939 = vmatpush1.xpose.msra.mxu0 %v608
      %940 = vmatprep.subr.mxu0 0.0
      %941 = vmatpush1.xpose.msra.mxu0 %v611
      %942 = vmatprep.subr.mxu0 0.0
      %943 = vmatpush1.xpose.msra.mxu0 %v614
      %944 = vmatprep.subr.mxu0 0.0
      %945 = vmatpush1.xpose.msra.mxu0 %v617
      %946 = vmatprep.subr.mxu0 0.0
      %947 = vmatpush1.xpose.msra.mxu0 %v620
      %948 = vmatprep.subr.mxu0 0.0
      %949 = vmatpush1.xpose.msra.mxu0 %v623
      %950 = vmatprep.subr.mxu0 0.0
      %951 = vmatpush1.xpose.msra.mxu0 %v626
      %952 = vmatprep.subr.mxu0 0.0
      %953 = vmatpush1.xpose.msra.mxu0 %v629
      %954 = vmatprep.subr.mxu0 0.0
      %955 = vmatpush1.xpose.msra.mxu0 %v632
      %956 = vmatprep.subr.mxu0 0.0
      %957 = vmatpush1.xpose.msra.mxu0 %v635
      %958 = vmatprep.subr.mxu0 0.0
      %959 = vmatpush1.xpose.msra.mxu0 %v638
      %960 = vmatprep.subr.mxu0 0.0
      %961 = vmatpush1.xpose.msra.mxu0 %v641
      %962 = vmatprep.subr.mxu0 0.0
      %963 = vmatpush1.xpose.msra.mxu0 %v644
      %964 = vmatprep.subr.mxu0 0.0
      %965 = vmatpush1.xpose.msra.mxu0 %v647
      %966 = vmatprep.subr.mxu0 0.0
      %967 = vmatpush1.xpose.msra.mxu0 %v650
      %968 = vmatprep.subr.mxu0 0.0
      %969 = vmatpush1.xpose.msra.mxu0 %v653
      %970 = vmatprep.subr.mxu0 0.0
      %971 = vmatpush1.xpose.msra.mxu0 %v656
      %972 = vmatprep.mubr.f32.mxu0 0.0
      %973 = vmatmul.mubr.f32.gmra.mrb[0].mxu0 %v365
      %v974 = vpop.f32.mrb[0].mxu0
      %v975 = vadd.f32 0.0, %v974
      %v976 = vpop.f32.mrb[0].mxu0
      %v977 = vadd.f32 0.0, %v976
      %978 = vmatprep.mubr.f32.mxu0 0.0
      %979 = vmatmul.mubr.f32.gmra.mrb[0].mxu0 %v368
      %v980 = vpop.f32.mrb[0].mxu0
      %v981 = vadd.f32 0.0, %v980
      %v982 = vpop.f32.mrb[0].mxu0
      %v983 = vadd.f32 0.0, %v982
      %984 = vdwg.mxu0
      %985 = vmatprep.subr.mxu0 0.0
      %986 = vmatpush1.xpose.msra.mxu0 %v659
      %987 = vmatprep.subr.mxu0 0.0
      %988 = vmatpush1.xpose.msra.mxu0 %v662
      %989 = vmatprep.subr.mxu0 0.0
      %990 = vmatpush1.xpose.msra.mxu0 %v665
      %991 = vmatprep.subr.mxu0 0.0
      %992 = vmatpush1.xpose.msra.mxu0 %v668
      %993 = vmatprep.subr.mxu0 0.0
      %994 = vmatpush1.xpose.msra.mxu0 %v671
      %995 = vmatprep.subr.mxu0 0.0
      %996 = vmatpush1.xpose.msra.mxu0 %v674
      %997 = vmatprep.subr.mxu0 0.0
      %998 = vmatpush1.xpose.msra.mxu0 %v677
      %999 = vmatprep.subr.mxu0 0.0
      %1000 = vmatpush1.xpose.msra.mxu0 %v680
      %1001 = vmatprep.subr.mxu0 0.0
      %1002 = vmatpush1.xpose.msra.mxu0 %v683
      %1003 = vmatprep.subr.mxu0 0.0
      %1004 = vmatpush1.xpose.msra.mxu0 %v686
      %1005 = vmatprep.subr.mxu0 0.0
      %1006 = vmatpush1.xpose.msra.mxu0 %v689
      %1007 = vmatprep.subr.mxu0 0.0
      %1008 = vmatpush1.xpose.msra.mxu0 %v692
      %1009 = vmatprep.subr.mxu0 0.0
      %1010 = vmatpush1.xpose.msra.mxu0 %v695
      %1011 = vmatprep.subr.mxu0 0.0
      %1012 = vmatpush1.xpose.msra.mxu0 %v698
      %1013 = vmatprep.subr.mxu0 0.0
      %1014 = vmatpush1.xpose.msra.mxu0 %v701
      %1015 = vmatprep.subr.mxu0 0.0
      %1016 = vmatpush1.xpose.msra.mxu0 %v704
      %1017 = vmatprep.subr.mxu0 0.0
      %1018 = vmatpush1.xpose.msra.mxu0 %v707
      %1019 = vmatprep.subr.mxu0 0.0
      %1020 = vmatpush1.xpose.msra.mxu0 %v710
      %1021 = vmatprep.subr.mxu0 0.0
      %1022 = vmatpush1.xpose.msra.mxu0 %v713
      %1023 = vmatprep.subr.mxu0 0.0
      %1024 = vmatpush1.xpose.msra.mxu0 %v716
      %1025 = vmatprep.subr.mxu0 0.0
      %1026 = vmatpush1.xpose.msra.mxu0 %v719
      %1027 = vmatprep.subr.mxu0 0.0
      %1028 = vmatpush1.xpose.msra.mxu0 %v722
      %1029 = vmatprep.subr.mxu0 0.0
      %1030 = vmatpush1.xpose.msra.mxu0 %v725
      %1031 = vmatprep.subr.mxu0 0.0
      %1032 = vmatpush1.xpose.msra.mxu0 %v728
      %1033 = vmatprep.subr.mxu0 0.0
      %1034 = vmatpush1.xpose.msra.mxu0 %v731
      %1035 = vmatprep.subr.mxu0 0.0
      %1036 = vmatpush1.xpose.msra.mxu0 %v734
      %1037 = vmatprep.subr.mxu0 0.0
      %1038 = vmatpush1.xpose.msra.mxu0 %v737
      %1039 = vmatprep.subr.mxu0 0.0
      %1040 = vmatpush1.xpose.msra.mxu0 %v740
      %1041 = vmatprep.subr.mxu0 0.0
      %1042 = vmatpush1.xpose.msra.mxu0 %v743
      %1043 = vmatprep.subr.mxu0 0.0
      %1044 = vmatpush1.xpose.msra.mxu0 %v746
      %1045 = vmatprep.subr.mxu0 0.0
      %1046 = vmatpush1.xpose.msra.mxu0 %v749
      %1047 = vmatprep.subr.mxu0 0.0
      %1048 = vmatpush1.xpose.msra.mxu0 %v752
      %1049 = vmatprep.mubr.f32.mxu0 0.0
      %1050 = vmatmul.mubr.f32.gmra.mrb[0].mxu0 %v365
      %v1051 = vpop.f32.mrb[0].mxu0
      %v1052 = vadd.f32 0.0, %v1051
      %v1053 = vpop.f32.mrb[0].mxu0
      %v1054 = vadd.f32 0.0, %v1053
      %1055 = vmatprep.mubr.f32.mxu0 0.0
      %1056 = vmatmul.mubr.f32.gmra.mrb[0].mxu0 %v368
      %v1057 = vpop.f32.mrb[0].mxu0
      %v1058 = vadd.f32 0.0, %v1057
      %v1059 = vpop.f32.mrb[0].mxu0
      %v1060 = vadd.f32 0.0, %v1059
      %1061 = vdwg.mxu0
      %s1062 = sld [smem:[#allocation2]]
      %v1063 = vstv %s1062
      %v1064 = vmul.f32 %v1063, %v821
      %v1065 = vmul.f32 %v1063, %v827
      %1066 = vst [vmem:[%s231] sm:$0xff] %v1064
      %1067 = vst [vmem:[%s231 + $0x8] sm:$0xff] %v1065
      %v1068 = vmul.f32 %v1063, %v823
      %v1069 = vmul.f32 %v1063, %v829
      %s1070 = scalar_lea.vmem %s231, 16
      %1071 = vst [vmem:[%s1070] sm:$0xff] %v1068
      %1072 = vst [vmem:[%s1070 + $0x8] sm:$0xff] %v1069
      %v1073 = vmul.f32 %v1063, %v898
      %v1074 = vmul.f32 %v1063, %v904
      %s1075 = scalar_lea.vmem %s231, 32
      %1076 = vst [vmem:[%s1075] sm:$0xff] %v1073
      %1077 = vst [vmem:[%s1075 + $0x8] sm:$0xff] %v1074
      %v1078 = vmul.f32 %v1063, %v900
      %v1079 = vmul.f32 %v1063, %v906
      %s1080 = scalar_lea.vmem %s231, 48
      %1081 = vst [vmem:[%s1080] sm:$0xff] %v1078
      %1082 = vst [vmem:[%s1080 + $0x8] sm:$0xff] %v1079
      %v1083 = vmul.f32 %v1063, %v975
      %v1084 = vmul.f32 %v1063, %v981
      %s1085 = scalar_lea.vmem %s231, 64
      %1086 = vst [vmem:[%s1085] sm:$0xff] %v1083
      %1087 = vst [vmem:[%s1085 + $0x8] sm:$0xff] %v1084
      %v1088 = vmul.f32 %v1063, %v977
      %v1089 = vmul.f32 %v1063, %v983
      %s1090 = scalar_lea.vmem %s231, 80
      %1091 = vst [vmem:[%s1090] sm:$0xff] %v1088
      %1092 = vst [vmem:[%s1090 + $0x8] sm:$0xff] %v1089
      %v1093 = vmul.f32 %v1063, %v1052
      %v1094 = vmul.f32 %v1063, %v1058
      %s1095 = scalar_lea.vmem %s231, 96
      %1096 = vst [vmem:[%s1095] sm:$0xff] %v1093
      %1097 = vst [vmem:[%s1095 + $0x8] sm:$0xff] %v1094
      %v1098 = vmul.f32 %v1063, %v1054
      %v1099 = vmul.f32 %v1063, %v1060
      %s1100 = scalar_lea.vmem %s231, 112
      %1101 = vst [vmem:[%s1100] sm:$0xff] %v1098
      %1102 = vst [vmem:[%s1100 + $0x8] sm:$0xff] %v1099
      %s1103 = smul.u32 8, %s20
      %p1104 = scmp.lt.s32.totalorder %s19, 1
      %s1105 = scalar_select %p1104, %s19, 1
      %p1106 = scmp.lt.s32.totalorder %s1103, 7
      %s1107 = scalar_select %p1106, %s1103, 7
      %s1108 = smul.addr %s1107, 2
      %s1109 = smul.addr %s1105, 16
      %s1110 = sadd.s32 %s1108, %s1109
      %s1111 = smul.addr %s1110, 8
      %s1112 = scalar_lea.vmem %s3, %s1111
      // Predicated region
      $region33: #{separable_attn.14} parent=31 // pred_check
        %p1113 = pneg %p122
      $region34: #{separable_attn.14} parent=31 // pred_check_branch
        %1115 = sbr.rel (%p1113) target = $region36
      $region35: #{separable_attn.14} parent=31 // pred_region
        %s1116 = smul.u32 8, %s20
      $region36: #{separable_attn.14} parent=31 // pred_fallthru
        _
    $region32: #{separable_attn.14} parent=5 // pred_fallthru
      _
    %p1117 = scmp.le.s32.totalorder 2, %s10
    // Predicated region
    $region37: #{separable_attn.14} parent=5 // pred_check
      %p1118 = pneg %p1117
    $region38: #{separable_attn.14} parent=5 // pred_check_branch
      %1120 = sbr.rel (%p1118) target = $region40
    $region39: #{separable_attn.14} parent=5 // pred_region
      %s1121 = ssub.s32 %s10, 2
      // Predicated region
      $region41: #{separable_attn.14} parent=39 // pred_check
        %p1122 = pneg %p128
      $region42: #{separable_attn.14} parent=39 // pred_check_branch
        %1124 = sbr.rel (%p1122) target = $region44
      $region43: #{separable_attn.14} parent=39 // pred_region
        %s1125 = smul.u32 8, %s22
        %p1126 = scmp.lt.s32.totalorder %s21, 1
        %s1127 = scalar_select %p1126, %s21, 1
        %p1128 = scmp.lt.s32.totalorder %s1125, 7
        %s1129 = scalar_select %p1128, %s1125, 7
        %s1130 = smul.addr %s1129, 2
        %s1131 = smul.addr %s1127, 16
        %s1132 = sadd.s32 %s1130, %s1131
        %s1133 = smul.addr %s1132, 8
        %s1134 = scalar_lea.vmem %s3, %s1133
      $region44: #{separable_attn.14} parent=39 // pred_fallthru
        _
    $region40: #{separable_attn.14} parent=5 // pred_fallthru
      _
  $region6: #{separable_attn.14} parent=0 // loop_footer
    %s14 = sadd.s32 1, %s10
  $region7: #{separable_attn.14} parent=0 // loop_footer_branch
    %9 = sbr.rel target = $region3
  $region8: #{separable_attn.14} parent=0 // loop_exit
    _

</llo_original>
